<compile_context>
chip_gen: v6e
topology: v6e:2x2x1
jax: 0.10.0
libtpu: 0.0.40
codegen_flags: <defaults>
</compile_context>

<pallas_src>
import functools

import jax
import jax.numpy as jnp
import numpy as np
from jax.experimental import pallas as pl
from jax.experimental.pallas import tpu as pltpu

HIDDEN = 128   # fixed by the module: nn.LSTM(embedding_dims, 128, 2, bidirectional=True)
SUBLANE = 8    # f32 sublane tile


# ----------------------------------------------------------------------------
# Fused Pallas kernel: 2 layers x 2 directions of LSTM + final Linear
# ----------------------------------------------------------------------------
def _birnn_fused_kernel(
    xf_ref,      # [T*BP, E]   padded time-major input (forward time order)
    wih1f_ref,   # [E, 4H]     layer-1 input weights, forward direction
    wih1b_ref,   # [E, 4H]     layer-1 input weights, backward direction
    whh1f_ref,   # [H, 4H]
    whh1b_ref,   # [H, 4H]
    b1f_ref,     # [1, 4H]
    b1b_ref,     # [1, 4H]
    wih2f_hbm,   # [2H, 4H]    layer-2 weights left in HBM (memory_space=ANY)
    wih2b_hbm,   # [2H, 4H]
    whh2f_hbm,   # [H, 4H]
    whh2b_hbm,   # [H, 4H]
    b2f_ref,     # [1, 4H]
    b2b_ref,     # [1, 4H]
    fcw_ref,     # [2H, C]
    fcb_ref,     # [1, C]
    out_ref,     # [BP, C]
    ginf_sc,     # [T*BP, 4H]  hoisted fwd-direction gate inputs (reused layer 2)
    ginb_sc,     # [T*BP, 4H]  hoisted bwd-direction gate inputs (forward time order)
    in2_sc,      # [T*BP, 2H]  layer-1 output out1(t) = [h1_f(t) | h1_b(t)]
    wih2f_sc,    # [2H, 4H]    VMEM landing buffers for the overlapped layer-2 DMA
    wih2b_sc,    # [2H, 4H]
    whh2f_sc,    # [H, 4H]
    whh2b_sc,    # [H, 4H]
    dma_sem,     # DMA semaphores (4,)
    *, T, BP, H,
):
    H2, H3, H4 = 2 * H, 3 * H, 4 * H

    # ---- start layer-2 weight DMAs; they overlap the layer-1 recurrence ----
    l2_copies = (
        pltpu.make_async_copy(wih2f_hbm, wih2f_sc, dma_sem.at[0]),
        pltpu.make_async_copy(wih2b_hbm, wih2b_sc, dma_sem.at[1]),
        pltpu.make_async_copy(whh2f_hbm, whh2f_sc, dma_sem.at[2]),
        pltpu.make_async_copy(whh2b_hbm, whh2b_sc, dma_sem.at[3]),
    )
    for cp in l2_copies:
        cp.start()

    def lstm_step(gin, h, c, whh_ref):
        """One direction, one timestep.  gin = hoisted x-projection (+bias).
        Single [BP,H]x[H,4H] MXU issue on the serial critical path."""
        gates = gin + jnp.dot(h, whh_ref[...], preferred_element_type=jnp.float32)
        i = jax.nn.sigmoid(gates[:, 0:H])
        f = jax.nn.sigmoid(gates[:, H:H2])
        g = jnp.tanh(gates[:, H2:H3])
        o = jax.nn.sigmoid(gates[:, H3:H4])
        c = f * c + i * g
        h = o * jnp.tanh(c)
        return h, c

    zero = jnp.zeros((BP, H), jnp.float32)

    # ---------------- layer 1 ----------------
    # Hoisted input projections, one matmul per direction (no zero padding).
    x = xf_ref[...]
    ginf_sc[...] = (
        jnp.dot(x, wih1f_ref[...], preferred_element_type=jnp.float32) + b1f_ref[...]
    )
    ginb_sc[...] = (
        jnp.dot(x, wih1b_ref[...], preferred_element_type=jnp.float32) + b1b_ref[...]
    )

    hf, cf, hb, cb = zero, zero, zero, zero
    for t in range(T):                       # fully unrolled, static indices
        rt = T - 1 - t
        # fwd processes original time t; bwd processes original time T-1-t.
        hf, cf = lstm_step(ginf_sc[t * BP:(t + 1) * BP, :], hf, cf, whh1f_ref)
        hb, cb = lstm_step(ginb_sc[rt * BP:(rt + 1) * BP, :], hb, cb, whh1b_ref)
        # out1(s) = [h1_f(s) | h1_b(s)], stored in forward time order.
        in2_sc[t * BP:(t + 1) * BP, 0:H] = hf
        in2_sc[rt * BP:(rt + 1) * BP, H:H2] = hb

    # ---------------- layer 2 ----------------
    # Layer-2 weights must be resident now (DMA has had the whole layer-1
    # recurrence to complete).
    for cp in l2_copies:
        cp.wait()

    in2 = in2_sc[...]
    ginf_sc[...] = (
        jnp.dot(in2, wih2f_sc[...], preferred_element_type=jnp.float32) + b2f_ref[...]
    )
    ginb_sc[...] = (
        jnp.dot(in2, wih2b_sc[...], preferred_element_type=jnp.float32) + b2b_ref[...]
    )

    hf, cf, hb, cb = zero, zero, zero, zero
    hb_t0 = zero
    for t in range(T):
        rt = T - 1 - t
        hf, cf = lstm_step(ginf_sc[t * BP:(t + 1) * BP, :], hf, cf, whh2f_sc)
        hb, cb = lstm_step(ginb_sc[rt * BP:(rt + 1) * BP, :], hb, cb, whh2b_sc)
        if t == 0:
            hb_t0 = hb   # backward hidden at original time T-1 (its first step)

    # ---------------- fused FC head on out[:, -1, :] ----------------
    fcin = jnp.concatenate([hf, hb_t0], axis=1)          # [BP, 2H]
    out_ref[...] = (
        jnp.dot(fcin, fcw_ref[...], preferred_element_type=jnp.float32) + fcb_ref[...]
    ).astype(out_ref.dtype)


def birnn_fused(xf, wih1f, wih1b, whh1f, whh1b, b1f, b1b,
                wih2f, wih2b, whh2f, whh2b, b2f, b2b, fcw, fcb, *, T, BP, H):
    C = fcw.shape[1]

    def vmem_full(a):
        return pl.BlockSpec(a.shape, lambda: (0, 0))

    any_spec = pl.BlockSpec(memory_space=pl.ANY)

    kernel = functools.partial(_birnn_fused_kernel, T=T, BP=BP, H=H)
    return pl.pallas_call(
        kernel,
        out_shape=jax.ShapeDtypeStruct((BP, C), jnp.float32),
        grid=(),
        in_specs=[
            vmem_full(xf),
            vmem_full(wih1f), vmem_full(wih1b),
            vmem_full(whh1f), vmem_full(whh1b),
            vmem_full(b1f), vmem_full(b1b),
            any_spec, any_spec, any_spec, any_spec,   # layer-2 weights stay in HBM
            vmem_full(b2f), vmem_full(b2b),
            vmem_full(fcw), vmem_full(fcb),
        ],
        out_specs=pl.BlockSpec((BP, C), lambda: (0, 0)),
        scratch_shapes=[
            pltpu.VMEM((T * BP, 4 * H), jnp.float32),  # ginf
            pltpu.VMEM((T * BP, 4 * H), jnp.float32),  # ginb
            pltpu.VMEM((T * BP, 2 * H), jnp.float32),  # layer-2 input (out1)
            pltpu.VMEM((2 * H, 4 * H), jnp.float32),   # wih2 fwd landing buffer
            pltpu.VMEM((2 * H, 4 * H), jnp.float32),   # wih2 bwd
            pltpu.VMEM((H, 4 * H), jnp.float32),       # whh2 fwd
            pltpu.VMEM((H, 4 * H), jnp.float32),       # whh2 bwd
            pltpu.SemaphoreType.DMA((4,)),
        ],
    )(xf, wih1f, wih1b, whh1f, whh1b, b1f, b1b,
      wih2f, wih2b, whh2f, whh2b, b2f, b2b, fcw, fcb)


# ----------------------------------------------------------------------------
# Forward pass (single fused kernel; only the embedding gather stays in XLA)
# ----------------------------------------------------------------------------
def text_birnn_forward(params, token_ids):
    # TODO(synk): embedding row-gather kept in XLA (jnp.take); a manual
    # DMA-gather Pallas kernel is not worthwhile at this vocab/batch size.
    emb = jnp.take(params["embedding"], token_ids, axis=0)   # [B, T, E]
    x = jnp.transpose(emb, (1, 0, 2)).astype(jnp.float32)    # time-major [T, B, E]
    T, B, E = x.shape
    BP = ((B + SUBLANE - 1) // SUBLANE) * SUBLANE            # pad rows to sublane tile
    xf = jnp.zeros((T, BP, E), jnp.float32).at[:, :B, :].set(x).reshape(T * BP, E)

    l1, l2 = params["lstm"]
    out = birnn_fused(
        xf,
        l1["w_ih_f"], l1["w_ih_b"], l1["w_hh_f"], l1["w_hh_b"], l1["b_f"], l1["b_b"],
        l2["w_ih_f"], l2["w_ih_b"], l2["w_hh_f"], l2["w_hh_b"], l2["b_f"], l2["b_b"],
        params["fc_w"], params["fc_b"],
        T=T, BP=BP, H=HIDDEN,
    )
    return out[:B]


# ----------------------------------------------------------------------------
# Pure-JAX reference (same math, lax.scan) for correctness
# ----------------------------------------------------------------------------
def _ref_lstm_dir(x_seq, w_ih, w_hh, b):
    T, B, _ = x_seq.shape
    H = w_hh.shape[0]

    def step(carry, x_t):
        h, c = carry
        gates = x_t @ w_ih + h @ w_hh + b[0]
        i = jax.nn.sigmoid(gates[:, 0 * H:1 * H])
        f = jax.nn.sigmoid(gates[:, 1 * H:2 * H])
        g = jnp.tanh(gates[:, 2 * H:3 * H])
        o = jax.nn.sigmoid(gates[:, 3 * H:4 * H])
        c = f * c + i * g
        h = o * jnp.tanh(c)
        return (h, c), h

    init = (jnp.zeros((B, H), jnp.float32), jnp.zeros((B, H), jnp.float32))
    _, hs = jax.lax.scan(step, init, x_seq)
    return hs


def ref_forward(params, token_ids):
    emb = jnp.take(params["embedding"], token_ids, axis=0)
    x = jnp.transpose(emb, (1, 0, 2))
    for layer in range(2):
        lw = params["lstm"][layer]
        h_fwd = _ref_lstm_dir(x, lw["w_ih_f"], lw["w_hh_f"], lw["b_f"])
        h_bwd = _ref_lstm_dir(x[::-1], lw["w_ih_b"], lw["w_hh_b"], lw["b_b"])[::-1]
        x = jnp.concatenate([h_fwd, h_bwd], axis=-1)
    return x[-1] @ params["fc_w"] + params["fc_b"][0]


# ----------------------------------------------------------------------------
# Deterministic parameter construction (PyTorch-like layout, transposed weights)
# ----------------------------------------------------------------------------
def init_params(key, max_features, embedding_dims, nums_class):
    H = HIDDEN
    ks = iter(jax.random.split(key, 64))
    scale = 1.0 / np.sqrt(H)

    def u(shape):
        return jax.random.uniform(next(ks), shape, jnp.float32, -scale, scale)

    params = {
        "embedding": jax.random.normal(
            next(ks), (max_features, embedding_dims), jnp.float32
        )
    }
    lstm_layers = []
    for layer in range(2):
        d_in = embedding_dims if layer == 0 else 2 * H
        layer_params = {}
        for tag in ("f", "b"):
            layer_params[f"w_ih_{tag}"] = u((d_in, 4 * H))
            layer_params[f"w_hh_{tag}"] = u((H, 4 * H))
            # PyTorch keeps b_ih and b_hh separately; sum them up-front.
            layer_params[f"b_{tag}"] = u((1, 4 * H)) + u((1, 4 * H))
        lstm_layers.append(layer_params)
    params["lstm"] = lstm_layers
    params["fc_w"] = u((2 * H, nums_class))
    params["fc_b"] = u((1, nums_class))
    return params


if __name__ == "__main__":
    config = {"max_features": 100, "embedding_dims": 32, "nums_class": 4}
    B, T = 2, 8

    key = jax.random.PRNGKey(0)
    k_param, k_tok = jax.random.split(key)
    params = init_params(
        k_param, config["max_features"], config["embedding_dims"], config["nums_class"]
    )
    token_ids = jax.random.randint(
        k_tok, (B, T), 0, config["max_features"], dtype=jnp.int32
    )

    out = jax.jit(text_birnn_forward)(params, token_ids)
    out = jax.block_until_ready(out)
    assert out.shape == (B, config["nums_class"])

    ref = jax.block_until_ready(ref_forward(params, token_ids))
    np.testing.assert_allclose(np.asarray(out), np.asarray(ref), rtol=1e-4, atol=1e-4)

    print("KERNEL_OK")
</pallas_src>

<mosaic_0001>
module attributes {stable_mosaic.version = 11 : i64} {
  func.func @_birnn_fused_kernel(%arg0: memref<64x32xf32, #tpu.memory_space<vmem>>, %arg1: memref<32x512xf32, #tpu.memory_space<vmem>>, %arg2: memref<32x512xf32, #tpu.memory_space<vmem>>, %arg3: memref<128x512xf32, #tpu.memory_space<vmem>>, %arg4: memref<128x512xf32, #tpu.memory_space<vmem>>, %arg5: memref<1x512xf32, #tpu.memory_space<vmem>>, %arg6: memref<1x512xf32, #tpu.memory_space<vmem>>, %arg7: memref<256x512xf32, #tpu.memory_space<any>>, %arg8: memref<256x512xf32, #tpu.memory_space<any>>, %arg9: memref<128x512xf32, #tpu.memory_space<any>>, %arg10: memref<128x512xf32, #tpu.memory_space<any>>, %arg11: memref<1x512xf32, #tpu.memory_space<vmem>>, %arg12: memref<1x512xf32, #tpu.memory_space<vmem>>, %arg13: memref<256x4xf32, #tpu.memory_space<vmem>>, %arg14: memref<1x4xf32, #tpu.memory_space<vmem>>, %arg15: memref<8x4xf32, #tpu.memory_space<vmem>>, %arg16: memref<64x512xf32, #tpu.memory_space<vmem>>, %arg17: memref<64x512xf32, #tpu.memory_space<vmem>>, %arg18: memref<64x256xf32, #tpu.memory_space<vmem>>, %arg19: memref<256x512xf32, #tpu.memory_space<vmem>>, %arg20: memref<256x512xf32, #tpu.memory_space<vmem>>, %arg21: memref<128x512xf32, #tpu.memory_space<vmem>>, %arg22: memref<128x512xf32, #tpu.memory_space<vmem>>, %arg23: memref<4x!tpu.dma_semaphore, #tpu.memory_space<semaphore_mem>>) attributes {dimension_semantics = [], scalar_prefetch = 0 : i64, scratch_operands = 8 : i64, tpu.core_type = #tpu.core_type<tc>} {
    %c0_i32 = arith.constant 0 : i32
    %0 = tpu.memref_slice %arg23[%c0_i32] : memref<4x!tpu.dma_semaphore, #tpu.memory_space<semaphore_mem>> -> memref<1x!tpu.dma_semaphore, #tpu.memory_space<semaphore_mem>>
    %1 = tpu.memref_squeeze %0 : memref<1x!tpu.dma_semaphore, #tpu.memory_space<semaphore_mem>> -> memref<!tpu.dma_semaphore, #tpu.memory_space<semaphore_mem>>
    tpu.enqueue_dma source(%arg7 : memref<256x512xf32, #tpu.memory_space<any>>) target(%arg19 : memref<256x512xf32, #tpu.memory_space<vmem>>) target_semaphore(%1 : memref<!tpu.dma_semaphore, #tpu.memory_space<semaphore_mem>>)
    %c1_i32 = arith.constant 1 : i32
    %2 = tpu.memref_slice %arg23[%c1_i32] : memref<4x!tpu.dma_semaphore, #tpu.memory_space<semaphore_mem>> -> memref<1x!tpu.dma_semaphore, #tpu.memory_space<semaphore_mem>>
    %3 = tpu.memref_squeeze %2 : memref<1x!tpu.dma_semaphore, #tpu.memory_space<semaphore_mem>> -> memref<!tpu.dma_semaphore, #tpu.memory_space<semaphore_mem>>
    tpu.enqueue_dma source(%arg8 : memref<256x512xf32, #tpu.memory_space<any>>) target(%arg20 : memref<256x512xf32, #tpu.memory_space<vmem>>) target_semaphore(%3 : memref<!tpu.dma_semaphore, #tpu.memory_space<semaphore_mem>>)
    %c2_i32 = arith.constant 2 : i32
    %4 = tpu.memref_slice %arg23[%c2_i32] : memref<4x!tpu.dma_semaphore, #tpu.memory_space<semaphore_mem>> -> memref<1x!tpu.dma_semaphore, #tpu.memory_space<semaphore_mem>>
    %5 = tpu.memref_squeeze %4 : memref<1x!tpu.dma_semaphore, #tpu.memory_space<semaphore_mem>> -> memref<!tpu.dma_semaphore, #tpu.memory_space<semaphore_mem>>
    tpu.enqueue_dma source(%arg9 : memref<128x512xf32, #tpu.memory_space<any>>) target(%arg21 : memref<128x512xf32, #tpu.memory_space<vmem>>) target_semaphore(%5 : memref<!tpu.dma_semaphore, #tpu.memory_space<semaphore_mem>>)
    %c3_i32 = arith.constant 3 : i32
    %6 = tpu.memref_slice %arg23[%c3_i32] : memref<4x!tpu.dma_semaphore, #tpu.memory_space<semaphore_mem>> -> memref<1x!tpu.dma_semaphore, #tpu.memory_space<semaphore_mem>>
    %7 = tpu.memref_squeeze %6 : memref<1x!tpu.dma_semaphore, #tpu.memory_space<semaphore_mem>> -> memref<!tpu.dma_semaphore, #tpu.memory_space<semaphore_mem>>
    tpu.enqueue_dma source(%arg10 : memref<128x512xf32, #tpu.memory_space<any>>) target(%arg22 : memref<128x512xf32, #tpu.memory_space<vmem>>) target_semaphore(%7 : memref<!tpu.dma_semaphore, #tpu.memory_space<semaphore_mem>>)
    %cst = arith.constant 0.000000e+00 : f32
    %8 = vector.broadcast %cst : f32 to vector<8x128xf32>
    %c0 = arith.constant 0 : index
    %c0_0 = arith.constant 0 : index
    %9 = vector.load %arg0[%c0, %c0_0] : memref<64x32xf32, #tpu.memory_space<vmem>>, vector<64x32xf32>
    %c0_1 = arith.constant 0 : index
    %c0_2 = arith.constant 0 : index
    %10 = vector.load %arg1[%c0_1, %c0_2] : memref<32x512xf32, #tpu.memory_space<vmem>>, vector<32x512xf32>
    %cst_3 = arith.constant dense<0.000000e+00> : vector<64x512xf32>
    %11 = tpu.matmul %9, %10, %cst_3 {dimension_numbers = #tpu.dot_dimension_numbers<[1], [0], [0], [1], [0, 0, 1, 1], [], []>} : vector<64x32xf32>, vector<32x512xf32>, vector<64x512xf32> -> vector<64x512xf32>
    %c0_4 = arith.constant 0 : index
    %c0_5 = arith.constant 0 : index
    %12 = vector.load %arg5[%c0_4, %c0_5] : memref<1x512xf32, #tpu.memory_space<vmem>>, vector<1x512xf32>
    %13 = vector.broadcast %12 : vector<1x512xf32> to vector<64x512xf32>
    %14 = arith.addf %11, %13 : vector<64x512xf32>
    %c0_6 = arith.constant 0 : index
    %c0_7 = arith.constant 0 : index
    %15 = vector.load %arg16[%c0_6, %c0_7] : memref<64x512xf32, #tpu.memory_space<vmem>>, vector<64x512xf32>
    tpu.vector_store %arg16[%c0_6, %c0_7], %14 {strides = array<i32>} : memref<64x512xf32, #tpu.memory_space<vmem>>, vector<64x512xf32>,
    %c0_8 = arith.constant 0 : index
    %c0_9 = arith.constant 0 : index
    %16 = vector.load %arg2[%c0_8, %c0_9] : memref<32x512xf32, #tpu.memory_space<vmem>>, vector<32x512xf32>
    %cst_10 = arith.constant dense<0.000000e+00> : vector<64x512xf32>
    %17 = tpu.matmul %9, %16, %cst_10 {dimension_numbers = #tpu.dot_dimension_numbers<[1], [0], [0], [1], [0, 0, 1, 1], [], []>} : vector<64x32xf32>, vector<32x512xf32>, vector<64x512xf32> -> vector<64x512xf32>
    %c0_11 = arith.constant 0 : index
    %c0_12 = arith.constant 0 : index
    %18 = vector.load %arg6[%c0_11, %c0_12] : memref<1x512xf32, #tpu.memory_space<vmem>>, vector<1x512xf32>
    %19 = vector.broadcast %18 : vector<1x512xf32> to vector<64x512xf32>
    %20 = arith.addf %17, %19 : vector<64x512xf32>
    %c0_13 = arith.constant 0 : index
    %c0_14 = arith.constant 0 : index
    %21 = vector.load %arg17[%c0_13, %c0_14] : memref<64x512xf32, #tpu.memory_space<vmem>>, vector<64x512xf32>
    tpu.vector_store %arg17[%c0_13, %c0_14], %20 {strides = array<i32>} : memref<64x512xf32, #tpu.memory_space<vmem>>, vector<64x512xf32>,
    %c0_15 = arith.constant 0 : index
    %c0_16 = arith.constant 0 : index
    %22 = vector.load %arg16[%c0_15, %c0_16] : memref<64x512xf32, #tpu.memory_space<vmem>>, vector<8x512xf32>
    %c0_17 = arith.constant 0 : index
    %c0_18 = arith.constant 0 : index
    %23 = vector.load %arg3[%c0_17, %c0_18] : memref<128x512xf32, #tpu.memory_space<vmem>>, vector<128x512xf32>
    %cst_19 = arith.constant dense<0.000000e+00> : vector<8x512xf32>
    %24 = tpu.matmul %8, %23, %cst_19 {dimension_numbers = #tpu.dot_dimension_numbers<[1], [0], [0], [1], [0, 0, 1, 1], [], []>} : vector<8x128xf32>, vector<128x512xf32>, vector<8x512xf32> -> vector<8x512xf32>
    %25 = arith.addf %22, %24 : vector<8x512xf32>
    %26 = vector.extract_strided_slice %25 {offsets = [0, 0], sizes = [8, 128], strides = [1, 1]} : vector<8x512xf32> to vector<8x128xf32>
    %27 = arith.negf %26 : vector<8x128xf32>
    %28 = math.exp %27 : vector<8x128xf32>
    %cst_20 = arith.constant 1.000000e+00 : f32
    %29 = vector.broadcast %cst_20 : f32 to vector<8x128xf32>
    %30 = arith.addf %29, %28 : vector<8x128xf32>
    %31 = arith.divf %29, %30 : vector<8x128xf32>
    %32 = vector.extract_strided_slice %25 {offsets = [0, 128], sizes = [8, 128], strides = [1, 1]} : vector<8x512xf32> to vector<8x128xf32>
    %33 = arith.negf %32 : vector<8x128xf32>
    %34 = math.exp %33 : vector<8x128xf32>
    %cst_21 = arith.constant 1.000000e+00 : f32
    %35 = vector.broadcast %cst_21 : f32 to vector<8x128xf32>
    %36 = arith.addf %35, %34 : vector<8x128xf32>
    %37 = arith.divf %35, %36 : vector<8x128xf32>
    %38 = vector.extract_strided_slice %25 {offsets = [0, 256], sizes = [8, 128], strides = [1, 1]} : vector<8x512xf32> to vector<8x128xf32>
    %39 = math.tanh %38 : vector<8x128xf32>
    %40 = vector.extract_strided_slice %25 {offsets = [0, 384], sizes = [8, 128], strides = [1, 1]} : vector<8x512xf32> to vector<8x128xf32>
    %41 = arith.negf %40 : vector<8x128xf32>
    %42 = math.exp %41 : vector<8x128xf32>
    %cst_22 = arith.constant 1.000000e+00 : f32
    %43 = vector.broadcast %cst_22 : f32 to vector<8x128xf32>
    %44 = arith.addf %43, %42 : vector<8x128xf32>
    %45 = arith.divf %43, %44 : vector<8x128xf32>
    %46 = arith.mulf %37, %8 : vector<8x128xf32>
    %47 = arith.mulf %31, %39 : vector<8x128xf32>
    %48 = arith.addf %46, %47 : vector<8x128xf32>
    %49 = math.tanh %48 : vector<8x128xf32>
    %50 = arith.mulf %45, %49 : vector<8x128xf32>
    %c56 = arith.constant 56 : index
    %c0_23 = arith.constant 0 : index
    %51 = vector.load %arg17[%c56, %c0_23] : memref<64x512xf32, #tpu.memory_space<vmem>>, vector<8x512xf32>
    %c0_24 = arith.constant 0 : index
    %c0_25 = arith.constant 0 : index
    %52 = vector.load %arg4[%c0_24, %c0_25] : memref<128x512xf32, #tpu.memory_space<vmem>>, vector<128x512xf32>
    %cst_26 = arith.constant dense<0.000000e+00> : vector<8x512xf32>
    %53 = tpu.matmul %8, %52, %cst_26 {dimension_numbers = #tpu.dot_dimension_numbers<[1], [0], [0], [1], [0, 0, 1, 1], [], []>} : vector<8x128xf32>, vector<128x512xf32>, vector<8x512xf32> -> vector<8x512xf32>
    %54 = arith.addf %51, %53 : vector<8x512xf32>
    %55 = vector.extract_strided_slice %54 {offsets = [0, 0], sizes = [8, 128], strides = [1, 1]} : vector<8x512xf32> to vector<8x128xf32>
    %56 = arith.negf %55 : vector<8x128xf32>
    %57 = math.exp %56 : vector<8x128xf32>
    %cst_27 = arith.constant 1.000000e+00 : f32
    %58 = vector.broadcast %cst_27 : f32 to vector<8x128xf32>
    %59 = arith.addf %58, %57 : vector<8x128xf32>
    %60 = arith.divf %58, %59 : vector<8x128xf32>
    %61 = vector.extract_strided_slice %54 {offsets = [0, 128], sizes = [8, 128], strides = [1, 1]} : vector<8x512xf32> to vector<8x128xf32>
    %62 = arith.negf %61 : vector<8x128xf32>
    %63 = math.exp %62 : vector<8x128xf32>
    %cst_28 = arith.constant 1.000000e+00 : f32
    %64 = vector.broadcast %cst_28 : f32 to vector<8x128xf32>
    %65 = arith.addf %64, %63 : vector<8x128xf32>
    %66 = arith.divf %64, %65 : vector<8x128xf32>
    %67 = vector.extract_strided_slice %54 {offsets = [0, 256], sizes = [8, 128], strides = [1, 1]} : vector<8x512xf32> to vector<8x128xf32>
    %68 = math.tanh %67 : vector<8x128xf32>
    %69 = vector.extract_strided_slice %54 {offsets = [0, 384], sizes = [8, 128], strides = [1, 1]} : vector<8x512xf32> to vector<8x128xf32>
    %70 = arith.negf %69 : vector<8x128xf32>
    %71 = math.exp %70 : vector<8x128xf32>
    %cst_29 = arith.constant 1.000000e+00 : f32
    %72 = vector.broadcast %cst_29 : f32 to vector<8x128xf32>
    %73 = arith.addf %72, %71 : vector<8x128xf32>
    %74 = arith.divf %72, %73 : vector<8x128xf32>
    %75 = arith.mulf %66, %8 : vector<8x128xf32>
    %76 = arith.mulf %60, %68 : vector<8x128xf32>
    %77 = arith.addf %75, %76 : vector<8x128xf32>
    %78 = math.tanh %77 : vector<8x128xf32>
    %79 = arith.mulf %74, %78 : vector<8x128xf32>
    %c0_30 = arith.constant 0 : index
    %c0_31 = arith.constant 0 : index
    %80 = vector.load %arg18[%c0_30, %c0_31] : memref<64x256xf32, #tpu.memory_space<vmem>>, vector<8x128xf32>
    tpu.vector_store %arg18[%c0_30, %c0_31], %50 {strides = array<i32>} : memref<64x256xf32, #tpu.memory_space<vmem>>, vector<8x128xf32>,
    %c56_32 = arith.constant 56 : index
    %c128 = arith.constant 128 : index
    %81 = vector.load %arg18[%c56_32, %c128] : memref<64x256xf32, #tpu.memory_space<vmem>>, vector<8x128xf32>
    tpu.vector_store %arg18[%c56_32, %c128], %79 {strides = array<i32>} : memref<64x256xf32, #tpu.memory_space<vmem>>, vector<8x128xf32>,
    %c8 = arith.constant 8 : index
    %c0_33 = arith.constant 0 : index
    %82 = vector.load %arg16[%c8, %c0_33] : memref<64x512xf32, #tpu.memory_space<vmem>>, vector<8x512xf32>
    %c0_34 = arith.constant 0 : index
    %c0_35 = arith.constant 0 : index
    %83 = vector.load %arg3[%c0_34, %c0_35] : memref<128x512xf32, #tpu.memory_space<vmem>>, vector<128x512xf32>
    %cst_36 = arith.constant dense<0.000000e+00> : vector<8x512xf32>
    %84 = tpu.matmul %50, %83, %cst_36 {dimension_numbers = #tpu.dot_dimension_numbers<[1], [0], [0], [1], [0, 0, 1, 1], [], []>} : vector<8x128xf32>, vector<128x512xf32>, vector<8x512xf32> -> vector<8x512xf32>
    %85 = arith.addf %82, %84 : vector<8x512xf32>
    %86 = vector.extract_strided_slice %85 {offsets = [0, 0], sizes = [8, 128], strides = [1, 1]} : vector<8x512xf32> to vector<8x128xf32>
    %87 = arith.negf %86 : vector<8x128xf32>
    %88 = math.exp %87 : vector<8x128xf32>
    %cst_37 = arith.constant 1.000000e+00 : f32
    %89 = vector.broadcast %cst_37 : f32 to vector<8x128xf32>
    %90 = arith.addf %89, %88 : vector<8x128xf32>
    %91 = arith.divf %89, %90 : vector<8x128xf32>
    %92 = vector.extract_strided_slice %85 {offsets = [0, 128], sizes = [8, 128], strides = [1, 1]} : vector<8x512xf32> to vector<8x128xf32>
    %93 = arith.negf %92 : vector<8x128xf32>
    %94 = math.exp %93 : vector<8x128xf32>
    %cst_38 = arith.constant 1.000000e+00 : f32
    %95 = vector.broadcast %cst_38 : f32 to vector<8x128xf32>
    %96 = arith.addf %95, %94 : vector<8x128xf32>
    %97 = arith.divf %95, %96 : vector<8x128xf32>
    %98 = vector.extract_strided_slice %85 {offsets = [0, 256], sizes = [8, 128], strides = [1, 1]} : vector<8x512xf32> to vector<8x128xf32>
    %99 = math.tanh %98 : vector<8x128xf32>
    %100 = vector.extract_strided_slice %85 {offsets = [0, 384], sizes = [8, 128], strides = [1, 1]} : vector<8x512xf32> to vector<8x128xf32>
    %101 = arith.negf %100 : vector<8x128xf32>
    %102 = math.exp %101 : vector<8x128xf32>
    %cst_39 = arith.constant 1.000000e+00 : f32
    %103 = vector.broadcast %cst_39 : f32 to vector<8x128xf32>
    %104 = arith.addf %103, %102 : vector<8x128xf32>
    %105 = arith.divf %103, %104 : vector<8x128xf32>
    %106 = arith.mulf %97, %48 : vector<8x128xf32>
    %107 = arith.mulf %91, %99 : vector<8x128xf32>
    %108 = arith.addf %106, %107 : vector<8x128xf32>
    %109 = math.tanh %108 : vector<8x128xf32>
    %110 = arith.mulf %105, %109 : vector<8x128xf32>
    %c48 = arith.constant 48 : index
    %c0_40 = arith.constant 0 : index
    %111 = vector.load %arg17[%c48, %c0_40] : memref<64x512xf32, #tpu.memory_space<vmem>>, vector<8x512xf32>
    %c0_41 = arith.constant 0 : index
    %c0_42 = arith.constant 0 : index
    %112 = vector.load %arg4[%c0_41, %c0_42] : memref<128x512xf32, #tpu.memory_space<vmem>>, vector<128x512xf32>
    %cst_43 = arith.constant dense<0.000000e+00> : vector<8x512xf32>
    %113 = tpu.matmul %79, %112, %cst_43 {dimension_numbers = #tpu.dot_dimension_numbers<[1], [0], [0], [1], [0, 0, 1, 1], [], []>} : vector<8x128xf32>, vector<128x512xf32>, vector<8x512xf32> -> vector<8x512xf32>
    %114 = arith.addf %111, %113 : vector<8x512xf32>
    %115 = vector.extract_strided_slice %114 {offsets = [0, 0], sizes = [8, 128], strides = [1, 1]} : vector<8x512xf32> to vector<8x128xf32>
    %116 = arith.negf %115 : vector<8x128xf32>
    %117 = math.exp %116 : vector<8x128xf32>
    %cst_44 = arith.constant 1.000000e+00 : f32
    %118 = vector.broadcast %cst_44 : f32 to vector<8x128xf32>
    %119 = arith.addf %118, %117 : vector<8x128xf32>
    %120 = arith.divf %118, %119 : vector<8x128xf32>
    %121 = vector.extract_strided_slice %114 {offsets = [0, 128], sizes = [8, 128], strides = [1, 1]} : vector<8x512xf32> to vector<8x128xf32>
    %122 = arith.negf %121 : vector<8x128xf32>
    %123 = math.exp %122 : vector<8x128xf32>
    %cst_45 = arith.constant 1.000000e+00 : f32
    %124 = vector.broadcast %cst_45 : f32 to vector<8x128xf32>
    %125 = arith.addf %124, %123 : vector<8x128xf32>
    %126 = arith.divf %124, %125 : vector<8x128xf32>
    %127 = vector.extract_strided_slice %114 {offsets = [0, 256], sizes = [8, 128], strides = [1, 1]} : vector<8x512xf32> to vector<8x128xf32>
    %128 = math.tanh %127 : vector<8x128xf32>
    %129 = vector.extract_strided_slice %114 {offsets = [0, 384], sizes = [8, 128], strides = [1, 1]} : vector<8x512xf32> to vector<8x128xf32>
    %130 = arith.negf %129 : vector<8x128xf32>
    %131 = math.exp %130 : vector<8x128xf32>
    %cst_46 = arith.constant 1.000000e+00 : f32
    %132 = vector.broadcast %cst_46 : f32 to vector<8x128xf32>
    %133 = arith.addf %132, %131 : vector<8x128xf32>
    %134 = arith.divf %132, %133 : vector<8x128xf32>
    %135 = arith.mulf %126, %77 : vector<8x128xf32>
    %136 = arith.mulf %120, %128 : vector<8x128xf32>
    %137 = arith.addf %135, %136 : vector<8x128xf32>
    %138 = math.tanh %137 : vector<8x128xf32>
    %139 = arith.mulf %134, %138 : vector<8x128xf32>
    %c8_47 = arith.constant 8 : index
    %c0_48 = arith.constant 0 : index
    %140 = vector.load %arg18[%c8_47, %c0_48] : memref<64x256xf32, #tpu.memory_space<vmem>>, vector<8x128xf32>
    tpu.vector_store %arg18[%c8_47, %c0_48], %110 {strides = array<i32>} : memref<64x256xf32, #tpu.memory_space<vmem>>, vector<8x128xf32>,
    %c48_49 = arith.constant 48 : index
    %c128_50 = arith.constant 128 : index
    %141 = vector.load %arg18[%c48_49, %c128_50] : memref<64x256xf32, #tpu.memory_space<vmem>>, vector<8x128xf32>
    tpu.vector_store %arg18[%c48_49, %c128_50], %139 {strides = array<i32>} : memref<64x256xf32, #tpu.memory_space<vmem>>, vector<8x128xf32>,
    %c16 = arith.constant 16 : index
    %c0_51 = arith.constant 0 : index
    %142 = vector.load %arg16[%c16, %c0_51] : memref<64x512xf32, #tpu.memory_space<vmem>>, vector<8x512xf32>
    %c0_52 = arith.constant 0 : index
    %c0_53 = arith.constant 0 : index
    %143 = vector.load %arg3[%c0_52, %c0_53] : memref<128x512xf32, #tpu.memory_space<vmem>>, vector<128x512xf32>
    %cst_54 = arith.constant dense<0.000000e+00> : vector<8x512xf32>
    %144 = tpu.matmul %110, %143, %cst_54 {dimension_numbers = #tpu.dot_dimension_numbers<[1], [0], [0], [1], [0, 0, 1, 1], [], []>} : vector<8x128xf32>, vector<128x512xf32>, vector<8x512xf32> -> vector<8x512xf32>
    %145 = arith.addf %142, %144 : vector<8x512xf32>
    %146 = vector.extract_strided_slice %145 {offsets = [0, 0], sizes = [8, 128], strides = [1, 1]} : vector<8x512xf32> to vector<8x128xf32>
    %147 = arith.negf %146 : vector<8x128xf32>
    %148 = math.exp %147 : vector<8x128xf32>
    %cst_55 = arith.constant 1.000000e+00 : f32
    %149 = vector.broadcast %cst_55 : f32 to vector<8x128xf32>
    %150 = arith.addf %149, %148 : vector<8x128xf32>
    %151 = arith.divf %149, %150 : vector<8x128xf32>
    %152 = vector.extract_strided_slice %145 {offsets = [0, 128], sizes = [8, 128], strides = [1, 1]} : vector<8x512xf32> to vector<8x128xf32>
    %153 = arith.negf %152 : vector<8x128xf32>
    %154 = math.exp %153 : vector<8x128xf32>
    %cst_56 = arith.constant 1.000000e+00 : f32
    %155 = vector.broadcast %cst_56 : f32 to vector<8x128xf32>
    %156 = arith.addf %155, %154 : vector<8x128xf32>
    %157 = arith.divf %155, %156 : vector<8x128xf32>
    %158 = vector.extract_strided_slice %145 {offsets = [0, 256], sizes = [8, 128], strides = [1, 1]} : vector<8x512xf32> to vector<8x128xf32>
    %159 = math.tanh %158 : vector<8x128xf32>
    %160 = vector.extract_strided_slice %145 {offsets = [0, 384], sizes = [8, 128], strides = [1, 1]} : vector<8x512xf32> to vector<8x128xf32>
    %161 = arith.negf %160 : vector<8x128xf32>
    %162 = math.exp %161 : vector<8x128xf32>
    %cst_57 = arith.constant 1.000000e+00 : f32
    %163 = vector.broadcast %cst_57 : f32 to vector<8x128xf32>
    %164 = arith.addf %163, %162 : vector<8x128xf32>
    %165 = arith.divf %163, %164 : vector<8x128xf32>
    %166 = arith.mulf %157, %108 : vector<8x128xf32>
    %167 = arith.mulf %151, %159 : vector<8x128xf32>
    %168 = arith.addf %166, %167 : vector<8x128xf32>
    %169 = math.tanh %168 : vector<8x128xf32>
    %170 = arith.mulf %165, %169 : vector<8x128xf32>
    %c40 = arith.constant 40 : index
    %c0_58 = arith.constant 0 : index
    %171 = vector.load %arg17[%c40, %c0_58] : memref<64x512xf32, #tpu.memory_space<vmem>>, vector<8x512xf32>
    %c0_59 = arith.constant 0 : index
    %c0_60 = arith.constant 0 : index
    %172 = vector.load %arg4[%c0_59, %c0_60] : memref<128x512xf32, #tpu.memory_space<vmem>>, vector<128x512xf32>
    %cst_61 = arith.constant dense<0.000000e+00> : vector<8x512xf32>
    %173 = tpu.matmul %139, %172, %cst_61 {dimension_numbers = #tpu.dot_dimension_numbers<[1], [0], [0], [1], [0, 0, 1, 1], [], []>} : vector<8x128xf32>, vector<128x512xf32>, vector<8x512xf32> -> vector<8x512xf32>
    %174 = arith.addf %171, %173 : vector<8x512xf32>
    %175 = vector.extract_strided_slice %174 {offsets = [0, 0], sizes = [8, 128], strides = [1, 1]} : vector<8x512xf32> to vector<8x128xf32>
    %176 = arith.negf %175 : vector<8x128xf32>
    %177 = math.exp %176 : vector<8x128xf32>
    %cst_62 = arith.constant 1.000000e+00 : f32
    %178 = vector.broadcast %cst_62 : f32 to vector<8x128xf32>
    %179 = arith.addf %178, %177 : vector<8x128xf32>
    %180 = arith.divf %178, %179 : vector<8x128xf32>
    %181 = vector.extract_strided_slice %174 {offsets = [0, 128], sizes = [8, 128], strides = [1, 1]} : vector<8x512xf32> to vector<8x128xf32>
    %182 = arith.negf %181 : vector<8x128xf32>
    %183 = math.exp %182 : vector<8x128xf32>
    %cst_63 = arith.constant 1.000000e+00 : f32
    %184 = vector.broadcast %cst_63 : f32 to vector<8x128xf32>
    %185 = arith.addf %184, %183 : vector<8x128xf32>
    %186 = arith.divf %184, %185 : vector<8x128xf32>
    %187 = vector.extract_strided_slice %174 {offsets = [0, 256], sizes = [8, 128], strides = [1, 1]} : vector<8x512xf32> to vector<8x128xf32>
    %188 = math.tanh %187 : vector<8x128xf32>
    %189 = vector.extract_strided_slice %174 {offsets = [0, 384], sizes = [8, 128], strides = [1, 1]} : vector<8x512xf32> to vector<8x128xf32>
    %190 = arith.negf %189 : vector<8x128xf32>
    %191 = math.exp %190 : vector<8x128xf32>
    %cst_64 = arith.constant 1.000000e+00 : f32
    %192 = vector.broadcast %cst_64 : f32 to vector<8x128xf32>
    %193 = arith.addf %192, %191 : vector<8x128xf32>
    %194 = arith.divf %192, %193 : vector<8x128xf32>
    %195 = arith.mulf %186, %137 : vector<8x128xf32>
    %196 = arith.mulf %180, %188 : vector<8x128xf32>
    %197 = arith.addf %195, %196 : vector<8x128xf32>
    %198 = math.tanh %197 : vector<8x128xf32>
    %199 = arith.mulf %194, %198 : vector<8x128xf32>
    %c16_65 = arith.constant 16 : index
    %c0_66 = arith.constant 0 : index
    %200 = vector.load %arg18[%c16_65, %c0_66] : memref<64x256xf32, #tpu.memory_space<vmem>>, vector<8x128xf32>
    tpu.vector_store %arg18[%c16_65, %c0_66], %170 {strides = array<i32>} : memref<64x256xf32, #tpu.memory_space<vmem>>, vector<8x128xf32>,
    %c40_67 = arith.constant 40 : index
    %c128_68 = arith.constant 128 : index
    %201 = vector.load %arg18[%c40_67, %c128_68] : memref<64x256xf32, #tpu.memory_space<vmem>>, vector<8x128xf32>
    tpu.vector_store %arg18[%c40_67, %c128_68], %199 {strides = array<i32>} : memref<64x256xf32, #tpu.memory_space<vmem>>, vector<8x128xf32>,
    %c24 = arith.constant 24 : index
    %c0_69 = arith.constant 0 : index
    %202 = vector.load %arg16[%c24, %c0_69] : memref<64x512xf32, #tpu.memory_space<vmem>>, vector<8x512xf32>
    %c0_70 = arith.constant 0 : index
    %c0_71 = arith.constant 0 : index
    %203 = vector.load %arg3[%c0_70, %c0_71] : memref<128x512xf32, #tpu.memory_space<vmem>>, vector<128x512xf32>
    %cst_72 = arith.constant dense<0.000000e+00> : vector<8x512xf32>
    %204 = tpu.matmul %170, %203, %cst_72 {dimension_numbers = #tpu.dot_dimension_numbers<[1], [0], [0], [1], [0, 0, 1, 1], [], []>} : vector<8x128xf32>, vector<128x512xf32>, vector<8x512xf32> -> vector<8x512xf32>
    %205 = arith.addf %202, %204 : vector<8x512xf32>
    %206 = vector.extract_strided_slice %205 {offsets = [0, 0], sizes = [8, 128], strides = [1, 1]} : vector<8x512xf32> to vector<8x128xf32>
    %207 = arith.negf %206 : vector<8x128xf32>
    %208 = math.exp %207 : vector<8x128xf32>
    %cst_73 = arith.constant 1.000000e+00 : f32
    %209 = vector.broadcast %cst_73 : f32 to vector<8x128xf32>
    %210 = arith.addf %209, %208 : vector<8x128xf32>
    %211 = arith.divf %209, %210 : vector<8x128xf32>
    %212 = vector.extract_strided_slice %205 {offsets = [0, 128], sizes = [8, 128], strides = [1, 1]} : vector<8x512xf32> to vector<8x128xf32>
    %213 = arith.negf %212 : vector<8x128xf32>
    %214 = math.exp %213 : vector<8x128xf32>
    %cst_74 = arith.constant 1.000000e+00 : f32
    %215 = vector.broadcast %cst_74 : f32 to vector<8x128xf32>
    %216 = arith.addf %215, %214 : vector<8x128xf32>
    %217 = arith.divf %215, %216 : vector<8x128xf32>
    %218 = vector.extract_strided_slice %205 {offsets = [0, 256], sizes = [8, 128], strides = [1, 1]} : vector<8x512xf32> to vector<8x128xf32>
    %219 = math.tanh %218 : vector<8x128xf32>
    %220 = vector.extract_strided_slice %205 {offsets = [0, 384], sizes = [8, 128], strides = [1, 1]} : vector<8x512xf32> to vector<8x128xf32>
    %221 = arith.negf %220 : vector<8x128xf32>
    %222 = math.exp %221 : vector<8x128xf32>
    %cst_75 = arith.constant 1.000000e+00 : f32
    %223 = vector.broadcast %cst_75 : f32 to vector<8x128xf32>
    %224 = arith.addf %223, %222 : vector<8x128xf32>
    %225 = arith.divf %223, %224 : vector<8x128xf32>
    %226 = arith.mulf %217, %168 : vector<8x128xf32>
    %227 = arith.mulf %211, %219 : vector<8x128xf32>
    %228 = arith.addf %226, %227 : vector<8x128xf32>
    %229 = math.tanh %228 : vector<8x128xf32>
    %230 = arith.mulf %225, %229 : vector<8x128xf32>
    %c32 = arith.constant 32 : index
    %c0_76 = arith.constant 0 : index
    %231 = vector.load %arg17[%c32, %c0_76] : memref<64x512xf32, #tpu.memory_space<vmem>>, vector<8x512xf32>
    %c0_77 = arith.constant 0 : index
    %c0_78 = arith.constant 0 : index
    %232 = vector.load %arg4[%c0_77, %c0_78] : memref<128x512xf32, #tpu.memory_space<vmem>>, vector<128x512xf32>
    %cst_79 = arith.constant dense<0.000000e+00> : vector<8x512xf32>
    %233 = tpu.matmul %199, %232, %cst_79 {dimension_numbers = #tpu.dot_dimension_numbers<[1], [0], [0], [1], [0, 0, 1, 1], [], []>} : vector<8x128xf32>, vector<128x512xf32>, vector<8x512xf32> -> vector<8x512xf32>
    %234 = arith.addf %231, %233 : vector<8x512xf32>
    %235 = vector.extract_strided_slice %234 {offsets = [0, 0], sizes = [8, 128], strides = [1, 1]} : vector<8x512xf32> to vector<8x128xf32>
    %236 = arith.negf %235 : vector<8x128xf32>
    %237 = math.exp %236 : vector<8x128xf32>
    %cst_80 = arith.constant 1.000000e+00 : f32
    %238 = vector.broadcast %cst_80 : f32 to vector<8x128xf32>
    %239 = arith.addf %238, %237 : vector<8x128xf32>
    %240 = arith.divf %238, %239 : vector<8x128xf32>
    %241 = vector.extract_strided_slice %234 {offsets = [0, 128], sizes = [8, 128], strides = [1, 1]} : vector<8x512xf32> to vector<8x128xf32>
    %242 = arith.negf %241 : vector<8x128xf32>
    %243 = math.exp %242 : vector<8x128xf32>
    %cst_81 = arith.constant 1.000000e+00 : f32
    %244 = vector.broadcast %cst_81 : f32 to vector<8x128xf32>
    %245 = arith.addf %244, %243 : vector<8x128xf32>
    %246 = arith.divf %244, %245 : vector<8x128xf32>
    %247 = vector.extract_strided_slice %234 {offsets = [0, 256], sizes = [8, 128], strides = [1, 1]} : vector<8x512xf32> to vector<8x128xf32>
    %248 = math.tanh %247 : vector<8x128xf32>
    %249 = vector.extract_strided_slice %234 {offsets = [0, 384], sizes = [8, 128], strides = [1, 1]} : vector<8x512xf32> to vector<8x128xf32>
    %250 = arith.negf %249 : vector<8x128xf32>
    %251 = math.exp %250 : vector<8x128xf32>
    %cst_82 = arith.constant 1.000000e+00 : f32
    %252 = vector.broadcast %cst_82 : f32 to vector<8x128xf32>
    %253 = arith.addf %252, %251 : vector<8x128xf32>
    %254 = arith.divf %252, %253 : vector<8x128xf32>
    %255 = arith.mulf %246, %197 : vector<8x128xf32>
    %256 = arith.mulf %240, %248 : vector<8x128xf32>
    %257 = arith.addf %255, %256 : vector<8x128xf32>
    %258 = math.tanh %257 : vector<8x128xf32>
    %259 = arith.mulf %254, %258 : vector<8x128xf32>
    %c24_83 = arith.constant 24 : index
    %c0_84 = arith.constant 0 : index
    %260 = vector.load %arg18[%c24_83, %c0_84] : memref<64x256xf32, #tpu.memory_space<vmem>>, vector<8x128xf32>
    tpu.vector_store %arg18[%c24_83, %c0_84], %230 {strides = array<i32>} : memref<64x256xf32, #tpu.memory_space<vmem>>, vector<8x128xf32>,
    %c32_85 = arith.constant 32 : index
    %c128_86 = arith.constant 128 : index
    %261 = vector.load %arg18[%c32_85, %c128_86] : memref<64x256xf32, #tpu.memory_space<vmem>>, vector<8x128xf32>
    tpu.vector_store %arg18[%c32_85, %c128_86], %259 {strides = array<i32>} : memref<64x256xf32, #tpu.memory_space<vmem>>, vector<8x128xf32>,
    %c32_87 = arith.constant 32 : index
    %c0_88 = arith.constant 0 : index
    %262 = vector.load %arg16[%c32_87, %c0_88] : memref<64x512xf32, #tpu.memory_space<vmem>>, vector<8x512xf32>
    %c0_89 = arith.constant 0 : index
    %c0_90 = arith.constant 0 : index
    %263 = vector.load %arg3[%c0_89, %c0_90] : memref<128x512xf32, #tpu.memory_space<vmem>>, vector<128x512xf32>
    %cst_91 = arith.constant dense<0.000000e+00> : vector<8x512xf32>
    %264 = tpu.matmul %230, %263, %cst_91 {dimension_numbers = #tpu.dot_dimension_numbers<[1], [0], [0], [1], [0, 0, 1, 1], [], []>} : vector<8x128xf32>, vector<128x512xf32>, vector<8x512xf32> -> vector<8x512xf32>
    %265 = arith.addf %262, %264 : vector<8x512xf32>
    %266 = vector.extract_strided_slice %265 {offsets = [0, 0], sizes = [8, 128], strides = [1, 1]} : vector<8x512xf32> to vector<8x128xf32>
    %267 = arith.negf %266 : vector<8x128xf32>
    %268 = math.exp %267 : vector<8x128xf32>
    %cst_92 = arith.constant 1.000000e+00 : f32
    %269 = vector.broadcast %cst_92 : f32 to vector<8x128xf32>
    %270 = arith.addf %269, %268 : vector<8x128xf32>
    %271 = arith.divf %269, %270 : vector<8x128xf32>
    %272 = vector.extract_strided_slice %265 {offsets = [0, 128], sizes = [8, 128], strides = [1, 1]} : vector<8x512xf32> to vector<8x128xf32>
    %273 = arith.negf %272 : vector<8x128xf32>
    %274 = math.exp %273 : vector<8x128xf32>
    %cst_93 = arith.constant 1.000000e+00 : f32
    %275 = vector.broadcast %cst_93 : f32 to vector<8x128xf32>
    %276 = arith.addf %275, %274 : vector<8x128xf32>
    %277 = arith.divf %275, %276 : vector<8x128xf32>
    %278 = vector.extract_strided_slice %265 {offsets = [0, 256], sizes = [8, 128], strides = [1, 1]} : vector<8x512xf32> to vector<8x128xf32>
    %279 = math.tanh %278 : vector<8x128xf32>
    %280 = vector.extract_strided_slice %265 {offsets = [0, 384], sizes = [8, 128], strides = [1, 1]} : vector<8x512xf32> to vector<8x128xf32>
    %281 = arith.negf %280 : vector<8x128xf32>
    %282 = math.exp %281 : vector<8x128xf32>
    %cst_94 = arith.constant 1.000000e+00 : f32
    %283 = vector.broadcast %cst_94 : f32 to vector<8x128xf32>
    %284 = arith.addf %283, %282 : vector<8x128xf32>
    %285 = arith.divf %283, %284 : vector<8x128xf32>
    %286 = arith.mulf %277, %228 : vector<8x128xf32>
    %287 = arith.mulf %271, %279 : vector<8x128xf32>
    %288 = arith.addf %286, %287 : vector<8x128xf32>
    %289 = math.tanh %288 : vector<8x128xf32>
    %290 = arith.mulf %285, %289 : vector<8x128xf32>
    %c24_95 = arith.constant 24 : index
    %c0_96 = arith.constant 0 : index
    %291 = vector.load %arg17[%c24_95, %c0_96] : memref<64x512xf32, #tpu.memory_space<vmem>>, vector<8x512xf32>
    %c0_97 = arith.constant 0 : index
    %c0_98 = arith.constant 0 : index
    %292 = vector.load %arg4[%c0_97, %c0_98] : memref<128x512xf32, #tpu.memory_space<vmem>>, vector<128x512xf32>
    %cst_99 = arith.constant dense<0.000000e+00> : vector<8x512xf32>
    %293 = tpu.matmul %259, %292, %cst_99 {dimension_numbers = #tpu.dot_dimension_numbers<[1], [0], [0], [1], [0, 0, 1, 1], [], []>} : vector<8x128xf32>, vector<128x512xf32>, vector<8x512xf32> -> vector<8x512xf32>
    %294 = arith.addf %291, %293 : vector<8x512xf32>
    %295 = vector.extract_strided_slice %294 {offsets = [0, 0], sizes = [8, 128], strides = [1, 1]} : vector<8x512xf32> to vector<8x128xf32>
    %296 = arith.negf %295 : vector<8x128xf32>
    %297 = math.exp %296 : vector<8x128xf32>
    %cst_100 = arith.constant 1.000000e+00 : f32
    %298 = vector.broadcast %cst_100 : f32 to vector<8x128xf32>
    %299 = arith.addf %298, %297 : vector<8x128xf32>
    %300 = arith.divf %298, %299 : vector<8x128xf32>
    %301 = vector.extract_strided_slice %294 {offsets = [0, 128], sizes = [8, 128], strides = [1, 1]} : vector<8x512xf32> to vector<8x128xf32>
    %302 = arith.negf %301 : vector<8x128xf32>
    %303 = math.exp %302 : vector<8x128xf32>
    %cst_101 = arith.constant 1.000000e+00 : f32
    %304 = vector.broadcast %cst_101 : f32 to vector<8x128xf32>
    %305 = arith.addf %304, %303 : vector<8x128xf32>
    %306 = arith.divf %304, %305 : vector<8x128xf32>
    %307 = vector.extract_strided_slice %294 {offsets = [0, 256], sizes = [8, 128], strides = [1, 1]} : vector<8x512xf32> to vector<8x128xf32>
    %308 = math.tanh %307 : vector<8x128xf32>
    %309 = vector.extract_strided_slice %294 {offsets = [0, 384], sizes = [8, 128], strides = [1, 1]} : vector<8x512xf32> to vector<8x128xf32>
    %310 = arith.negf %309 : vector<8x128xf32>
    %311 = math.exp %310 : vector<8x128xf32>
    %cst_102 = arith.constant 1.000000e+00 : f32
    %312 = vector.broadcast %cst_102 : f32 to vector<8x128xf32>
    %313 = arith.addf %312, %311 : vector<8x128xf32>
    %314 = arith.divf %312, %313 : vector<8x128xf32>
    %315 = arith.mulf %306, %257 : vector<8x128xf32>
    %316 = arith.mulf %300, %308 : vector<8x128xf32>
    %317 = arith.addf %315, %316 : vector<8x128xf32>
    %318 = math.tanh %317 : vector<8x128xf32>
    %319 = arith.mulf %314, %318 : vector<8x128xf32>
    %c32_103 = arith.constant 32 : index
    %c0_104 = arith.constant 0 : index
    %320 = vector.load %arg18[%c32_103, %c0_104] : memref<64x256xf32, #tpu.memory_space<vmem>>, vector<8x128xf32>
    tpu.vector_store %arg18[%c32_103, %c0_104], %290 {strides = array<i32>} : memref<64x256xf32, #tpu.memory_space<vmem>>, vector<8x128xf32>,
    %c24_105 = arith.constant 24 : index
    %c128_106 = arith.constant 128 : index
    %321 = vector.load %arg18[%c24_105, %c128_106] : memref<64x256xf32, #tpu.memory_space<vmem>>, vector<8x128xf32>
    tpu.vector_store %arg18[%c24_105, %c128_106], %319 {strides = array<i32>} : memref<64x256xf32, #tpu.memory_space<vmem>>, vector<8x128xf32>,
    %c40_107 = arith.constant 40 : index
    %c0_108 = arith.constant 0 : index
    %322 = vector.load %arg16[%c40_107, %c0_108] : memref<64x512xf32, #tpu.memory_space<vmem>>, vector<8x512xf32>
    %c0_109 = arith.constant 0 : index
    %c0_110 = arith.constant 0 : index
    %323 = vector.load %arg3[%c0_109, %c0_110] : memref<128x512xf32, #tpu.memory_space<vmem>>, vector<128x512xf32>
    %cst_111 = arith.constant dense<0.000000e+00> : vector<8x512xf32>
    %324 = tpu.matmul %290, %323, %cst_111 {dimension_numbers = #tpu.dot_dimension_numbers<[1], [0], [0], [1], [0, 0, 1, 1], [], []>} : vector<8x128xf32>, vector<128x512xf32>, vector<8x512xf32> -> vector<8x512xf32>
    %325 = arith.addf %322, %324 : vector<8x512xf32>
    %326 = vector.extract_strided_slice %325 {offsets = [0, 0], sizes = [8, 128], strides = [1, 1]} : vector<8x512xf32> to vector<8x128xf32>
    %327 = arith.negf %326 : vector<8x128xf32>
    %328 = math.exp %327 : vector<8x128xf32>
    %cst_112 = arith.constant 1.000000e+00 : f32
    %329 = vector.broadcast %cst_112 : f32 to vector<8x128xf32>
    %330 = arith.addf %329, %328 : vector<8x128xf32>
    %331 = arith.divf %329, %330 : vector<8x128xf32>
    %332 = vector.extract_strided_slice %325 {offsets = [0, 128], sizes = [8, 128], strides = [1, 1]} : vector<8x512xf32> to vector<8x128xf32>
    %333 = arith.negf %332 : vector<8x128xf32>
    %334 = math.exp %333 : vector<8x128xf32>
    %cst_113 = arith.constant 1.000000e+00 : f32
    %335 = vector.broadcast %cst_113 : f32 to vector<8x128xf32>
    %336 = arith.addf %335, %334 : vector<8x128xf32>
    %337 = arith.divf %335, %336 : vector<8x128xf32>
    %338 = vector.extract_strided_slice %325 {offsets = [0, 256], sizes = [8, 128], strides = [1, 1]} : vector<8x512xf32> to vector<8x128xf32>
    %339 = math.tanh %338 : vector<8x128xf32>
    %340 = vector.extract_strided_slice %325 {offsets = [0, 384], sizes = [8, 128], strides = [1, 1]} : vector<8x512xf32> to vector<8x128xf32>
    %341 = arith.negf %340 : vector<8x128xf32>
    %342 = math.exp %341 : vector<8x128xf32>
    %cst_114 = arith.constant 1.000000e+00 : f32
    %343 = vector.broadcast %cst_114 : f32 to vector<8x128xf32>
    %344 = arith.addf %343, %342 : vector<8x128xf32>
    %345 = arith.divf %343, %344 : vector<8x128xf32>
    %346 = arith.mulf %337, %288 : vector<8x128xf32>
    %347 = arith.mulf %331, %339 : vector<8x128xf32>
    %348 = arith.addf %346, %347 : vector<8x128xf32>
    %349 = math.tanh %348 : vector<8x128xf32>
    %350 = arith.mulf %345, %349 : vector<8x128xf32>
    %c16_115 = arith.constant 16 : index
    %c0_116 = arith.constant 0 : index
    %351 = vector.load %arg17[%c16_115, %c0_116] : memref<64x512xf32, #tpu.memory_space<vmem>>, vector<8x512xf32>
    %c0_117 = arith.constant 0 : index
    %c0_118 = arith.constant 0 : index
    %352 = vector.load %arg4[%c0_117, %c0_118] : memref<128x512xf32, #tpu.memory_space<vmem>>, vector<128x512xf32>
    %cst_119 = arith.constant dense<0.000000e+00> : vector<8x512xf32>
    %353 = tpu.matmul %319, %352, %cst_119 {dimension_numbers = #tpu.dot_dimension_numbers<[1], [0], [0], [1], [0, 0, 1, 1], [], []>} : vector<8x128xf32>, vector<128x512xf32>, vector<8x512xf32> -> vector<8x512xf32>
    %354 = arith.addf %351, %353 : vector<8x512xf32>
    %355 = vector.extract_strided_slice %354 {offsets = [0, 0], sizes = [8, 128], strides = [1, 1]} : vector<8x512xf32> to vector<8x128xf32>
    %356 = arith.negf %355 : vector<8x128xf32>
    %357 = math.exp %356 : vector<8x128xf32>
    %cst_120 = arith.constant 1.000000e+00 : f32
    %358 = vector.broadcast %cst_120 : f32 to vector<8x128xf32>
    %359 = arith.addf %358, %357 : vector<8x128xf32>
    %360 = arith.divf %358, %359 : vector<8x128xf32>
    %361 = vector.extract_strided_slice %354 {offsets = [0, 128], sizes = [8, 128], strides = [1, 1]} : vector<8x512xf32> to vector<8x128xf32>
    %362 = arith.negf %361 : vector<8x128xf32>
    %363 = math.exp %362 : vector<8x128xf32>
    %cst_121 = arith.constant 1.000000e+00 : f32
    %364 = vector.broadcast %cst_121 : f32 to vector<8x128xf32>
    %365 = arith.addf %364, %363 : vector<8x128xf32>
    %366 = arith.divf %364, %365 : vector<8x128xf32>
    %367 = vector.extract_strided_slice %354 {offsets = [0, 256], sizes = [8, 128], strides = [1, 1]} : vector<8x512xf32> to vector<8x128xf32>
    %368 = math.tanh %367 : vector<8x128xf32>
    %369 = vector.extract_strided_slice %354 {offsets = [0, 384], sizes = [8, 128], strides = [1, 1]} : vector<8x512xf32> to vector<8x128xf32>
    %370 = arith.negf %369 : vector<8x128xf32>
    %371 = math.exp %370 : vector<8x128xf32>
    %cst_122 = arith.constant 1.000000e+00 : f32
    %372 = vector.broadcast %cst_122 : f32 to vector<8x128xf32>
    %373 = arith.addf %372, %371 : vector<8x128xf32>
    %374 = arith.divf %372, %373 : vector<8x128xf32>
    %375 = arith.mulf %366, %317 : vector<8x128xf32>
    %376 = arith.mulf %360, %368 : vector<8x128xf32>
    %377 = arith.addf %375, %376 : vector<8x128xf32>
    %378 = math.tanh %377 : vector<8x128xf32>
    %379 = arith.mulf %374, %378 : vector<8x128xf32>
    %c40_123 = arith.constant 40 : index
    %c0_124 = arith.constant 0 : index
    %380 = vector.load %arg18[%c40_123, %c0_124] : memref<64x256xf32, #tpu.memory_space<vmem>>, vector<8x128xf32>
    tpu.vector_store %arg18[%c40_123, %c0_124], %350 {strides = array<i32>} : memref<64x256xf32, #tpu.memory_space<vmem>>, vector<8x128xf32>,
    %c16_125 = arith.constant 16 : index
    %c128_126 = arith.constant 128 : index
    %381 = vector.load %arg18[%c16_125, %c128_126] : memref<64x256xf32, #tpu.memory_space<vmem>>, vector<8x128xf32>
    tpu.vector_store %arg18[%c16_125, %c128_126], %379 {strides = array<i32>} : memref<64x256xf32, #tpu.memory_space<vmem>>, vector<8x128xf32>,
    %c48_127 = arith.constant 48 : index
    %c0_128 = arith.constant 0 : index
    %382 = vector.load %arg16[%c48_127, %c0_128] : memref<64x512xf32, #tpu.memory_space<vmem>>, vector<8x512xf32>
    %c0_129 = arith.constant 0 : index
    %c0_130 = arith.constant 0 : index
    %383 = vector.load %arg3[%c0_129, %c0_130] : memref<128x512xf32, #tpu.memory_space<vmem>>, vector<128x512xf32>
    %cst_131 = arith.constant dense<0.000000e+00> : vector<8x512xf32>
    %384 = tpu.matmul %350, %383, %cst_131 {dimension_numbers = #tpu.dot_dimension_numbers<[1], [0], [0], [1], [0, 0, 1, 1], [], []>} : vector<8x128xf32>, vector<128x512xf32>, vector<8x512xf32> -> vector<8x512xf32>
    %385 = arith.addf %382, %384 : vector<8x512xf32>
    %386 = vector.extract_strided_slice %385 {offsets = [0, 0], sizes = [8, 128], strides = [1, 1]} : vector<8x512xf32> to vector<8x128xf32>
    %387 = arith.negf %386 : vector<8x128xf32>
    %388 = math.exp %387 : vector<8x128xf32>
    %cst_132 = arith.constant 1.000000e+00 : f32
    %389 = vector.broadcast %cst_132 : f32 to vector<8x128xf32>
    %390 = arith.addf %389, %388 : vector<8x128xf32>
    %391 = arith.divf %389, %390 : vector<8x128xf32>
    %392 = vector.extract_strided_slice %385 {offsets = [0, 128], sizes = [8, 128], strides = [1, 1]} : vector<8x512xf32> to vector<8x128xf32>
    %393 = arith.negf %392 : vector<8x128xf32>
    %394 = math.exp %393 : vector<8x128xf32>
    %cst_133 = arith.constant 1.000000e+00 : f32
    %395 = vector.broadcast %cst_133 : f32 to vector<8x128xf32>
    %396 = arith.addf %395, %394 : vector<8x128xf32>
    %397 = arith.divf %395, %396 : vector<8x128xf32>
    %398 = vector.extract_strided_slice %385 {offsets = [0, 256], sizes = [8, 128], strides = [1, 1]} : vector<8x512xf32> to vector<8x128xf32>
    %399 = math.tanh %398 : vector<8x128xf32>
    %400 = vector.extract_strided_slice %385 {offsets = [0, 384], sizes = [8, 128], strides = [1, 1]} : vector<8x512xf32> to vector<8x128xf32>
    %401 = arith.negf %400 : vector<8x128xf32>
    %402 = math.exp %401 : vector<8x128xf32>
    %cst_134 = arith.constant 1.000000e+00 : f32
    %403 = vector.broadcast %cst_134 : f32 to vector<8x128xf32>
    %404 = arith.addf %403, %402 : vector<8x128xf32>
    %405 = arith.divf %403, %404 : vector<8x128xf32>
    %406 = arith.mulf %397, %348 : vector<8x128xf32>
    %407 = arith.mulf %391, %399 : vector<8x128xf32>
    %408 = arith.addf %406, %407 : vector<8x128xf32>
    %409 = math.tanh %408 : vector<8x128xf32>
    %410 = arith.mulf %405, %409 : vector<8x128xf32>
    %c8_135 = arith.constant 8 : index
    %c0_136 = arith.constant 0 : index
    %411 = vector.load %arg17[%c8_135, %c0_136] : memref<64x512xf32, #tpu.memory_space<vmem>>, vector<8x512xf32>
    %c0_137 = arith.constant 0 : index
    %c0_138 = arith.constant 0 : index
    %412 = vector.load %arg4[%c0_137, %c0_138] : memref<128x512xf32, #tpu.memory_space<vmem>>, vector<128x512xf32>
    %cst_139 = arith.constant dense<0.000000e+00> : vector<8x512xf32>
    %413 = tpu.matmul %379, %412, %cst_139 {dimension_numbers = #tpu.dot_dimension_numbers<[1], [0], [0], [1], [0, 0, 1, 1], [], []>} : vector<8x128xf32>, vector<128x512xf32>, vector<8x512xf32> -> vector<8x512xf32>
    %414 = arith.addf %411, %413 : vector<8x512xf32>
    %415 = vector.extract_strided_slice %414 {offsets = [0, 0], sizes = [8, 128], strides = [1, 1]} : vector<8x512xf32> to vector<8x128xf32>
    %416 = arith.negf %415 : vector<8x128xf32>
    %417 = math.exp %416 : vector<8x128xf32>
    %cst_140 = arith.constant 1.000000e+00 : f32
    %418 = vector.broadcast %cst_140 : f32 to vector<8x128xf32>
    %419 = arith.addf %418, %417 : vector<8x128xf32>
    %420 = arith.divf %418, %419 : vector<8x128xf32>
    %421 = vector.extract_strided_slice %414 {offsets = [0, 128], sizes = [8, 128], strides = [1, 1]} : vector<8x512xf32> to vector<8x128xf32>
    %422 = arith.negf %421 : vector<8x128xf32>
    %423 = math.exp %422 : vector<8x128xf32>
    %cst_141 = arith.constant 1.000000e+00 : f32
    %424 = vector.broadcast %cst_141 : f32 to vector<8x128xf32>
    %425 = arith.addf %424, %423 : vector<8x128xf32>
    %426 = arith.divf %424, %425 : vector<8x128xf32>
    %427 = vector.extract_strided_slice %414 {offsets = [0, 256], sizes = [8, 128], strides = [1, 1]} : vector<8x512xf32> to vector<8x128xf32>
    %428 = math.tanh %427 : vector<8x128xf32>
    %429 = vector.extract_strided_slice %414 {offsets = [0, 384], sizes = [8, 128], strides = [1, 1]} : vector<8x512xf32> to vector<8x128xf32>
    %430 = arith.negf %429 : vector<8x128xf32>
    %431 = math.exp %430 : vector<8x128xf32>
    %cst_142 = arith.constant 1.000000e+00 : f32
    %432 = vector.broadcast %cst_142 : f32 to vector<8x128xf32>
    %433 = arith.addf %432, %431 : vector<8x128xf32>
    %434 = arith.divf %432, %433 : vector<8x128xf32>
    %435 = arith.mulf %426, %377 : vector<8x128xf32>
    %436 = arith.mulf %420, %428 : vector<8x128xf32>
    %437 = arith.addf %435, %436 : vector<8x128xf32>
    %438 = math.tanh %437 : vector<8x128xf32>
    %439 = arith.mulf %434, %438 : vector<8x128xf32>
    %c48_143 = arith.constant 48 : index
    %c0_144 = arith.constant 0 : index
    %440 = vector.load %arg18[%c48_143, %c0_144] : memref<64x256xf32, #tpu.memory_space<vmem>>, vector<8x128xf32>
    tpu.vector_store %arg18[%c48_143, %c0_144], %410 {strides = array<i32>} : memref<64x256xf32, #tpu.memory_space<vmem>>, vector<8x128xf32>,
    %c8_145 = arith.constant 8 : index
    %c128_146 = arith.constant 128 : index
    %441 = vector.load %arg18[%c8_145, %c128_146] : memref<64x256xf32, #tpu.memory_space<vmem>>, vector<8x128xf32>
    tpu.vector_store %arg18[%c8_145, %c128_146], %439 {strides = array<i32>} : memref<64x256xf32, #tpu.memory_space<vmem>>, vector<8x128xf32>,
    %c56_147 = arith.constant 56 : index
    %c0_148 = arith.constant 0 : index
    %442 = vector.load %arg16[%c56_147, %c0_148] : memref<64x512xf32, #tpu.memory_space<vmem>>, vector<8x512xf32>
    %c0_149 = arith.constant 0 : index
    %c0_150 = arith.constant 0 : index
    %443 = vector.load %arg3[%c0_149, %c0_150] : memref<128x512xf32, #tpu.memory_space<vmem>>, vector<128x512xf32>
    %cst_151 = arith.constant dense<0.000000e+00> : vector<8x512xf32>
    %444 = tpu.matmul %410, %443, %cst_151 {dimension_numbers = #tpu.dot_dimension_numbers<[1], [0], [0], [1], [0, 0, 1, 1], [], []>} : vector<8x128xf32>, vector<128x512xf32>, vector<8x512xf32> -> vector<8x512xf32>
    %445 = arith.addf %442, %444 : vector<8x512xf32>
    %446 = vector.extract_strided_slice %445 {offsets = [0, 0], sizes = [8, 128], strides = [1, 1]} : vector<8x512xf32> to vector<8x128xf32>
    %447 = arith.negf %446 : vector<8x128xf32>
    %448 = math.exp %447 : vector<8x128xf32>
    %cst_152 = arith.constant 1.000000e+00 : f32
    %449 = vector.broadcast %cst_152 : f32 to vector<8x128xf32>
    %450 = arith.addf %449, %448 : vector<8x128xf32>
    %451 = arith.divf %449, %450 : vector<8x128xf32>
    %452 = vector.extract_strided_slice %445 {offsets = [0, 128], sizes = [8, 128], strides = [1, 1]} : vector<8x512xf32> to vector<8x128xf32>
    %453 = arith.negf %452 : vector<8x128xf32>
    %454 = math.exp %453 : vector<8x128xf32>
    %cst_153 = arith.constant 1.000000e+00 : f32
    %455 = vector.broadcast %cst_153 : f32 to vector<8x128xf32>
    %456 = arith.addf %455, %454 : vector<8x128xf32>
    %457 = arith.divf %455, %456 : vector<8x128xf32>
    %458 = vector.extract_strided_slice %445 {offsets = [0, 256], sizes = [8, 128], strides = [1, 1]} : vector<8x512xf32> to vector<8x128xf32>
    %459 = math.tanh %458 : vector<8x128xf32>
    %460 = vector.extract_strided_slice %445 {offsets = [0, 384], sizes = [8, 128], strides = [1, 1]} : vector<8x512xf32> to vector<8x128xf32>
    %461 = arith.negf %460 : vector<8x128xf32>
    %462 = math.exp %461 : vector<8x128xf32>
    %cst_154 = arith.constant 1.000000e+00 : f32
    %463 = vector.broadcast %cst_154 : f32 to vector<8x128xf32>
    %464 = arith.addf %463, %462 : vector<8x128xf32>
    %465 = arith.divf %463, %464 : vector<8x128xf32>
    %466 = arith.mulf %457, %408 : vector<8x128xf32>
    %467 = arith.mulf %451, %459 : vector<8x128xf32>
    %468 = arith.addf %466, %467 : vector<8x128xf32>
    %469 = math.tanh %468 : vector<8x128xf32>
    %470 = arith.mulf %465, %469 : vector<8x128xf32>
    %c0_155 = arith.constant 0 : index
    %c0_156 = arith.constant 0 : index
    %471 = vector.load %arg17[%c0_155, %c0_156] : memref<64x512xf32, #tpu.memory_space<vmem>>, vector<8x512xf32>
    %c0_157 = arith.constant 0 : index
    %c0_158 = arith.constant 0 : index
    %472 = vector.load %arg4[%c0_157, %c0_158] : memref<128x512xf32, #tpu.memory_space<vmem>>, vector<128x512xf32>
    %cst_159 = arith.constant dense<0.000000e+00> : vector<8x512xf32>
    %473 = tpu.matmul %439, %472, %cst_159 {dimension_numbers = #tpu.dot_dimension_numbers<[1], [0], [0], [1], [0, 0, 1, 1], [], []>} : vector<8x128xf32>, vector<128x512xf32>, vector<8x512xf32> -> vector<8x512xf32>
    %474 = arith.addf %471, %473 : vector<8x512xf32>
    %475 = vector.extract_strided_slice %474 {offsets = [0, 0], sizes = [8, 128], strides = [1, 1]} : vector<8x512xf32> to vector<8x128xf32>
    %476 = arith.negf %475 : vector<8x128xf32>
    %477 = math.exp %476 : vector<8x128xf32>
    %cst_160 = arith.constant 1.000000e+00 : f32
    %478 = vector.broadcast %cst_160 : f32 to vector<8x128xf32>
    %479 = arith.addf %478, %477 : vector<8x128xf32>
    %480 = arith.divf %478, %479 : vector<8x128xf32>
    %481 = vector.extract_strided_slice %474 {offsets = [0, 128], sizes = [8, 128], strides = [1, 1]} : vector<8x512xf32> to vector<8x128xf32>
    %482 = arith.negf %481 : vector<8x128xf32>
    %483 = math.exp %482 : vector<8x128xf32>
    %cst_161 = arith.constant 1.000000e+00 : f32
    %484 = vector.broadcast %cst_161 : f32 to vector<8x128xf32>
    %485 = arith.addf %484, %483 : vector<8x128xf32>
    %486 = arith.divf %484, %485 : vector<8x128xf32>
    %487 = vector.extract_strided_slice %474 {offsets = [0, 256], sizes = [8, 128], strides = [1, 1]} : vector<8x512xf32> to vector<8x128xf32>
    %488 = math.tanh %487 : vector<8x128xf32>
    %489 = vector.extract_strided_slice %474 {offsets = [0, 384], sizes = [8, 128], strides = [1, 1]} : vector<8x512xf32> to vector<8x128xf32>
    %490 = arith.negf %489 : vector<8x128xf32>
    %491 = math.exp %490 : vector<8x128xf32>
    %cst_162 = arith.constant 1.000000e+00 : f32
    %492 = vector.broadcast %cst_162 : f32 to vector<8x128xf32>
    %493 = arith.addf %492, %491 : vector<8x128xf32>
    %494 = arith.divf %492, %493 : vector<8x128xf32>
    %495 = arith.mulf %486, %437 : vector<8x128xf32>
    %496 = arith.mulf %480, %488 : vector<8x128xf32>
    %497 = arith.addf %495, %496 : vector<8x128xf32>
    %498 = math.tanh %497 : vector<8x128xf32>
    %499 = arith.mulf %494, %498 : vector<8x128xf32>
    %c56_163 = arith.constant 56 : index
    %c0_164 = arith.constant 0 : index
    %500 = vector.load %arg18[%c56_163, %c0_164] : memref<64x256xf32, #tpu.memory_space<vmem>>, vector<8x128xf32>
    tpu.vector_store %arg18[%c56_163, %c0_164], %470 {strides = array<i32>} : memref<64x256xf32, #tpu.memory_space<vmem>>, vector<8x128xf32>,
    %c0_165 = arith.constant 0 : index
    %c128_166 = arith.constant 128 : index
    %501 = vector.load %arg18[%c0_165, %c128_166] : memref<64x256xf32, #tpu.memory_space<vmem>>, vector<8x128xf32>
    tpu.vector_store %arg18[%c0_165, %c128_166], %499 {strides = array<i32>} : memref<64x256xf32, #tpu.memory_space<vmem>>, vector<8x128xf32>,
    %c0_i32_167 = arith.constant 0 : i32
    %502 = tpu.memref_slice %arg23[%c0_i32_167] : memref<4x!tpu.dma_semaphore, #tpu.memory_space<semaphore_mem>> -> memref<1x!tpu.dma_semaphore, #tpu.memory_space<semaphore_mem>>
    %503 = tpu.memref_squeeze %502 : memref<1x!tpu.dma_semaphore, #tpu.memory_space<semaphore_mem>> -> memref<!tpu.dma_semaphore, #tpu.memory_space<semaphore_mem>>
    tpu.wait_dma2 semaphore(%503 : memref<!tpu.dma_semaphore, #tpu.memory_space<semaphore_mem>>) src(%arg7 : memref<256x512xf32, #tpu.memory_space<any>>) dst(%arg19 : memref<256x512xf32, #tpu.memory_space<vmem>>)
    %c1_i32_168 = arith.constant 1 : i32
    %504 = tpu.memref_slice %arg23[%c1_i32_168] : memref<4x!tpu.dma_semaphore, #tpu.memory_space<semaphore_mem>> -> memref<1x!tpu.dma_semaphore, #tpu.memory_space<semaphore_mem>>
    %505 = tpu.memref_squeeze %504 : memref<1x!tpu.dma_semaphore, #tpu.memory_space<semaphore_mem>> -> memref<!tpu.dma_semaphore, #tpu.memory_space<semaphore_mem>>
    tpu.wait_dma2 semaphore(%505 : memref<!tpu.dma_semaphore, #tpu.memory_space<semaphore_mem>>) src(%arg8 : memref<256x512xf32, #tpu.memory_space<any>>) dst(%arg20 : memref<256x512xf32, #tpu.memory_space<vmem>>)
    %c2_i32_169 = arith.constant 2 : i32
    %506 = tpu.memref_slice %arg23[%c2_i32_169] : memref<4x!tpu.dma_semaphore, #tpu.memory_space<semaphore_mem>> -> memref<1x!tpu.dma_semaphore, #tpu.memory_space<semaphore_mem>>
    %507 = tpu.memref_squeeze %506 : memref<1x!tpu.dma_semaphore, #tpu.memory_space<semaphore_mem>> -> memref<!tpu.dma_semaphore, #tpu.memory_space<semaphore_mem>>
    tpu.wait_dma2 semaphore(%507 : memref<!tpu.dma_semaphore, #tpu.memory_space<semaphore_mem>>) src(%arg9 : memref<128x512xf32, #tpu.memory_space<any>>) dst(%arg21 : memref<128x512xf32, #tpu.memory_space<vmem>>)
    %c3_i32_170 = arith.constant 3 : i32
    %508 = tpu.memref_slice %arg23[%c3_i32_170] : memref<4x!tpu.dma_semaphore, #tpu.memory_space<semaphore_mem>> -> memref<1x!tpu.dma_semaphore, #tpu.memory_space<semaphore_mem>>
    %509 = tpu.memref_squeeze %508 : memref<1x!tpu.dma_semaphore, #tpu.memory_space<semaphore_mem>> -> memref<!tpu.dma_semaphore, #tpu.memory_space<semaphore_mem>>
    tpu.wait_dma2 semaphore(%509 : memref<!tpu.dma_semaphore, #tpu.memory_space<semaphore_mem>>) src(%arg10 : memref<128x512xf32, #tpu.memory_space<any>>) dst(%arg22 : memref<128x512xf32, #tpu.memory_space<vmem>>)
    %c0_171 = arith.constant 0 : index
    %c0_172 = arith.constant 0 : index
    %510 = vector.load %arg18[%c0_171, %c0_172] : memref<64x256xf32, #tpu.memory_space<vmem>>, vector<64x256xf32>
    %c0_173 = arith.constant 0 : index
    %c0_174 = arith.constant 0 : index
    %511 = vector.load %arg19[%c0_173, %c0_174] : memref<256x512xf32, #tpu.memory_space<vmem>>, vector<256x512xf32>
    %cst_175 = arith.constant dense<0.000000e+00> : vector<64x512xf32>
    %512 = tpu.matmul %510, %511, %cst_175 {dimension_numbers = #tpu.dot_dimension_numbers<[1], [0], [0], [1], [0, 0, 1, 1], [], []>} : vector<64x256xf32>, vector<256x512xf32>, vector<64x512xf32> -> vector<64x512xf32>
    %c0_176 = arith.constant 0 : index
    %c0_177 = arith.constant 0 : index
    %513 = vector.load %arg11[%c0_176, %c0_177] : memref<1x512xf32, #tpu.memory_space<vmem>>, vector<1x512xf32>
    %514 = vector.broadcast %513 : vector<1x512xf32> to vector<64x512xf32>
    %515 = arith.addf %512, %514 : vector<64x512xf32>
    %c0_178 = arith.constant 0 : index
    %c0_179 = arith.constant 0 : index
    %516 = vector.load %arg16[%c0_178, %c0_179] : memref<64x512xf32, #tpu.memory_space<vmem>>, vector<64x512xf32>
    tpu.vector_store %arg16[%c0_178, %c0_179], %515 {strides = array<i32>} : memref<64x512xf32, #tpu.memory_space<vmem>>, vector<64x512xf32>,
    %c0_180 = arith.constant 0 : index
    %c0_181 = arith.constant 0 : index
    %517 = vector.load %arg20[%c0_180, %c0_181] : memref<256x512xf32, #tpu.memory_space<vmem>>, vector<256x512xf32>
    %cst_182 = arith.constant dense<0.000000e+00> : vector<64x512xf32>
    %518 = tpu.matmul %510, %517, %cst_182 {dimension_numbers = #tpu.dot_dimension_numbers<[1], [0], [0], [1], [0, 0, 1, 1], [], []>} : vector<64x256xf32>, vector<256x512xf32>, vector<64x512xf32> -> vector<64x512xf32>
    %c0_183 = arith.constant 0 : index
    %c0_184 = arith.constant 0 : index
    %519 = vector.load %arg12[%c0_183, %c0_184] : memref<1x512xf32, #tpu.memory_space<vmem>>, vector<1x512xf32>
    %520 = vector.broadcast %519 : vector<1x512xf32> to vector<64x512xf32>
    %521 = arith.addf %518, %520 : vector<64x512xf32>
    %c0_185 = arith.constant 0 : index
    %c0_186 = arith.constant 0 : index
    %522 = vector.load %arg17[%c0_185, %c0_186] : memref<64x512xf32, #tpu.memory_space<vmem>>, vector<64x512xf32>
    tpu.vector_store %arg17[%c0_185, %c0_186], %521 {strides = array<i32>} : memref<64x512xf32, #tpu.memory_space<vmem>>, vector<64x512xf32>,
    %c0_187 = arith.constant 0 : index
    %c0_188 = arith.constant 0 : index
    %523 = vector.load %arg16[%c0_187, %c0_188] : memref<64x512xf32, #tpu.memory_space<vmem>>, vector<8x512xf32>
    %c0_189 = arith.constant 0 : index
    %c0_190 = arith.constant 0 : index
    %524 = vector.load %arg21[%c0_189, %c0_190] : memref<128x512xf32, #tpu.memory_space<vmem>>, vector<128x512xf32>
    %cst_191 = arith.constant dense<0.000000e+00> : vector<8x512xf32>
    %525 = tpu.matmul %8, %524, %cst_191 {dimension_numbers = #tpu.dot_dimension_numbers<[1], [0], [0], [1], [0, 0, 1, 1], [], []>} : vector<8x128xf32>, vector<128x512xf32>, vector<8x512xf32> -> vector<8x512xf32>
    %526 = arith.addf %523, %525 : vector<8x512xf32>
    %527 = vector.extract_strided_slice %526 {offsets = [0, 0], sizes = [8, 128], strides = [1, 1]} : vector<8x512xf32> to vector<8x128xf32>
    %528 = arith.negf %527 : vector<8x128xf32>
    %529 = math.exp %528 : vector<8x128xf32>
    %cst_192 = arith.constant 1.000000e+00 : f32
    %530 = vector.broadcast %cst_192 : f32 to vector<8x128xf32>
    %531 = arith.addf %530, %529 : vector<8x128xf32>
    %532 = arith.divf %530, %531 : vector<8x128xf32>
    %533 = vector.extract_strided_slice %526 {offsets = [0, 128], sizes = [8, 128], strides = [1, 1]} : vector<8x512xf32> to vector<8x128xf32>
    %534 = arith.negf %533 : vector<8x128xf32>
    %535 = math.exp %534 : vector<8x128xf32>
    %cst_193 = arith.constant 1.000000e+00 : f32
    %536 = vector.broadcast %cst_193 : f32 to vector<8x128xf32>
    %537 = arith.addf %536, %535 : vector<8x128xf32>
    %538 = arith.divf %536, %537 : vector<8x128xf32>
    %539 = vector.extract_strided_slice %526 {offsets = [0, 256], sizes = [8, 128], strides = [1, 1]} : vector<8x512xf32> to vector<8x128xf32>
    %540 = math.tanh %539 : vector<8x128xf32>
    %541 = vector.extract_strided_slice %526 {offsets = [0, 384], sizes = [8, 128], strides = [1, 1]} : vector<8x512xf32> to vector<8x128xf32>
    %542 = arith.negf %541 : vector<8x128xf32>
    %543 = math.exp %542 : vector<8x128xf32>
    %cst_194 = arith.constant 1.000000e+00 : f32
    %544 = vector.broadcast %cst_194 : f32 to vector<8x128xf32>
    %545 = arith.addf %544, %543 : vector<8x128xf32>
    %546 = arith.divf %544, %545 : vector<8x128xf32>
    %547 = arith.mulf %538, %8 : vector<8x128xf32>
    %548 = arith.mulf %532, %540 : vector<8x128xf32>
    %549 = arith.addf %547, %548 : vector<8x128xf32>
    %550 = math.tanh %549 : vector<8x128xf32>
    %551 = arith.mulf %546, %550 : vector<8x128xf32>
    %c56_195 = arith.constant 56 : index
    %c0_196 = arith.constant 0 : index
    %552 = vector.load %arg17[%c56_195, %c0_196] : memref<64x512xf32, #tpu.memory_space<vmem>>, vector<8x512xf32>
    %c0_197 = arith.constant 0 : index
    %c0_198 = arith.constant 0 : index
    %553 = vector.load %arg22[%c0_197, %c0_198] : memref<128x512xf32, #tpu.memory_space<vmem>>, vector<128x512xf32>
    %cst_199 = arith.constant dense<0.000000e+00> : vector<8x512xf32>
    %554 = tpu.matmul %8, %553, %cst_199 {dimension_numbers = #tpu.dot_dimension_numbers<[1], [0], [0], [1], [0, 0, 1, 1], [], []>} : vector<8x128xf32>, vector<128x512xf32>, vector<8x512xf32> -> vector<8x512xf32>
    %555 = arith.addf %552, %554 : vector<8x512xf32>
    %556 = vector.extract_strided_slice %555 {offsets = [0, 0], sizes = [8, 128], strides = [1, 1]} : vector<8x512xf32> to vector<8x128xf32>
    %557 = arith.negf %556 : vector<8x128xf32>
    %558 = math.exp %557 : vector<8x128xf32>
    %cst_200 = arith.constant 1.000000e+00 : f32
    %559 = vector.broadcast %cst_200 : f32 to vector<8x128xf32>
    %560 = arith.addf %559, %558 : vector<8x128xf32>
    %561 = arith.divf %559, %560 : vector<8x128xf32>
    %562 = vector.extract_strided_slice %555 {offsets = [0, 128], sizes = [8, 128], strides = [1, 1]} : vector<8x512xf32> to vector<8x128xf32>
    %563 = arith.negf %562 : vector<8x128xf32>
    %564 = math.exp %563 : vector<8x128xf32>
    %cst_201 = arith.constant 1.000000e+00 : f32
    %565 = vector.broadcast %cst_201 : f32 to vector<8x128xf32>
    %566 = arith.addf %565, %564 : vector<8x128xf32>
    %567 = arith.divf %565, %566 : vector<8x128xf32>
    %568 = vector.extract_strided_slice %555 {offsets = [0, 256], sizes = [8, 128], strides = [1, 1]} : vector<8x512xf32> to vector<8x128xf32>
    %569 = math.tanh %568 : vector<8x128xf32>
    %570 = vector.extract_strided_slice %555 {offsets = [0, 384], sizes = [8, 128], strides = [1, 1]} : vector<8x512xf32> to vector<8x128xf32>
    %571 = arith.negf %570 : vector<8x128xf32>
    %572 = math.exp %571 : vector<8x128xf32>
    %cst_202 = arith.constant 1.000000e+00 : f32
    %573 = vector.broadcast %cst_202 : f32 to vector<8x128xf32>
    %574 = arith.addf %573, %572 : vector<8x128xf32>
    %575 = arith.divf %573, %574 : vector<8x128xf32>
    %576 = arith.mulf %567, %8 : vector<8x128xf32>
    %577 = arith.mulf %561, %569 : vector<8x128xf32>
    %578 = arith.addf %576, %577 : vector<8x128xf32>
    %579 = math.tanh %578 : vector<8x128xf32>
    %580 = arith.mulf %575, %579 : vector<8x128xf32>
    %c8_203 = arith.constant 8 : index
    %c0_204 = arith.constant 0 : index
    %581 = vector.load %arg16[%c8_203, %c0_204] : memref<64x512xf32, #tpu.memory_space<vmem>>, vector<8x512xf32>
    %c0_205 = arith.constant 0 : index
    %c0_206 = arith.constant 0 : index
    %582 = vector.load %arg21[%c0_205, %c0_206] : memref<128x512xf32, #tpu.memory_space<vmem>>, vector<128x512xf32>
    %cst_207 = arith.constant dense<0.000000e+00> : vector<8x512xf32>
    %583 = tpu.matmul %551, %582, %cst_207 {dimension_numbers = #tpu.dot_dimension_numbers<[1], [0], [0], [1], [0, 0, 1, 1], [], []>} : vector<8x128xf32>, vector<128x512xf32>, vector<8x512xf32> -> vector<8x512xf32>
    %584 = arith.addf %581, %583 : vector<8x512xf32>
    %585 = vector.extract_strided_slice %584 {offsets = [0, 0], sizes = [8, 128], strides = [1, 1]} : vector<8x512xf32> to vector<8x128xf32>
    %586 = arith.negf %585 : vector<8x128xf32>
    %587 = math.exp %586 : vector<8x128xf32>
    %cst_208 = arith.constant 1.000000e+00 : f32
    %588 = vector.broadcast %cst_208 : f32 to vector<8x128xf32>
    %589 = arith.addf %588, %587 : vector<8x128xf32>
    %590 = arith.divf %588, %589 : vector<8x128xf32>
    %591 = vector.extract_strided_slice %584 {offsets = [0, 128], sizes = [8, 128], strides = [1, 1]} : vector<8x512xf32> to vector<8x128xf32>
    %592 = arith.negf %591 : vector<8x128xf32>
    %593 = math.exp %592 : vector<8x128xf32>
    %cst_209 = arith.constant 1.000000e+00 : f32
    %594 = vector.broadcast %cst_209 : f32 to vector<8x128xf32>
    %595 = arith.addf %594, %593 : vector<8x128xf32>
    %596 = arith.divf %594, %595 : vector<8x128xf32>
    %597 = vector.extract_strided_slice %584 {offsets = [0, 256], sizes = [8, 128], strides = [1, 1]} : vector<8x512xf32> to vector<8x128xf32>
    %598 = math.tanh %597 : vector<8x128xf32>
    %599 = vector.extract_strided_slice %584 {offsets = [0, 384], sizes = [8, 128], strides = [1, 1]} : vector<8x512xf32> to vector<8x128xf32>
    %600 = arith.negf %599 : vector<8x128xf32>
    %601 = math.exp %600 : vector<8x128xf32>
    %cst_210 = arith.constant 1.000000e+00 : f32
    %602 = vector.broadcast %cst_210 : f32 to vector<8x128xf32>
    %603 = arith.addf %602, %601 : vector<8x128xf32>
    %604 = arith.divf %602, %603 : vector<8x128xf32>
    %605 = arith.mulf %596, %549 : vector<8x128xf32>
    %606 = arith.mulf %590, %598 : vector<8x128xf32>
    %607 = arith.addf %605, %606 : vector<8x128xf32>
    %608 = math.tanh %607 : vector<8x128xf32>
    %609 = arith.mulf %604, %608 : vector<8x128xf32>
    %c16_211 = arith.constant 16 : index
    %c0_212 = arith.constant 0 : index
    %610 = vector.load %arg16[%c16_211, %c0_212] : memref<64x512xf32, #tpu.memory_space<vmem>>, vector<8x512xf32>
    %c0_213 = arith.constant 0 : index
    %c0_214 = arith.constant 0 : index
    %611 = vector.load %arg21[%c0_213, %c0_214] : memref<128x512xf32, #tpu.memory_space<vmem>>, vector<128x512xf32>
    %cst_215 = arith.constant dense<0.000000e+00> : vector<8x512xf32>
    %612 = tpu.matmul %609, %611, %cst_215 {dimension_numbers = #tpu.dot_dimension_numbers<[1], [0], [0], [1], [0, 0, 1, 1], [], []>} : vector<8x128xf32>, vector<128x512xf32>, vector<8x512xf32> -> vector<8x512xf32>
    %613 = arith.addf %610, %612 : vector<8x512xf32>
    %614 = vector.extract_strided_slice %613 {offsets = [0, 0], sizes = [8, 128], strides = [1, 1]} : vector<8x512xf32> to vector<8x128xf32>
    %615 = arith.negf %614 : vector<8x128xf32>
    %616 = math.exp %615 : vector<8x128xf32>
    %cst_216 = arith.constant 1.000000e+00 : f32
    %617 = vector.broadcast %cst_216 : f32 to vector<8x128xf32>
    %618 = arith.addf %617, %616 : vector<8x128xf32>
    %619 = arith.divf %617, %618 : vector<8x128xf32>
    %620 = vector.extract_strided_slice %613 {offsets = [0, 128], sizes = [8, 128], strides = [1, 1]} : vector<8x512xf32> to vector<8x128xf32>
    %621 = arith.negf %620 : vector<8x128xf32>
    %622 = math.exp %621 : vector<8x128xf32>
    %cst_217 = arith.constant 1.000000e+00 : f32
    %623 = vector.broadcast %cst_217 : f32 to vector<8x128xf32>
    %624 = arith.addf %623, %622 : vector<8x128xf32>
    %625 = arith.divf %623, %624 : vector<8x128xf32>
    %626 = vector.extract_strided_slice %613 {offsets = [0, 256], sizes = [8, 128], strides = [1, 1]} : vector<8x512xf32> to vector<8x128xf32>
    %627 = math.tanh %626 : vector<8x128xf32>
    %628 = vector.extract_strided_slice %613 {offsets = [0, 384], sizes = [8, 128], strides = [1, 1]} : vector<8x512xf32> to vector<8x128xf32>
    %629 = arith.negf %628 : vector<8x128xf32>
    %630 = math.exp %629 : vector<8x128xf32>
    %cst_218 = arith.constant 1.000000e+00 : f32
    %631 = vector.broadcast %cst_218 : f32 to vector<8x128xf32>
    %632 = arith.addf %631, %630 : vector<8x128xf32>
    %633 = arith.divf %631, %632 : vector<8x128xf32>
    %634 = arith.mulf %625, %607 : vector<8x128xf32>
    %635 = arith.mulf %619, %627 : vector<8x128xf32>
    %636 = arith.addf %634, %635 : vector<8x128xf32>
    %637 = math.tanh %636 : vector<8x128xf32>
    %638 = arith.mulf %633, %637 : vector<8x128xf32>
    %c24_219 = arith.constant 24 : index
    %c0_220 = arith.constant 0 : index
    %639 = vector.load %arg16[%c24_219, %c0_220] : memref<64x512xf32, #tpu.memory_space<vmem>>, vector<8x512xf32>
    %c0_221 = arith.constant 0 : index
    %c0_222 = arith.constant 0 : index
    %640 = vector.load %arg21[%c0_221, %c0_222] : memref<128x512xf32, #tpu.memory_space<vmem>>, vector<128x512xf32>
    %cst_223 = arith.constant dense<0.000000e+00> : vector<8x512xf32>
    %641 = tpu.matmul %638, %640, %cst_223 {dimension_numbers = #tpu.dot_dimension_numbers<[1], [0], [0], [1], [0, 0, 1, 1], [], []>} : vector<8x128xf32>, vector<128x512xf32>, vector<8x512xf32> -> vector<8x512xf32>
    %642 = arith.addf %639, %641 : vector<8x512xf32>
    %643 = vector.extract_strided_slice %642 {offsets = [0, 0], sizes = [8, 128], strides = [1, 1]} : vector<8x512xf32> to vector<8x128xf32>
    %644 = arith.negf %643 : vector<8x128xf32>
    %645 = math.exp %644 : vector<8x128xf32>
    %cst_224 = arith.constant 1.000000e+00 : f32
    %646 = vector.broadcast %cst_224 : f32 to vector<8x128xf32>
    %647 = arith.addf %646, %645 : vector<8x128xf32>
    %648 = arith.divf %646, %647 : vector<8x128xf32>
    %649 = vector.extract_strided_slice %642 {offsets = [0, 128], sizes = [8, 128], strides = [1, 1]} : vector<8x512xf32> to vector<8x128xf32>
    %650 = arith.negf %649 : vector<8x128xf32>
    %651 = math.exp %650 : vector<8x128xf32>
    %cst_225 = arith.constant 1.000000e+00 : f32
    %652 = vector.broadcast %cst_225 : f32 to vector<8x128xf32>
    %653 = arith.addf %652, %651 : vector<8x128xf32>
    %654 = arith.divf %652, %653 : vector<8x128xf32>
    %655 = vector.extract_strided_slice %642 {offsets = [0, 256], sizes = [8, 128], strides = [1, 1]} : vector<8x512xf32> to vector<8x128xf32>
    %656 = math.tanh %655 : vector<8x128xf32>
    %657 = vector.extract_strided_slice %642 {offsets = [0, 384], sizes = [8, 128], strides = [1, 1]} : vector<8x512xf32> to vector<8x128xf32>
    %658 = arith.negf %657 : vector<8x128xf32>
    %659 = math.exp %658 : vector<8x128xf32>
    %cst_226 = arith.constant 1.000000e+00 : f32
    %660 = vector.broadcast %cst_226 : f32 to vector<8x128xf32>
    %661 = arith.addf %660, %659 : vector<8x128xf32>
    %662 = arith.divf %660, %661 : vector<8x128xf32>
    %663 = arith.mulf %654, %636 : vector<8x128xf32>
    %664 = arith.mulf %648, %656 : vector<8x128xf32>
    %665 = arith.addf %663, %664 : vector<8x128xf32>
    %666 = math.tanh %665 : vector<8x128xf32>
    %667 = arith.mulf %662, %666 : vector<8x128xf32>
    %c32_227 = arith.constant 32 : index
    %c0_228 = arith.constant 0 : index
    %668 = vector.load %arg16[%c32_227, %c0_228] : memref<64x512xf32, #tpu.memory_space<vmem>>, vector<8x512xf32>
    %c0_229 = arith.constant 0 : index
    %c0_230 = arith.constant 0 : index
    %669 = vector.load %arg21[%c0_229, %c0_230] : memref<128x512xf32, #tpu.memory_space<vmem>>, vector<128x512xf32>
    %cst_231 = arith.constant dense<0.000000e+00> : vector<8x512xf32>
    %670 = tpu.matmul %667, %669, %cst_231 {dimension_numbers = #tpu.dot_dimension_numbers<[1], [0], [0], [1], [0, 0, 1, 1], [], []>} : vector<8x128xf32>, vector<128x512xf32>, vector<8x512xf32> -> vector<8x512xf32>
    %671 = arith.addf %668, %670 : vector<8x512xf32>
    %672 = vector.extract_strided_slice %671 {offsets = [0, 0], sizes = [8, 128], strides = [1, 1]} : vector<8x512xf32> to vector<8x128xf32>
    %673 = arith.negf %672 : vector<8x128xf32>
    %674 = math.exp %673 : vector<8x128xf32>
    %cst_232 = arith.constant 1.000000e+00 : f32
    %675 = vector.broadcast %cst_232 : f32 to vector<8x128xf32>
    %676 = arith.addf %675, %674 : vector<8x128xf32>
    %677 = arith.divf %675, %676 : vector<8x128xf32>
    %678 = vector.extract_strided_slice %671 {offsets = [0, 128], sizes = [8, 128], strides = [1, 1]} : vector<8x512xf32> to vector<8x128xf32>
    %679 = arith.negf %678 : vector<8x128xf32>
    %680 = math.exp %679 : vector<8x128xf32>
    %cst_233 = arith.constant 1.000000e+00 : f32
    %681 = vector.broadcast %cst_233 : f32 to vector<8x128xf32>
    %682 = arith.addf %681, %680 : vector<8x128xf32>
    %683 = arith.divf %681, %682 : vector<8x128xf32>
    %684 = vector.extract_strided_slice %671 {offsets = [0, 256], sizes = [8, 128], strides = [1, 1]} : vector<8x512xf32> to vector<8x128xf32>
    %685 = math.tanh %684 : vector<8x128xf32>
    %686 = vector.extract_strided_slice %671 {offsets = [0, 384], sizes = [8, 128], strides = [1, 1]} : vector<8x512xf32> to vector<8x128xf32>
    %687 = arith.negf %686 : vector<8x128xf32>
    %688 = math.exp %687 : vector<8x128xf32>
    %cst_234 = arith.constant 1.000000e+00 : f32
    %689 = vector.broadcast %cst_234 : f32 to vector<8x128xf32>
    %690 = arith.addf %689, %688 : vector<8x128xf32>
    %691 = arith.divf %689, %690 : vector<8x128xf32>
    %692 = arith.mulf %683, %665 : vector<8x128xf32>
    %693 = arith.mulf %677, %685 : vector<8x128xf32>
    %694 = arith.addf %692, %693 : vector<8x128xf32>
    %695 = math.tanh %694 : vector<8x128xf32>
    %696 = arith.mulf %691, %695 : vector<8x128xf32>
    %c40_235 = arith.constant 40 : index
    %c0_236 = arith.constant 0 : index
    %697 = vector.load %arg16[%c40_235, %c0_236] : memref<64x512xf32, #tpu.memory_space<vmem>>, vector<8x512xf32>
    %c0_237 = arith.constant 0 : index
    %c0_238 = arith.constant 0 : index
    %698 = vector.load %arg21[%c0_237, %c0_238] : memref<128x512xf32, #tpu.memory_space<vmem>>, vector<128x512xf32>
    %cst_239 = arith.constant dense<0.000000e+00> : vector<8x512xf32>
    %699 = tpu.matmul %696, %698, %cst_239 {dimension_numbers = #tpu.dot_dimension_numbers<[1], [0], [0], [1], [0, 0, 1, 1], [], []>} : vector<8x128xf32>, vector<128x512xf32>, vector<8x512xf32> -> vector<8x512xf32>
    %700 = arith.addf %697, %699 : vector<8x512xf32>
    %701 = vector.extract_strided_slice %700 {offsets = [0, 0], sizes = [8, 128], strides = [1, 1]} : vector<8x512xf32> to vector<8x128xf32>
    %702 = arith.negf %701 : vector<8x128xf32>
    %703 = math.exp %702 : vector<8x128xf32>
    %cst_240 = arith.constant 1.000000e+00 : f32
    %704 = vector.broadcast %cst_240 : f32 to vector<8x128xf32>
    %705 = arith.addf %704, %703 : vector<8x128xf32>
    %706 = arith.divf %704, %705 : vector<8x128xf32>
    %707 = vector.extract_strided_slice %700 {offsets = [0, 128], sizes = [8, 128], strides = [1, 1]} : vector<8x512xf32> to vector<8x128xf32>
    %708 = arith.negf %707 : vector<8x128xf32>
    %709 = math.exp %708 : vector<8x128xf32>
    %cst_241 = arith.constant 1.000000e+00 : f32
    %710 = vector.broadcast %cst_241 : f32 to vector<8x128xf32>
    %711 = arith.addf %710, %709 : vector<8x128xf32>
    %712 = arith.divf %710, %711 : vector<8x128xf32>
    %713 = vector.extract_strided_slice %700 {offsets = [0, 256], sizes = [8, 128], strides = [1, 1]} : vector<8x512xf32> to vector<8x128xf32>
    %714 = math.tanh %713 : vector<8x128xf32>
    %715 = vector.extract_strided_slice %700 {offsets = [0, 384], sizes = [8, 128], strides = [1, 1]} : vector<8x512xf32> to vector<8x128xf32>
    %716 = arith.negf %715 : vector<8x128xf32>
    %717 = math.exp %716 : vector<8x128xf32>
    %cst_242 = arith.constant 1.000000e+00 : f32
    %718 = vector.broadcast %cst_242 : f32 to vector<8x128xf32>
    %719 = arith.addf %718, %717 : vector<8x128xf32>
    %720 = arith.divf %718, %719 : vector<8x128xf32>
    %721 = arith.mulf %712, %694 : vector<8x128xf32>
    %722 = arith.mulf %706, %714 : vector<8x128xf32>
    %723 = arith.addf %721, %722 : vector<8x128xf32>
    %724 = math.tanh %723 : vector<8x128xf32>
    %725 = arith.mulf %720, %724 : vector<8x128xf32>
    %c48_243 = arith.constant 48 : index
    %c0_244 = arith.constant 0 : index
    %726 = vector.load %arg16[%c48_243, %c0_244] : memref<64x512xf32, #tpu.memory_space<vmem>>, vector<8x512xf32>
    %c0_245 = arith.constant 0 : index
    %c0_246 = arith.constant 0 : index
    %727 = vector.load %arg21[%c0_245, %c0_246] : memref<128x512xf32, #tpu.memory_space<vmem>>, vector<128x512xf32>
    %cst_247 = arith.constant dense<0.000000e+00> : vector<8x512xf32>
    %728 = tpu.matmul %725, %727, %cst_247 {dimension_numbers = #tpu.dot_dimension_numbers<[1], [0], [0], [1], [0, 0, 1, 1], [], []>} : vector<8x128xf32>, vector<128x512xf32>, vector<8x512xf32> -> vector<8x512xf32>
    %729 = arith.addf %726, %728 : vector<8x512xf32>
    %730 = vector.extract_strided_slice %729 {offsets = [0, 0], sizes = [8, 128], strides = [1, 1]} : vector<8x512xf32> to vector<8x128xf32>
    %731 = arith.negf %730 : vector<8x128xf32>
    %732 = math.exp %731 : vector<8x128xf32>
    %cst_248 = arith.constant 1.000000e+00 : f32
    %733 = vector.broadcast %cst_248 : f32 to vector<8x128xf32>
    %734 = arith.addf %733, %732 : vector<8x128xf32>
    %735 = arith.divf %733, %734 : vector<8x128xf32>
    %736 = vector.extract_strided_slice %729 {offsets = [0, 128], sizes = [8, 128], strides = [1, 1]} : vector<8x512xf32> to vector<8x128xf32>
    %737 = arith.negf %736 : vector<8x128xf32>
    %738 = math.exp %737 : vector<8x128xf32>
    %cst_249 = arith.constant 1.000000e+00 : f32
    %739 = vector.broadcast %cst_249 : f32 to vector<8x128xf32>
    %740 = arith.addf %739, %738 : vector<8x128xf32>
    %741 = arith.divf %739, %740 : vector<8x128xf32>
    %742 = vector.extract_strided_slice %729 {offsets = [0, 256], sizes = [8, 128], strides = [1, 1]} : vector<8x512xf32> to vector<8x128xf32>
    %743 = math.tanh %742 : vector<8x128xf32>
    %744 = vector.extract_strided_slice %729 {offsets = [0, 384], sizes = [8, 128], strides = [1, 1]} : vector<8x512xf32> to vector<8x128xf32>
    %745 = arith.negf %744 : vector<8x128xf32>
    %746 = math.exp %745 : vector<8x128xf32>
    %cst_250 = arith.constant 1.000000e+00 : f32
    %747 = vector.broadcast %cst_250 : f32 to vector<8x128xf32>
    %748 = arith.addf %747, %746 : vector<8x128xf32>
    %749 = arith.divf %747, %748 : vector<8x128xf32>
    %750 = arith.mulf %741, %723 : vector<8x128xf32>
    %751 = arith.mulf %735, %743 : vector<8x128xf32>
    %752 = arith.addf %750, %751 : vector<8x128xf32>
    %753 = math.tanh %752 : vector<8x128xf32>
    %754 = arith.mulf %749, %753 : vector<8x128xf32>
    %c56_251 = arith.constant 56 : index
    %c0_252 = arith.constant 0 : index
    %755 = vector.load %arg16[%c56_251, %c0_252] : memref<64x512xf32, #tpu.memory_space<vmem>>, vector<8x512xf32>
    %c0_253 = arith.constant 0 : index
    %c0_254 = arith.constant 0 : index
    %756 = vector.load %arg21[%c0_253, %c0_254] : memref<128x512xf32, #tpu.memory_space<vmem>>, vector<128x512xf32>
    %cst_255 = arith.constant dense<0.000000e+00> : vector<8x512xf32>
    %757 = tpu.matmul %754, %756, %cst_255 {dimension_numbers = #tpu.dot_dimension_numbers<[1], [0], [0], [1], [0, 0, 1, 1], [], []>} : vector<8x128xf32>, vector<128x512xf32>, vector<8x512xf32> -> vector<8x512xf32>
    %758 = arith.addf %755, %757 : vector<8x512xf32>
    %759 = vector.extract_strided_slice %758 {offsets = [0, 0], sizes = [8, 128], strides = [1, 1]} : vector<8x512xf32> to vector<8x128xf32>
    %760 = arith.negf %759 : vector<8x128xf32>
    %761 = math.exp %760 : vector<8x128xf32>
    %cst_256 = arith.constant 1.000000e+00 : f32
    %762 = vector.broadcast %cst_256 : f32 to vector<8x128xf32>
    %763 = arith.addf %762, %761 : vector<8x128xf32>
    %764 = arith.divf %762, %763 : vector<8x128xf32>
    %765 = vector.extract_strided_slice %758 {offsets = [0, 128], sizes = [8, 128], strides = [1, 1]} : vector<8x512xf32> to vector<8x128xf32>
    %766 = arith.negf %765 : vector<8x128xf32>
    %767 = math.exp %766 : vector<8x128xf32>
    %cst_257 = arith.constant 1.000000e+00 : f32
    %768 = vector.broadcast %cst_257 : f32 to vector<8x128xf32>
    %769 = arith.addf %768, %767 : vector<8x128xf32>
    %770 = arith.divf %768, %769 : vector<8x128xf32>
    %771 = vector.extract_strided_slice %758 {offsets = [0, 256], sizes = [8, 128], strides = [1, 1]} : vector<8x512xf32> to vector<8x128xf32>
    %772 = math.tanh %771 : vector<8x128xf32>
    %773 = vector.extract_strided_slice %758 {offsets = [0, 384], sizes = [8, 128], strides = [1, 1]} : vector<8x512xf32> to vector<8x128xf32>
    %774 = arith.negf %773 : vector<8x128xf32>
    %775 = math.exp %774 : vector<8x128xf32>
    %cst_258 = arith.constant 1.000000e+00 : f32
    %776 = vector.broadcast %cst_258 : f32 to vector<8x128xf32>
    %777 = arith.addf %776, %775 : vector<8x128xf32>
    %778 = arith.divf %776, %777 : vector<8x128xf32>
    %779 = arith.mulf %770, %752 : vector<8x128xf32>
    %780 = arith.mulf %764, %772 : vector<8x128xf32>
    %781 = arith.addf %779, %780 : vector<8x128xf32>
    %782 = math.tanh %781 : vector<8x128xf32>
    %783 = arith.mulf %778, %782 : vector<8x128xf32>
    %784 = tpu.concatenate %783, %580 in 1 : vector<8x128xf32>, vector<8x128xf32> -> vector<8x256xf32>
    %c0_259 = arith.constant 0 : index
    %c0_260 = arith.constant 0 : index
    %785 = vector.load %arg13[%c0_259, %c0_260] : memref<256x4xf32, #tpu.memory_space<vmem>>, vector<256x4xf32>
    %cst_261 = arith.constant dense<0.000000e+00> : vector<8x4xf32>
    %786 = tpu.matmul %784, %785, %cst_261 {dimension_numbers = #tpu.dot_dimension_numbers<[1], [0], [0], [1], [0, 0, 1, 1], [], []>} : vector<8x256xf32>, vector<256x4xf32>, vector<8x4xf32> -> vector<8x4xf32>
    %c0_262 = arith.constant 0 : index
    %c0_263 = arith.constant 0 : index
    %787 = vector.load %arg14[%c0_262, %c0_263] : memref<1x4xf32, #tpu.memory_space<vmem>>, vector<1x4xf32>
    %788 = vector.broadcast %787 : vector<1x4xf32> to vector<8x4xf32>
    %789 = arith.addf %786, %788 : vector<8x4xf32>
    %c0_264 = arith.constant 0 : index
    %c0_265 = arith.constant 0 : index
    %790 = vector.load %arg15[%c0_264, %c0_265] : memref<8x4xf32, #tpu.memory_space<vmem>>, vector<8x4xf32>
    tpu.vector_store %arg15[%c0_264, %c0_265], %789 {strides = array<i32>} : memref<8x4xf32, #tpu.memory_space<vmem>>, vector<8x4xf32>,
    return
  }
}

</mosaic_0001>

<llo_original>
// kernel: text_birnn_forward.1
$region0: #{text_birnn_forward.1}
  #allocation0 [shape = 'u32[]', space=smem, size = 0x4, offset = 0x4, fixed_abs, tag = 'smem constant byte address 0x4 - core index']
  #allocation1 [shape = 'u32[144,128]{1,0:T(1,128)}', space=vmem, size = 0x12000, scoped, tag = 'internal scratch']
  #allocation2 [shape = 'f32[64,512]{1,0:T(8,128)}', space=vmem, size = 0x20000, scoped, tag = 'scratch operand']
  #allocation3 [shape = 'f32[64,512]{1,0:T(8,128)}', space=vmem, size = 0x20000, scoped, tag = 'scratch operand']
  #allocation4 [shape = 'f32[64,256]{1,0:T(8,128)}', space=vmem, size = 0x10000, scoped, tag = 'scratch operand']
  #allocation5 [shape = 'f32[256,512]{1,0:T(8,128)}', space=vmem, size = 0x80000, scoped, tag = 'scratch operand']
  #allocation6 [shape = 'f32[256,512]{1,0:T(8,128)}', space=vmem, size = 0x80000, scoped, tag = 'scratch operand']
  #allocation7 [shape = 'f32[128,512]{1,0:T(8,128)}', space=vmem, size = 0x40000, scoped, tag = 'scratch operand']
  #allocation8 [shape = 'f32[128,512]{1,0:T(8,128)}', space=vmem, size = 0x40000, scoped, tag = 'scratch operand']
  #allocation9 [shape = 's32[4]{0}', space=sflag, size = 0x10, scoped, tag = 'scratch operand']
  #allocation14 [shape = 's32[]', space=sflag, size = 0x4, offset = 0, fixed_abs, tag = 'sflag constant byte address 0x0 - dummy sync flag']
  #allocation15 [shape = 's32[]', space=sflag, size = 0x4, offset = 0, fixed_abs, tag = 'sflag constant byte address 0x0 - dummy sync flag']
  #allocation16 [shape = 'u32[]', space=smem, size = 0x4, offset = 0x44, fixed_abs, tag = 'smem constant byte address 0x44 - assertion arg 0']
  #allocation17 [shape = 'u32[]', space=smem, size = 0x4, offset = 0x48, fixed_abs, tag = 'smem constant byte address 0x48 - assertion arg 1']
  #allocation18 [shape = 's32[]', space=sflag, size = 0x4, offset = 0, fixed_abs, tag = 'sflag constant byte address 0x0 - dummy sync flag']
  #allocation19 [shape = 's32[]', space=sflag, size = 0x4, offset = 0, fixed_abs, tag = 'sflag constant byte address 0x0 - dummy sync flag']
  #allocation20 [shape = 's32[]', space=sflag, size = 0x4, offset = 0, fixed_abs, tag = 'sflag constant byte address 0x0 - dummy sync flag']
  #allocation21 [shape = 's32[]', space=sflag, size = 0x4, offset = 0, fixed_abs, tag = 'sflag constant byte address 0x0 - dummy sync flag']
  #allocation22 [shape = 's32[]', space=sflag, size = 0x4, offset = 0, fixed_abs, tag = 'sflag constant byte address 0x0 - dummy sync flag']
  #allocation23 [shape = 's32[]', space=sflag, size = 0x4, offset = 0, fixed_abs, tag = 'sflag constant byte address 0x0 - dummy sync flag']
  %s0 = inlined_call_operand.vmem [shape: f32[64,32], index: 0, kind: input, shape index: {}]
  %s1 = inlined_call_operand.vmem [shape: f32[32,512], index: 1, kind: input, shape index: {}]
  %s2 = inlined_call_operand.hbm [shape: f32[32,512], index: 2, kind: input, shape index: {}]
  %s3 = inlined_call_operand.vmem [shape: f32[128,512], index: 3, kind: input, shape index: {}]
  %s4 = inlined_call_operand.hbm [shape: f32[128,512], index: 4, kind: input, shape index: {}]
  %s5 = inlined_call_operand.vmem [shape: f32[1,512], index: 5, kind: input, shape index: {}]
  %s6 = inlined_call_operand.vmem [shape: f32[1,512], index: 6, kind: input, shape index: {}]
  %s7 = inlined_call_operand.hbm [shape: f32[256,512], index: 7, kind: input, shape index: {}]
  %s8 = inlined_call_operand.hbm [shape: f32[256,512], index: 8, kind: input, shape index: {}]
  %s9 = inlined_call_operand.hbm [shape: f32[128,512], index: 9, kind: input, shape index: {}]
  %s10 = inlined_call_operand.hbm [shape: f32[128,512], index: 10, kind: input, shape index: {}]
  %s11 = inlined_call_operand.vmem [shape: f32[1,512], index: 11, kind: input, shape index: {}]
  %s12 = inlined_call_operand.vmem [shape: f32[1,512], index: 12, kind: input, shape index: {}]
  %s13 = inlined_call_operand.vmem [shape: f32[256,4], index: 13, kind: input, shape index: {}]
  %s14 = inlined_call_operand.vmem [shape: f32[1,4], index: 14, kind: input, shape index: {}]
  %s15 = inlined_call_operand.vmem [shape: f32[8,4], index: 15, kind: output, shape index: {}]
  %s16 = sld [smem:[#allocation0]]
  $region78: #{text_birnn_forward.1} parent=0
    _
  %s18 = ssub.s32 1, %s16
  %s19 = scalar_select 0, %s18, %s16
  $region1: #{text_birnn_forward.1} parent=0
    #allocation10 [shape = 'u8[65536]{0}', space=vmem, size = 0x10000, scoped, tag = 'input window, operand 2, single buffered']
    #allocation11 [shape = 's32[1]{0}', space=sflag, size = 0x4, scoped, tag = 'scoped memory for text_birnn_forward.1']
    #allocation12 [shape = 'u8[262144]{0}', space=vmem, size = 0x40000, scoped, tag = 'input window, operand 4, single buffered']
    #allocation13 [shape = 's32[1]{0}', space=sflag, size = 0x4, scoped, tag = 'scoped memory for text_birnn_forward.1']
    %20 = vsyncpa [#allocation11], 0
    %21 = vsyncpa [#allocation13], 0
    // Predicated region
    $region2: #{text_birnn_forward.1} parent=1 // pred_check
      _
    $region3: #{text_birnn_forward.1} parent=1 // pred_check_branch
      %23 = sbr.rel (0) target = $region5
    $region4: #{text_birnn_forward.1} parent=1 // pred_region
      _
    $region5: #{text_birnn_forward.1} parent=1 // pred_fallthru
      _
    // Predicated region
    $region6: #{text_birnn_forward.1} parent=1 // pred_check
      _
    $region7: #{text_birnn_forward.1} parent=1 // pred_check_branch
      %25 = sbr.rel (0) target = $region9
    $region8: #{text_birnn_forward.1} parent=1 // pred_region
      _
    $region9: #{text_birnn_forward.1} parent=1 // pred_fallthru
      _
    // Predicated region
    $region10: #{text_birnn_forward.1} parent=1 // pred_check
      _
    $region11: #{text_birnn_forward.1} parent=1 // pred_check_branch
      %27 = sbr.rel (0) target = $region13
    $region12: #{text_birnn_forward.1} parent=1 // pred_region
      %s29 = ssub.s32 2048, 2048
      %30 = vsyncadd [#allocation11], %s29
      %s31 = sshll.u32 [#allocation10], 4
      %s32 = int_to_ptr.vmem [resolvable:$true] %s31
      %37 = dma.hbm_to_vmem [thread:$0]  %s2, 2048, %s32, [#allocation11], 512, 512, 32
    $region13: #{text_birnn_forward.1} parent=1 // pred_fallthru
      _
    // Predicated region
    $region14: #{text_birnn_forward.1} parent=1 // pred_check
      _
    $region15: #{text_birnn_forward.1} parent=1 // pred_check_branch
      %39 = sbr.rel (0) target = $region17
    $region16: #{text_birnn_forward.1} parent=1 // pred_region
      _
    $region17: #{text_birnn_forward.1} parent=1 // pred_fallthru
      _
    // Predicated region
    $region18: #{text_birnn_forward.1} parent=1 // pred_check
      _
    $region19: #{text_birnn_forward.1} parent=1 // pred_check_branch
      %41 = sbr.rel (0) target = $region21
    $region20: #{text_birnn_forward.1} parent=1 // pred_region
      %s43 = ssub.s32 8192, 8192
      %44 = vsyncadd [#allocation13], %s43
      %s45 = sshll.u32 [#allocation12], 4
      %s46 = int_to_ptr.vmem [resolvable:$true] %s45
      %51 = dma.hbm_to_vmem [thread:$0]  %s4, 8192, %s46, [#allocation13], 512, 512, 32
    $region21: #{text_birnn_forward.1} parent=1 // pred_fallthru
      _
    // Predicated region
    $region22: #{text_birnn_forward.1} parent=1 // pred_check
      _
    $region23: #{text_birnn_forward.1} parent=1 // pred_check_branch
      %53 = sbr.rel (0) target = $region25
    $region24: #{text_birnn_forward.1} parent=1 // pred_region
      _
    $region25: #{text_birnn_forward.1} parent=1 // pred_fallthru
      _
    // Predicated region
    $region26: #{text_birnn_forward.1} parent=1 // pred_check
      _
    $region27: #{text_birnn_forward.1} parent=1 // pred_check_branch
      %55 = sbr.rel (0) target = $region29
    $region28: #{text_birnn_forward.1} parent=1 // pred_region
      _
    $region29: #{text_birnn_forward.1} parent=1 // pred_fallthru
      _
    // Predicated region
    $region30: #{text_birnn_forward.1} parent=1 // pred_check
      _
    $region31: #{text_birnn_forward.1} parent=1 // pred_check_branch
      %57 = sbr.rel (0) target = $region33
    $region32: #{text_birnn_forward.1} parent=1 // pred_region
      _
    $region33: #{text_birnn_forward.1} parent=1 // pred_fallthru
      _
    // Predicated region
    $region34: #{text_birnn_forward.1} parent=1 // pred_check
      _
    $region35: #{text_birnn_forward.1} parent=1 // pred_check_branch
      %59 = sbr.rel (0) target = $region37
    $region36: #{text_birnn_forward.1} parent=1 // pred_region
      _
    $region37: #{text_birnn_forward.1} parent=1 // pred_fallthru
      _
    // Predicated region
    $region38: #{text_birnn_forward.1} parent=1 // pred_check
      _
    $region39: #{text_birnn_forward.1} parent=1 // pred_check_branch
      %61 = sbr.rel (0) target = $region41
    $region40: #{text_birnn_forward.1} parent=1 // pred_region
      _
    $region41: #{text_birnn_forward.1} parent=1 // pred_fallthru
      _
    // Predicated region
    $region42: #{text_birnn_forward.1} parent=1 // pred_check
      _
    $region43: #{text_birnn_forward.1} parent=1 // pred_check_branch
      %63 = sbr.rel (0) target = $region45
    $region44: #{text_birnn_forward.1} parent=1 // pred_region
      _
    $region45: #{text_birnn_forward.1} parent=1 // pred_fallthru
      _
    // Predicated region
    $region46: #{text_birnn_forward.1} parent=1 // pred_check
      _
    $region47: #{text_birnn_forward.1} parent=1 // pred_check_branch
      %65 = sbr.rel (0) target = $region49
    $region48: #{text_birnn_forward.1} parent=1 // pred_region
      %66 = dma.done [#allocation11], 2048
    $region49: #{text_birnn_forward.1} parent=1 // pred_fallthru
      _
    // Predicated region
    $region50: #{text_birnn_forward.1} parent=1 // pred_check
      _
    $region51: #{text_birnn_forward.1} parent=1 // pred_check_branch
      %68 = sbr.rel (0) target = $region53
    $region52: #{text_birnn_forward.1} parent=1 // pred_region
      %69 = dma.done [#allocation13], 8192
    $region53: #{text_birnn_forward.1} parent=1 // pred_fallthru
      _
    // Predicated region
    $region54: #{text_birnn_forward.1} parent=1 // pred_check
      _
    $region55: #{text_birnn_forward.1} parent=1 // pred_check_branch
      %71 = sbr.rel target = $region57
    $region56: #{text_birnn_forward.1} parent=1 // pred_region
      %72 = sst [smem:[#allocation16]] [#allocation15]
      %73 = sst [smem:[#allocation17]] [#allocation14]
    $region57: #{text_birnn_forward.1} parent=1 // pred_fallthru
      _
    %75 = shalt.err (0)
    %s77 = sshll.u32 [#allocation5], 4
    %s78 = int_to_ptr.vmem [resolvable:$true] %s77
    %80 = dma.hbm_to_vmem [thread:$0]  %s7, 16384, %s78, [#allocation9]
    %s81 = scalar_lea.sflag [#allocation9], 1
    // Predicated region
    $region58: #{text_birnn_forward.1} parent=1 // pred_check
      _
    $region59: #{text_birnn_forward.1} parent=1 // pred_check_branch
      %83 = sbr.rel target = $region61
    $region60: #{text_birnn_forward.1} parent=1 // pred_region
      %84 = sst [smem:[#allocation16]] [#allocation19]
      %85 = sst [smem:[#allocation17]] [#allocation18]
    $region61: #{text_birnn_forward.1} parent=1 // pred_fallthru
      _
    %87 = shalt.err (0)
    %s89 = sshll.u32 [#allocation6], 4
    %s90 = int_to_ptr.vmem [resolvable:$true] %s89
    %92 = dma.hbm_to_vmem [thread:$0]  %s8, 16384, %s90, %s81
    %s93 = scalar_lea.sflag [#allocation9], 2
    // Predicated region
    $region62: #{text_birnn_forward.1} parent=1 // pred_check
      _
    $region63: #{text_birnn_forward.1} parent=1 // pred_check_branch
      %95 = sbr.rel target = $region65
    $region64: #{text_birnn_forward.1} parent=1 // pred_region
      %96 = sst [smem:[#allocation16]] [#allocation21]
      %97 = sst [smem:[#allocation17]] [#allocation20]
    $region65: #{text_birnn_forward.1} parent=1 // pred_fallthru
      _
    %99 = shalt.err (0)
    %s101 = sshll.u32 [#allocation7], 4
    %s102 = int_to_ptr.vmem [resolvable:$true] %s101
    %104 = dma.hbm_to_vmem [thread:$0]  %s9, 8192, %s102, %s93
    %s105 = scalar_lea.sflag [#allocation9], 3
    // Predicated region
    $region66: #{text_birnn_forward.1} parent=1 // pred_check
      _
    $region67: #{text_birnn_forward.1} parent=1 // pred_check_branch
      %107 = sbr.rel target = $region69
    $region68: #{text_birnn_forward.1} parent=1 // pred_region
      %108 = sst [smem:[#allocation16]] [#allocation23]
      %109 = sst [smem:[#allocation17]] [#allocation22]
    $region69: #{text_birnn_forward.1} parent=1 // pred_fallthru
      _
    %111 = shalt.err (0)
    %s113 = sshll.u32 [#allocation8], 4
    %s114 = int_to_ptr.vmem [resolvable:$true] %s113
    %116 = dma.hbm_to_vmem [thread:$0]  %s10, 8192, %s114, %s105
    %v117 = vld [vmem:[%s0] sm:$0xff]
    %v118 = vld [vmem:[%s0 + $0x8] sm:$0xff]
    %v119 = vld [vmem:[%s0 + $0x10] sm:$0xff]
    %v120 = vld [vmem:[%s0 + $0x18] sm:$0xff]
    %v121 = vld [vmem:[%s0 + $0x20] sm:$0xff]
    %v122 = vld [vmem:[%s0 + $0x28] sm:$0xff]
    %v123 = vld [vmem:[%s0 + $0x30] sm:$0xff]
    %v124 = vld [vmem:[%s0 + $0x38] sm:$0xff]
    %v125 = vld [vmem:[%s1] sm:$0xff]
    %v126 = vld [vmem:[%s1 + $0x8] sm:$0xff]
    %v127 = vld [vmem:[%s1 + $0x10] sm:$0xff]
    %v128 = vld [vmem:[%s1 + $0x18] sm:$0xff]
    %v129 = vld [vmem:[%s1 + $0x20] sm:$0xff]
    %v130 = vld [vmem:[%s1 + $0x28] sm:$0xff]
    %v131 = vld [vmem:[%s1 + $0x30] sm:$0xff]
    %v132 = vld [vmem:[%s1 + $0x38] sm:$0xff]
    %v133 = vld [vmem:[%s1 + $0x40] sm:$0xff]
    %v134 = vld [vmem:[%s1 + $0x48] sm:$0xff]
    %v135 = vld [vmem:[%s1 + $0x50] sm:$0xff]
    %v136 = vld [vmem:[%s1 + $0x58] sm:$0xff]
    %v137 = vld [vmem:[%s1 + $0x60] sm:$0xff]
    %v138 = vld [vmem:[%s1 + $0x68] sm:$0xff]
    %v139 = vld [vmem:[%s1 + $0x70] sm:$0xff]
    %v140 = vld [vmem:[%s1 + $0x78] sm:$0xff]
    %v141 = vld [vmem:[%s5] sm:$0xf]
    %v143 = vlaneseq
    %v144 = vshrl.u32 %v143, 7
    %v145 = vsub.s32 0, %v144
    %v146 = vrot.slane %v141, %v145
    %v147 = vlaneseq
    %v148 = vshrl.u32 %v147, 7
    %v149 = vsub.s32 1, %v148
    %v150 = vrot.slane %v141, %v149
    %v151 = vlaneseq
    %v152 = vshrl.u32 %v151, 7
    %v153 = vsub.s32 2, %v152
    %v154 = vrot.slane %v141, %v153
    %v155 = vlaneseq
    %v156 = vshrl.u32 %v155, 7
    %v157 = vsub.s32 3, %v156
    %v158 = vrot.slane %v141, %v157
    %vm163 = vcmask 261120
    %v165 = vsel %vm163, %v117, 0
    %v168 = vsel %vm163, %v118, 0
    %v171 = vsel %vm163, %v119, 0
    %v174 = vsel %vm163, %v120, 0
    %v177 = vsel %vm163, %v121, 0
    %v180 = vsel %vm163, %v122, 0
    %v183 = vsel %vm163, %v123, 0
    %v186 = vsel %vm163, %v124, 0
    %188 = vmatprep.subr.mxu0 0.0
    %189 = vmatpush1.msra.mxu0 0.0
    %190 = vmatprep.subr.mxu0 0.0
    %191 = vmatpush1.msra.mxu0 0.0
    %192 = vmatprep.subr.mxu0 0.0
    %193 = vmatpush1.msra.mxu0 0.0
    %194 = vmatprep.subr.mxu0 0.0
    %195 = vmatpush1.msra.mxu0 0.0
    %196 = vmatprep.subr.mxu0 0.0
    %197 = vmatpush1.msra.mxu0 0.0
    %198 = vmatprep.subr.mxu0 0.0
    %199 = vmatpush1.msra.mxu0 0.0
    %200 = vmatprep.subr.mxu0 0.0
    %201 = vmatpush1.msra.mxu0 0.0
    %202 = vmatprep.subr.mxu0 0.0
    %203 = vmatpush1.msra.mxu0 0.0
    %204 = vmatprep.subr.mxu0 0.0
    %205 = vmatpush1.msra.mxu0 0.0
    %206 = vmatprep.subr.mxu0 0.0
    %207 = vmatpush1.msra.mxu0 0.0
    %208 = vmatprep.subr.mxu0 0.0
    %209 = vmatpush1.msra.mxu0 0.0
    %210 = vmatprep.subr.mxu0 0.0
    %211 = vmatpush1.msra.mxu0 0.0
    %212 = vmatprep.subr.mxu0 %v138
    %213 = vmatpush1.msra.mxu0 %v137
    %214 = vmatprep.subr.mxu0 %v134
    %215 = vmatpush1.msra.mxu0 %v133
    %216 = vmatprep.subr.mxu0 %v130
    %217 = vmatpush1.msra.mxu0 %v129
    %218 = vmatprep.subr.mxu0 %v126
    %219 = vmatpush1.msra.mxu0 %v125
    %220 = vmatprep.subr.mxu0 0.0
    %221 = vmatpush2.msra.mxu0 0.0
    %222 = vmatprep.subr.mxu0 0.0
    %223 = vmatpush2.msra.mxu0 0.0
    %224 = vmatprep.subr.mxu0 0.0
    %225 = vmatpush2.msra.mxu0 0.0
    %226 = vmatprep.subr.mxu0 0.0
    %227 = vmatpush2.msra.mxu0 0.0
    %228 = vmatprep.subr.mxu0 0.0
    %229 = vmatpush2.msra.mxu0 0.0
    %230 = vmatprep.subr.mxu0 0.0
    %231 = vmatpush2.msra.mxu0 0.0
    %232 = vmatprep.subr.mxu0 0.0
    %233 = vmatpush2.msra.mxu0 0.0
    %234 = vmatprep.subr.mxu0 0.0
    %235 = vmatpush2.msra.mxu0 0.0
    %236 = vmatprep.subr.mxu0 0.0
    %237 = vmatpush2.msra.mxu0 0.0
    %238 = vmatprep.subr.mxu0 0.0
    %239 = vmatpush2.msra.mxu0 0.0
    %240 = vmatprep.subr.mxu0 0.0
    %241 = vmatpush2.msra.mxu0 0.0
    %242 = vmatprep.subr.mxu0 0.0
    %243 = vmatpush2.msra.mxu0 0.0
    %244 = vmatprep.subr.mxu0 0.0
    %245 = vmatpush2.msra.mxu0 0.0
    %246 = vmatprep.subr.mxu0 0.0
    %247 = vmatpush2.msra.mxu0 0.0
    %248 = vmatprep.subr.mxu0 0.0
    %249 = vmatpush2.msra.mxu0 0.0
    %250 = vmatprep.subr.mxu0 0.0
    %251 = vmatpush2.msra.mxu0 0.0
    %252 = vmatprep.mubr.f32.mxu0 0.0
    %253 = vmatmul.mubr.f32.gmra.mxu0 %v165
    %v254 = vpop.f32.mrf.mxu0
    %v255 = vadd.f32 %v146, %v254
    %v256 = vpop.f32.mrf.mxu0
    %v257 = vadd.f32 %v150, %v256
    %258 = vmatprep.mubr.f32.mxu0 0.0
    %259 = vmatmul.mubr.f32.gmra.mxu0 %v168
    %v260 = vpop.f32.mrf.mxu0
    %v261 = vadd.f32 %v146, %v260
    %v262 = vpop.f32.mrf.mxu0
    %v263 = vadd.f32 %v150, %v262
    %264 = vmatprep.mubr.f32.mxu0 0.0
    %265 = vmatmul.mubr.f32.gmra.mxu0 %v171
    %v266 = vpop.f32.mrf.mxu0
    %v267 = vadd.f32 %v146, %v266
    %v268 = vpop.f32.mrf.mxu0
    %v269 = vadd.f32 %v150, %v268
    %270 = vmatprep.mubr.f32.mxu0 0.0
    %271 = vmatmul.mubr.f32.gmra.mxu0 %v174
    %v272 = vpop.f32.mrf.mxu0
    %v273 = vadd.f32 %v146, %v272
    %v274 = vpop.f32.mrf.mxu0
    %v275 = vadd.f32 %v150, %v274
    %276 = vmatprep.mubr.f32.mxu0 0.0
    %277 = vmatmul.mubr.f32.gmra.mxu0 %v177
    %v278 = vpop.f32.mrf.mxu0
    %v279 = vadd.f32 %v146, %v278
    %v280 = vpop.f32.mrf.mxu0
    %v281 = vadd.f32 %v150, %v280
    %282 = vmatprep.mubr.f32.mxu0 0.0
    %283 = vmatmul.mubr.f32.gmra.mxu0 %v180
    %v284 = vpop.f32.mrf.mxu0
    %v285 = vadd.f32 %v146, %v284
    %v286 = vpop.f32.mrf.mxu0
    %v287 = vadd.f32 %v150, %v286
    %288 = vmatprep.mubr.f32.mxu0 0.0
    %289 = vmatmul.mubr.f32.gmra.mxu0 %v183
    %v290 = vpop.f32.mrf.mxu0
    %v291 = vadd.f32 %v146, %v290
    %v292 = vpop.f32.mrf.mxu0
    %v293 = vadd.f32 %v150, %v292
    %294 = vmatprep.mubr.f32.mxu0 0.0
    %295 = vmatmul.mubr.f32.gmra.mxu0 %v186
    %v296 = vpop.f32.mrf.mxu0
    %v297 = vadd.f32 %v146, %v296
    %v298 = vpop.f32.mrf.mxu0
    %v299 = vadd.f32 %v150, %v298
    %300 = vdwg.mxu0
    %301 = vmatprep.subr.mxu0 0.0
    %302 = vmatpush1.msra.mxu0 0.0
    %303 = vmatprep.subr.mxu0 0.0
    %304 = vmatpush1.msra.mxu0 0.0
    %305 = vmatprep.subr.mxu0 0.0
    %306 = vmatpush1.msra.mxu0 0.0
    %307 = vmatprep.subr.mxu0 0.0
    %308 = vmatpush1.msra.mxu0 0.0
    %309 = vmatprep.subr.mxu0 0.0
    %310 = vmatpush1.msra.mxu0 0.0
    %311 = vmatprep.subr.mxu0 0.0
    %312 = vmatpush1.msra.mxu0 0.0
    %313 = vmatprep.subr.mxu0 0.0
    %314 = vmatpush1.msra.mxu0 0.0
    %315 = vmatprep.subr.mxu0 0.0
    %316 = vmatpush1.msra.mxu0 0.0
    %317 = vmatprep.subr.mxu0 0.0
    %318 = vmatpush1.msra.mxu0 0.0
    %319 = vmatprep.subr.mxu0 0.0
    %320 = vmatpush1.msra.mxu0 0.0
    %321 = vmatprep.subr.mxu0 0.0
    %322 = vmatpush1.msra.mxu0 0.0
    %323 = vmatprep.subr.mxu0 0.0
    %324 = vmatpush1.msra.mxu0 0.0
    %325 = vmatprep.subr.mxu0 %v140
    %326 = vmatpush1.msra.mxu0 %v139
    %327 = vmatprep.subr.mxu0 %v136
    %328 = vmatpush1.msra.mxu0 %v135
    %329 = vmatprep.subr.mxu0 %v132
    %330 = vmatpush1.msra.mxu0 %v131
    %331 = vmatprep.subr.mxu0 %v128
    %332 = vmatpush1.msra.mxu0 %v127
    %333 = vmatprep.subr.mxu0 0.0
    %334 = vmatpush2.msra.mxu0 0.0
    %335 = vmatprep.subr.mxu0 0.0
    %336 = vmatpush2.msra.mxu0 0.0
    %337 = vmatprep.subr.mxu0 0.0
    %338 = vmatpush2.msra.mxu0 0.0
    %339 = vmatprep.subr.mxu0 0.0
    %340 = vmatpush2.msra.mxu0 0.0
    %341 = vmatprep.subr.mxu0 0.0
    %342 = vmatpush2.msra.mxu0 0.0
    %343 = vmatprep.subr.mxu0 0.0
    %344 = vmatpush2.msra.mxu0 0.0
    %345 = vmatprep.subr.mxu0 0.0
    %346 = vmatpush2.msra.mxu0 0.0
    %347 = vmatprep.subr.mxu0 0.0
    %348 = vmatpush2.msra.mxu0 0.0
    %349 = vmatprep.subr.mxu0 0.0
    %350 = vmatpush2.msra.mxu0 0.0
    %351 = vmatprep.subr.mxu0 0.0
    %352 = vmatpush2.msra.mxu0 0.0
    %353 = vmatprep.subr.mxu0 0.0
    %354 = vmatpush2.msra.mxu0 0.0
    %355 = vmatprep.subr.mxu0 0.0
    %356 = vmatpush2.msra.mxu0 0.0
    %357 = vmatprep.subr.mxu0 0.0
    %358 = vmatpush2.msra.mxu0 0.0
    %359 = vmatprep.subr.mxu0 0.0
    %360 = vmatpush2.msra.mxu0 0.0
    %361 = vmatprep.subr.mxu0 0.0
    %362 = vmatpush2.msra.mxu0 0.0
    %363 = vmatprep.subr.mxu0 0.0
    %364 = vmatpush2.msra.mxu0 0.0
    %365 = vmatprep.mubr.f32.mxu0 0.0
    %366 = vmatmul.mubr.f32.gmra.mxu0 %v165
    %v367 = vpop.f32.mrf.mxu0
    %v368 = vadd.f32 %v154, %v367
    %v369 = vpop.f32.mrf.mxu0
    %v370 = vadd.f32 %v158, %v369
    %371 = vmatprep.mubr.f32.mxu0 0.0
    %372 = vmatmul.mubr.f32.gmra.mxu0 %v168
    %v373 = vpop.f32.mrf.mxu0
    %v374 = vadd.f32 %v154, %v373
    %v375 = vpop.f32.mrf.mxu0
    %v376 = vadd.f32 %v158, %v375
    %377 = vmatprep.mubr.f32.mxu0 0.0
    %378 = vmatmul.mubr.f32.gmra.mxu0 %v171
    %v379 = vpop.f32.mrf.mxu0
    %v380 = vadd.f32 %v154, %v379
    %v381 = vpop.f32.mrf.mxu0
    %v382 = vadd.f32 %v158, %v381
    %383 = vmatprep.mubr.f32.mxu0 0.0
    %384 = vmatmul.mubr.f32.gmra.mxu0 %v174
    %v385 = vpop.f32.mrf.mxu0
    %v386 = vadd.f32 %v154, %v385
    %v387 = vpop.f32.mrf.mxu0
    %v388 = vadd.f32 %v158, %v387
    %389 = vmatprep.mubr.f32.mxu0 0.0
    %390 = vmatmul.mubr.f32.gmra.mxu0 %v177
    %v391 = vpop.f32.mrf.mxu0
    %v392 = vadd.f32 %v154, %v391
    %v393 = vpop.f32.mrf.mxu0
    %v394 = vadd.f32 %v158, %v393
    %395 = vmatprep.mubr.f32.mxu0 0.0
    %396 = vmatmul.mubr.f32.gmra.mxu0 %v180
    %v397 = vpop.f32.mrf.mxu0
    %v398 = vadd.f32 %v154, %v397
    %v399 = vpop.f32.mrf.mxu0
    %v400 = vadd.f32 %v158, %v399
    %401 = vmatprep.mubr.f32.mxu0 0.0
    %402 = vmatmul.mubr.f32.gmra.mxu0 %v183
    %v403 = vpop.f32.mrf.mxu0
    %v404 = vadd.f32 %v154, %v403
    %v405 = vpop.f32.mrf.mxu0
    %v406 = vadd.f32 %v158, %v405
    %407 = vmatprep.mubr.f32.mxu0 0.0
    %408 = vmatmul.mubr.f32.gmra.mxu0 %v186
    %v409 = vpop.f32.mrf.mxu0
    %v410 = vadd.f32 %v154, %v409
    %v411 = vpop.f32.mrf.mxu0
    %v412 = vadd.f32 %v158, %v411
    %413 = vdwg.mxu0
    %414 = vst [vmem:[#allocation2] sm:$0xff] %v255
    %415 = vst [vmem:[#allocation2 + $0x8] sm:$0xff] %v257
    %416 = vst [vmem:[#allocation2 + $0x10] sm:$0xff] %v368
    %417 = vst [vmem:[#allocation2 + $0x18] sm:$0xff] %v370
    %418 = vst [vmem:[#allocation2 + $0x20] sm:$0xff] %v261
    %419 = vst [vmem:[#allocation2 + $0x28] sm:$0xff] %v263
    %420 = vst [vmem:[#allocation2 + $0x30] sm:$0xff] %v374
    %421 = vst [vmem:[#allocation2 + $0x38] sm:$0xff] %v376
    %422 = vst [vmem:[#allocation2 + $0x40] sm:$0xff] %v267
    %423 = vst [vmem:[#allocation2 + $0x48] sm:$0xff] %v269
    %424 = vst [vmem:[#allocation2 + $0x50] sm:$0xff] %v380
    %425 = vst [vmem:[#allocation2 + $0x58] sm:$0xff] %v382
    %426 = vst [vmem:[#allocation2 + $0x60] sm:$0xff] %v273
    %427 = vst [vmem:[#allocation2 + $0x68] sm:$0xff] %v275
    %428 = vst [vmem:[#allocation2 + $0x70] sm:$0xff] %v386
    %429 = vst [vmem:[#allocation2 + $0x78] sm:$0xff] %v388
    %430 = vst [vmem:[#allocation2 + $0x80] sm:$0xff] %v279
    %431 = vst [vmem:[#allocation2 + $0x88] sm:$0xff] %v281
    %432 = vst [vmem:[#allocation2 + $0x90] sm:$0xff] %v392
    %433 = vst [vmem:[#allocation2 + $0x98] sm:$0xff] %v394
    %434 = vst [vmem:[#allocation2 + $0xa0] sm:$0xff] %v285
    %435 = vst [vmem:[#allocation2 + $0xa8] sm:$0xff] %v287
    %436 = vst [vmem:[#allocation2 + $0xb0] sm:$0xff] %v398
    %437 = vst [vmem:[#allocation2 + $0xb8] sm:$0xff] %v400
    %438 = vst [vmem:[#allocation2 + $0xc0] sm:$0xff] %v291
    %439 = vst [vmem:[#allocation2 + $0xc8] sm:$0xff] %v293
    %440 = vst [vmem:[#allocation2 + $0xd0] sm:$0xff] %v404
    %441 = vst [vmem:[#allocation2 + $0xd8] sm:$0xff] %v406
    %442 = vst [vmem:[#allocation2 + $0xe0] sm:$0xff] %v297
    %443 = vst [vmem:[#allocation2 + $0xe8] sm:$0xff] %v299
    %444 = vst [vmem:[#allocation2 + $0xf0] sm:$0xff] %v410
    %445 = vst [vmem:[#allocation2 + $0xf8] sm:$0xff] %v412
    %v446 = vld [vmem:[#allocation10] sm:$0xff]
    %v447 = vld [vmem:[#allocation10 + $0x8] sm:$0xff]
    %v448 = vld [vmem:[#allocation10 + $0x10] sm:$0xff]
    %v449 = vld [vmem:[#allocation10 + $0x18] sm:$0xff]
    %v450 = vld [vmem:[#allocation10 + $0x20] sm:$0xff]
    %v451 = vld [vmem:[#allocation10 + $0x28] sm:$0xff]
    %v452 = vld [vmem:[#allocation10 + $0x30] sm:$0xff]
    %v453 = vld [vmem:[#allocation10 + $0x38] sm:$0xff]
    %v454 = vld [vmem:[#allocation10 + $0x40] sm:$0xff]
    %v455 = vld [vmem:[#allocation10 + $0x48] sm:$0xff]
    %v456 = vld [vmem:[#allocation10 + $0x50] sm:$0xff]
    %v457 = vld [vmem:[#allocation10 + $0x58] sm:$0xff]
    %v458 = vld [vmem:[#allocation10 + $0x60] sm:$0xff]
    %v459 = vld [vmem:[#allocation10 + $0x68] sm:$0xff]
    %v460 = vld [vmem:[#allocation10 + $0x70] sm:$0xff]
    %v461 = vld [vmem:[#allocation10 + $0x78] sm:$0xff]
    %v462 = vld [vmem:[%s6] sm:$0xf]
    %v464 = vlaneseq
    %v465 = vshrl.u32 %v464, 7
    %v466 = vsub.s32 0, %v465
    %v467 = vrot.slane %v462, %v466
    %v468 = vlaneseq
    %v469 = vshrl.u32 %v468, 7
    %v470 = vsub.s32 1, %v469
    %v471 = vrot.slane %v462, %v470
    %v472 = vlaneseq
    %v473 = vshrl.u32 %v472, 7
    %v474 = vsub.s32 2, %v473
    %v475 = vrot.slane %v462, %v474
    %v476 = vlaneseq
    %v477 = vshrl.u32 %v476, 7
    %v478 = vsub.s32 3, %v477
    %v479 = vrot.slane %v462, %v478
    %484 = vmatprep.subr.mxu0 0.0
    %485 = vmatpush1.msra.mxu0 0.0
    %486 = vmatprep.subr.mxu0 0.0
    %487 = vmatpush1.msra.mxu0 0.0
    %488 = vmatprep.subr.mxu0 0.0
    %489 = vmatpush1.msra.mxu0 0.0
    %490 = vmatprep.subr.mxu0 0.0
    %491 = vmatpush1.msra.mxu0 0.0
    %492 = vmatprep.subr.mxu0 0.0
    %493 = vmatpush1.msra.mxu0 0.0
    %494 = vmatprep.subr.mxu0 0.0
    %495 = vmatpush1.msra.mxu0 0.0
    %496 = vmatprep.subr.mxu0 0.0
    %497 = vmatpush1.msra.mxu0 0.0
    %498 = vmatprep.subr.mxu0 0.0
    %499 = vmatpush1.msra.mxu0 0.0
    %500 = vmatprep.subr.mxu0 0.0
    %501 = vmatpush1.msra.mxu0 0.0
    %502 = vmatprep.subr.mxu0 0.0
    %503 = vmatpush1.msra.mxu0 0.0
    %504 = vmatprep.subr.mxu0 0.0
    %505 = vmatpush1.msra.mxu0 0.0
    %506 = vmatprep.subr.mxu0 0.0
    %507 = vmatpush1.msra.mxu0 0.0
    %508 = vmatprep.subr.mxu0 %v459
    %509 = vmatpush1.msra.mxu0 %v458
    %510 = vmatprep.subr.mxu0 %v455
    %511 = vmatpush1.msra.mxu0 %v454
    %512 = vmatprep.subr.mxu0 %v451
    %513 = vmatpush1.msra.mxu0 %v450
    %514 = vmatprep.subr.mxu0 %v447
    %515 = vmatpush1.msra.mxu0 %v446
    %516 = vmatprep.subr.mxu0 0.0
    %517 = vmatpush2.msra.mxu0 0.0
    %518 = vmatprep.subr.mxu0 0.0
    %519 = vmatpush2.msra.mxu0 0.0
    %520 = vmatprep.subr.mxu0 0.0
    %521 = vmatpush2.msra.mxu0 0.0
    %522 = vmatprep.subr.mxu0 0.0
    %523 = vmatpush2.msra.mxu0 0.0
    %524 = vmatprep.subr.mxu0 0.0
    %525 = vmatpush2.msra.mxu0 0.0
    %526 = vmatprep.subr.mxu0 0.0
    %527 = vmatpush2.msra.mxu0 0.0
    %528 = vmatprep.subr.mxu0 0.0
    %529 = vmatpush2.msra.mxu0 0.0
    %530 = vmatprep.subr.mxu0 0.0
    %531 = vmatpush2.msra.mxu0 0.0
    %532 = vmatprep.subr.mxu0 0.0
    %533 = vmatpush2.msra.mxu0 0.0
    %534 = vmatprep.subr.mxu0 0.0
    %535 = vmatpush2.msra.mxu0 0.0
    %536 = vmatprep.subr.mxu0 0.0
    %537 = vmatpush2.msra.mxu0 0.0
    %538 = vmatprep.subr.mxu0 0.0
    %539 = vmatpush2.msra.mxu0 0.0
    %540 = vmatprep.subr.mxu0 0.0
    %541 = vmatpush2.msra.mxu0 0.0
    %542 = vmatprep.subr.mxu0 0.0
    %543 = vmatpush2.msra.mxu0 0.0
    %544 = vmatprep.subr.mxu0 0.0
    %545 = vmatpush2.msra.mxu0 0.0
    %546 = vmatprep.subr.mxu0 0.0
    %547 = vmatpush2.msra.mxu0 0.0
    %548 = vmatprep.mubr.f32.mxu0 0.0
    %549 = vmatmul.mubr.f32.gmra.mxu0 %v165
    %v550 = vpop.f32.mrf.mxu0
    %v551 = vadd.f32 %v467, %v550
    %v552 = vpop.f32.mrf.mxu0
    %v553 = vadd.f32 %v471, %v552
    %554 = vmatprep.mubr.f32.mxu0 0.0
    %555 = vmatmul.mubr.f32.gmra.mxu0 %v168
    %v556 = vpop.f32.mrf.mxu0
    %v557 = vadd.f32 %v467, %v556
    %v558 = vpop.f32.mrf.mxu0
    %v559 = vadd.f32 %v471, %v558
    %560 = vmatprep.mubr.f32.mxu0 0.0
    %561 = vmatmul.mubr.f32.gmra.mxu0 %v171
    %v562 = vpop.f32.mrf.mxu0
    %v563 = vadd.f32 %v467, %v562
    %v564 = vpop.f32.mrf.mxu0
    %v565 = vadd.f32 %v471, %v564
    %566 = vmatprep.mubr.f32.mxu0 0.0
    %567 = vmatmul.mubr.f32.gmra.mxu0 %v174
    %v568 = vpop.f32.mrf.mxu0
    %v569 = vadd.f32 %v467, %v568
    %v570 = vpop.f32.mrf.mxu0
    %v571 = vadd.f32 %v471, %v570
    %572 = vmatprep.mubr.f32.mxu0 0.0
    %573 = vmatmul.mubr.f32.gmra.mxu0 %v177
    %v574 = vpop.f32.mrf.mxu0
    %v575 = vadd.f32 %v467, %v574
    %v576 = vpop.f32.mrf.mxu0
    %v577 = vadd.f32 %v471, %v576
    %578 = vmatprep.mubr.f32.mxu0 0.0
    %579 = vmatmul.mubr.f32.gmra.mxu0 %v180
    %v580 = vpop.f32.mrf.mxu0
    %v581 = vadd.f32 %v467, %v580
    %v582 = vpop.f32.mrf.mxu0
    %v583 = vadd.f32 %v471, %v582
    %584 = vmatprep.mubr.f32.mxu0 0.0
    %585 = vmatmul.mubr.f32.gmra.mxu0 %v183
    %v586 = vpop.f32.mrf.mxu0
    %v587 = vadd.f32 %v467, %v586
    %v588 = vpop.f32.mrf.mxu0
    %v589 = vadd.f32 %v471, %v588
    %590 = vmatprep.mubr.f32.mxu0 0.0
    %591 = vmatmul.mubr.f32.gmra.mxu0 %v186
    %v592 = vpop.f32.mrf.mxu0
    %v593 = vadd.f32 %v467, %v592
    %v594 = vpop.f32.mrf.mxu0
    %v595 = vadd.f32 %v471, %v594
    %596 = vdwg.mxu0
    %597 = vmatprep.subr.mxu0 0.0
    %598 = vmatpush1.msra.mxu0 0.0
    %599 = vmatprep.subr.mxu0 0.0
    %600 = vmatpush1.msra.mxu0 0.0
    %601 = vmatprep.subr.mxu0 0.0
    %602 = vmatpush1.msra.mxu0 0.0
    %603 = vmatprep.subr.mxu0 0.0
    %604 = vmatpush1.msra.mxu0 0.0
    %605 = vmatprep.subr.mxu0 0.0
    %606 = vmatpush1.msra.mxu0 0.0
    %607 = vmatprep.subr.mxu0 0.0
    %608 = vmatpush1.msra.mxu0 0.0
    %609 = vmatprep.subr.mxu0 0.0
    %610 = vmatpush1.msra.mxu0 0.0
    %611 = vmatprep.subr.mxu0 0.0
    %612 = vmatpush1.msra.mxu0 0.0
    %613 = vmatprep.subr.mxu0 0.0
    %614 = vmatpush1.msra.mxu0 0.0
    %615 = vmatprep.subr.mxu0 0.0
    %616 = vmatpush1.msra.mxu0 0.0
    %617 = vmatprep.subr.mxu0 0.0
    %618 = vmatpush1.msra.mxu0 0.0
    %619 = vmatprep.subr.mxu0 0.0
    %620 = vmatpush1.msra.mxu0 0.0
    %621 = vmatprep.subr.mxu0 %v461
    %622 = vmatpush1.msra.mxu0 %v460
    %623 = vmatprep.subr.mxu0 %v457
    %624 = vmatpush1.msra.mxu0 %v456
    %625 = vmatprep.subr.mxu0 %v453
    %626 = vmatpush1.msra.mxu0 %v452
    %627 = vmatprep.subr.mxu0 %v449
    %628 = vmatpush1.msra.mxu0 %v448
    %629 = vmatprep.subr.mxu0 0.0
    %630 = vmatpush2.msra.mxu0 0.0
    %631 = vmatprep.subr.mxu0 0.0
    %632 = vmatpush2.msra.mxu0 0.0
    %633 = vmatprep.subr.mxu0 0.0
    %634 = vmatpush2.msra.mxu0 0.0
    %635 = vmatprep.subr.mxu0 0.0
    %636 = vmatpush2.msra.mxu0 0.0
    %637 = vmatprep.subr.mxu0 0.0
    %638 = vmatpush2.msra.mxu0 0.0
    %639 = vmatprep.subr.mxu0 0.0
    %640 = vmatpush2.msra.mxu0 0.0
    %641 = vmatprep.subr.mxu0 0.0
    %642 = vmatpush2.msra.mxu0 0.0
    %643 = vmatprep.subr.mxu0 0.0
    %644 = vmatpush2.msra.mxu0 0.0
    %645 = vmatprep.subr.mxu0 0.0
    %646 = vmatpush2.msra.mxu0 0.0
    %647 = vmatprep.subr.mxu0 0.0
    %648 = vmatpush2.msra.mxu0 0.0
    %649 = vmatprep.subr.mxu0 0.0
    %650 = vmatpush2.msra.mxu0 0.0
    %651 = vmatprep.subr.mxu0 0.0
    %652 = vmatpush2.msra.mxu0 0.0
    %653 = vmatprep.subr.mxu0 0.0
    %654 = vmatpush2.msra.mxu0 0.0
    %655 = vmatprep.subr.mxu0 0.0
    %656 = vmatpush2.msra.mxu0 0.0
    %657 = vmatprep.subr.mxu0 0.0
    %658 = vmatpush2.msra.mxu0 0.0
    %659 = vmatprep.subr.mxu0 0.0
    %660 = vmatpush2.msra.mxu0 0.0
    %661 = vmatprep.mubr.f32.mxu0 0.0
    %662 = vmatmul.mubr.f32.gmra.mxu0 %v165
    %v663 = vpop.f32.mrf.mxu0
    %v664 = vadd.f32 %v475, %v663
    %v665 = vpop.f32.mrf.mxu0
    %v666 = vadd.f32 %v479, %v665
    %667 = vmatprep.mubr.f32.mxu0 0.0
    %668 = vmatmul.mubr.f32.gmra.mxu0 %v168
    %v669 = vpop.f32.mrf.mxu0
    %v670 = vadd.f32 %v475, %v669
    %v671 = vpop.f32.mrf.mxu0
    %v672 = vadd.f32 %v479, %v671
    %673 = vmatprep.mubr.f32.mxu0 0.0
    %674 = vmatmul.mubr.f32.gmra.mxu0 %v171
    %v675 = vpop.f32.mrf.mxu0
    %v676 = vadd.f32 %v475, %v675
    %v677 = vpop.f32.mrf.mxu0
    %v678 = vadd.f32 %v479, %v677
    %679 = vmatprep.mubr.f32.mxu0 0.0
    %680 = vmatmul.mubr.f32.gmra.mxu0 %v174
    %v681 = vpop.f32.mrf.mxu0
    %v682 = vadd.f32 %v475, %v681
    %v683 = vpop.f32.mrf.mxu0
    %v684 = vadd.f32 %v479, %v683
    %685 = vmatprep.mubr.f32.mxu0 0.0
    %686 = vmatmul.mubr.f32.gmra.mxu0 %v177
    %v687 = vpop.f32.mrf.mxu0
    %v688 = vadd.f32 %v475, %v687
    %v689 = vpop.f32.mrf.mxu0
    %v690 = vadd.f32 %v479, %v689
    %691 = vmatprep.mubr.f32.mxu0 0.0
    %692 = vmatmul.mubr.f32.gmra.mxu0 %v180
    %v693 = vpop.f32.mrf.mxu0
    %v694 = vadd.f32 %v475, %v693
    %v695 = vpop.f32.mrf.mxu0
    %v696 = vadd.f32 %v479, %v695
    %697 = vmatprep.mubr.f32.mxu0 0.0
    %698 = vmatmul.mubr.f32.gmra.mxu0 %v183
    %v699 = vpop.f32.mrf.mxu0
    %v700 = vadd.f32 %v475, %v699
    %v701 = vpop.f32.mrf.mxu0
    %v702 = vadd.f32 %v479, %v701
    %703 = vmatprep.mubr.f32.mxu0 0.0
    %704 = vmatmul.mubr.f32.gmra.mxu0 %v186
    %v705 = vpop.f32.mrf.mxu0
    %v706 = vadd.f32 %v475, %v705
    %v707 = vpop.f32.mrf.mxu0
    %v708 = vadd.f32 %v479, %v707
    %709 = vdwg.mxu0
    %710 = vst [vmem:[#allocation3] sm:$0xff] %v551
    %711 = vst [vmem:[#allocation3 + $0x8] sm:$0xff] %v553
    %712 = vst [vmem:[#allocation3 + $0x10] sm:$0xff] %v664
    %713 = vst [vmem:[#allocation3 + $0x18] sm:$0xff] %v666
    %714 = vst [vmem:[#allocation3 + $0x20] sm:$0xff] %v557
    %715 = vst [vmem:[#allocation3 + $0x28] sm:$0xff] %v559
    %716 = vst [vmem:[#allocation3 + $0x30] sm:$0xff] %v670
    %717 = vst [vmem:[#allocation3 + $0x38] sm:$0xff] %v672
    %718 = vst [vmem:[#allocation3 + $0x40] sm:$0xff] %v563
    %719 = vst [vmem:[#allocation3 + $0x48] sm:$0xff] %v565
    %720 = vst [vmem:[#allocation3 + $0x50] sm:$0xff] %v676
    %721 = vst [vmem:[#allocation3 + $0x58] sm:$0xff] %v678
    %722 = vst [vmem:[#allocation3 + $0x60] sm:$0xff] %v569
    %723 = vst [vmem:[#allocation3 + $0x68] sm:$0xff] %v571
    %724 = vst [vmem:[#allocation3 + $0x70] sm:$0xff] %v682
    %725 = vst [vmem:[#allocation3 + $0x78] sm:$0xff] %v684
    %726 = vst [vmem:[#allocation3 + $0x80] sm:$0xff] %v575
    %727 = vst [vmem:[#allocation3 + $0x88] sm:$0xff] %v577
    %728 = vst [vmem:[#allocation3 + $0x90] sm:$0xff] %v688
    %729 = vst [vmem:[#allocation3 + $0x98] sm:$0xff] %v690
    %730 = vst [vmem:[#allocation3 + $0xa0] sm:$0xff] %v581
    %731 = vst [vmem:[#allocation3 + $0xa8] sm:$0xff] %v583
    %732 = vst [vmem:[#allocation3 + $0xb0] sm:$0xff] %v694
    %733 = vst [vmem:[#allocation3 + $0xb8] sm:$0xff] %v696
    %734 = vst [vmem:[#allocation3 + $0xc0] sm:$0xff] %v587
    %735 = vst [vmem:[#allocation3 + $0xc8] sm:$0xff] %v589
    %736 = vst [vmem:[#allocation3 + $0xd0] sm:$0xff] %v700
    %737 = vst [vmem:[#allocation3 + $0xd8] sm:$0xff] %v702
    %738 = vst [vmem:[#allocation3 + $0xe0] sm:$0xff] %v593
    %739 = vst [vmem:[#allocation3 + $0xe8] sm:$0xff] %v595
    %740 = vst [vmem:[#allocation3 + $0xf0] sm:$0xff] %v706
    %741 = vst [vmem:[#allocation3 + $0xf8] sm:$0xff] %v708
    %v742 = vld [vmem:[#allocation2] sm:$0xff]
    %v743 = vld [vmem:[#allocation2 + $0x8] sm:$0xff]
    %v744 = vld [vmem:[#allocation2 + $0x10] sm:$0xff]
    %v745 = vld [vmem:[#allocation2 + $0x18] sm:$0xff]
    %v746 = vld [vmem:[%s3] sm:$0xff]
    %v747 = vld [vmem:[%s3 + $0x8] sm:$0xff]
    %v748 = vld [vmem:[%s3 + $0x10] sm:$0xff]
    %v749 = vld [vmem:[%s3 + $0x18] sm:$0xff]
    %v750 = vld [vmem:[%s3 + $0x20] sm:$0xff]
    %v751 = vld [vmem:[%s3 + $0x28] sm:$0xff]
    %v752 = vld [vmem:[%s3 + $0x30] sm:$0xff]
    %v753 = vld [vmem:[%s3 + $0x38] sm:$0xff]
    %v754 = vld [vmem:[%s3 + $0x40] sm:$0xff]
    %v755 = vld [vmem:[%s3 + $0x48] sm:$0xff]
    %v756 = vld [vmem:[%s3 + $0x50] sm:$0xff]
    %v757 = vld [vmem:[%s3 + $0x58] sm:$0xff]
    %v758 = vld [vmem:[%s3 + $0x60] sm:$0xff]
    %v759 = vld [vmem:[%s3 + $0x68] sm:$0xff]
    %v760 = vld [vmem:[%s3 + $0x70] sm:$0xff]
    %v761 = vld [vmem:[%s3 + $0x78] sm:$0xff]
    %v762 = vld [vmem:[%s3 + $0x80] sm:$0xff]
    %v763 = vld [vmem:[%s3 + $0x88] sm:$0xff]
    %v764 = vld [vmem:[%s3 + $0x90] sm:$0xff]
    %v765 = vld [vmem:[%s3 + $0x98] sm:$0xff]
    %v766 = vld [vmem:[%s3 + $0xa0] sm:$0xff]
    %v767 = vld [vmem:[%s3 + $0xa8] sm:$0xff]
    %v768 = vld [vmem:[%s3 + $0xb0] sm:$0xff]
    %v769 = vld [vmem:[%s3 + $0xb8] sm:$0xff]
    %v770 = vld [vmem:[%s3 + $0xc0] sm:$0xff]
    %v771 = vld [vmem:[%s3 + $0xc8] sm:$0xff]
    %v772 = vld [vmem:[%s3 + $0xd0] sm:$0xff]
    %v773 = vld [vmem:[%s3 + $0xd8] sm:$0xff]
    %v774 = vld [vmem:[%s3 + $0xe0] sm:$0xff]
    %v775 = vld [vmem:[%s3 + $0xe8] sm:$0xff]
    %v776 = vld [vmem:[%s3 + $0xf0] sm:$0xff]
    %v777 = vld [vmem:[%s3 + $0xf8] sm:$0xff]
    %v778 = vld [vmem:[%s3 + $0x100] sm:$0xff]
    %v779 = vld [vmem:[%s3 + $0x108] sm:$0xff]
    %v780 = vld [vmem:[%s3 + $0x110] sm:$0xff]
    %v781 = vld [vmem:[%s3 + $0x118] sm:$0xff]
    %v782 = vld [vmem:[%s3 + $0x120] sm:$0xff]
    %v783 = vld [vmem:[%s3 + $0x128] sm:$0xff]
    %v784 = vld [vmem:[%s3 + $0x130] sm:$0xff]
    %v785 = vld [vmem:[%s3 + $0x138] sm:$0xff]
    %v786 = vld [vmem:[%s3 + $0x140] sm:$0xff]
    %v787 = vld [vmem:[%s3 + $0x148] sm:$0xff]
    %v788 = vld [vmem:[%s3 + $0x150] sm:$0xff]
    %v789 = vld [vmem:[%s3 + $0x158] sm:$0xff]
    %v790 = vld [vmem:[%s3 + $0x160] sm:$0xff]
    %v791 = vld [vmem:[%s3 + $0x168] sm:$0xff]
    %v792 = vld [vmem:[%s3 + $0x170] sm:$0xff]
    %v793 = vld [vmem:[%s3 + $0x178] sm:$0xff]
    %v794 = vld [vmem:[%s3 + $0x180] sm:$0xff]
    %v795 = vld [vmem:[%s3 + $0x188] sm:$0xff]
    %v796 = vld [vmem:[%s3 + $0x190] sm:$0xff]
    %v797 = vld [vmem:[%s3 + $0x198] sm:$0xff]
    %v798 = vld [vmem:[%s3 + $0x1a0] sm:$0xff]
    %v799 = vld [vmem:[%s3 + $0x1a8] sm:$0xff]
    %v800 = vld [vmem:[%s3 + $0x1b0] sm:$0xff]
    %v801 = vld [vmem:[%s3 + $0x1b8] sm:$0xff]
    %v802 = vld [vmem:[%s3 + $0x1c0] sm:$0xff]
    %v803 = vld [vmem:[%s3 + $0x1c8] sm:$0xff]
    %v804 = vld [vmem:[%s3 + $0x1d0] sm:$0xff]
    %v805 = vld [vmem:[%s3 + $0x1d8] sm:$0xff]
    %v806 = vld [vmem:[%s3 + $0x1e0] sm:$0xff]
    %v807 = vld [vmem:[%s3 + $0x1e8] sm:$0xff]
    %v808 = vld [vmem:[%s3 + $0x1f0] sm:$0xff]
    %v809 = vld [vmem:[%s3 + $0x1f8] sm:$0xff]
    %810 = vmatprep.subr.mxu0 %v807
    %811 = vmatpush1.msra.mxu0 %v806
    %812 = vmatprep.subr.mxu0 %v803
    %813 = vmatpush1.msra.mxu0 %v802
    %814 = vmatprep.subr.mxu0 %v799
    %815 = vmatpush1.msra.mxu0 %v798
    %816 = vmatprep.subr.mxu0 %v795
    %817 = vmatpush1.msra.mxu0 %v794
    %818 = vmatprep.subr.mxu0 %v791
    %819 = vmatpush1.msra.mxu0 %v790
    %820 = vmatprep.subr.mxu0 %v787
    %821 = vmatpush1.msra.mxu0 %v786
    %822 = vmatprep.subr.mxu0 %v783
    %823 = vmatpush1.msra.mxu0 %v782
    %824 = vmatprep.subr.mxu0 %v779
    %825 = vmatpush1.msra.mxu0 %v778
    %826 = vmatprep.subr.mxu0 %v775
    %827 = vmatpush1.msra.mxu0 %v774
    %828 = vmatprep.subr.mxu0 %v771
    %829 = vmatpush1.msra.mxu0 %v770
    %830 = vmatprep.subr.mxu0 %v767
    %831 = vmatpush1.msra.mxu0 %v766
    %832 = vmatprep.subr.mxu0 %v763
    %833 = vmatpush1.msra.mxu0 %v762
    %834 = vmatprep.subr.mxu0 %v759
    %835 = vmatpush1.msra.mxu0 %v758
    %836 = vmatprep.subr.mxu0 %v755
    %837 = vmatpush1.msra.mxu0 %v754
    %838 = vmatprep.subr.mxu0 %v751
    %839 = vmatpush1.msra.mxu0 %v750
    %840 = vmatprep.subr.mxu0 %v747
    %841 = vmatpush1.msra.mxu0 %v746
    %842 = vmatprep.subr.mxu0 0.0
    %843 = vmatpush2.msra.mxu0 0.0
    %844 = vmatprep.subr.mxu0 0.0
    %845 = vmatpush2.msra.mxu0 0.0
    %846 = vmatprep.subr.mxu0 0.0
    %847 = vmatpush2.msra.mxu0 0.0
    %848 = vmatprep.subr.mxu0 0.0
    %849 = vmatpush2.msra.mxu0 0.0
    %850 = vmatprep.subr.mxu0 0.0
    %851 = vmatpush2.msra.mxu0 0.0
    %852 = vmatprep.subr.mxu0 0.0
    %853 = vmatpush2.msra.mxu0 0.0
    %854 = vmatprep.subr.mxu0 0.0
    %855 = vmatpush2.msra.mxu0 0.0
    %856 = vmatprep.subr.mxu0 0.0
    %857 = vmatpush2.msra.mxu0 0.0
    %858 = vmatprep.subr.mxu0 0.0
    %859 = vmatpush2.msra.mxu0 0.0
    %860 = vmatprep.subr.mxu0 0.0
    %861 = vmatpush2.msra.mxu0 0.0
    %862 = vmatprep.subr.mxu0 0.0
    %863 = vmatpush2.msra.mxu0 0.0
    %864 = vmatprep.subr.mxu0 0.0
    %865 = vmatpush2.msra.mxu0 0.0
    %866 = vmatprep.subr.mxu0 0.0
    %867 = vmatpush2.msra.mxu0 0.0
    %868 = vmatprep.subr.mxu0 0.0
    %869 = vmatpush2.msra.mxu0 0.0
    %870 = vmatprep.subr.mxu0 0.0
    %871 = vmatpush2.msra.mxu0 0.0
    %872 = vmatprep.subr.mxu0 0.0
    %873 = vmatpush2.msra.mxu0 0.0
    %874 = vmatprep.mubr.f32.mxu0 0.0
    %875 = vmatmul.mubr.f32.gmra.mxu0 0.0
    %v876 = vpop.f32.mrf.mxu0
    %v877 = vadd.f32 0.0, %v876
    %v878 = vpop.f32.mrf.mxu0
    %v879 = vadd.f32 0.0, %v878
    %880 = vdwg.mxu0
    %881 = vmatprep.subr.mxu0 %v809
    %882 = vmatpush1.msra.mxu0 %v808
    %883 = vmatprep.subr.mxu0 %v805
    %884 = vmatpush1.msra.mxu0 %v804
    %885 = vmatprep.subr.mxu0 %v801
    %886 = vmatpush1.msra.mxu0 %v800
    %887 = vmatprep.subr.mxu0 %v797
    %888 = vmatpush1.msra.mxu0 %v796
    %889 = vmatprep.subr.mxu0 %v793
    %890 = vmatpush1.msra.mxu0 %v792
    %891 = vmatprep.subr.mxu0 %v789
    %892 = vmatpush1.msra.mxu0 %v788
    %893 = vmatprep.subr.mxu0 %v785
    %894 = vmatpush1.msra.mxu0 %v784
    %895 = vmatprep.subr.mxu0 %v781
    %896 = vmatpush1.msra.mxu0 %v780
    %897 = vmatprep.subr.mxu0 %v777
    %898 = vmatpush1.msra.mxu0 %v776
    %899 = vmatprep.subr.mxu0 %v773
    %900 = vmatpush1.msra.mxu0 %v772
    %901 = vmatprep.subr.mxu0 %v769
    %902 = vmatpush1.msra.mxu0 %v768
    %903 = vmatprep.subr.mxu0 %v765
    %904 = vmatpush1.msra.mxu0 %v764
    %905 = vmatprep.subr.mxu0 %v761
    %906 = vmatpush1.msra.mxu0 %v760
    %907 = vmatprep.subr.mxu0 %v757
    %908 = vmatpush1.msra.mxu0 %v756
    %909 = vmatprep.subr.mxu0 %v753
    %910 = vmatpush1.msra.mxu0 %v752
    %911 = vmatprep.subr.mxu0 %v749
    %912 = vmatpush1.msra.mxu0 %v748
    %913 = vmatprep.subr.mxu0 0.0
    %914 = vmatpush2.msra.mxu0 0.0
    %915 = vmatprep.subr.mxu0 0.0
    %916 = vmatpush2.msra.mxu0 0.0
    %917 = vmatprep.subr.mxu0 0.0
    %918 = vmatpush2.msra.mxu0 0.0
    %919 = vmatprep.subr.mxu0 0.0
    %920 = vmatpush2.msra.mxu0 0.0
    %921 = vmatprep.subr.mxu0 0.0
    %922 = vmatpush2.msra.mxu0 0.0
    %923 = vmatprep.subr.mxu0 0.0
    %924 = vmatpush2.msra.mxu0 0.0
    %925 = vmatprep.subr.mxu0 0.0
    %926 = vmatpush2.msra.mxu0 0.0
    %927 = vmatprep.subr.mxu0 0.0
    %928 = vmatpush2.msra.mxu0 0.0
    %929 = vmatprep.subr.mxu0 0.0
    %930 = vmatpush2.msra.mxu0 0.0
    %931 = vmatprep.subr.mxu0 0.0
    %932 = vmatpush2.msra.mxu0 0.0
    %933 = vmatprep.subr.mxu0 0.0
    %934 = vmatpush2.msra.mxu0 0.0
    %935 = vmatprep.subr.mxu0 0.0
    %936 = vmatpush2.msra.mxu0 0.0
    %937 = vmatprep.subr.mxu0 0.0
    %938 = vmatpush2.msra.mxu0 0.0
    %939 = vmatprep.subr.mxu0 0.0
    %940 = vmatpush2.msra.mxu0 0.0
    %941 = vmatprep.subr.mxu0 0.0
    %942 = vmatpush2.msra.mxu0 0.0
    %943 = vmatprep.subr.mxu0 0.0
    %944 = vmatpush2.msra.mxu0 0.0
    %945 = vmatprep.mubr.f32.mxu0 0.0
    %946 = vmatmul.mubr.f32.gmra.mxu0 0.0
    %v947 = vpop.f32.mrf.mxu0
    %v948 = vadd.f32 0.0, %v947
    %v949 = vpop.f32.mrf.mxu0
    %v950 = vadd.f32 0.0, %v949
    %951 = vdwg.mxu0
    %v952 = vadd.f32 %v742, %v877
    %v953 = vadd.f32 %v743, %v879
    %v954 = vadd.f32 %v744, %v948
    %v955 = vadd.f32 %v745, %v950
    %v956 = vxor.u32 %v952, 2147483648
    %v957 = vmul.f32 %v956, 1.442695
    %v958 = vpow.pop %v957
    %v959 = vadd.f32 %v958, 1.0
    %v960 = vrcp.pop %v959
    %v961 = vmul.f32 1.0, %v960
    %v962 = vxor.u32 %v953, 2147483648
    %v963 = vmul.f32 %v962, 1.442695
    %v964 = vpow.pop %v963
    %v965 = vadd.f32 %v964, 1.0
    %v966 = vrcp.pop %v965
    %v967 = vmul.f32 1.0, %v966
    %v968 = vtanh.pop %v954
    %v969 = vxor.u32 %v955, 2147483648
    %v970 = vmul.f32 %v969, 1.442695
    %v971 = vpow.pop %v970
    %v972 = vadd.f32 %v971, 1.0
    %v973 = vrcp.pop %v972
    %v974 = vmul.f32 1.0, %v973
    %v975 = vmul.f32 %v967, 0.0
    %v976 = vmul.f32 %v961, %v968
    %v977 = vadd.f32 %v975, %v976
    %v978 = vtanh.pop %v977
    %v979 = vmul.f32 %v974, %v978
    %v980 = vld [vmem:[#allocation3 + $0xe0] sm:$0xff]
    %v981 = vld [vmem:[#allocation3 + $0xe8] sm:$0xff]
    %v982 = vld [vmem:[#allocation3 + $0xf0] sm:$0xff]
    %v983 = vld [vmem:[#allocation3 + $0xf8] sm:$0xff]
    %v984 = vld [vmem:[#allocation12] sm:$0xff]
    %v985 = vld [vmem:[#allocation12 + $0x8] sm:$0xff]
    %v986 = vld [vmem:[#allocation12 + $0x10] sm:$0xff]
    %v987 = vld [vmem:[#allocation12 + $0x18] sm:$0xff]
    %v988 = vld [vmem:[#allocation12 + $0x20] sm:$0xff]
    %v989 = vld [vmem:[#allocation12 + $0x28] sm:$0xff]
    %v990 = vld [vmem:[#allocation12 + $0x30] sm:$0xff]
    %v991 = vld [vmem:[#allocation12 + $0x38] sm:$0xff]
    %v992 = vld [vmem:[#allocation12 + $0x40] sm:$0xff]
    %v993 = vld [vmem:[#allocation12 + $0x48] sm:$0xff]
    %v994 = vld [vmem:[#allocation12 + $0x50] sm:$0xff]
    %v995 = vld [vmem:[#allocation12 + $0x58] sm:$0xff]
    %v996 = vld [vmem:[#allocation12 + $0x60] sm:$0xff]
    %v997 = vld [vmem:[#allocation12 + $0x68] sm:$0xff]
    %v998 = vld [vmem:[#allocation12 + $0x70] sm:$0xff]
    %v999 = vld [vmem:[#allocation12 + $0x78] sm:$0xff]
    %v1000 = vld [vmem:[#allocation12 + $0x80] sm:$0xff]
    %v1001 = vld [vmem:[#allocation12 + $0x88] sm:$0xff]
    %v1002 = vld [vmem:[#allocation12 + $0x90] sm:$0xff]
    %v1003 = vld [vmem:[#allocation12 + $0x98] sm:$0xff]
    %v1004 = vld [vmem:[#allocation12 + $0xa0] sm:$0xff]
    %v1005 = vld [vmem:[#allocation12 + $0xa8] sm:$0xff]
    %v1006 = vld [vmem:[#allocation12 + $0xb0] sm:$0xff]
    %v1007 = vld [vmem:[#allocation12 + $0xb8] sm:$0xff]
    %v1008 = vld [vmem:[#allocation12 + $0xc0] sm:$0xff]
    %v1009 = vld [vmem:[#allocation12 + $0xc8] sm:$0xff]
    %v1010 = vld [vmem:[#allocation12 + $0xd0] sm:$0xff]
    %v1011 = vld [vmem:[#allocation12 + $0xd8] sm:$0xff]
    %v1012 = vld [vmem:[#allocation12 + $0xe0] sm:$0xff]
    %v1013 = vld [vmem:[#allocation12 + $0xe8] sm:$0xff]
    %v1014 = vld [vmem:[#allocation12 + $0xf0] sm:$0xff]
    %v1015 = vld [vmem:[#allocation12 + $0xf8] sm:$0xff]
    %v1016 = vld [vmem:[#allocation12 + $0x100] sm:$0xff]
    %v1017 = vld [vmem:[#allocation12 + $0x108] sm:$0xff]
    %v1018 = vld [vmem:[#allocation12 + $0x110] sm:$0xff]
    %v1019 = vld [vmem:[#allocation12 + $0x118] sm:$0xff]
    %v1020 = vld [vmem:[#allocation12 + $0x120] sm:$0xff]
    %v1021 = vld [vmem:[#allocation12 + $0x128] sm:$0xff]
    %v1022 = vld [vmem:[#allocation12 + $0x130] sm:$0xff]
    %v1023 = vld [vmem:[#allocation12 + $0x138] sm:$0xff]
    %v1024 = vld [vmem:[#allocation12 + $0x140] sm:$0xff]
    %v1025 = vld [vmem:[#allocation12 + $0x148] sm:$0xff]
    %v1026 = vld [vmem:[#allocation12 + $0x150] sm:$0xff]
    %v1027 = vld [vmem:[#allocation12 + $0x158] sm:$0xff]
    %v1028 = vld [vmem:[#allocation12 + $0x160] sm:$0xff]
    %v1029 = vld [vmem:[#allocation12 + $0x168] sm:$0xff]
    %v1030 = vld [vmem:[#allocation12 + $0x170] sm:$0xff]
    %v1031 = vld [vmem:[#allocation12 + $0x178] sm:$0xff]
    %v1032 = vld [vmem:[#allocation12 + $0x180] sm:$0xff]
    %v1033 = vld [vmem:[#allocation12 + $0x188] sm:$0xff]
    %v1034 = vld [vmem:[#allocation12 + $0x190] sm:$0xff]
    %v1035 = vld [vmem:[#allocation12 + $0x198] sm:$0xff]
    %v1036 = vld [vmem:[#allocation12 + $0x1a0] sm:$0xff]
    %v1037 = vld [vmem:[#allocation12 + $0x1a8] sm:$0xff]
    %v1038 = vld [vmem:[#allocation12 + $0x1b0] sm:$0xff]
    %v1039 = vld [vmem:[#allocation12 + $0x1b8] sm:$0xff]
    %v1040 = vld [vmem:[#allocation12 + $0x1c0] sm:$0xff]
    %v1041 = vld [vmem:[#allocation12 + $0x1c8] sm:$0xff]
    %v1042 = vld [vmem:[#allocation12 + $0x1d0] sm:$0xff]
    %v1043 = vld [vmem:[#allocation12 + $0x1d8] sm:$0xff]
    %v1044 = vld [vmem:[#allocation12 + $0x1e0] sm:$0xff]
    %v1045 = vld [vmem:[#allocation12 + $0x1e8] sm:$0xff]
    %v1046 = vld [vmem:[#allocation12 + $0x1f0] sm:$0xff]
    %v1047 = vld [vmem:[#allocation12 + $0x1f8] sm:$0xff]
    %1048 = vmatprep.subr.mxu0 %v1045
    %1049 = vmatpush1.msra.mxu0 %v1044
    %1050 = vmatprep.subr.mxu0 %v1041
    %1051 = vmatpush1.msra.mxu0 %v1040
    %1052 = vmatprep.subr.mxu0 %v1037
    %1053 = vmatpush1.msra.mxu0 %v1036
    %1054 = vmatprep.subr.mxu0 %v1033
    %1055 = vmatpush1.msra.mxu0 %v1032
    %1056 = vmatprep.subr.mxu0 %v1029
    %1057 = vmatpush1.msra.mxu0 %v1028
    %1058 = vmatprep.subr.mxu0 %v1025
    %1059 = vmatpush1.msra.mxu0 %v1024
    %1060 = vmatprep.subr.mxu0 %v1021
    %1061 = vmatpush1.msra.mxu0 %v1020
    %1062 = vmatprep.subr.mxu0 %v1017
    %1063 = vmatpush1.msra.mxu0 %v1016
    %1064 = vmatprep.subr.mxu0 %v1013
    %1065 = vmatpush1.msra.mxu0 %v1012
    %1066 = vmatprep.subr.mxu0 %v1009
    %1067 = vmatpush1.msra.mxu0 %v1008
    %1068 = vmatprep.subr.mxu0 %v1005
    %1069 = vmatpush1.msra.mxu0 %v1004
    %1070 = vmatprep.subr.mxu0 %v1001
    %1071 = vmatpush1.msra.mxu0 %v1000
    %1072 = vmatprep.subr.mxu0 %v997
    %1073 = vmatpush1.msra.mxu0 %v996
    %1074 = vmatprep.subr.mxu0 %v993
    %1075 = vmatpush1.msra.mxu0 %v992
    %1076 = vmatprep.subr.mxu0 %v989
    %1077 = vmatpush1.msra.mxu0 %v988
    %1078 = vmatprep.subr.mxu0 %v985
    %1079 = vmatpush1.msra.mxu0 %v984
    %1080 = vmatprep.subr.mxu0 0.0
    %1081 = vmatpush2.msra.mxu0 0.0
    %1082 = vmatprep.subr.mxu0 0.0
    %1083 = vmatpush2.msra.mxu0 0.0
    %1084 = vmatprep.subr.mxu0 0.0
    %1085 = vmatpush2.msra.mxu0 0.0
    %1086 = vmatprep.subr.mxu0 0.0
    %1087 = vmatpush2.msra.mxu0 0.0
    %1088 = vmatprep.subr.mxu0 0.0
    %1089 = vmatpush2.msra.mxu0 0.0
    %1090 = vmatprep.subr.mxu0 0.0
    %1091 = vmatpush2.msra.mxu0 0.0
    %1092 = vmatprep.subr.mxu0 0.0
    %1093 = vmatpush2.msra.mxu0 0.0
    %1094 = vmatprep.subr.mxu0 0.0
    %1095 = vmatpush2.msra.mxu0 0.0
    %1096 = vmatprep.subr.mxu0 0.0
    %1097 = vmatpush2.msra.mxu0 0.0
    %1098 = vmatprep.subr.mxu0 0.0
    %1099 = vmatpush2.msra.mxu0 0.0
    %1100 = vmatprep.subr.mxu0 0.0
    %1101 = vmatpush2.msra.mxu0 0.0
    %1102 = vmatprep.subr.mxu0 0.0
    %1103 = vmatpush2.msra.mxu0 0.0
    %1104 = vmatprep.subr.mxu0 0.0
    %1105 = vmatpush2.msra.mxu0 0.0
    %1106 = vmatprep.subr.mxu0 0.0
    %1107 = vmatpush2.msra.mxu0 0.0
    %1108 = vmatprep.subr.mxu0 0.0
    %1109 = vmatpush2.msra.mxu0 0.0
    %1110 = vmatprep.subr.mxu0 0.0
    %1111 = vmatpush2.msra.mxu0 0.0
    %1112 = vmatprep.mubr.f32.mxu0 0.0
    %1113 = vmatmul.mubr.f32.gmra.mxu0 0.0
    %v1114 = vpop.f32.mrf.mxu0
    %v1115 = vadd.f32 0.0, %v1114
    %v1116 = vpop.f32.mrf.mxu0
    %v1117 = vadd.f32 0.0, %v1116
    %1118 = vdwg.mxu0
    %1119 = vmatprep.subr.mxu0 %v1047
    %1120 = vmatpush1.msra.mxu0 %v1046
    %1121 = vmatprep.subr.mxu0 %v1043
    %1122 = vmatpush1.msra.mxu0 %v1042
    %1123 = vmatprep.subr.mxu0 %v1039
    %1124 = vmatpush1.msra.mxu0 %v1038
    %1125 = vmatprep.subr.mxu0 %v1035
    %1126 = vmatpush1.msra.mxu0 %v1034
    %1127 = vmatprep.subr.mxu0 %v1031
    %1128 = vmatpush1.msra.mxu0 %v1030
    %1129 = vmatprep.subr.mxu0 %v1027
    %1130 = vmatpush1.msra.mxu0 %v1026
    %1131 = vmatprep.subr.mxu0 %v1023
    %1132 = vmatpush1.msra.mxu0 %v1022
    %1133 = vmatprep.subr.mxu0 %v1019
    %1134 = vmatpush1.msra.mxu0 %v1018
    %1135 = vmatprep.subr.mxu0 %v1015
    %1136 = vmatpush1.msra.mxu0 %v1014
    %1137 = vmatprep.subr.mxu0 %v1011
    %1138 = vmatpush1.msra.mxu0 %v1010
    %1139 = vmatprep.subr.mxu0 %v1007
    %1140 = vmatpush1.msra.mxu0 %v1006
    %1141 = vmatprep.subr.mxu0 %v1003
    %1142 = vmatpush1.msra.mxu0 %v1002
    %1143 = vmatprep.subr.mxu0 %v999
    %1144 = vmatpush1.msra.mxu0 %v998
    %1145 = vmatprep.subr.mxu0 %v995
    %1146 = vmatpush1.msra.mxu0 %v994
    %1147 = vmatprep.subr.mxu0 %v991
    %1148 = vmatpush1.msra.mxu0 %v990
    %1149 = vmatprep.subr.mxu0 %v987
    %1150 = vmatpush1.msra.mxu0 %v986
    %1151 = vmatprep.subr.mxu0 0.0
    %1152 = vmatpush2.msra.mxu0 0.0
    %1153 = vmatprep.subr.mxu0 0.0
    %1154 = vmatpush2.msra.mxu0 0.0
    %1155 = vmatprep.subr.mxu0 0.0
    %1156 = vmatpush2.msra.mxu0 0.0
    %1157 = vmatprep.subr.mxu0 0.0
    %1158 = vmatpush2.msra.mxu0 0.0
    %1159 = vmatprep.subr.mxu0 0.0
    %1160 = vmatpush2.msra.mxu0 0.0
    %1161 = vmatprep.subr.mxu0 0.0
    %1162 = vmatpush2.msra.mxu0 0.0
    %1163 = vmatprep.subr.mxu0 0.0
    %1164 = vmatpush2.msra.mxu0 0.0
    %1165 = vmatprep.subr.mxu0 0.0
    %1166 = vmatpush2.msra.mxu0 0.0
    %1167 = vmatprep.subr.mxu0 0.0
    %1168 = vmatpush2.msra.mxu0 0.0
    %1169 = vmatprep.subr.mxu0 0.0
    %1170 = vmatpush2.msra.mxu0 0.0
    %1171 = vmatprep.subr.mxu0 0.0
    %1172 = vmatpush2.msra.mxu0 0.0
    %1173 = vmatprep.subr.mxu0 0.0
    %1174 = vmatpush2.msra.mxu0 0.0
    %1175 = vmatprep.subr.mxu0 0.0
    %1176 = vmatpush2.msra.mxu0 0.0
    %1177 = vmatprep.subr.mxu0 0.0
    %1178 = vmatpush2.msra.mxu0 0.0
    %1179 = vmatprep.subr.mxu0 0.0
    %1180 = vmatpush2.msra.mxu0 0.0
    %1181 = vmatprep.subr.mxu0 0.0
    %1182 = vmatpush2.msra.mxu0 0.0
    %1183 = vmatprep.mubr.f32.mxu0 0.0
    %1184 = vmatmul.mubr.f32.gmra.mxu0 0.0
    %v1185 = vpop.f32.mrf.mxu0
    %v1186 = vadd.f32 0.0, %v1185
    %v1187 = vpop.f32.mrf.mxu0
    %v1188 = vadd.f32 0.0, %v1187
    %1189 = vdwg.mxu0
    %v1190 = vadd.f32 %v980, %v1115
    %v1191 = vadd.f32 %v981, %v1117
    %v1192 = vadd.f32 %v982, %v1186
    %v1193 = vadd.f32 %v983, %v1188
    %v1194 = vxor.u32 %v1190, 2147483648
    %v1195 = vmul.f32 %v1194, 1.442695
    %v1196 = vpow.pop %v1195
    %v1197 = vadd.f32 %v1196, 1.0
    %v1198 = vrcp.pop %v1197
    %v1199 = vmul.f32 1.0, %v1198
    %v1200 = vxor.u32 %v1191, 2147483648
    %v1201 = vmul.f32 %v1200, 1.442695
    %v1202 = vpow.pop %v1201
    %v1203 = vadd.f32 %v1202, 1.0
    %v1204 = vrcp.pop %v1203
    %v1205 = vmul.f32 1.0, %v1204
    %v1206 = vtanh.pop %v1192
    %v1207 = vxor.u32 %v1193, 2147483648
    %v1208 = vmul.f32 %v1207, 1.442695
    %v1209 = vpow.pop %v1208
    %v1210 = vadd.f32 %v1209, 1.0
    %v1211 = vrcp.pop %v1210
    %v1212 = vmul.f32 1.0, %v1211
    %v1213 = vmul.f32 %v1205, 0.0
    %v1214 = vmul.f32 %v1199, %v1206
    %v1215 = vadd.f32 %v1213, %v1214
    %v1216 = vtanh.pop %v1215
    %v1217 = vmul.f32 %v1212, %v1216
    %1218 = vst [vmem:[#allocation4] sm:$0xff] %v979
    %1219 = vst [vmem:[#allocation4 + $0x78] sm:$0xff] %v1217
    %v1220 = vld [vmem:[#allocation2 + $0x20] sm:$0xff]
    %v1221 = vld [vmem:[#allocation2 + $0x28] sm:$0xff]
    %v1222 = vld [vmem:[#allocation2 + $0x30] sm:$0xff]
    %v1223 = vld [vmem:[#allocation2 + $0x38] sm:$0xff]
    %v1224 = vld [vmem:[%s3] sm:$0xff]
    %v1225 = vld [vmem:[%s3 + $0x8] sm:$0xff]
    %v1226 = vld [vmem:[%s3 + $0x10] sm:$0xff]
    %v1227 = vld [vmem:[%s3 + $0x18] sm:$0xff]
    %v1228 = vld [vmem:[%s3 + $0x20] sm:$0xff]
    %v1229 = vld [vmem:[%s3 + $0x28] sm:$0xff]
    %v1230 = vld [vmem:[%s3 + $0x30] sm:$0xff]
    %v1231 = vld [vmem:[%s3 + $0x38] sm:$0xff]
    %v1232 = vld [vmem:[%s3 + $0x40] sm:$0xff]
    %v1233 = vld [vmem:[%s3 + $0x48] sm:$0xff]
    %v1234 = vld [vmem:[%s3 + $0x50] sm:$0xff]
    %v1235 = vld [vmem:[%s3 + $0x58] sm:$0xff]
    %v1236 = vld [vmem:[%s3 + $0x60] sm:$0xff]
    %v1237 = vld [vmem:[%s3 + $0x68] sm:$0xff]
    %v1238 = vld [vmem:[%s3 + $0x70] sm:$0xff]
    %v1239 = vld [vmem:[%s3 + $0x78] sm:$0xff]
    %v1240 = vld [vmem:[%s3 + $0x80] sm:$0xff]
    %v1241 = vld [vmem:[%s3 + $0x88] sm:$0xff]
    %v1242 = vld [vmem:[%s3 + $0x90] sm:$0xff]
    %v1243 = vld [vmem:[%s3 + $0x98] sm:$0xff]
    %v1244 = vld [vmem:[%s3 + $0xa0] sm:$0xff]
    %v1245 = vld [vmem:[%s3 + $0xa8] sm:$0xff]
    %v1246 = vld [vmem:[%s3 + $0xb0] sm:$0xff]
    %v1247 = vld [vmem:[%s3 + $0xb8] sm:$0xff]
    %v1248 = vld [vmem:[%s3 + $0xc0] sm:$0xff]
    %v1249 = vld [vmem:[%s3 + $0xc8] sm:$0xff]
    %v1250 = vld [vmem:[%s3 + $0xd0] sm:$0xff]
    %v1251 = vld [vmem:[%s3 + $0xd8] sm:$0xff]
    %v1252 = vld [vmem:[%s3 + $0xe0] sm:$0xff]
    %v1253 = vld [vmem:[%s3 + $0xe8] sm:$0xff]
    %v1254 = vld [vmem:[%s3 + $0xf0] sm:$0xff]
    %v1255 = vld [vmem:[%s3 + $0xf8] sm:$0xff]
    %v1256 = vld [vmem:[%s3 + $0x100] sm:$0xff]
    %v1257 = vld [vmem:[%s3 + $0x108] sm:$0xff]
    %v1258 = vld [vmem:[%s3 + $0x110] sm:$0xff]
    %v1259 = vld [vmem:[%s3 + $0x118] sm:$0xff]
    %v1260 = vld [vmem:[%s3 + $0x120] sm:$0xff]
    %v1261 = vld [vmem:[%s3 + $0x128] sm:$0xff]
    %v1262 = vld [vmem:[%s3 + $0x130] sm:$0xff]
    %v1263 = vld [vmem:[%s3 + $0x138] sm:$0xff]
    %v1264 = vld [vmem:[%s3 + $0x140] sm:$0xff]
    %v1265 = vld [vmem:[%s3 + $0x148] sm:$0xff]
    %v1266 = vld [vmem:[%s3 + $0x150] sm:$0xff]
    %v1267 = vld [vmem:[%s3 + $0x158] sm:$0xff]
    %v1268 = vld [vmem:[%s3 + $0x160] sm:$0xff]
    %v1269 = vld [vmem:[%s3 + $0x168] sm:$0xff]
    %v1270 = vld [vmem:[%s3 + $0x170] sm:$0xff]
    %v1271 = vld [vmem:[%s3 + $0x178] sm:$0xff]
    %v1272 = vld [vmem:[%s3 + $0x180] sm:$0xff]
    %v1273 = vld [vmem:[%s3 + $0x188] sm:$0xff]
    %v1274 = vld [vmem:[%s3 + $0x190] sm:$0xff]
    %v1275 = vld [vmem:[%s3 + $0x198] sm:$0xff]
    %v1276 = vld [vmem:[%s3 + $0x1a0] sm:$0xff]
    %v1277 = vld [vmem:[%s3 + $0x1a8] sm:$0xff]
    %v1278 = vld [vmem:[%s3 + $0x1b0] sm:$0xff]
    %v1279 = vld [vmem:[%s3 + $0x1b8] sm:$0xff]
    %v1280 = vld [vmem:[%s3 + $0x1c0] sm:$0xff]
    %v1281 = vld [vmem:[%s3 + $0x1c8] sm:$0xff]
    %v1282 = vld [vmem:[%s3 + $0x1d0] sm:$0xff]
    %v1283 = vld [vmem:[%s3 + $0x1d8] sm:$0xff]
    %v1284 = vld [vmem:[%s3 + $0x1e0] sm:$0xff]
    %v1285 = vld [vmem:[%s3 + $0x1e8] sm:$0xff]
    %v1286 = vld [vmem:[%s3 + $0x1f0] sm:$0xff]
    %v1287 = vld [vmem:[%s3 + $0x1f8] sm:$0xff]
    %1288 = vmatprep.subr.mxu0 %v1285
    %1289 = vmatpush1.msra.mxu0 %v1284
    %1290 = vmatprep.subr.mxu0 %v1281
    %1291 = vmatpush1.msra.mxu0 %v1280
    %1292 = vmatprep.subr.mxu0 %v1277
    %1293 = vmatpush1.msra.mxu0 %v1276
    %1294 = vmatprep.subr.mxu0 %v1273
    %1295 = vmatpush1.msra.mxu0 %v1272
    %1296 = vmatprep.subr.mxu0 %v1269
    %1297 = vmatpush1.msra.mxu0 %v1268
    %1298 = vmatprep.subr.mxu0 %v1265
    %1299 = vmatpush1.msra.mxu0 %v1264
    %1300 = vmatprep.subr.mxu0 %v1261
    %1301 = vmatpush1.msra.mxu0 %v1260
    %1302 = vmatprep.subr.mxu0 %v1257
    %1303 = vmatpush1.msra.mxu0 %v1256
    %1304 = vmatprep.subr.mxu0 %v1253
    %1305 = vmatpush1.msra.mxu0 %v1252
    %1306 = vmatprep.subr.mxu0 %v1249
    %1307 = vmatpush1.msra.mxu0 %v1248
    %1308 = vmatprep.subr.mxu0 %v1245
    %1309 = vmatpush1.msra.mxu0 %v1244
    %1310 = vmatprep.subr.mxu0 %v1241
    %1311 = vmatpush1.msra.mxu0 %v1240
    %1312 = vmatprep.subr.mxu0 %v1237
    %1313 = vmatpush1.msra.mxu0 %v1236
    %1314 = vmatprep.subr.mxu0 %v1233
    %1315 = vmatpush1.msra.mxu0 %v1232
    %1316 = vmatprep.subr.mxu0 %v1229
    %1317 = vmatpush1.msra.mxu0 %v1228
    %1318 = vmatprep.subr.mxu0 %v1225
    %1319 = vmatpush1.msra.mxu0 %v1224
    %1320 = vmatprep.subr.mxu0 0.0
    %1321 = vmatpush2.msra.mxu0 0.0
    %1322 = vmatprep.subr.mxu0 0.0
    %1323 = vmatpush2.msra.mxu0 0.0
    %1324 = vmatprep.subr.mxu0 0.0
    %1325 = vmatpush2.msra.mxu0 0.0
    %1326 = vmatprep.subr.mxu0 0.0
    %1327 = vmatpush2.msra.mxu0 0.0
    %1328 = vmatprep.subr.mxu0 0.0
    %1329 = vmatpush2.msra.mxu0 0.0
    %1330 = vmatprep.subr.mxu0 0.0
    %1331 = vmatpush2.msra.mxu0 0.0
    %1332 = vmatprep.subr.mxu0 0.0
    %1333 = vmatpush2.msra.mxu0 0.0
    %1334 = vmatprep.subr.mxu0 0.0
    %1335 = vmatpush2.msra.mxu0 0.0
    %1336 = vmatprep.subr.mxu0 0.0
    %1337 = vmatpush2.msra.mxu0 0.0
    %1338 = vmatprep.subr.mxu0 0.0
    %1339 = vmatpush2.msra.mxu0 0.0
    %1340 = vmatprep.subr.mxu0 0.0
    %1341 = vmatpush2.msra.mxu0 0.0
    %1342 = vmatprep.subr.mxu0 0.0
    %1343 = vmatpush2.msra.mxu0 0.0
    %1344 = vmatprep.subr.mxu0 0.0
    %1345 = vmatpush2.msra.mxu0 0.0
    %1346 = vmatprep.subr.mxu0 0.0
    %1347 = vmatpush2.msra.mxu0 0.0
    %1348 = vmatprep.subr.mxu0 0.0
    %1349 = vmatpush2.msra.mxu0 0.0
    %1350 = vmatprep.subr.mxu0 0.0
    %1351 = vmatpush2.msra.mxu0 0.0
    %1352 = vmatprep.mubr.f32.mxu0 0.0
    %1353 = vmatmul.mubr.f32.gmra.mxu0 %v979
    %v1354 = vpop.f32.mrf.mxu0
    %v1355 = vadd.f32 0.0, %v1354
    %v1356 = vpop.f32.mrf.mxu0
    %v1357 = vadd.f32 0.0, %v1356
    %1358 = vdwg.mxu0
    %1359 = vmatprep.subr.mxu0 %v1287
    %1360 = vmatpush1.msra.mxu0 %v1286
    %1361 = vmatprep.subr.mxu0 %v1283
    %1362 = vmatpush1.msra.mxu0 %v1282
    %1363 = vmatprep.subr.mxu0 %v1279
    %1364 = vmatpush1.msra.mxu0 %v1278
    %1365 = vmatprep.subr.mxu0 %v1275
    %1366 = vmatpush1.msra.mxu0 %v1274
    %1367 = vmatprep.subr.mxu0 %v1271
    %1368 = vmatpush1.msra.mxu0 %v1270
    %1369 = vmatprep.subr.mxu0 %v1267
    %1370 = vmatpush1.msra.mxu0 %v1266
    %1371 = vmatprep.subr.mxu0 %v1263
    %1372 = vmatpush1.msra.mxu0 %v1262
    %1373 = vmatprep.subr.mxu0 %v1259
    %1374 = vmatpush1.msra.mxu0 %v1258
    %1375 = vmatprep.subr.mxu0 %v1255
    %1376 = vmatpush1.msra.mxu0 %v1254
    %1377 = vmatprep.subr.mxu0 %v1251
    %1378 = vmatpush1.msra.mxu0 %v1250
    %1379 = vmatprep.subr.mxu0 %v1247
    %1380 = vmatpush1.msra.mxu0 %v1246
    %1381 = vmatprep.subr.mxu0 %v1243
    %1382 = vmatpush1.msra.mxu0 %v1242
    %1383 = vmatprep.subr.mxu0 %v1239
    %1384 = vmatpush1.msra.mxu0 %v1238
    %1385 = vmatprep.subr.mxu0 %v1235
    %1386 = vmatpush1.msra.mxu0 %v1234
    %1387 = vmatprep.subr.mxu0 %v1231
    %1388 = vmatpush1.msra.mxu0 %v1230
    %1389 = vmatprep.subr.mxu0 %v1227
    %1390 = vmatpush1.msra.mxu0 %v1226
    %1391 = vmatprep.subr.mxu0 0.0
    %1392 = vmatpush2.msra.mxu0 0.0
    %1393 = vmatprep.subr.mxu0 0.0
    %1394 = vmatpush2.msra.mxu0 0.0
    %1395 = vmatprep.subr.mxu0 0.0
    %1396 = vmatpush2.msra.mxu0 0.0
    %1397 = vmatprep.subr.mxu0 0.0
    %1398 = vmatpush2.msra.mxu0 0.0
    %1399 = vmatprep.subr.mxu0 0.0
    %1400 = vmatpush2.msra.mxu0 0.0
    %1401 = vmatprep.subr.mxu0 0.0
    %1402 = vmatpush2.msra.mxu0 0.0
    %1403 = vmatprep.subr.mxu0 0.0
    %1404 = vmatpush2.msra.mxu0 0.0
    %1405 = vmatprep.subr.mxu0 0.0
    %1406 = vmatpush2.msra.mxu0 0.0
    %1407 = vmatprep.subr.mxu0 0.0
    %1408 = vmatpush2.msra.mxu0 0.0
    %1409 = vmatprep.subr.mxu0 0.0
    %1410 = vmatpush2.msra.mxu0 0.0
    %1411 = vmatprep.subr.mxu0 0.0
    %1412 = vmatpush2.msra.mxu0 0.0
    %1413 = vmatprep.subr.mxu0 0.0
    %1414 = vmatpush2.msra.mxu0 0.0
    %1415 = vmatprep.subr.mxu0 0.0
    %1416 = vmatpush2.msra.mxu0 0.0
    %1417 = vmatprep.subr.mxu0 0.0
    %1418 = vmatpush2.msra.mxu0 0.0
    %1419 = vmatprep.subr.mxu0 0.0
    %1420 = vmatpush2.msra.mxu0 0.0
    %1421 = vmatprep.subr.mxu0 0.0
    %1422 = vmatpush2.msra.mxu0 0.0
    %1423 = vmatprep.mubr.f32.mxu0 0.0
    %1424 = vmatmul.mubr.f32.gmra.mxu0 %v979
    %v1425 = vpop.f32.mrf.mxu0
    %v1426 = vadd.f32 0.0, %v1425
    %v1427 = vpop.f32.mrf.mxu0
    %v1428 = vadd.f32 0.0, %v1427
    %1429 = vdwg.mxu0
    %v1430 = vadd.f32 %v1220, %v1355
    %v1431 = vadd.f32 %v1221, %v1357
    %v1432 = vadd.f32 %v1222, %v1426
    %v1433 = vadd.f32 %v1223, %v1428
    %v1434 = vxor.u32 %v1430, 2147483648
    %v1435 = vmul.f32 %v1434, 1.442695
    %v1436 = vpow.pop %v1435
    %v1437 = vadd.f32 %v1436, 1.0
    %v1438 = vrcp.pop %v1437
    %v1439 = vmul.f32 1.0, %v1438
    %v1440 = vxor.u32 %v1431, 2147483648
    %v1441 = vmul.f32 %v1440, 1.442695
    %v1442 = vpow.pop %v1441
    %v1443 = vadd.f32 %v1442, 1.0
    %v1444 = vrcp.pop %v1443
    %v1445 = vmul.f32 1.0, %v1444
    %v1446 = vtanh.pop %v1432
    %v1447 = vxor.u32 %v1433, 2147483648
    %v1448 = vmul.f32 %v1447, 1.442695
    %v1449 = vpow.pop %v1448
    %v1450 = vadd.f32 %v1449, 1.0
    %v1451 = vrcp.pop %v1450
    %v1452 = vmul.f32 1.0, %v1451
    %v1453 = vmul.f32 %v1445, %v977
    %v1454 = vmul.f32 %v1439, %v1446
    %v1455 = vadd.f32 %v1453, %v1454
    %v1456 = vtanh.pop %v1455
    %v1457 = vmul.f32 %v1452, %v1456
    %v1458 = vld [vmem:[#allocation3 + $0xc0] sm:$0xff]
    %v1459 = vld [vmem:[#allocation3 + $0xc8] sm:$0xff]
    %v1460 = vld [vmem:[#allocation3 + $0xd0] sm:$0xff]
    %v1461 = vld [vmem:[#allocation3 + $0xd8] sm:$0xff]
    %v1462 = vld [vmem:[#allocation12] sm:$0xff]
    %v1463 = vld [vmem:[#allocation12 + $0x8] sm:$0xff]
    %v1464 = vld [vmem:[#allocation12 + $0x10] sm:$0xff]
    %v1465 = vld [vmem:[#allocation12 + $0x18] sm:$0xff]
    %v1466 = vld [vmem:[#allocation12 + $0x20] sm:$0xff]
    %v1467 = vld [vmem:[#allocation12 + $0x28] sm:$0xff]
    %v1468 = vld [vmem:[#allocation12 + $0x30] sm:$0xff]
    %v1469 = vld [vmem:[#allocation12 + $0x38] sm:$0xff]
    %v1470 = vld [vmem:[#allocation12 + $0x40] sm:$0xff]
    %v1471 = vld [vmem:[#allocation12 + $0x48] sm:$0xff]
    %v1472 = vld [vmem:[#allocation12 + $0x50] sm:$0xff]
    %v1473 = vld [vmem:[#allocation12 + $0x58] sm:$0xff]
    %v1474 = vld [vmem:[#allocation12 + $0x60] sm:$0xff]
    %v1475 = vld [vmem:[#allocation12 + $0x68] sm:$0xff]
    %v1476 = vld [vmem:[#allocation12 + $0x70] sm:$0xff]
    %v1477 = vld [vmem:[#allocation12 + $0x78] sm:$0xff]
    %v1478 = vld [vmem:[#allocation12 + $0x80] sm:$0xff]
    %v1479 = vld [vmem:[#allocation12 + $0x88] sm:$0xff]
    %v1480 = vld [vmem:[#allocation12 + $0x90] sm:$0xff]
    %v1481 = vld [vmem:[#allocation12 + $0x98] sm:$0xff]
    %v1482 = vld [vmem:[#allocation12 + $0xa0] sm:$0xff]
    %v1483 = vld [vmem:[#allocation12 + $0xa8] sm:$0xff]
    %v1484 = vld [vmem:[#allocation12 + $0xb0] sm:$0xff]
    %v1485 = vld [vmem:[#allocation12 + $0xb8] sm:$0xff]
    %v1486 = vld [vmem:[#allocation12 + $0xc0] sm:$0xff]
    %v1487 = vld [vmem:[#allocation12 + $0xc8] sm:$0xff]
    %v1488 = vld [vmem:[#allocation12 + $0xd0] sm:$0xff]
    %v1489 = vld [vmem:[#allocation12 + $0xd8] sm:$0xff]
    %v1490 = vld [vmem:[#allocation12 + $0xe0] sm:$0xff]
    %v1491 = vld [vmem:[#allocation12 + $0xe8] sm:$0xff]
    %v1492 = vld [vmem:[#allocation12 + $0xf0] sm:$0xff]
    %v1493 = vld [vmem:[#allocation12 + $0xf8] sm:$0xff]
    %v1494 = vld [vmem:[#allocation12 + $0x100] sm:$0xff]
    %v1495 = vld [vmem:[#allocation12 + $0x108] sm:$0xff]
    %v1496 = vld [vmem:[#allocation12 + $0x110] sm:$0xff]
    %v1497 = vld [vmem:[#allocation12 + $0x118] sm:$0xff]
    %v1498 = vld [vmem:[#allocation12 + $0x120] sm:$0xff]
    %v1499 = vld [vmem:[#allocation12 + $0x128] sm:$0xff]
    %v1500 = vld [vmem:[#allocation12 + $0x130] sm:$0xff]
    %v1501 = vld [vmem:[#allocation12 + $0x138] sm:$0xff]
    %v1502 = vld [vmem:[#allocation12 + $0x140] sm:$0xff]
    %v1503 = vld [vmem:[#allocation12 + $0x148] sm:$0xff]
    %v1504 = vld [vmem:[#allocation12 + $0x150] sm:$0xff]
    %v1505 = vld [vmem:[#allocation12 + $0x158] sm:$0xff]
    %v1506 = vld [vmem:[#allocation12 + $0x160] sm:$0xff]
    %v1507 = vld [vmem:[#allocation12 + $0x168] sm:$0xff]
    %v1508 = vld [vmem:[#allocation12 + $0x170] sm:$0xff]
    %v1509 = vld [vmem:[#allocation12 + $0x178] sm:$0xff]
    %v1510 = vld [vmem:[#allocation12 + $0x180] sm:$0xff]
    %v1511 = vld [vmem:[#allocation12 + $0x188] sm:$0xff]
    %v1512 = vld [vmem:[#allocation12 + $0x190] sm:$0xff]
    %v1513 = vld [vmem:[#allocation12 + $0x198] sm:$0xff]
    %v1514 = vld [vmem:[#allocation12 + $0x1a0] sm:$0xff]
    %v1515 = vld [vmem:[#allocation12 + $0x1a8] sm:$0xff]
    %v1516 = vld [vmem:[#allocation12 + $0x1b0] sm:$0xff]
    %v1517 = vld [vmem:[#allocation12 + $0x1b8] sm:$0xff]
    %v1518 = vld [vmem:[#allocation12 + $0x1c0] sm:$0xff]
    %v1519 = vld [vmem:[#allocation12 + $0x1c8] sm:$0xff]
    %v1520 = vld [vmem:[#allocation12 + $0x1d0] sm:$0xff]
    %v1521 = vld [vmem:[#allocation12 + $0x1d8] sm:$0xff]
    %v1522 = vld [vmem:[#allocation12 + $0x1e0] sm:$0xff]
    %v1523 = vld [vmem:[#allocation12 + $0x1e8] sm:$0xff]
    %v1524 = vld [vmem:[#allocation12 + $0x1f0] sm:$0xff]
    %v1525 = vld [vmem:[#allocation12 + $0x1f8] sm:$0xff]
    %1526 = vmatprep.subr.mxu0 %v1523
    %1527 = vmatpush1.msra.mxu0 %v1522
    %1528 = vmatprep.subr.mxu0 %v1519
    %1529 = vmatpush1.msra.mxu0 %v1518
    %1530 = vmatprep.subr.mxu0 %v1515
    %1531 = vmatpush1.msra.mxu0 %v1514
    %1532 = vmatprep.subr.mxu0 %v1511
    %1533 = vmatpush1.msra.mxu0 %v1510
    %1534 = vmatprep.subr.mxu0 %v1507
    %1535 = vmatpush1.msra.mxu0 %v1506
    %1536 = vmatprep.subr.mxu0 %v1503
    %1537 = vmatpush1.msra.mxu0 %v1502
    %1538 = vmatprep.subr.mxu0 %v1499
    %1539 = vmatpush1.msra.mxu0 %v1498
    %1540 = vmatprep.subr.mxu0 %v1495
    %1541 = vmatpush1.msra.mxu0 %v1494
    %1542 = vmatprep.subr.mxu0 %v1491
    %1543 = vmatpush1.msra.mxu0 %v1490
    %1544 = vmatprep.subr.mxu0 %v1487
    %1545 = vmatpush1.msra.mxu0 %v1486
    %1546 = vmatprep.subr.mxu0 %v1483
    %1547 = vmatpush1.msra.mxu0 %v1482
    %1548 = vmatprep.subr.mxu0 %v1479
    %1549 = vmatpush1.msra.mxu0 %v1478
    %1550 = vmatprep.subr.mxu0 %v1475
    %1551 = vmatpush1.msra.mxu0 %v1474
    %1552 = vmatprep.subr.mxu0 %v1471
    %1553 = vmatpush1.msra.mxu0 %v1470
    %1554 = vmatprep.subr.mxu0 %v1467
    %1555 = vmatpush1.msra.mxu0 %v1466
    %1556 = vmatprep.subr.mxu0 %v1463
    %1557 = vmatpush1.msra.mxu0 %v1462
    %1558 = vmatprep.subr.mxu0 0.0
    %1559 = vmatpush2.msra.mxu0 0.0
    %1560 = vmatprep.subr.mxu0 0.0
    %1561 = vmatpush2.msra.mxu0 0.0
    %1562 = vmatprep.subr.mxu0 0.0
    %1563 = vmatpush2.msra.mxu0 0.0
    %1564 = vmatprep.subr.mxu0 0.0
    %1565 = vmatpush2.msra.mxu0 0.0
    %1566 = vmatprep.subr.mxu0 0.0
    %1567 = vmatpush2.msra.mxu0 0.0
    %1568 = vmatprep.subr.mxu0 0.0
    %1569 = vmatpush2.msra.mxu0 0.0
    %1570 = vmatprep.subr.mxu0 0.0
    %1571 = vmatpush2.msra.mxu0 0.0
    %1572 = vmatprep.subr.mxu0 0.0
    %1573 = vmatpush2.msra.mxu0 0.0
    %1574 = vmatprep.subr.mxu0 0.0
    %1575 = vmatpush2.msra.mxu0 0.0
    %1576 = vmatprep.subr.mxu0 0.0
    %1577 = vmatpush2.msra.mxu0 0.0
    %1578 = vmatprep.subr.mxu0 0.0
    %1579 = vmatpush2.msra.mxu0 0.0
    %1580 = vmatprep.subr.mxu0 0.0
    %1581 = vmatpush2.msra.mxu0 0.0
    %1582 = vmatprep.subr.mxu0 0.0
    %1583 = vmatpush2.msra.mxu0 0.0
    %1584 = vmatprep.subr.mxu0 0.0
    %1585 = vmatpush2.msra.mxu0 0.0
    %1586 = vmatprep.subr.mxu0 0.0
    %1587 = vmatpush2.msra.mxu0 0.0
    %1588 = vmatprep.subr.mxu0 0.0
    %1589 = vmatpush2.msra.mxu0 0.0
    %1590 = vmatprep.mubr.f32.mxu0 0.0
    %1591 = vmatmul.mubr.f32.gmra.mxu0 %v1217
    %v1592 = vpop.f32.mrf.mxu0
    %v1593 = vadd.f32 0.0, %v1592
    %v1594 = vpop.f32.mrf.mxu0
    %v1595 = vadd.f32 0.0, %v1594
    %1596 = vdwg.mxu0
    %1597 = vmatprep.subr.mxu0 %v1525
    %1598 = vmatpush1.msra.mxu0 %v1524
    %1599 = vmatprep.subr.mxu0 %v1521
    %1600 = vmatpush1.msra.mxu0 %v1520
    %1601 = vmatprep.subr.mxu0 %v1517
    %1602 = vmatpush1.msra.mxu0 %v1516
    %1603 = vmatprep.subr.mxu0 %v1513
    %1604 = vmatpush1.msra.mxu0 %v1512
    %1605 = vmatprep.subr.mxu0 %v1509
    %1606 = vmatpush1.msra.mxu0 %v1508
    %1607 = vmatprep.subr.mxu0 %v1505
    %1608 = vmatpush1.msra.mxu0 %v1504
    %1609 = vmatprep.subr.mxu0 %v1501
    %1610 = vmatpush1.msra.mxu0 %v1500
    %1611 = vmatprep.subr.mxu0 %v1497
    %1612 = vmatpush1.msra.mxu0 %v1496
    %1613 = vmatprep.subr.mxu0 %v1493
    %1614 = vmatpush1.msra.mxu0 %v1492
    %1615 = vmatprep.subr.mxu0 %v1489
    %1616 = vmatpush1.msra.mxu0 %v1488
    %1617 = vmatprep.subr.mxu0 %v1485
    %1618 = vmatpush1.msra.mxu0 %v1484
    %1619 = vmatprep.subr.mxu0 %v1481
    %1620 = vmatpush1.msra.mxu0 %v1480
    %1621 = vmatprep.subr.mxu0 %v1477
    %1622 = vmatpush1.msra.mxu0 %v1476
    %1623 = vmatprep.subr.mxu0 %v1473
    %1624 = vmatpush1.msra.mxu0 %v1472
    %1625 = vmatprep.subr.mxu0 %v1469
    %1626 = vmatpush1.msra.mxu0 %v1468
    %1627 = vmatprep.subr.mxu0 %v1465
    %1628 = vmatpush1.msra.mxu0 %v1464
    %1629 = vmatprep.subr.mxu0 0.0
    %1630 = vmatpush2.msra.mxu0 0.0
    %1631 = vmatprep.subr.mxu0 0.0
    %1632 = vmatpush2.msra.mxu0 0.0
    %1633 = vmatprep.subr.mxu0 0.0
    %1634 = vmatpush2.msra.mxu0 0.0
    %1635 = vmatprep.subr.mxu0 0.0
    %1636 = vmatpush2.msra.mxu0 0.0
    %1637 = vmatprep.subr.mxu0 0.0
    %1638 = vmatpush2.msra.mxu0 0.0
    %1639 = vmatprep.subr.mxu0 0.0
    %1640 = vmatpush2.msra.mxu0 0.0
    %1641 = vmatprep.subr.mxu0 0.0
    %1642 = vmatpush2.msra.mxu0 0.0
    %1643 = vmatprep.subr.mxu0 0.0
    %1644 = vmatpush2.msra.mxu0 0.0
    %1645 = vmatprep.subr.mxu0 0.0
    %1646 = vmatpush2.msra.mxu0 0.0
    %1647 = vmatprep.subr.mxu0 0.0
    %1648 = vmatpush2.msra.mxu0 0.0
    %1649 = vmatprep.subr.mxu0 0.0
    %1650 = vmatpush2.msra.mxu0 0.0
    %1651 = vmatprep.subr.mxu0 0.0
    %1652 = vmatpush2.msra.mxu0 0.0
    %1653 = vmatprep.subr.mxu0 0.0
    %1654 = vmatpush2.msra.mxu0 0.0
    %1655 = vmatprep.subr.mxu0 0.0
    %1656 = vmatpush2.msra.mxu0 0.0
    %1657 = vmatprep.subr.mxu0 0.0
    %1658 = vmatpush2.msra.mxu0 0.0
    %1659 = vmatprep.subr.mxu0 0.0
    %1660 = vmatpush2.msra.mxu0 0.0
    %1661 = vmatprep.mubr.f32.mxu0 0.0
    %1662 = vmatmul.mubr.f32.gmra.mxu0 %v1217
    %v1663 = vpop.f32.mrf.mxu0
    %v1664 = vadd.f32 0.0, %v1663
    %v1665 = vpop.f32.mrf.mxu0
    %v1666 = vadd.f32 0.0, %v1665
    %1667 = vdwg.mxu0
    %v1668 = vadd.f32 %v1458, %v1593
    %v1669 = vadd.f32 %v1459, %v1595
    %v1670 = vadd.f32 %v1460, %v1664
    %v1671 = vadd.f32 %v1461, %v1666
    %v1672 = vxor.u32 %v1668, 2147483648
    %v1673 = vmul.f32 %v1672, 1.442695
    %v1674 = vpow.pop %v1673
    %v1675 = vadd.f32 %v1674, 1.0
    %v1676 = vrcp.pop %v1675
    %v1677 = vmul.f32 1.0, %v1676
    %v1678 = vxor.u32 %v1669, 2147483648
    %v1679 = vmul.f32 %v1678, 1.442695
    %v1680 = vpow.pop %v1679
    %v1681 = vadd.f32 %v1680, 1.0
    %v1682 = vrcp.pop %v1681
    %v1683 = vmul.f32 1.0, %v1682
    %v1684 = vtanh.pop %v1670
    %v1685 = vxor.u32 %v1671, 2147483648
    %v1686 = vmul.f32 %v1685, 1.442695
    %v1687 = vpow.pop %v1686
    %v1688 = vadd.f32 %v1687, 1.0
    %v1689 = vrcp.pop %v1688
    %v1690 = vmul.f32 1.0, %v1689
    %v1691 = vmul.f32 %v1683, %v1215
    %v1692 = vmul.f32 %v1677, %v1684
    %v1693 = vadd.f32 %v1691, %v1692
    %v1694 = vtanh.pop %v1693
    %v1695 = vmul.f32 %v1690, %v1694
    %1696 = vst [vmem:[#allocation4 + $0x10] sm:$0xff] %v1457
    %1697 = vst [vmem:[#allocation4 + $0x68] sm:$0xff] %v1695
    %v1698 = vld [vmem:[#allocation2 + $0x40] sm:$0xff]
    %v1699 = vld [vmem:[#allocation2 + $0x48] sm:$0xff]
    %v1700 = vld [vmem:[#allocation2 + $0x50] sm:$0xff]
    %v1701 = vld [vmem:[#allocation2 + $0x58] sm:$0xff]
    %v1702 = vld [vmem:[%s3] sm:$0xff]
    %v1703 = vld [vmem:[%s3 + $0x8] sm:$0xff]
    %v1704 = vld [vmem:[%s3 + $0x10] sm:$0xff]
    %v1705 = vld [vmem:[%s3 + $0x18] sm:$0xff]
    %v1706 = vld [vmem:[%s3 + $0x20] sm:$0xff]
    %v1707 = vld [vmem:[%s3 + $0x28] sm:$0xff]
    %v1708 = vld [vmem:[%s3 + $0x30] sm:$0xff]
    %v1709 = vld [vmem:[%s3 + $0x38] sm:$0xff]
    %v1710 = vld [vmem:[%s3 + $0x40] sm:$0xff]
    %v1711 = vld [vmem:[%s3 + $0x48] sm:$0xff]
    %v1712 = vld [vmem:[%s3 + $0x50] sm:$0xff]
    %v1713 = vld [vmem:[%s3 + $0x58] sm:$0xff]
    %v1714 = vld [vmem:[%s3 + $0x60] sm:$0xff]
    %v1715 = vld [vmem:[%s3 + $0x68] sm:$0xff]
    %v1716 = vld [vmem:[%s3 + $0x70] sm:$0xff]
    %v1717 = vld [vmem:[%s3 + $0x78] sm:$0xff]
    %v1718 = vld [vmem:[%s3 + $0x80] sm:$0xff]
    %v1719 = vld [vmem:[%s3 + $0x88] sm:$0xff]
    %v1720 = vld [vmem:[%s3 + $0x90] sm:$0xff]
    %v1721 = vld [vmem:[%s3 + $0x98] sm:$0xff]
    %v1722 = vld [vmem:[%s3 + $0xa0] sm:$0xff]
    %v1723 = vld [vmem:[%s3 + $0xa8] sm:$0xff]
    %v1724 = vld [vmem:[%s3 + $0xb0] sm:$0xff]
    %v1725 = vld [vmem:[%s3 + $0xb8] sm:$0xff]
    %v1726 = vld [vmem:[%s3 + $0xc0] sm:$0xff]
    %v1727 = vld [vmem:[%s3 + $0xc8] sm:$0xff]
    %v1728 = vld [vmem:[%s3 + $0xd0] sm:$0xff]
    %v1729 = vld [vmem:[%s3 + $0xd8] sm:$0xff]
    %v1730 = vld [vmem:[%s3 + $0xe0] sm:$0xff]
    %v1731 = vld [vmem:[%s3 + $0xe8] sm:$0xff]
    %v1732 = vld [vmem:[%s3 + $0xf0] sm:$0xff]
    %v1733 = vld [vmem:[%s3 + $0xf8] sm:$0xff]
    %v1734 = vld [vmem:[%s3 + $0x100] sm:$0xff]
    %v1735 = vld [vmem:[%s3 + $0x108] sm:$0xff]
    %v1736 = vld [vmem:[%s3 + $0x110] sm:$0xff]
    %v1737 = vld [vmem:[%s3 + $0x118] sm:$0xff]
    %v1738 = vld [vmem:[%s3 + $0x120] sm:$0xff]
    %v1739 = vld [vmem:[%s3 + $0x128] sm:$0xff]
    %v1740 = vld [vmem:[%s3 + $0x130] sm:$0xff]
    %v1741 = vld [vmem:[%s3 + $0x138] sm:$0xff]
    %v1742 = vld [vmem:[%s3 + $0x140] sm:$0xff]
    %v1743 = vld [vmem:[%s3 + $0x148] sm:$0xff]
    %v1744 = vld [vmem:[%s3 + $0x150] sm:$0xff]
    %v1745 = vld [vmem:[%s3 + $0x158] sm:$0xff]
    %v1746 = vld [vmem:[%s3 + $0x160] sm:$0xff]
    %v1747 = vld [vmem:[%s3 + $0x168] sm:$0xff]
    %v1748 = vld [vmem:[%s3 + $0x170] sm:$0xff]
    %v1749 = vld [vmem:[%s3 + $0x178] sm:$0xff]
    %v1750 = vld [vmem:[%s3 + $0x180] sm:$0xff]
    %v1751 = vld [vmem:[%s3 + $0x188] sm:$0xff]
    %v1752 = vld [vmem:[%s3 + $0x190] sm:$0xff]
    %v1753 = vld [vmem:[%s3 + $0x198] sm:$0xff]
    %v1754 = vld [vmem:[%s3 + $0x1a0] sm:$0xff]
    %v1755 = vld [vmem:[%s3 + $0x1a8] sm:$0xff]
    %v1756 = vld [vmem:[%s3 + $0x1b0] sm:$0xff]
    %v1757 = vld [vmem:[%s3 + $0x1b8] sm:$0xff]
    %v1758 = vld [vmem:[%s3 + $0x1c0] sm:$0xff]
    %v1759 = vld [vmem:[%s3 + $0x1c8] sm:$0xff]
    %v1760 = vld [vmem:[%s3 + $0x1d0] sm:$0xff]
    %v1761 = vld [vmem:[%s3 + $0x1d8] sm:$0xff]
    %v1762 = vld [vmem:[%s3 + $0x1e0] sm:$0xff]
    %v1763 = vld [vmem:[%s3 + $0x1e8] sm:$0xff]
    %v1764 = vld [vmem:[%s3 + $0x1f0] sm:$0xff]
    %v1765 = vld [vmem:[%s3 + $0x1f8] sm:$0xff]
    %1766 = vmatprep.subr.mxu0 %v1763
    %1767 = vmatpush1.msra.mxu0 %v1762
    %1768 = vmatprep.subr.mxu0 %v1759
    %1769 = vmatpush1.msra.mxu0 %v1758
    %1770 = vmatprep.subr.mxu0 %v1755
    %1771 = vmatpush1.msra.mxu0 %v1754
    %1772 = vmatprep.subr.mxu0 %v1751
    %1773 = vmatpush1.msra.mxu0 %v1750
    %1774 = vmatprep.subr.mxu0 %v1747
    %1775 = vmatpush1.msra.mxu0 %v1746
    %1776 = vmatprep.subr.mxu0 %v1743
    %1777 = vmatpush1.msra.mxu0 %v1742
    %1778 = vmatprep.subr.mxu0 %v1739
    %1779 = vmatpush1.msra.mxu0 %v1738
    %1780 = vmatprep.subr.mxu0 %v1735
    %1781 = vmatpush1.msra.mxu0 %v1734
    %1782 = vmatprep.subr.mxu0 %v1731
    %1783 = vmatpush1.msra.mxu0 %v1730
    %1784 = vmatprep.subr.mxu0 %v1727
    %1785 = vmatpush1.msra.mxu0 %v1726
    %1786 = vmatprep.subr.mxu0 %v1723
    %1787 = vmatpush1.msra.mxu0 %v1722
    %1788 = vmatprep.subr.mxu0 %v1719
    %1789 = vmatpush1.msra.mxu0 %v1718
    %1790 = vmatprep.subr.mxu0 %v1715
    %1791 = vmatpush1.msra.mxu0 %v1714
    %1792 = vmatprep.subr.mxu0 %v1711
    %1793 = vmatpush1.msra.mxu0 %v1710
    %1794 = vmatprep.subr.mxu0 %v1707
    %1795 = vmatpush1.msra.mxu0 %v1706
    %1796 = vmatprep.subr.mxu0 %v1703
    %1797 = vmatpush1.msra.mxu0 %v1702
    %1798 = vmatprep.subr.mxu0 0.0
    %1799 = vmatpush2.msra.mxu0 0.0
    %1800 = vmatprep.subr.mxu0 0.0
    %1801 = vmatpush2.msra.mxu0 0.0
    %1802 = vmatprep.subr.mxu0 0.0
    %1803 = vmatpush2.msra.mxu0 0.0
    %1804 = vmatprep.subr.mxu0 0.0
    %1805 = vmatpush2.msra.mxu0 0.0
    %1806 = vmatprep.subr.mxu0 0.0
    %1807 = vmatpush2.msra.mxu0 0.0
    %1808 = vmatprep.subr.mxu0 0.0
    %1809 = vmatpush2.msra.mxu0 0.0
    %1810 = vmatprep.subr.mxu0 0.0
    %1811 = vmatpush2.msra.mxu0 0.0
    %1812 = vmatprep.subr.mxu0 0.0
    %1813 = vmatpush2.msra.mxu0 0.0
    %1814 = vmatprep.subr.mxu0 0.0
    %1815 = vmatpush2.msra.mxu0 0.0
    %1816 = vmatprep.subr.mxu0 0.0
    %1817 = vmatpush2.msra.mxu0 0.0
    %1818 = vmatprep.subr.mxu0 0.0
    %1819 = vmatpush2.msra.mxu0 0.0
    %1820 = vmatprep.subr.mxu0 0.0
    %1821 = vmatpush2.msra.mxu0 0.0
    %1822 = vmatprep.subr.mxu0 0.0
    %1823 = vmatpush2.msra.mxu0 0.0
    %1824 = vmatprep.subr.mxu0 0.0
    %1825 = vmatpush2.msra.mxu0 0.0
    %1826 = vmatprep.subr.mxu0 0.0
    %1827 = vmatpush2.msra.mxu0 0.0
    %1828 = vmatprep.subr.mxu0 0.0
    %1829 = vmatpush2.msra.mxu0 0.0
    %1830 = vmatprep.mubr.f32.mxu0 0.0
    %1831 = vmatmul.mubr.f32.gmra.mxu0 %v1457
    %v1832 = vpop.f32.mrf.mxu0
    %v1833 = vadd.f32 0.0, %v1832
    %v1834 = vpop.f32.mrf.mxu0
    %v1835 = vadd.f32 0.0, %v1834
    %1836 = vdwg.mxu0
    %1837 = vmatprep.subr.mxu0 %v1765
    %1838 = vmatpush1.msra.mxu0 %v1764
    %1839 = vmatprep.subr.mxu0 %v1761
    %1840 = vmatpush1.msra.mxu0 %v1760
    %1841 = vmatprep.subr.mxu0 %v1757
    %1842 = vmatpush1.msra.mxu0 %v1756
    %1843 = vmatprep.subr.mxu0 %v1753
    %1844 = vmatpush1.msra.mxu0 %v1752
    %1845 = vmatprep.subr.mxu0 %v1749
    %1846 = vmatpush1.msra.mxu0 %v1748
    %1847 = vmatprep.subr.mxu0 %v1745
    %1848 = vmatpush1.msra.mxu0 %v1744
    %1849 = vmatprep.subr.mxu0 %v1741
    %1850 = vmatpush1.msra.mxu0 %v1740
    %1851 = vmatprep.subr.mxu0 %v1737
    %1852 = vmatpush1.msra.mxu0 %v1736
    %1853 = vmatprep.subr.mxu0 %v1733
    %1854 = vmatpush1.msra.mxu0 %v1732
    %1855 = vmatprep.subr.mxu0 %v1729
    %1856 = vmatpush1.msra.mxu0 %v1728
    %1857 = vmatprep.subr.mxu0 %v1725
    %1858 = vmatpush1.msra.mxu0 %v1724
    %1859 = vmatprep.subr.mxu0 %v1721
    %1860 = vmatpush1.msra.mxu0 %v1720
    %1861 = vmatprep.subr.mxu0 %v1717
    %1862 = vmatpush1.msra.mxu0 %v1716
    %1863 = vmatprep.subr.mxu0 %v1713
    %1864 = vmatpush1.msra.mxu0 %v1712
    %1865 = vmatprep.subr.mxu0 %v1709
    %1866 = vmatpush1.msra.mxu0 %v1708
    %1867 = vmatprep.subr.mxu0 %v1705
    %1868 = vmatpush1.msra.mxu0 %v1704
    %1869 = vmatprep.subr.mxu0 0.0
    %1870 = vmatpush2.msra.mxu0 0.0
    %1871 = vmatprep.subr.mxu0 0.0
    %1872 = vmatpush2.msra.mxu0 0.0
    %1873 = vmatprep.subr.mxu0 0.0
    %1874 = vmatpush2.msra.mxu0 0.0
    %1875 = vmatprep.subr.mxu0 0.0
    %1876 = vmatpush2.msra.mxu0 0.0
    %1877 = vmatprep.subr.mxu0 0.0
    %1878 = vmatpush2.msra.mxu0 0.0
    %1879 = vmatprep.subr.mxu0 0.0
    %1880 = vmatpush2.msra.mxu0 0.0
    %1881 = vmatprep.subr.mxu0 0.0
    %1882 = vmatpush2.msra.mxu0 0.0
    %1883 = vmatprep.subr.mxu0 0.0
    %1884 = vmatpush2.msra.mxu0 0.0
    %1885 = vmatprep.subr.mxu0 0.0
    %1886 = vmatpush2.msra.mxu0 0.0
    %1887 = vmatprep.subr.mxu0 0.0
    %1888 = vmatpush2.msra.mxu0 0.0
    %1889 = vmatprep.subr.mxu0 0.0
    %1890 = vmatpush2.msra.mxu0 0.0
    %1891 = vmatprep.subr.mxu0 0.0
    %1892 = vmatpush2.msra.mxu0 0.0
    %1893 = vmatprep.subr.mxu0 0.0
    %1894 = vmatpush2.msra.mxu0 0.0
    %1895 = vmatprep.subr.mxu0 0.0
    %1896 = vmatpush2.msra.mxu0 0.0
    %1897 = vmatprep.subr.mxu0 0.0
    %1898 = vmatpush2.msra.mxu0 0.0
    %1899 = vmatprep.subr.mxu0 0.0
    %1900 = vmatpush2.msra.mxu0 0.0
    %1901 = vmatprep.mubr.f32.mxu0 0.0
    %1902 = vmatmul.mubr.f32.gmra.mxu0 %v1457
    %v1903 = vpop.f32.mrf.mxu0
    %v1904 = vadd.f32 0.0, %v1903
    %v1905 = vpop.f32.mrf.mxu0
    %v1906 = vadd.f32 0.0, %v1905
    %1907 = vdwg.mxu0
    %v1908 = vadd.f32 %v1698, %v1833
    %v1909 = vadd.f32 %v1699, %v1835
    %v1910 = vadd.f32 %v1700, %v1904
    %v1911 = vadd.f32 %v1701, %v1906
    %v1912 = vxor.u32 %v1908, 2147483648
    %v1913 = vmul.f32 %v1912, 1.442695
    %v1914 = vpow.pop %v1913
    %v1915 = vadd.f32 %v1914, 1.0
    %v1916 = vrcp.pop %v1915
    %v1917 = vmul.f32 1.0, %v1916
    %v1918 = vxor.u32 %v1909, 2147483648
    %v1919 = vmul.f32 %v1918, 1.442695
    %v1920 = vpow.pop %v1919
    %v1921 = vadd.f32 %v1920, 1.0
    %v1922 = vrcp.pop %v1921
    %v1923 = vmul.f32 1.0, %v1922
    %v1924 = vtanh.pop %v1910
    %v1925 = vxor.u32 %v1911, 2147483648
    %v1926 = vmul.f32 %v1925, 1.442695
    %v1927 = vpow.pop %v1926
    %v1928 = vadd.f32 %v1927, 1.0
    %v1929 = vrcp.pop %v1928
    %v1930 = vmul.f32 1.0, %v1929
    %v1931 = vmul.f32 %v1923, %v1455
    %v1932 = vmul.f32 %v1917, %v1924
    %v1933 = vadd.f32 %v1931, %v1932
    %v1934 = vtanh.pop %v1933
    %v1935 = vmul.f32 %v1930, %v1934
    %v1936 = vld [vmem:[#allocation3 + $0xa0] sm:$0xff]
    %v1937 = vld [vmem:[#allocation3 + $0xa8] sm:$0xff]
    %v1938 = vld [vmem:[#allocation3 + $0xb0] sm:$0xff]
    %v1939 = vld [vmem:[#allocation3 + $0xb8] sm:$0xff]
    %v1940 = vld [vmem:[#allocation12] sm:$0xff]
    %v1941 = vld [vmem:[#allocation12 + $0x8] sm:$0xff]
    %v1942 = vld [vmem:[#allocation12 + $0x10] sm:$0xff]
    %v1943 = vld [vmem:[#allocation12 + $0x18] sm:$0xff]
    %v1944 = vld [vmem:[#allocation12 + $0x20] sm:$0xff]
    %v1945 = vld [vmem:[#allocation12 + $0x28] sm:$0xff]
    %v1946 = vld [vmem:[#allocation12 + $0x30] sm:$0xff]
    %v1947 = vld [vmem:[#allocation12 + $0x38] sm:$0xff]
    %v1948 = vld [vmem:[#allocation12 + $0x40] sm:$0xff]
    %v1949 = vld [vmem:[#allocation12 + $0x48] sm:$0xff]
    %v1950 = vld [vmem:[#allocation12 + $0x50] sm:$0xff]
    %v1951 = vld [vmem:[#allocation12 + $0x58] sm:$0xff]
    %v1952 = vld [vmem:[#allocation12 + $0x60] sm:$0xff]
    %v1953 = vld [vmem:[#allocation12 + $0x68] sm:$0xff]
    %v1954 = vld [vmem:[#allocation12 + $0x70] sm:$0xff]
    %v1955 = vld [vmem:[#allocation12 + $0x78] sm:$0xff]
    %v1956 = vld [vmem:[#allocation12 + $0x80] sm:$0xff]
    %v1957 = vld [vmem:[#allocation12 + $0x88] sm:$0xff]
    %v1958 = vld [vmem:[#allocation12 + $0x90] sm:$0xff]
    %v1959 = vld [vmem:[#allocation12 + $0x98] sm:$0xff]
    %v1960 = vld [vmem:[#allocation12 + $0xa0] sm:$0xff]
    %v1961 = vld [vmem:[#allocation12 + $0xa8] sm:$0xff]
    %v1962 = vld [vmem:[#allocation12 + $0xb0] sm:$0xff]
    %v1963 = vld [vmem:[#allocation12 + $0xb8] sm:$0xff]
    %v1964 = vld [vmem:[#allocation12 + $0xc0] sm:$0xff]
    %v1965 = vld [vmem:[#allocation12 + $0xc8] sm:$0xff]
    %v1966 = vld [vmem:[#allocation12 + $0xd0] sm:$0xff]
    %v1967 = vld [vmem:[#allocation12 + $0xd8] sm:$0xff]
    %v1968 = vld [vmem:[#allocation12 + $0xe0] sm:$0xff]
    %v1969 = vld [vmem:[#allocation12 + $0xe8] sm:$0xff]
    %v1970 = vld [vmem:[#allocation12 + $0xf0] sm:$0xff]
    %v1971 = vld [vmem:[#allocation12 + $0xf8] sm:$0xff]
    %v1972 = vld [vmem:[#allocation12 + $0x100] sm:$0xff]
    %v1973 = vld [vmem:[#allocation12 + $0x108] sm:$0xff]
    %v1974 = vld [vmem:[#allocation12 + $0x110] sm:$0xff]
    %v1975 = vld [vmem:[#allocation12 + $0x118] sm:$0xff]
    %v1976 = vld [vmem:[#allocation12 + $0x120] sm:$0xff]
    %v1977 = vld [vmem:[#allocation12 + $0x128] sm:$0xff]
    %v1978 = vld [vmem:[#allocation12 + $0x130] sm:$0xff]
    %v1979 = vld [vmem:[#allocation12 + $0x138] sm:$0xff]
    %v1980 = vld [vmem:[#allocation12 + $0x140] sm:$0xff]
    %v1981 = vld [vmem:[#allocation12 + $0x148] sm:$0xff]
    %v1982 = vld [vmem:[#allocation12 + $0x150] sm:$0xff]
    %v1983 = vld [vmem:[#allocation12 + $0x158] sm:$0xff]
    %v1984 = vld [vmem:[#allocation12 + $0x160] sm:$0xff]
    %v1985 = vld [vmem:[#allocation12 + $0x168] sm:$0xff]
    %v1986 = vld [vmem:[#allocation12 + $0x170] sm:$0xff]
    %v1987 = vld [vmem:[#allocation12 + $0x178] sm:$0xff]
    %v1988 = vld [vmem:[#allocation12 + $0x180] sm:$0xff]
    %v1989 = vld [vmem:[#allocation12 + $0x188] sm:$0xff]
    %v1990 = vld [vmem:[#allocation12 + $0x190] sm:$0xff]
    %v1991 = vld [vmem:[#allocation12 + $0x198] sm:$0xff]
    %v1992 = vld [vmem:[#allocation12 + $0x1a0] sm:$0xff]
    %v1993 = vld [vmem:[#allocation12 + $0x1a8] sm:$0xff]
    %v1994 = vld [vmem:[#allocation12 + $0x1b0] sm:$0xff]
    %v1995 = vld [vmem:[#allocation12 + $0x1b8] sm:$0xff]
    %v1996 = vld [vmem:[#allocation12 + $0x1c0] sm:$0xff]
    %v1997 = vld [vmem:[#allocation12 + $0x1c8] sm:$0xff]
    %v1998 = vld [vmem:[#allocation12 + $0x1d0] sm:$0xff]
    %v1999 = vld [vmem:[#allocation12 + $0x1d8] sm:$0xff]
    %v2000 = vld [vmem:[#allocation12 + $0x1e0] sm:$0xff]
    %v2001 = vld [vmem:[#allocation12 + $0x1e8] sm:$0xff]
    %v2002 = vld [vmem:[#allocation12 + $0x1f0] sm:$0xff]
    %v2003 = vld [vmem:[#allocation12 + $0x1f8] sm:$0xff]
    %2004 = vmatprep.subr.mxu0 %v2001
    %2005 = vmatpush1.msra.mxu0 %v2000
    %2006 = vmatprep.subr.mxu0 %v1997
    %2007 = vmatpush1.msra.mxu0 %v1996
    %2008 = vmatprep.subr.mxu0 %v1993
    %2009 = vmatpush1.msra.mxu0 %v1992
    %2010 = vmatprep.subr.mxu0 %v1989
    %2011 = vmatpush1.msra.mxu0 %v1988
    %2012 = vmatprep.subr.mxu0 %v1985
    %2013 = vmatpush1.msra.mxu0 %v1984
    %2014 = vmatprep.subr.mxu0 %v1981
    %2015 = vmatpush1.msra.mxu0 %v1980
    %2016 = vmatprep.subr.mxu0 %v1977
    %2017 = vmatpush1.msra.mxu0 %v1976
    %2018 = vmatprep.subr.mxu0 %v1973
    %2019 = vmatpush1.msra.mxu0 %v1972
    %2020 = vmatprep.subr.mxu0 %v1969
    %2021 = vmatpush1.msra.mxu0 %v1968
    %2022 = vmatprep.subr.mxu0 %v1965
    %2023 = vmatpush1.msra.mxu0 %v1964
    %2024 = vmatprep.subr.mxu0 %v1961
    %2025 = vmatpush1.msra.mxu0 %v1960
    %2026 = vmatprep.subr.mxu0 %v1957
    %2027 = vmatpush1.msra.mxu0 %v1956
    %2028 = vmatprep.subr.mxu0 %v1953
    %2029 = vmatpush1.msra.mxu0 %v1952
    %2030 = vmatprep.subr.mxu0 %v1949
    %2031 = vmatpush1.msra.mxu0 %v1948
    %2032 = vmatprep.subr.mxu0 %v1945
    %2033 = vmatpush1.msra.mxu0 %v1944
    %2034 = vmatprep.subr.mxu0 %v1941
    %2035 = vmatpush1.msra.mxu0 %v1940
    %2036 = vmatprep.subr.mxu0 0.0
    %2037 = vmatpush2.msra.mxu0 0.0
    %2038 = vmatprep.subr.mxu0 0.0
    %2039 = vmatpush2.msra.mxu0 0.0
    %2040 = vmatprep.subr.mxu0 0.0
    %2041 = vmatpush2.msra.mxu0 0.0
    %2042 = vmatprep.subr.mxu0 0.0
    %2043 = vmatpush2.msra.mxu0 0.0
    %2044 = vmatprep.subr.mxu0 0.0
    %2045 = vmatpush2.msra.mxu0 0.0
    %2046 = vmatprep.subr.mxu0 0.0
    %2047 = vmatpush2.msra.mxu0 0.0
    %2048 = vmatprep.subr.mxu0 0.0
    %2049 = vmatpush2.msra.mxu0 0.0
    %2050 = vmatprep.subr.mxu0 0.0
    %2051 = vmatpush2.msra.mxu0 0.0
    %2052 = vmatprep.subr.mxu0 0.0
    %2053 = vmatpush2.msra.mxu0 0.0
    %2054 = vmatprep.subr.mxu0 0.0
    %2055 = vmatpush2.msra.mxu0 0.0
    %2056 = vmatprep.subr.mxu0 0.0
    %2057 = vmatpush2.msra.mxu0 0.0
    %2058 = vmatprep.subr.mxu0 0.0
    %2059 = vmatpush2.msra.mxu0 0.0
    %2060 = vmatprep.subr.mxu0 0.0
    %2061 = vmatpush2.msra.mxu0 0.0
    %2062 = vmatprep.subr.mxu0 0.0
    %2063 = vmatpush2.msra.mxu0 0.0
    %2064 = vmatprep.subr.mxu0 0.0
    %2065 = vmatpush2.msra.mxu0 0.0
    %2066 = vmatprep.subr.mxu0 0.0
    %2067 = vmatpush2.msra.mxu0 0.0
    %2068 = vmatprep.mubr.f32.mxu0 0.0
    %2069 = vmatmul.mubr.f32.gmra.mxu0 %v1695
    %v2070 = vpop.f32.mrf.mxu0
    %v2071 = vadd.f32 0.0, %v2070
    %v2072 = vpop.f32.mrf.mxu0
    %v2073 = vadd.f32 0.0, %v2072
    %2074 = vdwg.mxu0
    %2075 = vmatprep.subr.mxu0 %v2003
    %2076 = vmatpush1.msra.mxu0 %v2002
    %2077 = vmatprep.subr.mxu0 %v1999
    %2078 = vmatpush1.msra.mxu0 %v1998
    %2079 = vmatprep.subr.mxu0 %v1995
    %2080 = vmatpush1.msra.mxu0 %v1994
    %2081 = vmatprep.subr.mxu0 %v1991
    %2082 = vmatpush1.msra.mxu0 %v1990
    %2083 = vmatprep.subr.mxu0 %v1987
    %2084 = vmatpush1.msra.mxu0 %v1986
    %2085 = vmatprep.subr.mxu0 %v1983
    %2086 = vmatpush1.msra.mxu0 %v1982
    %2087 = vmatprep.subr.mxu0 %v1979
    %2088 = vmatpush1.msra.mxu0 %v1978
    %2089 = vmatprep.subr.mxu0 %v1975
    %2090 = vmatpush1.msra.mxu0 %v1974
    %2091 = vmatprep.subr.mxu0 %v1971
    %2092 = vmatpush1.msra.mxu0 %v1970
    %2093 = vmatprep.subr.mxu0 %v1967
    %2094 = vmatpush1.msra.mxu0 %v1966
    %2095 = vmatprep.subr.mxu0 %v1963
    %2096 = vmatpush1.msra.mxu0 %v1962
    %2097 = vmatprep.subr.mxu0 %v1959
    %2098 = vmatpush1.msra.mxu0 %v1958
    %2099 = vmatprep.subr.mxu0 %v1955
    %2100 = vmatpush1.msra.mxu0 %v1954
    %2101 = vmatprep.subr.mxu0 %v1951
    %2102 = vmatpush1.msra.mxu0 %v1950
    %2103 = vmatprep.subr.mxu0 %v1947
    %2104 = vmatpush1.msra.mxu0 %v1946
    %2105 = vmatprep.subr.mxu0 %v1943
    %2106 = vmatpush1.msra.mxu0 %v1942
    %2107 = vmatprep.subr.mxu0 0.0
    %2108 = vmatpush2.msra.mxu0 0.0
    %2109 = vmatprep.subr.mxu0 0.0
    %2110 = vmatpush2.msra.mxu0 0.0
    %2111 = vmatprep.subr.mxu0 0.0
    %2112 = vmatpush2.msra.mxu0 0.0
    %2113 = vmatprep.subr.mxu0 0.0
    %2114 = vmatpush2.msra.mxu0 0.0
    %2115 = vmatprep.subr.mxu0 0.0
    %2116 = vmatpush2.msra.mxu0 0.0
    %2117 = vmatprep.subr.mxu0 0.0
    %2118 = vmatpush2.msra.mxu0 0.0
    %2119 = vmatprep.subr.mxu0 0.0
    %2120 = vmatpush2.msra.mxu0 0.0
    %2121 = vmatprep.subr.mxu0 0.0
    %2122 = vmatpush2.msra.mxu0 0.0
    %2123 = vmatprep.subr.mxu0 0.0
    %2124 = vmatpush2.msra.mxu0 0.0
    %2125 = vmatprep.subr.mxu0 0.0
    %2126 = vmatpush2.msra.mxu0 0.0
    %2127 = vmatprep.subr.mxu0 0.0
    %2128 = vmatpush2.msra.mxu0 0.0
    %2129 = vmatprep.subr.mxu0 0.0
    %2130 = vmatpush2.msra.mxu0 0.0
    %2131 = vmatprep.subr.mxu0 0.0
    %2132 = vmatpush2.msra.mxu0 0.0
    %2133 = vmatprep.subr.mxu0 0.0
    %2134 = vmatpush2.msra.mxu0 0.0
    %2135 = vmatprep.subr.mxu0 0.0
    %2136 = vmatpush2.msra.mxu0 0.0
    %2137 = vmatprep.subr.mxu0 0.0
    %2138 = vmatpush2.msra.mxu0 0.0
    %2139 = vmatprep.mubr.f32.mxu0 0.0
    %2140 = vmatmul.mubr.f32.gmra.mxu0 %v1695
    %v2141 = vpop.f32.mrf.mxu0
    %v2142 = vadd.f32 0.0, %v2141
    %v2143 = vpop.f32.mrf.mxu0
    %v2144 = vadd.f32 0.0, %v2143
    %2145 = vdwg.mxu0
    %v2146 = vadd.f32 %v1936, %v2071
    %v2147 = vadd.f32 %v1937, %v2073
    %v2148 = vadd.f32 %v1938, %v2142
    %v2149 = vadd.f32 %v1939, %v2144
    %v2150 = vxor.u32 %v2146, 2147483648
    %v2151 = vmul.f32 %v2150, 1.442695
    %v2152 = vpow.pop %v2151
    %v2153 = vadd.f32 %v2152, 1.0
    %v2154 = vrcp.pop %v2153
    %v2155 = vmul.f32 1.0, %v2154
    %v2156 = vxor.u32 %v2147, 2147483648
    %v2157 = vmul.f32 %v2156, 1.442695
    %v2158 = vpow.pop %v2157
    %v2159 = vadd.f32 %v2158, 1.0
    %v2160 = vrcp.pop %v2159
    %v2161 = vmul.f32 1.0, %v2160
    %v2162 = vtanh.pop %v2148
    %v2163 = vxor.u32 %v2149, 2147483648
    %v2164 = vmul.f32 %v2163, 1.442695
    %v2165 = vpow.pop %v2164
    %v2166 = vadd.f32 %v2165, 1.0
    %v2167 = vrcp.pop %v2166
    %v2168 = vmul.f32 1.0, %v2167
    %v2169 = vmul.f32 %v2161, %v1693
    %v2170 = vmul.f32 %v2155, %v2162
    %v2171 = vadd.f32 %v2169, %v2170
    %v2172 = vtanh.pop %v2171
    %v2173 = vmul.f32 %v2168, %v2172
    %2174 = vst [vmem:[#allocation4 + $0x20] sm:$0xff] %v1935
    %2175 = vst [vmem:[#allocation4 + $0x58] sm:$0xff] %v2173
    %v2176 = vld [vmem:[#allocation2 + $0x60] sm:$0xff]
    %v2177 = vld [vmem:[#allocation2 + $0x68] sm:$0xff]
    %v2178 = vld [vmem:[#allocation2 + $0x70] sm:$0xff]
    %v2179 = vld [vmem:[#allocation2 + $0x78] sm:$0xff]
    %v2180 = vld [vmem:[%s3] sm:$0xff]
    %v2181 = vld [vmem:[%s3 + $0x8] sm:$0xff]
    %v2182 = vld [vmem:[%s3 + $0x10] sm:$0xff]
    %v2183 = vld [vmem:[%s3 + $0x18] sm:$0xff]
    %v2184 = vld [vmem:[%s3 + $0x20] sm:$0xff]
    %v2185 = vld [vmem:[%s3 + $0x28] sm:$0xff]
    %v2186 = vld [vmem:[%s3 + $0x30] sm:$0xff]
    %v2187 = vld [vmem:[%s3 + $0x38] sm:$0xff]
    %v2188 = vld [vmem:[%s3 + $0x40] sm:$0xff]
    %v2189 = vld [vmem:[%s3 + $0x48] sm:$0xff]
    %v2190 = vld [vmem:[%s3 + $0x50] sm:$0xff]
    %v2191 = vld [vmem:[%s3 + $0x58] sm:$0xff]
    %v2192 = vld [vmem:[%s3 + $0x60] sm:$0xff]
    %v2193 = vld [vmem:[%s3 + $0x68] sm:$0xff]
    %v2194 = vld [vmem:[%s3 + $0x70] sm:$0xff]
    %v2195 = vld [vmem:[%s3 + $0x78] sm:$0xff]
    %v2196 = vld [vmem:[%s3 + $0x80] sm:$0xff]
    %v2197 = vld [vmem:[%s3 + $0x88] sm:$0xff]
    %v2198 = vld [vmem:[%s3 + $0x90] sm:$0xff]
    %v2199 = vld [vmem:[%s3 + $0x98] sm:$0xff]
    %v2200 = vld [vmem:[%s3 + $0xa0] sm:$0xff]
    %v2201 = vld [vmem:[%s3 + $0xa8] sm:$0xff]
    %v2202 = vld [vmem:[%s3 + $0xb0] sm:$0xff]
    %v2203 = vld [vmem:[%s3 + $0xb8] sm:$0xff]
    %v2204 = vld [vmem:[%s3 + $0xc0] sm:$0xff]
    %v2205 = vld [vmem:[%s3 + $0xc8] sm:$0xff]
    %v2206 = vld [vmem:[%s3 + $0xd0] sm:$0xff]
    %v2207 = vld [vmem:[%s3 + $0xd8] sm:$0xff]
    %v2208 = vld [vmem:[%s3 + $0xe0] sm:$0xff]
    %v2209 = vld [vmem:[%s3 + $0xe8] sm:$0xff]
    %v2210 = vld [vmem:[%s3 + $0xf0] sm:$0xff]
    %v2211 = vld [vmem:[%s3 + $0xf8] sm:$0xff]
    %v2212 = vld [vmem:[%s3 + $0x100] sm:$0xff]
    %v2213 = vld [vmem:[%s3 + $0x108] sm:$0xff]
    %v2214 = vld [vmem:[%s3 + $0x110] sm:$0xff]
    %v2215 = vld [vmem:[%s3 + $0x118] sm:$0xff]
    %v2216 = vld [vmem:[%s3 + $0x120] sm:$0xff]
    %v2217 = vld [vmem:[%s3 + $0x128] sm:$0xff]
    %v2218 = vld [vmem:[%s3 + $0x130] sm:$0xff]
    %v2219 = vld [vmem:[%s3 + $0x138] sm:$0xff]
    %v2220 = vld [vmem:[%s3 + $0x140] sm:$0xff]
    %v2221 = vld [vmem:[%s3 + $0x148] sm:$0xff]
    %v2222 = vld [vmem:[%s3 + $0x150] sm:$0xff]
    %v2223 = vld [vmem:[%s3 + $0x158] sm:$0xff]
    %v2224 = vld [vmem:[%s3 + $0x160] sm:$0xff]
    %v2225 = vld [vmem:[%s3 + $0x168] sm:$0xff]
    %v2226 = vld [vmem:[%s3 + $0x170] sm:$0xff]
    %v2227 = vld [vmem:[%s3 + $0x178] sm:$0xff]
    %v2228 = vld [vmem:[%s3 + $0x180] sm:$0xff]
    %v2229 = vld [vmem:[%s3 + $0x188] sm:$0xff]
    %v2230 = vld [vmem:[%s3 + $0x190] sm:$0xff]
    %v2231 = vld [vmem:[%s3 + $0x198] sm:$0xff]
    %v2232 = vld [vmem:[%s3 + $0x1a0] sm:$0xff]
    %v2233 = vld [vmem:[%s3 + $0x1a8] sm:$0xff]
    %v2234 = vld [vmem:[%s3 + $0x1b0] sm:$0xff]
    %v2235 = vld [vmem:[%s3 + $0x1b8] sm:$0xff]
    %v2236 = vld [vmem:[%s3 + $0x1c0] sm:$0xff]
    %v2237 = vld [vmem:[%s3 + $0x1c8] sm:$0xff]
    %v2238 = vld [vmem:[%s3 + $0x1d0] sm:$0xff]
    %v2239 = vld [vmem:[%s3 + $0x1d8] sm:$0xff]
    %v2240 = vld [vmem:[%s3 + $0x1e0] sm:$0xff]
    %v2241 = vld [vmem:[%s3 + $0x1e8] sm:$0xff]
    %v2242 = vld [vmem:[%s3 + $0x1f0] sm:$0xff]
    %v2243 = vld [vmem:[%s3 + $0x1f8] sm:$0xff]
    %2244 = vmatprep.subr.mxu0 %v2241
    %2245 = vmatpush1.msra.mxu0 %v2240
    %2246 = vmatprep.subr.mxu0 %v2237
    %2247 = vmatpush1.msra.mxu0 %v2236
    %2248 = vmatprep.subr.mxu0 %v2233
    %2249 = vmatpush1.msra.mxu0 %v2232
    %2250 = vmatprep.subr.mxu0 %v2229
    %2251 = vmatpush1.msra.mxu0 %v2228
    %2252 = vmatprep.subr.mxu0 %v2225
    %2253 = vmatpush1.msra.mxu0 %v2224
    %2254 = vmatprep.subr.mxu0 %v2221
    %2255 = vmatpush1.msra.mxu0 %v2220
    %2256 = vmatprep.subr.mxu0 %v2217
    %2257 = vmatpush1.msra.mxu0 %v2216
    %2258 = vmatprep.subr.mxu0 %v2213
    %2259 = vmatpush1.msra.mxu0 %v2212
    %2260 = vmatprep.subr.mxu0 %v2209
    %2261 = vmatpush1.msra.mxu0 %v2208
    %2262 = vmatprep.subr.mxu0 %v2205
    %2263 = vmatpush1.msra.mxu0 %v2204
    %2264 = vmatprep.subr.mxu0 %v2201
    %2265 = vmatpush1.msra.mxu0 %v2200
    %2266 = vmatprep.subr.mxu0 %v2197
    %2267 = vmatpush1.msra.mxu0 %v2196
    %2268 = vmatprep.subr.mxu0 %v2193
    %2269 = vmatpush1.msra.mxu0 %v2192
    %2270 = vmatprep.subr.mxu0 %v2189
    %2271 = vmatpush1.msra.mxu0 %v2188
    %2272 = vmatprep.subr.mxu0 %v2185
    %2273 = vmatpush1.msra.mxu0 %v2184
    %2274 = vmatprep.subr.mxu0 %v2181
    %2275 = vmatpush1.msra.mxu0 %v2180
    %2276 = vmatprep.subr.mxu0 0.0
    %2277 = vmatpush2.msra.mxu0 0.0
    %2278 = vmatprep.subr.mxu0 0.0
    %2279 = vmatpush2.msra.mxu0 0.0
    %2280 = vmatprep.subr.mxu0 0.0
    %2281 = vmatpush2.msra.mxu0 0.0
    %2282 = vmatprep.subr.mxu0 0.0
    %2283 = vmatpush2.msra.mxu0 0.0
    %2284 = vmatprep.subr.mxu0 0.0
    %2285 = vmatpush2.msra.mxu0 0.0
    %2286 = vmatprep.subr.mxu0 0.0
    %2287 = vmatpush2.msra.mxu0 0.0
    %2288 = vmatprep.subr.mxu0 0.0
    %2289 = vmatpush2.msra.mxu0 0.0
    %2290 = vmatprep.subr.mxu0 0.0
    %2291 = vmatpush2.msra.mxu0 0.0
    %2292 = vmatprep.subr.mxu0 0.0
    %2293 = vmatpush2.msra.mxu0 0.0
    %2294 = vmatprep.subr.mxu0 0.0
    %2295 = vmatpush2.msra.mxu0 0.0
    %2296 = vmatprep.subr.mxu0 0.0
    %2297 = vmatpush2.msra.mxu0 0.0
    %2298 = vmatprep.subr.mxu0 0.0
    %2299 = vmatpush2.msra.mxu0 0.0
    %2300 = vmatprep.subr.mxu0 0.0
    %2301 = vmatpush2.msra.mxu0 0.0
    %2302 = vmatprep.subr.mxu0 0.0
    %2303 = vmatpush2.msra.mxu0 0.0
    %2304 = vmatprep.subr.mxu0 0.0
    %2305 = vmatpush2.msra.mxu0 0.0
    %2306 = vmatprep.subr.mxu0 0.0
    %2307 = vmatpush2.msra.mxu0 0.0
    %2308 = vmatprep.mubr.f32.mxu0 0.0
    %2309 = vmatmul.mubr.f32.gmra.mxu0 %v1935
    %v2310 = vpop.f32.mrf.mxu0
    %v2311 = vadd.f32 0.0, %v2310
    %v2312 = vpop.f32.mrf.mxu0
    %v2313 = vadd.f32 0.0, %v2312
    %2314 = vdwg.mxu0
    %2315 = vmatprep.subr.mxu0 %v2243
    %2316 = vmatpush1.msra.mxu0 %v2242
    %2317 = vmatprep.subr.mxu0 %v2239
    %2318 = vmatpush1.msra.mxu0 %v2238
    %2319 = vmatprep.subr.mxu0 %v2235
    %2320 = vmatpush1.msra.mxu0 %v2234
    %2321 = vmatprep.subr.mxu0 %v2231
    %2322 = vmatpush1.msra.mxu0 %v2230
    %2323 = vmatprep.subr.mxu0 %v2227
    %2324 = vmatpush1.msra.mxu0 %v2226
    %2325 = vmatprep.subr.mxu0 %v2223
    %2326 = vmatpush1.msra.mxu0 %v2222
    %2327 = vmatprep.subr.mxu0 %v2219
    %2328 = vmatpush1.msra.mxu0 %v2218
    %2329 = vmatprep.subr.mxu0 %v2215
    %2330 = vmatpush1.msra.mxu0 %v2214
    %2331 = vmatprep.subr.mxu0 %v2211
    %2332 = vmatpush1.msra.mxu0 %v2210
    %2333 = vmatprep.subr.mxu0 %v2207
    %2334 = vmatpush1.msra.mxu0 %v2206
    %2335 = vmatprep.subr.mxu0 %v2203
    %2336 = vmatpush1.msra.mxu0 %v2202
    %2337 = vmatprep.subr.mxu0 %v2199
    %2338 = vmatpush1.msra.mxu0 %v2198
    %2339 = vmatprep.subr.mxu0 %v2195
    %2340 = vmatpush1.msra.mxu0 %v2194
    %2341 = vmatprep.subr.mxu0 %v2191
    %2342 = vmatpush1.msra.mxu0 %v2190
    %2343 = vmatprep.subr.mxu0 %v2187
    %2344 = vmatpush1.msra.mxu0 %v2186
    %2345 = vmatprep.subr.mxu0 %v2183
    %2346 = vmatpush1.msra.mxu0 %v2182
    %2347 = vmatprep.subr.mxu0 0.0
    %2348 = vmatpush2.msra.mxu0 0.0
    %2349 = vmatprep.subr.mxu0 0.0
    %2350 = vmatpush2.msra.mxu0 0.0
    %2351 = vmatprep.subr.mxu0 0.0
    %2352 = vmatpush2.msra.mxu0 0.0
    %2353 = vmatprep.subr.mxu0 0.0
    %2354 = vmatpush2.msra.mxu0 0.0
    %2355 = vmatprep.subr.mxu0 0.0
    %2356 = vmatpush2.msra.mxu0 0.0
    %2357 = vmatprep.subr.mxu0 0.0
    %2358 = vmatpush2.msra.mxu0 0.0
    %2359 = vmatprep.subr.mxu0 0.0
    %2360 = vmatpush2.msra.mxu0 0.0
    %2361 = vmatprep.subr.mxu0 0.0
    %2362 = vmatpush2.msra.mxu0 0.0
    %2363 = vmatprep.subr.mxu0 0.0
    %2364 = vmatpush2.msra.mxu0 0.0
    %2365 = vmatprep.subr.mxu0 0.0
    %2366 = vmatpush2.msra.mxu0 0.0
    %2367 = vmatprep.subr.mxu0 0.0
    %2368 = vmatpush2.msra.mxu0 0.0
    %2369 = vmatprep.subr.mxu0 0.0
    %2370 = vmatpush2.msra.mxu0 0.0
    %2371 = vmatprep.subr.mxu0 0.0
    %2372 = vmatpush2.msra.mxu0 0.0
    %2373 = vmatprep.subr.mxu0 0.0
    %2374 = vmatpush2.msra.mxu0 0.0
    %2375 = vmatprep.subr.mxu0 0.0
    %2376 = vmatpush2.msra.mxu0 0.0
    %2377 = vmatprep.subr.mxu0 0.0
    %2378 = vmatpush2.msra.mxu0 0.0
    %2379 = vmatprep.mubr.f32.mxu0 0.0
    %2380 = vmatmul.mubr.f32.gmra.mxu0 %v1935
    %v2381 = vpop.f32.mrf.mxu0
    %v2382 = vadd.f32 0.0, %v2381
    %v2383 = vpop.f32.mrf.mxu0
    %v2384 = vadd.f32 0.0, %v2383
    %2385 = vdwg.mxu0
    %v2386 = vadd.f32 %v2176, %v2311
    %v2387 = vadd.f32 %v2177, %v2313
    %v2388 = vadd.f32 %v2178, %v2382
    %v2389 = vadd.f32 %v2179, %v2384
    %v2390 = vxor.u32 %v2386, 2147483648
    %v2391 = vmul.f32 %v2390, 1.442695
    %v2392 = vpow.pop %v2391
    %v2393 = vadd.f32 %v2392, 1.0
    %v2394 = vrcp.pop %v2393
    %v2395 = vmul.f32 1.0, %v2394
    %v2396 = vxor.u32 %v2387, 2147483648
    %v2397 = vmul.f32 %v2396, 1.442695
    %v2398 = vpow.pop %v2397
    %v2399 = vadd.f32 %v2398, 1.0
    %v2400 = vrcp.pop %v2399
    %v2401 = vmul.f32 1.0, %v2400
    %v2402 = vtanh.pop %v2388
    %v2403 = vxor.u32 %v2389, 2147483648
    %v2404 = vmul.f32 %v2403, 1.442695
    %v2405 = vpow.pop %v2404
    %v2406 = vadd.f32 %v2405, 1.0
    %v2407 = vrcp.pop %v2406
    %v2408 = vmul.f32 1.0, %v2407
    %v2409 = vmul.f32 %v2401, %v1933
    %v2410 = vmul.f32 %v2395, %v2402
    %v2411 = vadd.f32 %v2409, %v2410
    %v2412 = vtanh.pop %v2411
    %v2413 = vmul.f32 %v2408, %v2412
    %v2414 = vld [vmem:[#allocation3 + $0x80] sm:$0xff]
    %v2415 = vld [vmem:[#allocation3 + $0x88] sm:$0xff]
    %v2416 = vld [vmem:[#allocation3 + $0x90] sm:$0xff]
    %v2417 = vld [vmem:[#allocation3 + $0x98] sm:$0xff]
    %v2418 = vld [vmem:[#allocation12] sm:$0xff]
    %v2419 = vld [vmem:[#allocation12 + $0x8] sm:$0xff]
    %v2420 = vld [vmem:[#allocation12 + $0x10] sm:$0xff]
    %v2421 = vld [vmem:[#allocation12 + $0x18] sm:$0xff]
    %v2422 = vld [vmem:[#allocation12 + $0x20] sm:$0xff]
    %v2423 = vld [vmem:[#allocation12 + $0x28] sm:$0xff]
    %v2424 = vld [vmem:[#allocation12 + $0x30] sm:$0xff]
    %v2425 = vld [vmem:[#allocation12 + $0x38] sm:$0xff]
    %v2426 = vld [vmem:[#allocation12 + $0x40] sm:$0xff]
    %v2427 = vld [vmem:[#allocation12 + $0x48] sm:$0xff]
    %v2428 = vld [vmem:[#allocation12 + $0x50] sm:$0xff]
    %v2429 = vld [vmem:[#allocation12 + $0x58] sm:$0xff]
    %v2430 = vld [vmem:[#allocation12 + $0x60] sm:$0xff]
    %v2431 = vld [vmem:[#allocation12 + $0x68] sm:$0xff]
    %v2432 = vld [vmem:[#allocation12 + $0x70] sm:$0xff]
    %v2433 = vld [vmem:[#allocation12 + $0x78] sm:$0xff]
    %v2434 = vld [vmem:[#allocation12 + $0x80] sm:$0xff]
    %v2435 = vld [vmem:[#allocation12 + $0x88] sm:$0xff]
    %v2436 = vld [vmem:[#allocation12 + $0x90] sm:$0xff]
    %v2437 = vld [vmem:[#allocation12 + $0x98] sm:$0xff]
    %v2438 = vld [vmem:[#allocation12 + $0xa0] sm:$0xff]
    %v2439 = vld [vmem:[#allocation12 + $0xa8] sm:$0xff]
    %v2440 = vld [vmem:[#allocation12 + $0xb0] sm:$0xff]
    %v2441 = vld [vmem:[#allocation12 + $0xb8] sm:$0xff]
    %v2442 = vld [vmem:[#allocation12 + $0xc0] sm:$0xff]
    %v2443 = vld [vmem:[#allocation12 + $0xc8] sm:$0xff]
    %v2444 = vld [vmem:[#allocation12 + $0xd0] sm:$0xff]
    %v2445 = vld [vmem:[#allocation12 + $0xd8] sm:$0xff]
    %v2446 = vld [vmem:[#allocation12 + $0xe0] sm:$0xff]
    %v2447 = vld [vmem:[#allocation12 + $0xe8] sm:$0xff]
    %v2448 = vld [vmem:[#allocation12 + $0xf0] sm:$0xff]
    %v2449 = vld [vmem:[#allocation12 + $0xf8] sm:$0xff]
    %v2450 = vld [vmem:[#allocation12 + $0x100] sm:$0xff]
    %v2451 = vld [vmem:[#allocation12 + $0x108] sm:$0xff]
    %v2452 = vld [vmem:[#allocation12 + $0x110] sm:$0xff]
    %v2453 = vld [vmem:[#allocation12 + $0x118] sm:$0xff]
    %v2454 = vld [vmem:[#allocation12 + $0x120] sm:$0xff]
    %v2455 = vld [vmem:[#allocation12 + $0x128] sm:$0xff]
    %v2456 = vld [vmem:[#allocation12 + $0x130] sm:$0xff]
    %v2457 = vld [vmem:[#allocation12 + $0x138] sm:$0xff]
    %v2458 = vld [vmem:[#allocation12 + $0x140] sm:$0xff]
    %v2459 = vld [vmem:[#allocation12 + $0x148] sm:$0xff]
    %v2460 = vld [vmem:[#allocation12 + $0x150] sm:$0xff]
    %v2461 = vld [vmem:[#allocation12 + $0x158] sm:$0xff]
    %v2462 = vld [vmem:[#allocation12 + $0x160] sm:$0xff]
    %v2463 = vld [vmem:[#allocation12 + $0x168] sm:$0xff]
    %v2464 = vld [vmem:[#allocation12 + $0x170] sm:$0xff]
    %v2465 = vld [vmem:[#allocation12 + $0x178] sm:$0xff]
    %v2466 = vld [vmem:[#allocation12 + $0x180] sm:$0xff]
    %v2467 = vld [vmem:[#allocation12 + $0x188] sm:$0xff]
    %v2468 = vld [vmem:[#allocation12 + $0x190] sm:$0xff]
    %v2469 = vld [vmem:[#allocation12 + $0x198] sm:$0xff]
    %v2470 = vld [vmem:[#allocation12 + $0x1a0] sm:$0xff]
    %v2471 = vld [vmem:[#allocation12 + $0x1a8] sm:$0xff]
    %v2472 = vld [vmem:[#allocation12 + $0x1b0] sm:$0xff]
    %v2473 = vld [vmem:[#allocation12 + $0x1b8] sm:$0xff]
    %v2474 = vld [vmem:[#allocation12 + $0x1c0] sm:$0xff]
    %v2475 = vld [vmem:[#allocation12 + $0x1c8] sm:$0xff]
    %v2476 = vld [vmem:[#allocation12 + $0x1d0] sm:$0xff]
    %v2477 = vld [vmem:[#allocation12 + $0x1d8] sm:$0xff]
    %v2478 = vld [vmem:[#allocation12 + $0x1e0] sm:$0xff]
    %v2479 = vld [vmem:[#allocation12 + $0x1e8] sm:$0xff]
    %v2480 = vld [vmem:[#allocation12 + $0x1f0] sm:$0xff]
    %v2481 = vld [vmem:[#allocation12 + $0x1f8] sm:$0xff]
    %2482 = vmatprep.subr.mxu0 %v2479
    %2483 = vmatpush1.msra.mxu0 %v2478
    %2484 = vmatprep.subr.mxu0 %v2475
    %2485 = vmatpush1.msra.mxu0 %v2474
    %2486 = vmatprep.subr.mxu0 %v2471
    %2487 = vmatpush1.msra.mxu0 %v2470
    %2488 = vmatprep.subr.mxu0 %v2467
    %2489 = vmatpush1.msra.mxu0 %v2466
    %2490 = vmatprep.subr.mxu0 %v2463
    %2491 = vmatpush1.msra.mxu0 %v2462
    %2492 = vmatprep.subr.mxu0 %v2459
    %2493 = vmatpush1.msra.mxu0 %v2458
    %2494 = vmatprep.subr.mxu0 %v2455
    %2495 = vmatpush1.msra.mxu0 %v2454
    %2496 = vmatprep.subr.mxu0 %v2451
    %2497 = vmatpush1.msra.mxu0 %v2450
    %2498 = vmatprep.subr.mxu0 %v2447
    %2499 = vmatpush1.msra.mxu0 %v2446
    %2500 = vmatprep.subr.mxu0 %v2443
    %2501 = vmatpush1.msra.mxu0 %v2442
    %2502 = vmatprep.subr.mxu0 %v2439
    %2503 = vmatpush1.msra.mxu0 %v2438
    %2504 = vmatprep.subr.mxu0 %v2435
    %2505 = vmatpush1.msra.mxu0 %v2434
    %2506 = vmatprep.subr.mxu0 %v2431
    %2507 = vmatpush1.msra.mxu0 %v2430
    %2508 = vmatprep.subr.mxu0 %v2427
    %2509 = vmatpush1.msra.mxu0 %v2426
    %2510 = vmatprep.subr.mxu0 %v2423
    %2511 = vmatpush1.msra.mxu0 %v2422
    %2512 = vmatprep.subr.mxu0 %v2419
    %2513 = vmatpush1.msra.mxu0 %v2418
    %2514 = vmatprep.subr.mxu0 0.0
    %2515 = vmatpush2.msra.mxu0 0.0
    %2516 = vmatprep.subr.mxu0 0.0
    %2517 = vmatpush2.msra.mxu0 0.0
    %2518 = vmatprep.subr.mxu0 0.0
    %2519 = vmatpush2.msra.mxu0 0.0
    %2520 = vmatprep.subr.mxu0 0.0
    %2521 = vmatpush2.msra.mxu0 0.0
    %2522 = vmatprep.subr.mxu0 0.0
    %2523 = vmatpush2.msra.mxu0 0.0
    %2524 = vmatprep.subr.mxu0 0.0
    %2525 = vmatpush2.msra.mxu0 0.0
    %2526 = vmatprep.subr.mxu0 0.0
    %2527 = vmatpush2.msra.mxu0 0.0
    %2528 = vmatprep.subr.mxu0 0.0
    %2529 = vmatpush2.msra.mxu0 0.0
    %2530 = vmatprep.subr.mxu0 0.0
    %2531 = vmatpush2.msra.mxu0 0.0
    %2532 = vmatprep.subr.mxu0 0.0
    %2533 = vmatpush2.msra.mxu0 0.0
    %2534 = vmatprep.subr.mxu0 0.0
    %2535 = vmatpush2.msra.mxu0 0.0
    %2536 = vmatprep.subr.mxu0 0.0
    %2537 = vmatpush2.msra.mxu0 0.0
    %2538 = vmatprep.subr.mxu0 0.0
    %2539 = vmatpush2.msra.mxu0 0.0
    %2540 = vmatprep.subr.mxu0 0.0
    %2541 = vmatpush2.msra.mxu0 0.0
    %2542 = vmatprep.subr.mxu0 0.0
    %2543 = vmatpush2.msra.mxu0 0.0
    %2544 = vmatprep.subr.mxu0 0.0
    %2545 = vmatpush2.msra.mxu0 0.0
    %2546 = vmatprep.mubr.f32.mxu0 0.0
    %2547 = vmatmul.mubr.f32.gmra.mxu0 %v2173
    %v2548 = vpop.f32.mrf.mxu0
    %v2549 = vadd.f32 0.0, %v2548
    %v2550 = vpop.f32.mrf.mxu0
    %v2551 = vadd.f32 0.0, %v2550
    %2552 = vdwg.mxu0
    %2553 = vmatprep.subr.mxu0 %v2481
    %2554 = vmatpush1.msra.mxu0 %v2480
    %2555 = vmatprep.subr.mxu0 %v2477
    %2556 = vmatpush1.msra.mxu0 %v2476
    %2557 = vmatprep.subr.mxu0 %v2473
    %2558 = vmatpush1.msra.mxu0 %v2472
    %2559 = vmatprep.subr.mxu0 %v2469
    %2560 = vmatpush1.msra.mxu0 %v2468
    %2561 = vmatprep.subr.mxu0 %v2465
    %2562 = vmatpush1.msra.mxu0 %v2464
    %2563 = vmatprep.subr.mxu0 %v2461
    %2564 = vmatpush1.msra.mxu0 %v2460
    %2565 = vmatprep.subr.mxu0 %v2457
    %2566 = vmatpush1.msra.mxu0 %v2456
    %2567 = vmatprep.subr.mxu0 %v2453
    %2568 = vmatpush1.msra.mxu0 %v2452
    %2569 = vmatprep.subr.mxu0 %v2449
    %2570 = vmatpush1.msra.mxu0 %v2448
    %2571 = vmatprep.subr.mxu0 %v2445
    %2572 = vmatpush1.msra.mxu0 %v2444
    %2573 = vmatprep.subr.mxu0 %v2441
    %2574 = vmatpush1.msra.mxu0 %v2440
    %2575 = vmatprep.subr.mxu0 %v2437
    %2576 = vmatpush1.msra.mxu0 %v2436
    %2577 = vmatprep.subr.mxu0 %v2433
    %2578 = vmatpush1.msra.mxu0 %v2432
    %2579 = vmatprep.subr.mxu0 %v2429
    %2580 = vmatpush1.msra.mxu0 %v2428
    %2581 = vmatprep.subr.mxu0 %v2425
    %2582 = vmatpush1.msra.mxu0 %v2424
    %2583 = vmatprep.subr.mxu0 %v2421
    %2584 = vmatpush1.msra.mxu0 %v2420
    %2585 = vmatprep.subr.mxu0 0.0
    %2586 = vmatpush2.msra.mxu0 0.0
    %2587 = vmatprep.subr.mxu0 0.0
    %2588 = vmatpush2.msra.mxu0 0.0
    %2589 = vmatprep.subr.mxu0 0.0
    %2590 = vmatpush2.msra.mxu0 0.0
    %2591 = vmatprep.subr.mxu0 0.0
    %2592 = vmatpush2.msra.mxu0 0.0
    %2593 = vmatprep.subr.mxu0 0.0
    %2594 = vmatpush2.msra.mxu0 0.0
    %2595 = vmatprep.subr.mxu0 0.0
    %2596 = vmatpush2.msra.mxu0 0.0
    %2597 = vmatprep.subr.mxu0 0.0
    %2598 = vmatpush2.msra.mxu0 0.0
    %2599 = vmatprep.subr.mxu0 0.0
    %2600 = vmatpush2.msra.mxu0 0.0
    %2601 = vmatprep.subr.mxu0 0.0
    %2602 = vmatpush2.msra.mxu0 0.0
    %2603 = vmatprep.subr.mxu0 0.0
    %2604 = vmatpush2.msra.mxu0 0.0
    %2605 = vmatprep.subr.mxu0 0.0
    %2606 = vmatpush2.msra.mxu0 0.0
    %2607 = vmatprep.subr.mxu0 0.0
    %2608 = vmatpush2.msra.mxu0 0.0
    %2609 = vmatprep.subr.mxu0 0.0
    %2610 = vmatpush2.msra.mxu0 0.0
    %2611 = vmatprep.subr.mxu0 0.0
    %2612 = vmatpush2.msra.mxu0 0.0
    %2613 = vmatprep.subr.mxu0 0.0
    %2614 = vmatpush2.msra.mxu0 0.0
    %2615 = vmatprep.subr.mxu0 0.0
    %2616 = vmatpush2.msra.mxu0 0.0
    %2617 = vmatprep.mubr.f32.mxu0 0.0
    %2618 = vmatmul.mubr.f32.gmra.mxu0 %v2173
    %v2619 = vpop.f32.mrf.mxu0
    %v2620 = vadd.f32 0.0, %v2619
    %v2621 = vpop.f32.mrf.mxu0
    %v2622 = vadd.f32 0.0, %v2621
    %2623 = vdwg.mxu0
    %v2624 = vadd.f32 %v2414, %v2549
    %v2625 = vadd.f32 %v2415, %v2551
    %v2626 = vadd.f32 %v2416, %v2620
    %v2627 = vadd.f32 %v2417, %v2622
    %v2628 = vxor.u32 %v2624, 2147483648
    %v2629 = vmul.f32 %v2628, 1.442695
    %v2630 = vpow.pop %v2629
    %v2631 = vadd.f32 %v2630, 1.0
    %v2632 = vrcp.pop %v2631
    %v2633 = vmul.f32 1.0, %v2632
    %v2634 = vxor.u32 %v2625, 2147483648
    %v2635 = vmul.f32 %v2634, 1.442695
    %v2636 = vpow.pop %v2635
    %v2637 = vadd.f32 %v2636, 1.0
    %v2638 = vrcp.pop %v2637
    %v2639 = vmul.f32 1.0, %v2638
    %v2640 = vtanh.pop %v2626
    %v2641 = vxor.u32 %v2627, 2147483648
    %v2642 = vmul.f32 %v2641, 1.442695
    %v2643 = vpow.pop %v2642
    %v2644 = vadd.f32 %v2643, 1.0
    %v2645 = vrcp.pop %v2644
    %v2646 = vmul.f32 1.0, %v2645
    %v2647 = vmul.f32 %v2639, %v2171
    %v2648 = vmul.f32 %v2633, %v2640
    %v2649 = vadd.f32 %v2647, %v2648
    %v2650 = vtanh.pop %v2649
    %v2651 = vmul.f32 %v2646, %v2650
    %2652 = vst [vmem:[#allocation4 + $0x30] sm:$0xff] %v2413
    %2653 = vst [vmem:[#allocation4 + $0x48] sm:$0xff] %v2651
    %v2654 = vld [vmem:[#allocation2 + $0x80] sm:$0xff]
    %v2655 = vld [vmem:[#allocation2 + $0x88] sm:$0xff]
    %v2656 = vld [vmem:[#allocation2 + $0x90] sm:$0xff]
    %v2657 = vld [vmem:[#allocation2 + $0x98] sm:$0xff]
    %v2658 = vld [vmem:[%s3] sm:$0xff]
    %v2659 = vld [vmem:[%s3 + $0x8] sm:$0xff]
    %v2660 = vld [vmem:[%s3 + $0x10] sm:$0xff]
    %v2661 = vld [vmem:[%s3 + $0x18] sm:$0xff]
    %v2662 = vld [vmem:[%s3 + $0x20] sm:$0xff]
    %v2663 = vld [vmem:[%s3 + $0x28] sm:$0xff]
    %v2664 = vld [vmem:[%s3 + $0x30] sm:$0xff]
    %v2665 = vld [vmem:[%s3 + $0x38] sm:$0xff]
    %v2666 = vld [vmem:[%s3 + $0x40] sm:$0xff]
    %v2667 = vld [vmem:[%s3 + $0x48] sm:$0xff]
    %v2668 = vld [vmem:[%s3 + $0x50] sm:$0xff]
    %v2669 = vld [vmem:[%s3 + $0x58] sm:$0xff]
    %v2670 = vld [vmem:[%s3 + $0x60] sm:$0xff]
    %v2671 = vld [vmem:[%s3 + $0x68] sm:$0xff]
    %v2672 = vld [vmem:[%s3 + $0x70] sm:$0xff]
    %v2673 = vld [vmem:[%s3 + $0x78] sm:$0xff]
    %v2674 = vld [vmem:[%s3 + $0x80] sm:$0xff]
    %v2675 = vld [vmem:[%s3 + $0x88] sm:$0xff]
    %v2676 = vld [vmem:[%s3 + $0x90] sm:$0xff]
    %v2677 = vld [vmem:[%s3 + $0x98] sm:$0xff]
    %v2678 = vld [vmem:[%s3 + $0xa0] sm:$0xff]
    %v2679 = vld [vmem:[%s3 + $0xa8] sm:$0xff]
    %v2680 = vld [vmem:[%s3 + $0xb0] sm:$0xff]
    %v2681 = vld [vmem:[%s3 + $0xb8] sm:$0xff]
    %v2682 = vld [vmem:[%s3 + $0xc0] sm:$0xff]
    %v2683 = vld [vmem:[%s3 + $0xc8] sm:$0xff]
    %v2684 = vld [vmem:[%s3 + $0xd0] sm:$0xff]
    %v2685 = vld [vmem:[%s3 + $0xd8] sm:$0xff]
    %v2686 = vld [vmem:[%s3 + $0xe0] sm:$0xff]
    %v2687 = vld [vmem:[%s3 + $0xe8] sm:$0xff]
    %v2688 = vld [vmem:[%s3 + $0xf0] sm:$0xff]
    %v2689 = vld [vmem:[%s3 + $0xf8] sm:$0xff]
    %v2690 = vld [vmem:[%s3 + $0x100] sm:$0xff]
    %v2691 = vld [vmem:[%s3 + $0x108] sm:$0xff]
    %v2692 = vld [vmem:[%s3 + $0x110] sm:$0xff]
    %v2693 = vld [vmem:[%s3 + $0x118] sm:$0xff]
    %v2694 = vld [vmem:[%s3 + $0x120] sm:$0xff]
    %v2695 = vld [vmem:[%s3 + $0x128] sm:$0xff]
    %v2696 = vld [vmem:[%s3 + $0x130] sm:$0xff]
    %v2697 = vld [vmem:[%s3 + $0x138] sm:$0xff]
    %v2698 = vld [vmem:[%s3 + $0x140] sm:$0xff]
    %v2699 = vld [vmem:[%s3 + $0x148] sm:$0xff]
    %v2700 = vld [vmem:[%s3 + $0x150] sm:$0xff]
    %v2701 = vld [vmem:[%s3 + $0x158] sm:$0xff]
    %v2702 = vld [vmem:[%s3 + $0x160] sm:$0xff]
    %v2703 = vld [vmem:[%s3 + $0x168] sm:$0xff]
    %v2704 = vld [vmem:[%s3 + $0x170] sm:$0xff]
    %v2705 = vld [vmem:[%s3 + $0x178] sm:$0xff]
    %v2706 = vld [vmem:[%s3 + $0x180] sm:$0xff]
    %v2707 = vld [vmem:[%s3 + $0x188] sm:$0xff]
    %v2708 = vld [vmem:[%s3 + $0x190] sm:$0xff]
    %v2709 = vld [vmem:[%s3 + $0x198] sm:$0xff]
    %v2710 = vld [vmem:[%s3 + $0x1a0] sm:$0xff]
    %v2711 = vld [vmem:[%s3 + $0x1a8] sm:$0xff]
    %v2712 = vld [vmem:[%s3 + $0x1b0] sm:$0xff]
    %v2713 = vld [vmem:[%s3 + $0x1b8] sm:$0xff]
    %v2714 = vld [vmem:[%s3 + $0x1c0] sm:$0xff]
    %v2715 = vld [vmem:[%s3 + $0x1c8] sm:$0xff]
    %v2716 = vld [vmem:[%s3 + $0x1d0] sm:$0xff]
    %v2717 = vld [vmem:[%s3 + $0x1d8] sm:$0xff]
    %v2718 = vld [vmem:[%s3 + $0x1e0] sm:$0xff]
    %v2719 = vld [vmem:[%s3 + $0x1e8] sm:$0xff]
    %v2720 = vld [vmem:[%s3 + $0x1f0] sm:$0xff]
    %v2721 = vld [vmem:[%s3 + $0x1f8] sm:$0xff]
    %2722 = vmatprep.subr.mxu0 %v2719
    %2723 = vmatpush1.msra.mxu0 %v2718
    %2724 = vmatprep.subr.mxu0 %v2715
    %2725 = vmatpush1.msra.mxu0 %v2714
    %2726 = vmatprep.subr.mxu0 %v2711
    %2727 = vmatpush1.msra.mxu0 %v2710
    %2728 = vmatprep.subr.mxu0 %v2707
    %2729 = vmatpush1.msra.mxu0 %v2706
    %2730 = vmatprep.subr.mxu0 %v2703
    %2731 = vmatpush1.msra.mxu0 %v2702
    %2732 = vmatprep.subr.mxu0 %v2699
    %2733 = vmatpush1.msra.mxu0 %v2698
    %2734 = vmatprep.subr.mxu0 %v2695
    %2735 = vmatpush1.msra.mxu0 %v2694
    %2736 = vmatprep.subr.mxu0 %v2691
    %2737 = vmatpush1.msra.mxu0 %v2690
    %2738 = vmatprep.subr.mxu0 %v2687
    %2739 = vmatpush1.msra.mxu0 %v2686
    %2740 = vmatprep.subr.mxu0 %v2683
    %2741 = vmatpush1.msra.mxu0 %v2682
    %2742 = vmatprep.subr.mxu0 %v2679
    %2743 = vmatpush1.msra.mxu0 %v2678
    %2744 = vmatprep.subr.mxu0 %v2675
    %2745 = vmatpush1.msra.mxu0 %v2674
    %2746 = vmatprep.subr.mxu0 %v2671
    %2747 = vmatpush1.msra.mxu0 %v2670
    %2748 = vmatprep.subr.mxu0 %v2667
    %2749 = vmatpush1.msra.mxu0 %v2666
    %2750 = vmatprep.subr.mxu0 %v2663
    %2751 = vmatpush1.msra.mxu0 %v2662
    %2752 = vmatprep.subr.mxu0 %v2659
    %2753 = vmatpush1.msra.mxu0 %v2658
    %2754 = vmatprep.subr.mxu0 0.0
    %2755 = vmatpush2.msra.mxu0 0.0
    %2756 = vmatprep.subr.mxu0 0.0
    %2757 = vmatpush2.msra.mxu0 0.0
    %2758 = vmatprep.subr.mxu0 0.0
    %2759 = vmatpush2.msra.mxu0 0.0
    %2760 = vmatprep.subr.mxu0 0.0
    %2761 = vmatpush2.msra.mxu0 0.0
    %2762 = vmatprep.subr.mxu0 0.0
    %2763 = vmatpush2.msra.mxu0 0.0
    %2764 = vmatprep.subr.mxu0 0.0
    %2765 = vmatpush2.msra.mxu0 0.0
    %2766 = vmatprep.subr.mxu0 0.0
    %2767 = vmatpush2.msra.mxu0 0.0
    %2768 = vmatprep.subr.mxu0 0.0
    %2769 = vmatpush2.msra.mxu0 0.0
    %2770 = vmatprep.subr.mxu0 0.0
    %2771 = vmatpush2.msra.mxu0 0.0
    %2772 = vmatprep.subr.mxu0 0.0
    %2773 = vmatpush2.msra.mxu0 0.0
    %2774 = vmatprep.subr.mxu0 0.0
    %2775 = vmatpush2.msra.mxu0 0.0
    %2776 = vmatprep.subr.mxu0 0.0
    %2777 = vmatpush2.msra.mxu0 0.0
    %2778 = vmatprep.subr.mxu0 0.0
    %2779 = vmatpush2.msra.mxu0 0.0
    %2780 = vmatprep.subr.mxu0 0.0
    %2781 = vmatpush2.msra.mxu0 0.0
    %2782 = vmatprep.subr.mxu0 0.0
    %2783 = vmatpush2.msra.mxu0 0.0
    %2784 = vmatprep.subr.mxu0 0.0
    %2785 = vmatpush2.msra.mxu0 0.0
    %2786 = vmatprep.mubr.f32.mxu0 0.0
    %2787 = vmatmul.mubr.f32.gmra.mxu0 %v2413
    %v2788 = vpop.f32.mrf.mxu0
    %v2789 = vadd.f32 0.0, %v2788
    %v2790 = vpop.f32.mrf.mxu0
    %v2791 = vadd.f32 0.0, %v2790
    %2792 = vdwg.mxu0
    %2793 = vmatprep.subr.mxu0 %v2721
    %2794 = vmatpush1.msra.mxu0 %v2720
    %2795 = vmatprep.subr.mxu0 %v2717
    %2796 = vmatpush1.msra.mxu0 %v2716
    %2797 = vmatprep.subr.mxu0 %v2713
    %2798 = vmatpush1.msra.mxu0 %v2712
    %2799 = vmatprep.subr.mxu0 %v2709
    %2800 = vmatpush1.msra.mxu0 %v2708
    %2801 = vmatprep.subr.mxu0 %v2705
    %2802 = vmatpush1.msra.mxu0 %v2704
    %2803 = vmatprep.subr.mxu0 %v2701
    %2804 = vmatpush1.msra.mxu0 %v2700
    %2805 = vmatprep.subr.mxu0 %v2697
    %2806 = vmatpush1.msra.mxu0 %v2696
    %2807 = vmatprep.subr.mxu0 %v2693
    %2808 = vmatpush1.msra.mxu0 %v2692
    %2809 = vmatprep.subr.mxu0 %v2689
    %2810 = vmatpush1.msra.mxu0 %v2688
    %2811 = vmatprep.subr.mxu0 %v2685
    %2812 = vmatpush1.msra.mxu0 %v2684
    %2813 = vmatprep.subr.mxu0 %v2681
    %2814 = vmatpush1.msra.mxu0 %v2680
    %2815 = vmatprep.subr.mxu0 %v2677
    %2816 = vmatpush1.msra.mxu0 %v2676
    %2817 = vmatprep.subr.mxu0 %v2673
    %2818 = vmatpush1.msra.mxu0 %v2672
    %2819 = vmatprep.subr.mxu0 %v2669
    %2820 = vmatpush1.msra.mxu0 %v2668
    %2821 = vmatprep.subr.mxu0 %v2665
    %2822 = vmatpush1.msra.mxu0 %v2664
    %2823 = vmatprep.subr.mxu0 %v2661
    %2824 = vmatpush1.msra.mxu0 %v2660
    %2825 = vmatprep.subr.mxu0 0.0
    %2826 = vmatpush2.msra.mxu0 0.0
    %2827 = vmatprep.subr.mxu0 0.0
    %2828 = vmatpush2.msra.mxu0 0.0
    %2829 = vmatprep.subr.mxu0 0.0
    %2830 = vmatpush2.msra.mxu0 0.0
    %2831 = vmatprep.subr.mxu0 0.0
    %2832 = vmatpush2.msra.mxu0 0.0
    %2833 = vmatprep.subr.mxu0 0.0
    %2834 = vmatpush2.msra.mxu0 0.0
    %2835 = vmatprep.subr.mxu0 0.0
    %2836 = vmatpush2.msra.mxu0 0.0
    %2837 = vmatprep.subr.mxu0 0.0
    %2838 = vmatpush2.msra.mxu0 0.0
    %2839 = vmatprep.subr.mxu0 0.0
    %2840 = vmatpush2.msra.mxu0 0.0
    %2841 = vmatprep.subr.mxu0 0.0
    %2842 = vmatpush2.msra.mxu0 0.0
    %2843 = vmatprep.subr.mxu0 0.0
    %2844 = vmatpush2.msra.mxu0 0.0
    %2845 = vmatprep.subr.mxu0 0.0
    %2846 = vmatpush2.msra.mxu0 0.0
    %2847 = vmatprep.subr.mxu0 0.0
    %2848 = vmatpush2.msra.mxu0 0.0
    %2849 = vmatprep.subr.mxu0 0.0
    %2850 = vmatpush2.msra.mxu0 0.0
    %2851 = vmatprep.subr.mxu0 0.0
    %2852 = vmatpush2.msra.mxu0 0.0
    %2853 = vmatprep.subr.mxu0 0.0
    %2854 = vmatpush2.msra.mxu0 0.0
    %2855 = vmatprep.subr.mxu0 0.0
    %2856 = vmatpush2.msra.mxu0 0.0
    %2857 = vmatprep.mubr.f32.mxu0 0.0
    %2858 = vmatmul.mubr.f32.gmra.mxu0 %v2413
    %v2859 = vpop.f32.mrf.mxu0
    %v2860 = vadd.f32 0.0, %v2859
    %v2861 = vpop.f32.mrf.mxu0
    %v2862 = vadd.f32 0.0, %v2861
    %2863 = vdwg.mxu0
    %v2864 = vadd.f32 %v2654, %v2789
    %v2865 = vadd.f32 %v2655, %v2791
    %v2866 = vadd.f32 %v2656, %v2860
    %v2867 = vadd.f32 %v2657, %v2862
    %v2868 = vxor.u32 %v2864, 2147483648
    %v2869 = vmul.f32 %v2868, 1.442695
    %v2870 = vpow.pop %v2869
    %v2871 = vadd.f32 %v2870, 1.0
    %v2872 = vrcp.pop %v2871
    %v2873 = vmul.f32 1.0, %v2872
    %v2874 = vxor.u32 %v2865, 2147483648
    %v2875 = vmul.f32 %v2874, 1.442695
    %v2876 = vpow.pop %v2875
    %v2877 = vadd.f32 %v2876, 1.0
    %v2878 = vrcp.pop %v2877
    %v2879 = vmul.f32 1.0, %v2878
    %v2880 = vtanh.pop %v2866
    %v2881 = vxor.u32 %v2867, 2147483648
    %v2882 = vmul.f32 %v2881, 1.442695
    %v2883 = vpow.pop %v2882
    %v2884 = vadd.f32 %v2883, 1.0
    %v2885 = vrcp.pop %v2884
    %v2886 = vmul.f32 1.0, %v2885
    %v2887 = vmul.f32 %v2879, %v2411
    %v2888 = vmul.f32 %v2873, %v2880
    %v2889 = vadd.f32 %v2887, %v2888
    %v2890 = vtanh.pop %v2889
    %v2891 = vmul.f32 %v2886, %v2890
    %v2892 = vld [vmem:[#allocation3 + $0x60] sm:$0xff]
    %v2893 = vld [vmem:[#allocation3 + $0x68] sm:$0xff]
    %v2894 = vld [vmem:[#allocation3 + $0x70] sm:$0xff]
    %v2895 = vld [vmem:[#allocation3 + $0x78] sm:$0xff]
    %v2896 = vld [vmem:[#allocation12] sm:$0xff]
    %v2897 = vld [vmem:[#allocation12 + $0x8] sm:$0xff]
    %v2898 = vld [vmem:[#allocation12 + $0x10] sm:$0xff]
    %v2899 = vld [vmem:[#allocation12 + $0x18] sm:$0xff]
    %v2900 = vld [vmem:[#allocation12 + $0x20] sm:$0xff]
    %v2901 = vld [vmem:[#allocation12 + $0x28] sm:$0xff]
    %v2902 = vld [vmem:[#allocation12 + $0x30] sm:$0xff]
    %v2903 = vld [vmem:[#allocation12 + $0x38] sm:$0xff]
    %v2904 = vld [vmem:[#allocation12 + $0x40] sm:$0xff]
    %v2905 = vld [vmem:[#allocation12 + $0x48] sm:$0xff]
    %v2906 = vld [vmem:[#allocation12 + $0x50] sm:$0xff]
    %v2907 = vld [vmem:[#allocation12 + $0x58] sm:$0xff]
    %v2908 = vld [vmem:[#allocation12 + $0x60] sm:$0xff]
    %v2909 = vld [vmem:[#allocation12 + $0x68] sm:$0xff]
    %v2910 = vld [vmem:[#allocation12 + $0x70] sm:$0xff]
    %v2911 = vld [vmem:[#allocation12 + $0x78] sm:$0xff]
    %v2912 = vld [vmem:[#allocation12 + $0x80] sm:$0xff]
    %v2913 = vld [vmem:[#allocation12 + $0x88] sm:$0xff]
    %v2914 = vld [vmem:[#allocation12 + $0x90] sm:$0xff]
    %v2915 = vld [vmem:[#allocation12 + $0x98] sm:$0xff]
    %v2916 = vld [vmem:[#allocation12 + $0xa0] sm:$0xff]
    %v2917 = vld [vmem:[#allocation12 + $0xa8] sm:$0xff]
    %v2918 = vld [vmem:[#allocation12 + $0xb0] sm:$0xff]
    %v2919 = vld [vmem:[#allocation12 + $0xb8] sm:$0xff]
    %v2920 = vld [vmem:[#allocation12 + $0xc0] sm:$0xff]
    %v2921 = vld [vmem:[#allocation12 + $0xc8] sm:$0xff]
    %v2922 = vld [vmem:[#allocation12 + $0xd0] sm:$0xff]
    %v2923 = vld [vmem:[#allocation12 + $0xd8] sm:$0xff]
    %v2924 = vld [vmem:[#allocation12 + $0xe0] sm:$0xff]
    %v2925 = vld [vmem:[#allocation12 + $0xe8] sm:$0xff]
    %v2926 = vld [vmem:[#allocation12 + $0xf0] sm:$0xff]
    %v2927 = vld [vmem:[#allocation12 + $0xf8] sm:$0xff]
    %v2928 = vld [vmem:[#allocation12 + $0x100] sm:$0xff]
    %v2929 = vld [vmem:[#allocation12 + $0x108] sm:$0xff]
    %v2930 = vld [vmem:[#allocation12 + $0x110] sm:$0xff]
    %v2931 = vld [vmem:[#allocation12 + $0x118] sm:$0xff]
    %v2932 = vld [vmem:[#allocation12 + $0x120] sm:$0xff]
    %v2933 = vld [vmem:[#allocation12 + $0x128] sm:$0xff]
    %v2934 = vld [vmem:[#allocation12 + $0x130] sm:$0xff]
    %v2935 = vld [vmem:[#allocation12 + $0x138] sm:$0xff]
    %v2936 = vld [vmem:[#allocation12 + $0x140] sm:$0xff]
    %v2937 = vld [vmem:[#allocation12 + $0x148] sm:$0xff]
    %v2938 = vld [vmem:[#allocation12 + $0x150] sm:$0xff]
    %v2939 = vld [vmem:[#allocation12 + $0x158] sm:$0xff]
    %v2940 = vld [vmem:[#allocation12 + $0x160] sm:$0xff]
    %v2941 = vld [vmem:[#allocation12 + $0x168] sm:$0xff]
    %v2942 = vld [vmem:[#allocation12 + $0x170] sm:$0xff]
    %v2943 = vld [vmem:[#allocation12 + $0x178] sm:$0xff]
    %v2944 = vld [vmem:[#allocation12 + $0x180] sm:$0xff]
    %v2945 = vld [vmem:[#allocation12 + $0x188] sm:$0xff]
    %v2946 = vld [vmem:[#allocation12 + $0x190] sm:$0xff]
    %v2947 = vld [vmem:[#allocation12 + $0x198] sm:$0xff]
    %v2948 = vld [vmem:[#allocation12 + $0x1a0] sm:$0xff]
    %v2949 = vld [vmem:[#allocation12 + $0x1a8] sm:$0xff]
    %v2950 = vld [vmem:[#allocation12 + $0x1b0] sm:$0xff]
    %v2951 = vld [vmem:[#allocation12 + $0x1b8] sm:$0xff]
    %v2952 = vld [vmem:[#allocation12 + $0x1c0] sm:$0xff]
    %v2953 = vld [vmem:[#allocation12 + $0x1c8] sm:$0xff]
    %v2954 = vld [vmem:[#allocation12 + $0x1d0] sm:$0xff]
    %v2955 = vld [vmem:[#allocation12 + $0x1d8] sm:$0xff]
    %v2956 = vld [vmem:[#allocation12 + $0x1e0] sm:$0xff]
    %v2957 = vld [vmem:[#allocation12 + $0x1e8] sm:$0xff]
    %v2958 = vld [vmem:[#allocation12 + $0x1f0] sm:$0xff]
    %v2959 = vld [vmem:[#allocation12 + $0x1f8] sm:$0xff]
    %2960 = vmatprep.subr.mxu0 %v2957
    %2961 = vmatpush1.msra.mxu0 %v2956
    %2962 = vmatprep.subr.mxu0 %v2953
    %2963 = vmatpush1.msra.mxu0 %v2952
    %2964 = vmatprep.subr.mxu0 %v2949
    %2965 = vmatpush1.msra.mxu0 %v2948
    %2966 = vmatprep.subr.mxu0 %v2945
    %2967 = vmatpush1.msra.mxu0 %v2944
    %2968 = vmatprep.subr.mxu0 %v2941
    %2969 = vmatpush1.msra.mxu0 %v2940
    %2970 = vmatprep.subr.mxu0 %v2937
    %2971 = vmatpush1.msra.mxu0 %v2936
    %2972 = vmatprep.subr.mxu0 %v2933
    %2973 = vmatpush1.msra.mxu0 %v2932
    %2974 = vmatprep.subr.mxu0 %v2929
    %2975 = vmatpush1.msra.mxu0 %v2928
    %2976 = vmatprep.subr.mxu0 %v2925
    %2977 = vmatpush1.msra.mxu0 %v2924
    %2978 = vmatprep.subr.mxu0 %v2921
    %2979 = vmatpush1.msra.mxu0 %v2920
    %2980 = vmatprep.subr.mxu0 %v2917
    %2981 = vmatpush1.msra.mxu0 %v2916
    %2982 = vmatprep.subr.mxu0 %v2913
    %2983 = vmatpush1.msra.mxu0 %v2912
    %2984 = vmatprep.subr.mxu0 %v2909
    %2985 = vmatpush1.msra.mxu0 %v2908
    %2986 = vmatprep.subr.mxu0 %v2905
    %2987 = vmatpush1.msra.mxu0 %v2904
    %2988 = vmatprep.subr.mxu0 %v2901
    %2989 = vmatpush1.msra.mxu0 %v2900
    %2990 = vmatprep.subr.mxu0 %v2897
    %2991 = vmatpush1.msra.mxu0 %v2896
    %2992 = vmatprep.subr.mxu0 0.0
    %2993 = vmatpush2.msra.mxu0 0.0
    %2994 = vmatprep.subr.mxu0 0.0
    %2995 = vmatpush2.msra.mxu0 0.0
    %2996 = vmatprep.subr.mxu0 0.0
    %2997 = vmatpush2.msra.mxu0 0.0
    %2998 = vmatprep.subr.mxu0 0.0
    %2999 = vmatpush2.msra.mxu0 0.0
    %3000 = vmatprep.subr.mxu0 0.0
    %3001 = vmatpush2.msra.mxu0 0.0
    %3002 = vmatprep.subr.mxu0 0.0
    %3003 = vmatpush2.msra.mxu0 0.0
    %3004 = vmatprep.subr.mxu0 0.0
    %3005 = vmatpush2.msra.mxu0 0.0
    %3006 = vmatprep.subr.mxu0 0.0
    %3007 = vmatpush2.msra.mxu0 0.0
    %3008 = vmatprep.subr.mxu0 0.0
    %3009 = vmatpush2.msra.mxu0 0.0
    %3010 = vmatprep.subr.mxu0 0.0
    %3011 = vmatpush2.msra.mxu0 0.0
    %3012 = vmatprep.subr.mxu0 0.0
    %3013 = vmatpush2.msra.mxu0 0.0
    %3014 = vmatprep.subr.mxu0 0.0
    %3015 = vmatpush2.msra.mxu0 0.0
    %3016 = vmatprep.subr.mxu0 0.0
    %3017 = vmatpush2.msra.mxu0 0.0
    %3018 = vmatprep.subr.mxu0 0.0
    %3019 = vmatpush2.msra.mxu0 0.0
    %3020 = vmatprep.subr.mxu0 0.0
    %3021 = vmatpush2.msra.mxu0 0.0
    %3022 = vmatprep.subr.mxu0 0.0
    %3023 = vmatpush2.msra.mxu0 0.0
    %3024 = vmatprep.mubr.f32.mxu0 0.0
    %3025 = vmatmul.mubr.f32.gmra.mxu0 %v2651
    %v3026 = vpop.f32.mrf.mxu0
    %v3027 = vadd.f32 0.0, %v3026
    %v3028 = vpop.f32.mrf.mxu0
    %v3029 = vadd.f32 0.0, %v3028
    %3030 = vdwg.mxu0
    %3031 = vmatprep.subr.mxu0 %v2959
    %3032 = vmatpush1.msra.mxu0 %v2958
    %3033 = vmatprep.subr.mxu0 %v2955
    %3034 = vmatpush1.msra.mxu0 %v2954
    %3035 = vmatprep.subr.mxu0 %v2951
    %3036 = vmatpush1.msra.mxu0 %v2950
    %3037 = vmatprep.subr.mxu0 %v2947
    %3038 = vmatpush1.msra.mxu0 %v2946
    %3039 = vmatprep.subr.mxu0 %v2943
    %3040 = vmatpush1.msra.mxu0 %v2942
    %3041 = vmatprep.subr.mxu0 %v2939
    %3042 = vmatpush1.msra.mxu0 %v2938
    %3043 = vmatprep.subr.mxu0 %v2935
    %3044 = vmatpush1.msra.mxu0 %v2934
    %3045 = vmatprep.subr.mxu0 %v2931
    %3046 = vmatpush1.msra.mxu0 %v2930
    %3047 = vmatprep.subr.mxu0 %v2927
    %3048 = vmatpush1.msra.mxu0 %v2926
    %3049 = vmatprep.subr.mxu0 %v2923
    %3050 = vmatpush1.msra.mxu0 %v2922
    %3051 = vmatprep.subr.mxu0 %v2919
    %3052 = vmatpush1.msra.mxu0 %v2918
    %3053 = vmatprep.subr.mxu0 %v2915
    %3054 = vmatpush1.msra.mxu0 %v2914
    %3055 = vmatprep.subr.mxu0 %v2911
    %3056 = vmatpush1.msra.mxu0 %v2910
    %3057 = vmatprep.subr.mxu0 %v2907
    %3058 = vmatpush1.msra.mxu0 %v2906
    %3059 = vmatprep.subr.mxu0 %v2903
    %3060 = vmatpush1.msra.mxu0 %v2902
    %3061 = vmatprep.subr.mxu0 %v2899
    %3062 = vmatpush1.msra.mxu0 %v2898
    %3063 = vmatprep.subr.mxu0 0.0
    %3064 = vmatpush2.msra.mxu0 0.0
    %3065 = vmatprep.subr.mxu0 0.0
    %3066 = vmatpush2.msra.mxu0 0.0
    %3067 = vmatprep.subr.mxu0 0.0
    %3068 = vmatpush2.msra.mxu0 0.0
    %3069 = vmatprep.subr.mxu0 0.0
    %3070 = vmatpush2.msra.mxu0 0.0
    %3071 = vmatprep.subr.mxu0 0.0
    %3072 = vmatpush2.msra.mxu0 0.0
    %3073 = vmatprep.subr.mxu0 0.0
    %3074 = vmatpush2.msra.mxu0 0.0
    %3075 = vmatprep.subr.mxu0 0.0
    %3076 = vmatpush2.msra.mxu0 0.0
    %3077 = vmatprep.subr.mxu0 0.0
    %3078 = vmatpush2.msra.mxu0 0.0
    %3079 = vmatprep.subr.mxu0 0.0
    %3080 = vmatpush2.msra.mxu0 0.0
    %3081 = vmatprep.subr.mxu0 0.0
    %3082 = vmatpush2.msra.mxu0 0.0
    %3083 = vmatprep.subr.mxu0 0.0
    %3084 = vmatpush2.msra.mxu0 0.0
    %3085 = vmatprep.subr.mxu0 0.0
    %3086 = vmatpush2.msra.mxu0 0.0
    %3087 = vmatprep.subr.mxu0 0.0
    %3088 = vmatpush2.msra.mxu0 0.0
    %3089 = vmatprep.subr.mxu0 0.0
    %3090 = vmatpush2.msra.mxu0 0.0
    %3091 = vmatprep.subr.mxu0 0.0
    %3092 = vmatpush2.msra.mxu0 0.0
    %3093 = vmatprep.subr.mxu0 0.0
    %3094 = vmatpush2.msra.mxu0 0.0
    %3095 = vmatprep.mubr.f32.mxu0 0.0
    %3096 = vmatmul.mubr.f32.gmra.mxu0 %v2651
    %v3097 = vpop.f32.mrf.mxu0
    %v3098 = vadd.f32 0.0, %v3097
    %v3099 = vpop.f32.mrf.mxu0
    %v3100 = vadd.f32 0.0, %v3099
    %3101 = vdwg.mxu0
    %v3102 = vadd.f32 %v2892, %v3027
    %v3103 = vadd.f32 %v2893, %v3029
    %v3104 = vadd.f32 %v2894, %v3098
    %v3105 = vadd.f32 %v2895, %v3100
    %v3106 = vxor.u32 %v3102, 2147483648
    %v3107 = vmul.f32 %v3106, 1.442695
    %v3108 = vpow.pop %v3107
    %v3109 = vadd.f32 %v3108, 1.0
    %v3110 = vrcp.pop %v3109
    %v3111 = vmul.f32 1.0, %v3110
    %v3112 = vxor.u32 %v3103, 2147483648
    %v3113 = vmul.f32 %v3112, 1.442695
    %v3114 = vpow.pop %v3113
    %v3115 = vadd.f32 %v3114, 1.0
    %v3116 = vrcp.pop %v3115
    %v3117 = vmul.f32 1.0, %v3116
    %v3118 = vtanh.pop %v3104
    %v3119 = vxor.u32 %v3105, 2147483648
    %v3120 = vmul.f32 %v3119, 1.442695
    %v3121 = vpow.pop %v3120
    %v3122 = vadd.f32 %v3121, 1.0
    %v3123 = vrcp.pop %v3122
    %v3124 = vmul.f32 1.0, %v3123
    %v3125 = vmul.f32 %v3117, %v2649
    %v3126 = vmul.f32 %v3111, %v3118
    %v3127 = vadd.f32 %v3125, %v3126
    %v3128 = vtanh.pop %v3127
    %v3129 = vmul.f32 %v3124, %v3128
    %3130 = vst [vmem:[#allocation4 + $0x40] sm:$0xff] %v2891
    %3131 = vst [vmem:[#allocation4 + $0x38] sm:$0xff] %v3129
    %v3132 = vld [vmem:[#allocation2 + $0xa0] sm:$0xff]
    %v3133 = vld [vmem:[#allocation2 + $0xa8] sm:$0xff]
    %v3134 = vld [vmem:[#allocation2 + $0xb0] sm:$0xff]
    %v3135 = vld [vmem:[#allocation2 + $0xb8] sm:$0xff]
    %v3136 = vld [vmem:[%s3] sm:$0xff]
    %v3137 = vld [vmem:[%s3 + $0x8] sm:$0xff]
    %v3138 = vld [vmem:[%s3 + $0x10] sm:$0xff]
    %v3139 = vld [vmem:[%s3 + $0x18] sm:$0xff]
    %v3140 = vld [vmem:[%s3 + $0x20] sm:$0xff]
    %v3141 = vld [vmem:[%s3 + $0x28] sm:$0xff]
    %v3142 = vld [vmem:[%s3 + $0x30] sm:$0xff]
    %v3143 = vld [vmem:[%s3 + $0x38] sm:$0xff]
    %v3144 = vld [vmem:[%s3 + $0x40] sm:$0xff]
    %v3145 = vld [vmem:[%s3 + $0x48] sm:$0xff]
    %v3146 = vld [vmem:[%s3 + $0x50] sm:$0xff]
    %v3147 = vld [vmem:[%s3 + $0x58] sm:$0xff]
    %v3148 = vld [vmem:[%s3 + $0x60] sm:$0xff]
    %v3149 = vld [vmem:[%s3 + $0x68] sm:$0xff]
    %v3150 = vld [vmem:[%s3 + $0x70] sm:$0xff]
    %v3151 = vld [vmem:[%s3 + $0x78] sm:$0xff]
    %v3152 = vld [vmem:[%s3 + $0x80] sm:$0xff]
    %v3153 = vld [vmem:[%s3 + $0x88] sm:$0xff]
    %v3154 = vld [vmem:[%s3 + $0x90] sm:$0xff]
    %v3155 = vld [vmem:[%s3 + $0x98] sm:$0xff]
    %v3156 = vld [vmem:[%s3 + $0xa0] sm:$0xff]
    %v3157 = vld [vmem:[%s3 + $0xa8] sm:$0xff]
    %v3158 = vld [vmem:[%s3 + $0xb0] sm:$0xff]
    %v3159 = vld [vmem:[%s3 + $0xb8] sm:$0xff]
    %v3160 = vld [vmem:[%s3 + $0xc0] sm:$0xff]
    %v3161 = vld [vmem:[%s3 + $0xc8] sm:$0xff]
    %v3162 = vld [vmem:[%s3 + $0xd0] sm:$0xff]
    %v3163 = vld [vmem:[%s3 + $0xd8] sm:$0xff]
    %v3164 = vld [vmem:[%s3 + $0xe0] sm:$0xff]
    %v3165 = vld [vmem:[%s3 + $0xe8] sm:$0xff]
    %v3166 = vld [vmem:[%s3 + $0xf0] sm:$0xff]
    %v3167 = vld [vmem:[%s3 + $0xf8] sm:$0xff]
    %v3168 = vld [vmem:[%s3 + $0x100] sm:$0xff]
    %v3169 = vld [vmem:[%s3 + $0x108] sm:$0xff]
    %v3170 = vld [vmem:[%s3 + $0x110] sm:$0xff]
    %v3171 = vld [vmem:[%s3 + $0x118] sm:$0xff]
    %v3172 = vld [vmem:[%s3 + $0x120] sm:$0xff]
    %v3173 = vld [vmem:[%s3 + $0x128] sm:$0xff]
    %v3174 = vld [vmem:[%s3 + $0x130] sm:$0xff]
    %v3175 = vld [vmem:[%s3 + $0x138] sm:$0xff]
    %v3176 = vld [vmem:[%s3 + $0x140] sm:$0xff]
    %v3177 = vld [vmem:[%s3 + $0x148] sm:$0xff]
    %v3178 = vld [vmem:[%s3 + $0x150] sm:$0xff]
    %v3179 = vld [vmem:[%s3 + $0x158] sm:$0xff]
    %v3180 = vld [vmem:[%s3 + $0x160] sm:$0xff]
    %v3181 = vld [vmem:[%s3 + $0x168] sm:$0xff]
    %v3182 = vld [vmem:[%s3 + $0x170] sm:$0xff]
    %v3183 = vld [vmem:[%s3 + $0x178] sm:$0xff]
    %v3184 = vld [vmem:[%s3 + $0x180] sm:$0xff]
    %v3185 = vld [vmem:[%s3 + $0x188] sm:$0xff]
    %v3186 = vld [vmem:[%s3 + $0x190] sm:$0xff]
    %v3187 = vld [vmem:[%s3 + $0x198] sm:$0xff]
    %v3188 = vld [vmem:[%s3 + $0x1a0] sm:$0xff]
    %v3189 = vld [vmem:[%s3 + $0x1a8] sm:$0xff]
    %v3190 = vld [vmem:[%s3 + $0x1b0] sm:$0xff]
    %v3191 = vld [vmem:[%s3 + $0x1b8] sm:$0xff]
    %v3192 = vld [vmem:[%s3 + $0x1c0] sm:$0xff]
    %v3193 = vld [vmem:[%s3 + $0x1c8] sm:$0xff]
    %v3194 = vld [vmem:[%s3 + $0x1d0] sm:$0xff]
    %v3195 = vld [vmem:[%s3 + $0x1d8] sm:$0xff]
    %v3196 = vld [vmem:[%s3 + $0x1e0] sm:$0xff]
    %v3197 = vld [vmem:[%s3 + $0x1e8] sm:$0xff]
    %v3198 = vld [vmem:[%s3 + $0x1f0] sm:$0xff]
    %v3199 = vld [vmem:[%s3 + $0x1f8] sm:$0xff]
    %3200 = vmatprep.subr.mxu0 %v3197
    %3201 = vmatpush1.msra.mxu0 %v3196
    %3202 = vmatprep.subr.mxu0 %v3193
    %3203 = vmatpush1.msra.mxu0 %v3192
    %3204 = vmatprep.subr.mxu0 %v3189
    %3205 = vmatpush1.msra.mxu0 %v3188
    %3206 = vmatprep.subr.mxu0 %v3185
    %3207 = vmatpush1.msra.mxu0 %v3184
    %3208 = vmatprep.subr.mxu0 %v3181
    %3209 = vmatpush1.msra.mxu0 %v3180
    %3210 = vmatprep.subr.mxu0 %v3177
    %3211 = vmatpush1.msra.mxu0 %v3176
    %3212 = vmatprep.subr.mxu0 %v3173
    %3213 = vmatpush1.msra.mxu0 %v3172
    %3214 = vmatprep.subr.mxu0 %v3169
    %3215 = vmatpush1.msra.mxu0 %v3168
    %3216 = vmatprep.subr.mxu0 %v3165
    %3217 = vmatpush1.msra.mxu0 %v3164
    %3218 = vmatprep.subr.mxu0 %v3161
    %3219 = vmatpush1.msra.mxu0 %v3160
    %3220 = vmatprep.subr.mxu0 %v3157
    %3221 = vmatpush1.msra.mxu0 %v3156
    %3222 = vmatprep.subr.mxu0 %v3153
    %3223 = vmatpush1.msra.mxu0 %v3152
    %3224 = vmatprep.subr.mxu0 %v3149
    %3225 = vmatpush1.msra.mxu0 %v3148
    %3226 = vmatprep.subr.mxu0 %v3145
    %3227 = vmatpush1.msra.mxu0 %v3144
    %3228 = vmatprep.subr.mxu0 %v3141
    %3229 = vmatpush1.msra.mxu0 %v3140
    %3230 = vmatprep.subr.mxu0 %v3137
    %3231 = vmatpush1.msra.mxu0 %v3136
    %3232 = vmatprep.subr.mxu0 0.0
    %3233 = vmatpush2.msra.mxu0 0.0
    %3234 = vmatprep.subr.mxu0 0.0
    %3235 = vmatpush2.msra.mxu0 0.0
    %3236 = vmatprep.subr.mxu0 0.0
    %3237 = vmatpush2.msra.mxu0 0.0
    %3238 = vmatprep.subr.mxu0 0.0
    %3239 = vmatpush2.msra.mxu0 0.0
    %3240 = vmatprep.subr.mxu0 0.0
    %3241 = vmatpush2.msra.mxu0 0.0
    %3242 = vmatprep.subr.mxu0 0.0
    %3243 = vmatpush2.msra.mxu0 0.0
    %3244 = vmatprep.subr.mxu0 0.0
    %3245 = vmatpush2.msra.mxu0 0.0
    %3246 = vmatprep.subr.mxu0 0.0
    %3247 = vmatpush2.msra.mxu0 0.0
    %3248 = vmatprep.subr.mxu0 0.0
    %3249 = vmatpush2.msra.mxu0 0.0
    %3250 = vmatprep.subr.mxu0 0.0
    %3251 = vmatpush2.msra.mxu0 0.0
    %3252 = vmatprep.subr.mxu0 0.0
    %3253 = vmatpush2.msra.mxu0 0.0
    %3254 = vmatprep.subr.mxu0 0.0
    %3255 = vmatpush2.msra.mxu0 0.0
    %3256 = vmatprep.subr.mxu0 0.0
    %3257 = vmatpush2.msra.mxu0 0.0
    %3258 = vmatprep.subr.mxu0 0.0
    %3259 = vmatpush2.msra.mxu0 0.0
    %3260 = vmatprep.subr.mxu0 0.0
    %3261 = vmatpush2.msra.mxu0 0.0
    %3262 = vmatprep.subr.mxu0 0.0
    %3263 = vmatpush2.msra.mxu0 0.0
    %3264 = vmatprep.mubr.f32.mxu0 0.0
    %3265 = vmatmul.mubr.f32.gmra.mxu0 %v2891
    %v3266 = vpop.f32.mrf.mxu0
    %v3267 = vadd.f32 0.0, %v3266
    %v3268 = vpop.f32.mrf.mxu0
    %v3269 = vadd.f32 0.0, %v3268
    %3270 = vdwg.mxu0
    %3271 = vmatprep.subr.mxu0 %v3199
    %3272 = vmatpush1.msra.mxu0 %v3198
    %3273 = vmatprep.subr.mxu0 %v3195
    %3274 = vmatpush1.msra.mxu0 %v3194
    %3275 = vmatprep.subr.mxu0 %v3191
    %3276 = vmatpush1.msra.mxu0 %v3190
    %3277 = vmatprep.subr.mxu0 %v3187
    %3278 = vmatpush1.msra.mxu0 %v3186
    %3279 = vmatprep.subr.mxu0 %v3183
    %3280 = vmatpush1.msra.mxu0 %v3182
    %3281 = vmatprep.subr.mxu0 %v3179
    %3282 = vmatpush1.msra.mxu0 %v3178
    %3283 = vmatprep.subr.mxu0 %v3175
    %3284 = vmatpush1.msra.mxu0 %v3174
    %3285 = vmatprep.subr.mxu0 %v3171
    %3286 = vmatpush1.msra.mxu0 %v3170
    %3287 = vmatprep.subr.mxu0 %v3167
    %3288 = vmatpush1.msra.mxu0 %v3166
    %3289 = vmatprep.subr.mxu0 %v3163
    %3290 = vmatpush1.msra.mxu0 %v3162
    %3291 = vmatprep.subr.mxu0 %v3159
    %3292 = vmatpush1.msra.mxu0 %v3158
    %3293 = vmatprep.subr.mxu0 %v3155
    %3294 = vmatpush1.msra.mxu0 %v3154
    %3295 = vmatprep.subr.mxu0 %v3151
    %3296 = vmatpush1.msra.mxu0 %v3150
    %3297 = vmatprep.subr.mxu0 %v3147
    %3298 = vmatpush1.msra.mxu0 %v3146
    %3299 = vmatprep.subr.mxu0 %v3143
    %3300 = vmatpush1.msra.mxu0 %v3142
    %3301 = vmatprep.subr.mxu0 %v3139
    %3302 = vmatpush1.msra.mxu0 %v3138
    %3303 = vmatprep.subr.mxu0 0.0
    %3304 = vmatpush2.msra.mxu0 0.0
    %3305 = vmatprep.subr.mxu0 0.0
    %3306 = vmatpush2.msra.mxu0 0.0
    %3307 = vmatprep.subr.mxu0 0.0
    %3308 = vmatpush2.msra.mxu0 0.0
    %3309 = vmatprep.subr.mxu0 0.0
    %3310 = vmatpush2.msra.mxu0 0.0
    %3311 = vmatprep.subr.mxu0 0.0
    %3312 = vmatpush2.msra.mxu0 0.0
    %3313 = vmatprep.subr.mxu0 0.0
    %3314 = vmatpush2.msra.mxu0 0.0
    %3315 = vmatprep.subr.mxu0 0.0
    %3316 = vmatpush2.msra.mxu0 0.0
    %3317 = vmatprep.subr.mxu0 0.0
    %3318 = vmatpush2.msra.mxu0 0.0
    %3319 = vmatprep.subr.mxu0 0.0
    %3320 = vmatpush2.msra.mxu0 0.0
    %3321 = vmatprep.subr.mxu0 0.0
    %3322 = vmatpush2.msra.mxu0 0.0
    %3323 = vmatprep.subr.mxu0 0.0
    %3324 = vmatpush2.msra.mxu0 0.0
    %3325 = vmatprep.subr.mxu0 0.0
    %3326 = vmatpush2.msra.mxu0 0.0
    %3327 = vmatprep.subr.mxu0 0.0
    %3328 = vmatpush2.msra.mxu0 0.0
    %3329 = vmatprep.subr.mxu0 0.0
    %3330 = vmatpush2.msra.mxu0 0.0
    %3331 = vmatprep.subr.mxu0 0.0
    %3332 = vmatpush2.msra.mxu0 0.0
    %3333 = vmatprep.subr.mxu0 0.0
    %3334 = vmatpush2.msra.mxu0 0.0
    %3335 = vmatprep.mubr.f32.mxu0 0.0
    %3336 = vmatmul.mubr.f32.gmra.mxu0 %v2891
    %v3337 = vpop.f32.mrf.mxu0
    %v3338 = vadd.f32 0.0, %v3337
    %v3339 = vpop.f32.mrf.mxu0
    %v3340 = vadd.f32 0.0, %v3339
    %3341 = vdwg.mxu0
    %v3342 = vadd.f32 %v3132, %v3267
    %v3343 = vadd.f32 %v3133, %v3269
    %v3344 = vadd.f32 %v3134, %v3338
    %v3345 = vadd.f32 %v3135, %v3340
    %v3346 = vxor.u32 %v3342, 2147483648
    %v3347 = vmul.f32 %v3346, 1.442695
    %v3348 = vpow.pop %v3347
    %v3349 = vadd.f32 %v3348, 1.0
    %v3350 = vrcp.pop %v3349
    %v3351 = vmul.f32 1.0, %v3350
    %v3352 = vxor.u32 %v3343, 2147483648
    %v3353 = vmul.f32 %v3352, 1.442695
    %v3354 = vpow.pop %v3353
    %v3355 = vadd.f32 %v3354, 1.0
    %v3356 = vrcp.pop %v3355
    %v3357 = vmul.f32 1.0, %v3356
    %v3358 = vtanh.pop %v3344
    %v3359 = vxor.u32 %v3345, 2147483648
    %v3360 = vmul.f32 %v3359, 1.442695
    %v3361 = vpow.pop %v3360
    %v3362 = vadd.f32 %v3361, 1.0
    %v3363 = vrcp.pop %v3362
    %v3364 = vmul.f32 1.0, %v3363
    %v3365 = vmul.f32 %v3357, %v2889
    %v3366 = vmul.f32 %v3351, %v3358
    %v3367 = vadd.f32 %v3365, %v3366
    %v3368 = vtanh.pop %v3367
    %v3369 = vmul.f32 %v3364, %v3368
    %v3370 = vld [vmem:[#allocation3 + $0x40] sm:$0xff]
    %v3371 = vld [vmem:[#allocation3 + $0x48] sm:$0xff]
    %v3372 = vld [vmem:[#allocation3 + $0x50] sm:$0xff]
    %v3373 = vld [vmem:[#allocation3 + $0x58] sm:$0xff]
    %v3374 = vld [vmem:[#allocation12] sm:$0xff]
    %v3375 = vld [vmem:[#allocation12 + $0x8] sm:$0xff]
    %v3376 = vld [vmem:[#allocation12 + $0x10] sm:$0xff]
    %v3377 = vld [vmem:[#allocation12 + $0x18] sm:$0xff]
    %v3378 = vld [vmem:[#allocation12 + $0x20] sm:$0xff]
    %v3379 = vld [vmem:[#allocation12 + $0x28] sm:$0xff]
    %v3380 = vld [vmem:[#allocation12 + $0x30] sm:$0xff]
    %v3381 = vld [vmem:[#allocation12 + $0x38] sm:$0xff]
    %v3382 = vld [vmem:[#allocation12 + $0x40] sm:$0xff]
    %v3383 = vld [vmem:[#allocation12 + $0x48] sm:$0xff]
    %v3384 = vld [vmem:[#allocation12 + $0x50] sm:$0xff]
    %v3385 = vld [vmem:[#allocation12 + $0x58] sm:$0xff]
    %v3386 = vld [vmem:[#allocation12 + $0x60] sm:$0xff]
    %v3387 = vld [vmem:[#allocation12 + $0x68] sm:$0xff]
    %v3388 = vld [vmem:[#allocation12 + $0x70] sm:$0xff]
    %v3389 = vld [vmem:[#allocation12 + $0x78] sm:$0xff]
    %v3390 = vld [vmem:[#allocation12 + $0x80] sm:$0xff]
    %v3391 = vld [vmem:[#allocation12 + $0x88] sm:$0xff]
    %v3392 = vld [vmem:[#allocation12 + $0x90] sm:$0xff]
    %v3393 = vld [vmem:[#allocation12 + $0x98] sm:$0xff]
    %v3394 = vld [vmem:[#allocation12 + $0xa0] sm:$0xff]
    %v3395 = vld [vmem:[#allocation12 + $0xa8] sm:$0xff]
    %v3396 = vld [vmem:[#allocation12 + $0xb0] sm:$0xff]
    %v3397 = vld [vmem:[#allocation12 + $0xb8] sm:$0xff]
    %v3398 = vld [vmem:[#allocation12 + $0xc0] sm:$0xff]
    %v3399 = vld [vmem:[#allocation12 + $0xc8] sm:$0xff]
    %v3400 = vld [vmem:[#allocation12 + $0xd0] sm:$0xff]
    %v3401 = vld [vmem:[#allocation12 + $0xd8] sm:$0xff]
    %v3402 = vld [vmem:[#allocation12 + $0xe0] sm:$0xff]
    %v3403 = vld [vmem:[#allocation12 + $0xe8] sm:$0xff]
    %v3404 = vld [vmem:[#allocation12 + $0xf0] sm:$0xff]
    %v3405 = vld [vmem:[#allocation12 + $0xf8] sm:$0xff]
    %v3406 = vld [vmem:[#allocation12 + $0x100] sm:$0xff]
    %v3407 = vld [vmem:[#allocation12 + $0x108] sm:$0xff]
    %v3408 = vld [vmem:[#allocation12 + $0x110] sm:$0xff]
    %v3409 = vld [vmem:[#allocation12 + $0x118] sm:$0xff]
    %v3410 = vld [vmem:[#allocation12 + $0x120] sm:$0xff]
    %v3411 = vld [vmem:[#allocation12 + $0x128] sm:$0xff]
    %v3412 = vld [vmem:[#allocation12 + $0x130] sm:$0xff]
    %v3413 = vld [vmem:[#allocation12 + $0x138] sm:$0xff]
    %v3414 = vld [vmem:[#allocation12 + $0x140] sm:$0xff]
    %v3415 = vld [vmem:[#allocation12 + $0x148] sm:$0xff]
    %v3416 = vld [vmem:[#allocation12 + $0x150] sm:$0xff]
    %v3417 = vld [vmem:[#allocation12 + $0x158] sm:$0xff]
    %v3418 = vld [vmem:[#allocation12 + $0x160] sm:$0xff]
    %v3419 = vld [vmem:[#allocation12 + $0x168] sm:$0xff]
    %v3420 = vld [vmem:[#allocation12 + $0x170] sm:$0xff]
    %v3421 = vld [vmem:[#allocation12 + $0x178] sm:$0xff]
    %v3422 = vld [vmem:[#allocation12 + $0x180] sm:$0xff]
    %v3423 = vld [vmem:[#allocation12 + $0x188] sm:$0xff]
    %v3424 = vld [vmem:[#allocation12 + $0x190] sm:$0xff]
    %v3425 = vld [vmem:[#allocation12 + $0x198] sm:$0xff]
    %v3426 = vld [vmem:[#allocation12 + $0x1a0] sm:$0xff]
    %v3427 = vld [vmem:[#allocation12 + $0x1a8] sm:$0xff]
    %v3428 = vld [vmem:[#allocation12 + $0x1b0] sm:$0xff]
    %v3429 = vld [vmem:[#allocation12 + $0x1b8] sm:$0xff]
    %v3430 = vld [vmem:[#allocation12 + $0x1c0] sm:$0xff]
    %v3431 = vld [vmem:[#allocation12 + $0x1c8] sm:$0xff]
    %v3432 = vld [vmem:[#allocation12 + $0x1d0] sm:$0xff]
    %v3433 = vld [vmem:[#allocation12 + $0x1d8] sm:$0xff]
    %v3434 = vld [vmem:[#allocation12 + $0x1e0] sm:$0xff]
    %v3435 = vld [vmem:[#allocation12 + $0x1e8] sm:$0xff]
    %v3436 = vld [vmem:[#allocation12 + $0x1f0] sm:$0xff]
    %v3437 = vld [vmem:[#allocation12 + $0x1f8] sm:$0xff]
    %3438 = vmatprep.subr.mxu0 %v3435
    %3439 = vmatpush1.msra.mxu0 %v3434
    %3440 = vmatprep.subr.mxu0 %v3431
    %3441 = vmatpush1.msra.mxu0 %v3430
    %3442 = vmatprep.subr.mxu0 %v3427
    %3443 = vmatpush1.msra.mxu0 %v3426
    %3444 = vmatprep.subr.mxu0 %v3423
    %3445 = vmatpush1.msra.mxu0 %v3422
    %3446 = vmatprep.subr.mxu0 %v3419
    %3447 = vmatpush1.msra.mxu0 %v3418
    %3448 = vmatprep.subr.mxu0 %v3415
    %3449 = vmatpush1.msra.mxu0 %v3414
    %3450 = vmatprep.subr.mxu0 %v3411
    %3451 = vmatpush1.msra.mxu0 %v3410
    %3452 = vmatprep.subr.mxu0 %v3407
    %3453 = vmatpush1.msra.mxu0 %v3406
    %3454 = vmatprep.subr.mxu0 %v3403
    %3455 = vmatpush1.msra.mxu0 %v3402
    %3456 = vmatprep.subr.mxu0 %v3399
    %3457 = vmatpush1.msra.mxu0 %v3398
    %3458 = vmatprep.subr.mxu0 %v3395
    %3459 = vmatpush1.msra.mxu0 %v3394
    %3460 = vmatprep.subr.mxu0 %v3391
    %3461 = vmatpush1.msra.mxu0 %v3390
    %3462 = vmatprep.subr.mxu0 %v3387
    %3463 = vmatpush1.msra.mxu0 %v3386
    %3464 = vmatprep.subr.mxu0 %v3383
    %3465 = vmatpush1.msra.mxu0 %v3382
    %3466 = vmatprep.subr.mxu0 %v3379
    %3467 = vmatpush1.msra.mxu0 %v3378
    %3468 = vmatprep.subr.mxu0 %v3375
    %3469 = vmatpush1.msra.mxu0 %v3374
    %3470 = vmatprep.subr.mxu0 0.0
    %3471 = vmatpush2.msra.mxu0 0.0
    %3472 = vmatprep.subr.mxu0 0.0
    %3473 = vmatpush2.msra.mxu0 0.0
    %3474 = vmatprep.subr.mxu0 0.0
    %3475 = vmatpush2.msra.mxu0 0.0
    %3476 = vmatprep.subr.mxu0 0.0
    %3477 = vmatpush2.msra.mxu0 0.0
    %3478 = vmatprep.subr.mxu0 0.0
    %3479 = vmatpush2.msra.mxu0 0.0
    %3480 = vmatprep.subr.mxu0 0.0
    %3481 = vmatpush2.msra.mxu0 0.0
    %3482 = vmatprep.subr.mxu0 0.0
    %3483 = vmatpush2.msra.mxu0 0.0
    %3484 = vmatprep.subr.mxu0 0.0
    %3485 = vmatpush2.msra.mxu0 0.0
    %3486 = vmatprep.subr.mxu0 0.0
    %3487 = vmatpush2.msra.mxu0 0.0
    %3488 = vmatprep.subr.mxu0 0.0
    %3489 = vmatpush2.msra.mxu0 0.0
    %3490 = vmatprep.subr.mxu0 0.0
    %3491 = vmatpush2.msra.mxu0 0.0
    %3492 = vmatprep.subr.mxu0 0.0
    %3493 = vmatpush2.msra.mxu0 0.0
    %3494 = vmatprep.subr.mxu0 0.0
    %3495 = vmatpush2.msra.mxu0 0.0
    %3496 = vmatprep.subr.mxu0 0.0
    %3497 = vmatpush2.msra.mxu0 0.0
    %3498 = vmatprep.subr.mxu0 0.0
    %3499 = vmatpush2.msra.mxu0 0.0
    %3500 = vmatprep.subr.mxu0 0.0
    %3501 = vmatpush2.msra.mxu0 0.0
    %3502 = vmatprep.mubr.f32.mxu0 0.0
    %3503 = vmatmul.mubr.f32.gmra.mxu0 %v3129
    %v3504 = vpop.f32.mrf.mxu0
    %v3505 = vadd.f32 0.0, %v3504
    %v3506 = vpop.f32.mrf.mxu0
    %v3507 = vadd.f32 0.0, %v3506
    %3508 = vdwg.mxu0
    %3509 = vmatprep.subr.mxu0 %v3437
    %3510 = vmatpush1.msra.mxu0 %v3436
    %3511 = vmatprep.subr.mxu0 %v3433
    %3512 = vmatpush1.msra.mxu0 %v3432
    %3513 = vmatprep.subr.mxu0 %v3429
    %3514 = vmatpush1.msra.mxu0 %v3428
    %3515 = vmatprep.subr.mxu0 %v3425
    %3516 = vmatpush1.msra.mxu0 %v3424
    %3517 = vmatprep.subr.mxu0 %v3421
    %3518 = vmatpush1.msra.mxu0 %v3420
    %3519 = vmatprep.subr.mxu0 %v3417
    %3520 = vmatpush1.msra.mxu0 %v3416
    %3521 = vmatprep.subr.mxu0 %v3413
    %3522 = vmatpush1.msra.mxu0 %v3412
    %3523 = vmatprep.subr.mxu0 %v3409
    %3524 = vmatpush1.msra.mxu0 %v3408
    %3525 = vmatprep.subr.mxu0 %v3405
    %3526 = vmatpush1.msra.mxu0 %v3404
    %3527 = vmatprep.subr.mxu0 %v3401
    %3528 = vmatpush1.msra.mxu0 %v3400
    %3529 = vmatprep.subr.mxu0 %v3397
    %3530 = vmatpush1.msra.mxu0 %v3396
    %3531 = vmatprep.subr.mxu0 %v3393
    %3532 = vmatpush1.msra.mxu0 %v3392
    %3533 = vmatprep.subr.mxu0 %v3389
    %3534 = vmatpush1.msra.mxu0 %v3388
    %3535 = vmatprep.subr.mxu0 %v3385
    %3536 = vmatpush1.msra.mxu0 %v3384
    %3537 = vmatprep.subr.mxu0 %v3381
    %3538 = vmatpush1.msra.mxu0 %v3380
    %3539 = vmatprep.subr.mxu0 %v3377
    %3540 = vmatpush1.msra.mxu0 %v3376
    %3541 = vmatprep.subr.mxu0 0.0
    %3542 = vmatpush2.msra.mxu0 0.0
    %3543 = vmatprep.subr.mxu0 0.0
    %3544 = vmatpush2.msra.mxu0 0.0
    %3545 = vmatprep.subr.mxu0 0.0
    %3546 = vmatpush2.msra.mxu0 0.0
    %3547 = vmatprep.subr.mxu0 0.0
    %3548 = vmatpush2.msra.mxu0 0.0
    %3549 = vmatprep.subr.mxu0 0.0
    %3550 = vmatpush2.msra.mxu0 0.0
    %3551 = vmatprep.subr.mxu0 0.0
    %3552 = vmatpush2.msra.mxu0 0.0
    %3553 = vmatprep.subr.mxu0 0.0
    %3554 = vmatpush2.msra.mxu0 0.0
    %3555 = vmatprep.subr.mxu0 0.0
    %3556 = vmatpush2.msra.mxu0 0.0
    %3557 = vmatprep.subr.mxu0 0.0
    %3558 = vmatpush2.msra.mxu0 0.0
    %3559 = vmatprep.subr.mxu0 0.0
    %3560 = vmatpush2.msra.mxu0 0.0
    %3561 = vmatprep.subr.mxu0 0.0
    %3562 = vmatpush2.msra.mxu0 0.0
    %3563 = vmatprep.subr.mxu0 0.0
    %3564 = vmatpush2.msra.mxu0 0.0
    %3565 = vmatprep.subr.mxu0 0.0
    %3566 = vmatpush2.msra.mxu0 0.0
    %3567 = vmatprep.subr.mxu0 0.0
    %3568 = vmatpush2.msra.mxu0 0.0
    %3569 = vmatprep.subr.mxu0 0.0
    %3570 = vmatpush2.msra.mxu0 0.0
    %3571 = vmatprep.subr.mxu0 0.0
    %3572 = vmatpush2.msra.mxu0 0.0
    %3573 = vmatprep.mubr.f32.mxu0 0.0
    %3574 = vmatmul.mubr.f32.gmra.mxu0 %v3129
    %v3575 = vpop.f32.mrf.mxu0
    %v3576 = vadd.f32 0.0, %v3575
    %v3577 = vpop.f32.mrf.mxu0
    %v3578 = vadd.f32 0.0, %v3577
    %3579 = vdwg.mxu0
    %v3580 = vadd.f32 %v3370, %v3505
    %v3581 = vadd.f32 %v3371, %v3507
    %v3582 = vadd.f32 %v3372, %v3576
    %v3583 = vadd.f32 %v3373, %v3578
    %v3584 = vxor.u32 %v3580, 2147483648
    %v3585 = vmul.f32 %v3584, 1.442695
    %v3586 = vpow.pop %v3585
    %v3587 = vadd.f32 %v3586, 1.0
    %v3588 = vrcp.pop %v3587
    %v3589 = vmul.f32 1.0, %v3588
    %v3590 = vxor.u32 %v3581, 2147483648
    %v3591 = vmul.f32 %v3590, 1.442695
    %v3592 = vpow.pop %v3591
    %v3593 = vadd.f32 %v3592, 1.0
    %v3594 = vrcp.pop %v3593
    %v3595 = vmul.f32 1.0, %v3594
    %v3596 = vtanh.pop %v3582
    %v3597 = vxor.u32 %v3583, 2147483648
    %v3598 = vmul.f32 %v3597, 1.442695
    %v3599 = vpow.pop %v3598
    %v3600 = vadd.f32 %v3599, 1.0
    %v3601 = vrcp.pop %v3600
    %v3602 = vmul.f32 1.0, %v3601
    %v3603 = vmul.f32 %v3595, %v3127
    %v3604 = vmul.f32 %v3589, %v3596
    %v3605 = vadd.f32 %v3603, %v3604
    %v3606 = vtanh.pop %v3605
    %v3607 = vmul.f32 %v3602, %v3606
    %3608 = vst [vmem:[#allocation4 + $0x50] sm:$0xff] %v3369
    %3609 = vst [vmem:[#allocation4 + $0x28] sm:$0xff] %v3607
    %v3610 = vld [vmem:[#allocation2 + $0xc0] sm:$0xff]
    %v3611 = vld [vmem:[#allocation2 + $0xc8] sm:$0xff]
    %v3612 = vld [vmem:[#allocation2 + $0xd0] sm:$0xff]
    %v3613 = vld [vmem:[#allocation2 + $0xd8] sm:$0xff]
    %v3614 = vld [vmem:[%s3] sm:$0xff]
    %v3615 = vld [vmem:[%s3 + $0x8] sm:$0xff]
    %v3616 = vld [vmem:[%s3 + $0x10] sm:$0xff]
    %v3617 = vld [vmem:[%s3 + $0x18] sm:$0xff]
    %v3618 = vld [vmem:[%s3 + $0x20] sm:$0xff]
    %v3619 = vld [vmem:[%s3 + $0x28] sm:$0xff]
    %v3620 = vld [vmem:[%s3 + $0x30] sm:$0xff]
    %v3621 = vld [vmem:[%s3 + $0x38] sm:$0xff]
    %v3622 = vld [vmem:[%s3 + $0x40] sm:$0xff]
    %v3623 = vld [vmem:[%s3 + $0x48] sm:$0xff]
    %v3624 = vld [vmem:[%s3 + $0x50] sm:$0xff]
    %v3625 = vld [vmem:[%s3 + $0x58] sm:$0xff]
    %v3626 = vld [vmem:[%s3 + $0x60] sm:$0xff]
    %v3627 = vld [vmem:[%s3 + $0x68] sm:$0xff]
    %v3628 = vld [vmem:[%s3 + $0x70] sm:$0xff]
    %v3629 = vld [vmem:[%s3 + $0x78] sm:$0xff]
    %v3630 = vld [vmem:[%s3 + $0x80] sm:$0xff]
    %v3631 = vld [vmem:[%s3 + $0x88] sm:$0xff]
    %v3632 = vld [vmem:[%s3 + $0x90] sm:$0xff]
    %v3633 = vld [vmem:[%s3 + $0x98] sm:$0xff]
    %v3634 = vld [vmem:[%s3 + $0xa0] sm:$0xff]
    %v3635 = vld [vmem:[%s3 + $0xa8] sm:$0xff]
    %v3636 = vld [vmem:[%s3 + $0xb0] sm:$0xff]
    %v3637 = vld [vmem:[%s3 + $0xb8] sm:$0xff]
    %v3638 = vld [vmem:[%s3 + $0xc0] sm:$0xff]
    %v3639 = vld [vmem:[%s3 + $0xc8] sm:$0xff]
    %v3640 = vld [vmem:[%s3 + $0xd0] sm:$0xff]
    %v3641 = vld [vmem:[%s3 + $0xd8] sm:$0xff]
    %v3642 = vld [vmem:[%s3 + $0xe0] sm:$0xff]
    %v3643 = vld [vmem:[%s3 + $0xe8] sm:$0xff]
    %v3644 = vld [vmem:[%s3 + $0xf0] sm:$0xff]
    %v3645 = vld [vmem:[%s3 + $0xf8] sm:$0xff]
    %v3646 = vld [vmem:[%s3 + $0x100] sm:$0xff]
    %v3647 = vld [vmem:[%s3 + $0x108] sm:$0xff]
    %v3648 = vld [vmem:[%s3 + $0x110] sm:$0xff]
    %v3649 = vld [vmem:[%s3 + $0x118] sm:$0xff]
    %v3650 = vld [vmem:[%s3 + $0x120] sm:$0xff]
    %v3651 = vld [vmem:[%s3 + $0x128] sm:$0xff]
    %v3652 = vld [vmem:[%s3 + $0x130] sm:$0xff]
    %v3653 = vld [vmem:[%s3 + $0x138] sm:$0xff]
    %v3654 = vld [vmem:[%s3 + $0x140] sm:$0xff]
    %v3655 = vld [vmem:[%s3 + $0x148] sm:$0xff]
    %v3656 = vld [vmem:[%s3 + $0x150] sm:$0xff]
    %v3657 = vld [vmem:[%s3 + $0x158] sm:$0xff]
    %v3658 = vld [vmem:[%s3 + $0x160] sm:$0xff]
    %v3659 = vld [vmem:[%s3 + $0x168] sm:$0xff]
    %v3660 = vld [vmem:[%s3 + $0x170] sm:$0xff]
    %v3661 = vld [vmem:[%s3 + $0x178] sm:$0xff]
    %v3662 = vld [vmem:[%s3 + $0x180] sm:$0xff]
    %v3663 = vld [vmem:[%s3 + $0x188] sm:$0xff]
    %v3664 = vld [vmem:[%s3 + $0x190] sm:$0xff]
    %v3665 = vld [vmem:[%s3 + $0x198] sm:$0xff]
    %v3666 = vld [vmem:[%s3 + $0x1a0] sm:$0xff]
    %v3667 = vld [vmem:[%s3 + $0x1a8] sm:$0xff]
    %v3668 = vld [vmem:[%s3 + $0x1b0] sm:$0xff]
    %v3669 = vld [vmem:[%s3 + $0x1b8] sm:$0xff]
    %v3670 = vld [vmem:[%s3 + $0x1c0] sm:$0xff]
    %v3671 = vld [vmem:[%s3 + $0x1c8] sm:$0xff]
    %v3672 = vld [vmem:[%s3 + $0x1d0] sm:$0xff]
    %v3673 = vld [vmem:[%s3 + $0x1d8] sm:$0xff]
    %v3674 = vld [vmem:[%s3 + $0x1e0] sm:$0xff]
    %v3675 = vld [vmem:[%s3 + $0x1e8] sm:$0xff]
    %v3676 = vld [vmem:[%s3 + $0x1f0] sm:$0xff]
    %v3677 = vld [vmem:[%s3 + $0x1f8] sm:$0xff]
    %3678 = vmatprep.subr.mxu0 %v3675
    %3679 = vmatpush1.msra.mxu0 %v3674
    %3680 = vmatprep.subr.mxu0 %v3671
    %3681 = vmatpush1.msra.mxu0 %v3670
    %3682 = vmatprep.subr.mxu0 %v3667
    %3683 = vmatpush1.msra.mxu0 %v3666
    %3684 = vmatprep.subr.mxu0 %v3663
    %3685 = vmatpush1.msra.mxu0 %v3662
    %3686 = vmatprep.subr.mxu0 %v3659
    %3687 = vmatpush1.msra.mxu0 %v3658
    %3688 = vmatprep.subr.mxu0 %v3655
    %3689 = vmatpush1.msra.mxu0 %v3654
    %3690 = vmatprep.subr.mxu0 %v3651
    %3691 = vmatpush1.msra.mxu0 %v3650
    %3692 = vmatprep.subr.mxu0 %v3647
    %3693 = vmatpush1.msra.mxu0 %v3646
    %3694 = vmatprep.subr.mxu0 %v3643
    %3695 = vmatpush1.msra.mxu0 %v3642
    %3696 = vmatprep.subr.mxu0 %v3639
    %3697 = vmatpush1.msra.mxu0 %v3638
    %3698 = vmatprep.subr.mxu0 %v3635
    %3699 = vmatpush1.msra.mxu0 %v3634
    %3700 = vmatprep.subr.mxu0 %v3631
    %3701 = vmatpush1.msra.mxu0 %v3630
    %3702 = vmatprep.subr.mxu0 %v3627
    %3703 = vmatpush1.msra.mxu0 %v3626
    %3704 = vmatprep.subr.mxu0 %v3623
    %3705 = vmatpush1.msra.mxu0 %v3622
    %3706 = vmatprep.subr.mxu0 %v3619
    %3707 = vmatpush1.msra.mxu0 %v3618
    %3708 = vmatprep.subr.mxu0 %v3615
    %3709 = vmatpush1.msra.mxu0 %v3614
    %3710 = vmatprep.subr.mxu0 0.0
    %3711 = vmatpush2.msra.mxu0 0.0
    %3712 = vmatprep.subr.mxu0 0.0
    %3713 = vmatpush2.msra.mxu0 0.0
    %3714 = vmatprep.subr.mxu0 0.0
    %3715 = vmatpush2.msra.mxu0 0.0
    %3716 = vmatprep.subr.mxu0 0.0
    %3717 = vmatpush2.msra.mxu0 0.0
    %3718 = vmatprep.subr.mxu0 0.0
    %3719 = vmatpush2.msra.mxu0 0.0
    %3720 = vmatprep.subr.mxu0 0.0
    %3721 = vmatpush2.msra.mxu0 0.0
    %3722 = vmatprep.subr.mxu0 0.0
    %3723 = vmatpush2.msra.mxu0 0.0
    %3724 = vmatprep.subr.mxu0 0.0
    %3725 = vmatpush2.msra.mxu0 0.0
    %3726 = vmatprep.subr.mxu0 0.0
    %3727 = vmatpush2.msra.mxu0 0.0
    %3728 = vmatprep.subr.mxu0 0.0
    %3729 = vmatpush2.msra.mxu0 0.0
    %3730 = vmatprep.subr.mxu0 0.0
    %3731 = vmatpush2.msra.mxu0 0.0
    %3732 = vmatprep.subr.mxu0 0.0
    %3733 = vmatpush2.msra.mxu0 0.0
    %3734 = vmatprep.subr.mxu0 0.0
    %3735 = vmatpush2.msra.mxu0 0.0
    %3736 = vmatprep.subr.mxu0 0.0
    %3737 = vmatpush2.msra.mxu0 0.0
    %3738 = vmatprep.subr.mxu0 0.0
    %3739 = vmatpush2.msra.mxu0 0.0
    %3740 = vmatprep.subr.mxu0 0.0
    %3741 = vmatpush2.msra.mxu0 0.0
    %3742 = vmatprep.mubr.f32.mxu0 0.0
    %3743 = vmatmul.mubr.f32.gmra.mxu0 %v3369
    %v3744 = vpop.f32.mrf.mxu0
    %v3745 = vadd.f32 0.0, %v3744
    %v3746 = vpop.f32.mrf.mxu0
    %v3747 = vadd.f32 0.0, %v3746
    %3748 = vdwg.mxu0
    %3749 = vmatprep.subr.mxu0 %v3677
    %3750 = vmatpush1.msra.mxu0 %v3676
    %3751 = vmatprep.subr.mxu0 %v3673
    %3752 = vmatpush1.msra.mxu0 %v3672
    %3753 = vmatprep.subr.mxu0 %v3669
    %3754 = vmatpush1.msra.mxu0 %v3668
    %3755 = vmatprep.subr.mxu0 %v3665
    %3756 = vmatpush1.msra.mxu0 %v3664
    %3757 = vmatprep.subr.mxu0 %v3661
    %3758 = vmatpush1.msra.mxu0 %v3660
    %3759 = vmatprep.subr.mxu0 %v3657
    %3760 = vmatpush1.msra.mxu0 %v3656
    %3761 = vmatprep.subr.mxu0 %v3653
    %3762 = vmatpush1.msra.mxu0 %v3652
    %3763 = vmatprep.subr.mxu0 %v3649
    %3764 = vmatpush1.msra.mxu0 %v3648
    %3765 = vmatprep.subr.mxu0 %v3645
    %3766 = vmatpush1.msra.mxu0 %v3644
    %3767 = vmatprep.subr.mxu0 %v3641
    %3768 = vmatpush1.msra.mxu0 %v3640
    %3769 = vmatprep.subr.mxu0 %v3637
    %3770 = vmatpush1.msra.mxu0 %v3636
    %3771 = vmatprep.subr.mxu0 %v3633
    %3772 = vmatpush1.msra.mxu0 %v3632
    %3773 = vmatprep.subr.mxu0 %v3629
    %3774 = vmatpush1.msra.mxu0 %v3628
    %3775 = vmatprep.subr.mxu0 %v3625
    %3776 = vmatpush1.msra.mxu0 %v3624
    %3777 = vmatprep.subr.mxu0 %v3621
    %3778 = vmatpush1.msra.mxu0 %v3620
    %3779 = vmatprep.subr.mxu0 %v3617
    %3780 = vmatpush1.msra.mxu0 %v3616
    %3781 = vmatprep.subr.mxu0 0.0
    %3782 = vmatpush2.msra.mxu0 0.0
    %3783 = vmatprep.subr.mxu0 0.0
    %3784 = vmatpush2.msra.mxu0 0.0
    %3785 = vmatprep.subr.mxu0 0.0
    %3786 = vmatpush2.msra.mxu0 0.0
    %3787 = vmatprep.subr.mxu0 0.0
    %3788 = vmatpush2.msra.mxu0 0.0
    %3789 = vmatprep.subr.mxu0 0.0
    %3790 = vmatpush2.msra.mxu0 0.0
    %3791 = vmatprep.subr.mxu0 0.0
    %3792 = vmatpush2.msra.mxu0 0.0
    %3793 = vmatprep.subr.mxu0 0.0
    %3794 = vmatpush2.msra.mxu0 0.0
    %3795 = vmatprep.subr.mxu0 0.0
    %3796 = vmatpush2.msra.mxu0 0.0
    %3797 = vmatprep.subr.mxu0 0.0
    %3798 = vmatpush2.msra.mxu0 0.0
    %3799 = vmatprep.subr.mxu0 0.0
    %3800 = vmatpush2.msra.mxu0 0.0
    %3801 = vmatprep.subr.mxu0 0.0
    %3802 = vmatpush2.msra.mxu0 0.0
    %3803 = vmatprep.subr.mxu0 0.0
    %3804 = vmatpush2.msra.mxu0 0.0
    %3805 = vmatprep.subr.mxu0 0.0
    %3806 = vmatpush2.msra.mxu0 0.0
    %3807 = vmatprep.subr.mxu0 0.0
    %3808 = vmatpush2.msra.mxu0 0.0
    %3809 = vmatprep.subr.mxu0 0.0
    %3810 = vmatpush2.msra.mxu0 0.0
    %3811 = vmatprep.subr.mxu0 0.0
    %3812 = vmatpush2.msra.mxu0 0.0
    %3813 = vmatprep.mubr.f32.mxu0 0.0
    %3814 = vmatmul.mubr.f32.gmra.mxu0 %v3369
    %v3815 = vpop.f32.mrf.mxu0
    %v3816 = vadd.f32 0.0, %v3815
    %v3817 = vpop.f32.mrf.mxu0
    %v3818 = vadd.f32 0.0, %v3817
    %3819 = vdwg.mxu0
    %v3820 = vadd.f32 %v3610, %v3745
    %v3821 = vadd.f32 %v3611, %v3747
    %v3822 = vadd.f32 %v3612, %v3816
    %v3823 = vadd.f32 %v3613, %v3818
    %v3824 = vxor.u32 %v3820, 2147483648
    %v3825 = vmul.f32 %v3824, 1.442695
    %v3826 = vpow.pop %v3825
    %v3827 = vadd.f32 %v3826, 1.0
    %v3828 = vrcp.pop %v3827
    %v3829 = vmul.f32 1.0, %v3828
    %v3830 = vxor.u32 %v3821, 2147483648
    %v3831 = vmul.f32 %v3830, 1.442695
    %v3832 = vpow.pop %v3831
    %v3833 = vadd.f32 %v3832, 1.0
    %v3834 = vrcp.pop %v3833
    %v3835 = vmul.f32 1.0, %v3834
    %v3836 = vtanh.pop %v3822
    %v3837 = vxor.u32 %v3823, 2147483648
    %v3838 = vmul.f32 %v3837, 1.442695
    %v3839 = vpow.pop %v3838
    %v3840 = vadd.f32 %v3839, 1.0
    %v3841 = vrcp.pop %v3840
    %v3842 = vmul.f32 1.0, %v3841
    %v3843 = vmul.f32 %v3835, %v3367
    %v3844 = vmul.f32 %v3829, %v3836
    %v3845 = vadd.f32 %v3843, %v3844
    %v3846 = vtanh.pop %v3845
    %v3847 = vmul.f32 %v3842, %v3846
    %v3848 = vld [vmem:[#allocation3 + $0x20] sm:$0xff]
    %v3849 = vld [vmem:[#allocation3 + $0x28] sm:$0xff]
    %v3850 = vld [vmem:[#allocation3 + $0x30] sm:$0xff]
    %v3851 = vld [vmem:[#allocation3 + $0x38] sm:$0xff]
    %v3852 = vld [vmem:[#allocation12] sm:$0xff]
    %v3853 = vld [vmem:[#allocation12 + $0x8] sm:$0xff]
    %v3854 = vld [vmem:[#allocation12 + $0x10] sm:$0xff]
    %v3855 = vld [vmem:[#allocation12 + $0x18] sm:$0xff]
    %v3856 = vld [vmem:[#allocation12 + $0x20] sm:$0xff]
    %v3857 = vld [vmem:[#allocation12 + $0x28] sm:$0xff]
    %v3858 = vld [vmem:[#allocation12 + $0x30] sm:$0xff]
    %v3859 = vld [vmem:[#allocation12 + $0x38] sm:$0xff]
    %v3860 = vld [vmem:[#allocation12 + $0x40] sm:$0xff]
    %v3861 = vld [vmem:[#allocation12 + $0x48] sm:$0xff]
    %v3862 = vld [vmem:[#allocation12 + $0x50] sm:$0xff]
    %v3863 = vld [vmem:[#allocation12 + $0x58] sm:$0xff]
    %v3864 = vld [vmem:[#allocation12 + $0x60] sm:$0xff]
    %v3865 = vld [vmem:[#allocation12 + $0x68] sm:$0xff]
    %v3866 = vld [vmem:[#allocation12 + $0x70] sm:$0xff]
    %v3867 = vld [vmem:[#allocation12 + $0x78] sm:$0xff]
    %v3868 = vld [vmem:[#allocation12 + $0x80] sm:$0xff]
    %v3869 = vld [vmem:[#allocation12 + $0x88] sm:$0xff]
    %v3870 = vld [vmem:[#allocation12 + $0x90] sm:$0xff]
    %v3871 = vld [vmem:[#allocation12 + $0x98] sm:$0xff]
    %v3872 = vld [vmem:[#allocation12 + $0xa0] sm:$0xff]
    %v3873 = vld [vmem:[#allocation12 + $0xa8] sm:$0xff]
    %v3874 = vld [vmem:[#allocation12 + $0xb0] sm:$0xff]
    %v3875 = vld [vmem:[#allocation12 + $0xb8] sm:$0xff]
    %v3876 = vld [vmem:[#allocation12 + $0xc0] sm:$0xff]
    %v3877 = vld [vmem:[#allocation12 + $0xc8] sm:$0xff]
    %v3878 = vld [vmem:[#allocation12 + $0xd0] sm:$0xff]
    %v3879 = vld [vmem:[#allocation12 + $0xd8] sm:$0xff]
    %v3880 = vld [vmem:[#allocation12 + $0xe0] sm:$0xff]
    %v3881 = vld [vmem:[#allocation12 + $0xe8] sm:$0xff]
    %v3882 = vld [vmem:[#allocation12 + $0xf0] sm:$0xff]
    %v3883 = vld [vmem:[#allocation12 + $0xf8] sm:$0xff]
    %v3884 = vld [vmem:[#allocation12 + $0x100] sm:$0xff]
    %v3885 = vld [vmem:[#allocation12 + $0x108] sm:$0xff]
    %v3886 = vld [vmem:[#allocation12 + $0x110] sm:$0xff]
    %v3887 = vld [vmem:[#allocation12 + $0x118] sm:$0xff]
    %v3888 = vld [vmem:[#allocation12 + $0x120] sm:$0xff]
    %v3889 = vld [vmem:[#allocation12 + $0x128] sm:$0xff]
    %v3890 = vld [vmem:[#allocation12 + $0x130] sm:$0xff]
    %v3891 = vld [vmem:[#allocation12 + $0x138] sm:$0xff]
    %v3892 = vld [vmem:[#allocation12 + $0x140] sm:$0xff]
    %v3893 = vld [vmem:[#allocation12 + $0x148] sm:$0xff]
    %v3894 = vld [vmem:[#allocation12 + $0x150] sm:$0xff]
    %v3895 = vld [vmem:[#allocation12 + $0x158] sm:$0xff]
    %v3896 = vld [vmem:[#allocation12 + $0x160] sm:$0xff]
    %v3897 = vld [vmem:[#allocation12 + $0x168] sm:$0xff]
    %v3898 = vld [vmem:[#allocation12 + $0x170] sm:$0xff]
    %v3899 = vld [vmem:[#allocation12 + $0x178] sm:$0xff]
    %v3900 = vld [vmem:[#allocation12 + $0x180] sm:$0xff]
    %v3901 = vld [vmem:[#allocation12 + $0x188] sm:$0xff]
    %v3902 = vld [vmem:[#allocation12 + $0x190] sm:$0xff]
    %v3903 = vld [vmem:[#allocation12 + $0x198] sm:$0xff]
    %v3904 = vld [vmem:[#allocation12 + $0x1a0] sm:$0xff]
    %v3905 = vld [vmem:[#allocation12 + $0x1a8] sm:$0xff]
    %v3906 = vld [vmem:[#allocation12 + $0x1b0] sm:$0xff]
    %v3907 = vld [vmem:[#allocation12 + $0x1b8] sm:$0xff]
    %v3908 = vld [vmem:[#allocation12 + $0x1c0] sm:$0xff]
    %v3909 = vld [vmem:[#allocation12 + $0x1c8] sm:$0xff]
    %v3910 = vld [vmem:[#allocation12 + $0x1d0] sm:$0xff]
    %v3911 = vld [vmem:[#allocation12 + $0x1d8] sm:$0xff]
    %v3912 = vld [vmem:[#allocation12 + $0x1e0] sm:$0xff]
    %v3913 = vld [vmem:[#allocation12 + $0x1e8] sm:$0xff]
    %v3914 = vld [vmem:[#allocation12 + $0x1f0] sm:$0xff]
    %v3915 = vld [vmem:[#allocation12 + $0x1f8] sm:$0xff]
    %3916 = vmatprep.subr.mxu0 %v3913
    %3917 = vmatpush1.msra.mxu0 %v3912
    %3918 = vmatprep.subr.mxu0 %v3909
    %3919 = vmatpush1.msra.mxu0 %v3908
    %3920 = vmatprep.subr.mxu0 %v3905
    %3921 = vmatpush1.msra.mxu0 %v3904
    %3922 = vmatprep.subr.mxu0 %v3901
    %3923 = vmatpush1.msra.mxu0 %v3900
    %3924 = vmatprep.subr.mxu0 %v3897
    %3925 = vmatpush1.msra.mxu0 %v3896
    %3926 = vmatprep.subr.mxu0 %v3893
    %3927 = vmatpush1.msra.mxu0 %v3892
    %3928 = vmatprep.subr.mxu0 %v3889
    %3929 = vmatpush1.msra.mxu0 %v3888
    %3930 = vmatprep.subr.mxu0 %v3885
    %3931 = vmatpush1.msra.mxu0 %v3884
    %3932 = vmatprep.subr.mxu0 %v3881
    %3933 = vmatpush1.msra.mxu0 %v3880
    %3934 = vmatprep.subr.mxu0 %v3877
    %3935 = vmatpush1.msra.mxu0 %v3876
    %3936 = vmatprep.subr.mxu0 %v3873
    %3937 = vmatpush1.msra.mxu0 %v3872
    %3938 = vmatprep.subr.mxu0 %v3869
    %3939 = vmatpush1.msra.mxu0 %v3868
    %3940 = vmatprep.subr.mxu0 %v3865
    %3941 = vmatpush1.msra.mxu0 %v3864
    %3942 = vmatprep.subr.mxu0 %v3861
    %3943 = vmatpush1.msra.mxu0 %v3860
    %3944 = vmatprep.subr.mxu0 %v3857
    %3945 = vmatpush1.msra.mxu0 %v3856
    %3946 = vmatprep.subr.mxu0 %v3853
    %3947 = vmatpush1.msra.mxu0 %v3852
    %3948 = vmatprep.subr.mxu0 0.0
    %3949 = vmatpush2.msra.mxu0 0.0
    %3950 = vmatprep.subr.mxu0 0.0
    %3951 = vmatpush2.msra.mxu0 0.0
    %3952 = vmatprep.subr.mxu0 0.0
    %3953 = vmatpush2.msra.mxu0 0.0
    %3954 = vmatprep.subr.mxu0 0.0
    %3955 = vmatpush2.msra.mxu0 0.0
    %3956 = vmatprep.subr.mxu0 0.0
    %3957 = vmatpush2.msra.mxu0 0.0
    %3958 = vmatprep.subr.mxu0 0.0
    %3959 = vmatpush2.msra.mxu0 0.0
    %3960 = vmatprep.subr.mxu0 0.0
    %3961 = vmatpush2.msra.mxu0 0.0
    %3962 = vmatprep.subr.mxu0 0.0
    %3963 = vmatpush2.msra.mxu0 0.0
    %3964 = vmatprep.subr.mxu0 0.0
    %3965 = vmatpush2.msra.mxu0 0.0
    %3966 = vmatprep.subr.mxu0 0.0
    %3967 = vmatpush2.msra.mxu0 0.0
    %3968 = vmatprep.subr.mxu0 0.0
    %3969 = vmatpush2.msra.mxu0 0.0
    %3970 = vmatprep.subr.mxu0 0.0
    %3971 = vmatpush2.msra.mxu0 0.0
    %3972 = vmatprep.subr.mxu0 0.0
    %3973 = vmatpush2.msra.mxu0 0.0
    %3974 = vmatprep.subr.mxu0 0.0
    %3975 = vmatpush2.msra.mxu0 0.0
    %3976 = vmatprep.subr.mxu0 0.0
    %3977 = vmatpush2.msra.mxu0 0.0
    %3978 = vmatprep.subr.mxu0 0.0
    %3979 = vmatpush2.msra.mxu0 0.0
    %3980 = vmatprep.mubr.f32.mxu0 0.0
    %3981 = vmatmul.mubr.f32.gmra.mxu0 %v3607
    %v3982 = vpop.f32.mrf.mxu0
    %v3983 = vadd.f32 0.0, %v3982
    %v3984 = vpop.f32.mrf.mxu0
    %v3985 = vadd.f32 0.0, %v3984
    %3986 = vdwg.mxu0
    %3987 = vmatprep.subr.mxu0 %v3915
    %3988 = vmatpush1.msra.mxu0 %v3914
    %3989 = vmatprep.subr.mxu0 %v3911
    %3990 = vmatpush1.msra.mxu0 %v3910
    %3991 = vmatprep.subr.mxu0 %v3907
    %3992 = vmatpush1.msra.mxu0 %v3906
    %3993 = vmatprep.subr.mxu0 %v3903
    %3994 = vmatpush1.msra.mxu0 %v3902
    %3995 = vmatprep.subr.mxu0 %v3899
    %3996 = vmatpush1.msra.mxu0 %v3898
    %3997 = vmatprep.subr.mxu0 %v3895
    %3998 = vmatpush1.msra.mxu0 %v3894
    %3999 = vmatprep.subr.mxu0 %v3891
    %4000 = vmatpush1.msra.mxu0 %v3890
    %4001 = vmatprep.subr.mxu0 %v3887
    %4002 = vmatpush1.msra.mxu0 %v3886
    %4003 = vmatprep.subr.mxu0 %v3883
    %4004 = vmatpush1.msra.mxu0 %v3882
    %4005 = vmatprep.subr.mxu0 %v3879
    %4006 = vmatpush1.msra.mxu0 %v3878
    %4007 = vmatprep.subr.mxu0 %v3875
    %4008 = vmatpush1.msra.mxu0 %v3874
    %4009 = vmatprep.subr.mxu0 %v3871
    %4010 = vmatpush1.msra.mxu0 %v3870
    %4011 = vmatprep.subr.mxu0 %v3867
    %4012 = vmatpush1.msra.mxu0 %v3866
    %4013 = vmatprep.subr.mxu0 %v3863
    %4014 = vmatpush1.msra.mxu0 %v3862
    %4015 = vmatprep.subr.mxu0 %v3859
    %4016 = vmatpush1.msra.mxu0 %v3858
    %4017 = vmatprep.subr.mxu0 %v3855
    %4018 = vmatpush1.msra.mxu0 %v3854
    %4019 = vmatprep.subr.mxu0 0.0
    %4020 = vmatpush2.msra.mxu0 0.0
    %4021 = vmatprep.subr.mxu0 0.0
    %4022 = vmatpush2.msra.mxu0 0.0
    %4023 = vmatprep.subr.mxu0 0.0
    %4024 = vmatpush2.msra.mxu0 0.0
    %4025 = vmatprep.subr.mxu0 0.0
    %4026 = vmatpush2.msra.mxu0 0.0
    %4027 = vmatprep.subr.mxu0 0.0
    %4028 = vmatpush2.msra.mxu0 0.0
    %4029 = vmatprep.subr.mxu0 0.0
    %4030 = vmatpush2.msra.mxu0 0.0
    %4031 = vmatprep.subr.mxu0 0.0
    %4032 = vmatpush2.msra.mxu0 0.0
    %4033 = vmatprep.subr.mxu0 0.0
    %4034 = vmatpush2.msra.mxu0 0.0
    %4035 = vmatprep.subr.mxu0 0.0
    %4036 = vmatpush2.msra.mxu0 0.0
    %4037 = vmatprep.subr.mxu0 0.0
    %4038 = vmatpush2.msra.mxu0 0.0
    %4039 = vmatprep.subr.mxu0 0.0
    %4040 = vmatpush2.msra.mxu0 0.0
    %4041 = vmatprep.subr.mxu0 0.0
    %4042 = vmatpush2.msra.mxu0 0.0
    %4043 = vmatprep.subr.mxu0 0.0
    %4044 = vmatpush2.msra.mxu0 0.0
    %4045 = vmatprep.subr.mxu0 0.0
    %4046 = vmatpush2.msra.mxu0 0.0
    %4047 = vmatprep.subr.mxu0 0.0
    %4048 = vmatpush2.msra.mxu0 0.0
    %4049 = vmatprep.subr.mxu0 0.0
    %4050 = vmatpush2.msra.mxu0 0.0
    %4051 = vmatprep.mubr.f32.mxu0 0.0
    %4052 = vmatmul.mubr.f32.gmra.mxu0 %v3607
    %v4053 = vpop.f32.mrf.mxu0
    %v4054 = vadd.f32 0.0, %v4053
    %v4055 = vpop.f32.mrf.mxu0
    %v4056 = vadd.f32 0.0, %v4055
    %4057 = vdwg.mxu0
    %v4058 = vadd.f32 %v3848, %v3983
    %v4059 = vadd.f32 %v3849, %v3985
    %v4060 = vadd.f32 %v3850, %v4054
    %v4061 = vadd.f32 %v3851, %v4056
    %v4062 = vxor.u32 %v4058, 2147483648
    %v4063 = vmul.f32 %v4062, 1.442695
    %v4064 = vpow.pop %v4063
    %v4065 = vadd.f32 %v4064, 1.0
    %v4066 = vrcp.pop %v4065
    %v4067 = vmul.f32 1.0, %v4066
    %v4068 = vxor.u32 %v4059, 2147483648
    %v4069 = vmul.f32 %v4068, 1.442695
    %v4070 = vpow.pop %v4069
    %v4071 = vadd.f32 %v4070, 1.0
    %v4072 = vrcp.pop %v4071
    %v4073 = vmul.f32 1.0, %v4072
    %v4074 = vtanh.pop %v4060
    %v4075 = vxor.u32 %v4061, 2147483648
    %v4076 = vmul.f32 %v4075, 1.442695
    %v4077 = vpow.pop %v4076
    %v4078 = vadd.f32 %v4077, 1.0
    %v4079 = vrcp.pop %v4078
    %v4080 = vmul.f32 1.0, %v4079
    %v4081 = vmul.f32 %v4073, %v3605
    %v4082 = vmul.f32 %v4067, %v4074
    %v4083 = vadd.f32 %v4081, %v4082
    %v4084 = vtanh.pop %v4083
    %v4085 = vmul.f32 %v4080, %v4084
    %4086 = vst [vmem:[#allocation4 + $0x60] sm:$0xff] %v3847
    %4087 = vst [vmem:[#allocation4 + $0x18] sm:$0xff] %v4085
    %v4088 = vld [vmem:[#allocation2 + $0xe0] sm:$0xff]
    %v4089 = vld [vmem:[#allocation2 + $0xe8] sm:$0xff]
    %v4090 = vld [vmem:[#allocation2 + $0xf0] sm:$0xff]
    %v4091 = vld [vmem:[#allocation2 + $0xf8] sm:$0xff]
    %v4092 = vld [vmem:[%s3] sm:$0xff]
    %v4093 = vld [vmem:[%s3 + $0x8] sm:$0xff]
    %v4094 = vld [vmem:[%s3 + $0x10] sm:$0xff]
    %v4095 = vld [vmem:[%s3 + $0x18] sm:$0xff]
    %v4096 = vld [vmem:[%s3 + $0x20] sm:$0xff]
    %v4097 = vld [vmem:[%s3 + $0x28] sm:$0xff]
    %v4098 = vld [vmem:[%s3 + $0x30] sm:$0xff]
    %v4099 = vld [vmem:[%s3 + $0x38] sm:$0xff]
    %v4100 = vld [vmem:[%s3 + $0x40] sm:$0xff]
    %v4101 = vld [vmem:[%s3 + $0x48] sm:$0xff]
    %v4102 = vld [vmem:[%s3 + $0x50] sm:$0xff]
    %v4103 = vld [vmem:[%s3 + $0x58] sm:$0xff]
    %v4104 = vld [vmem:[%s3 + $0x60] sm:$0xff]
    %v4105 = vld [vmem:[%s3 + $0x68] sm:$0xff]
    %v4106 = vld [vmem:[%s3 + $0x70] sm:$0xff]
    %v4107 = vld [vmem:[%s3 + $0x78] sm:$0xff]
    %v4108 = vld [vmem:[%s3 + $0x80] sm:$0xff]
    %v4109 = vld [vmem:[%s3 + $0x88] sm:$0xff]
    %v4110 = vld [vmem:[%s3 + $0x90] sm:$0xff]
    %v4111 = vld [vmem:[%s3 + $0x98] sm:$0xff]
    %v4112 = vld [vmem:[%s3 + $0xa0] sm:$0xff]
    %v4113 = vld [vmem:[%s3 + $0xa8] sm:$0xff]
    %v4114 = vld [vmem:[%s3 + $0xb0] sm:$0xff]
    %v4115 = vld [vmem:[%s3 + $0xb8] sm:$0xff]
    %v4116 = vld [vmem:[%s3 + $0xc0] sm:$0xff]
    %v4117 = vld [vmem:[%s3 + $0xc8] sm:$0xff]
    %v4118 = vld [vmem:[%s3 + $0xd0] sm:$0xff]
    %v4119 = vld [vmem:[%s3 + $0xd8] sm:$0xff]
    %v4120 = vld [vmem:[%s3 + $0xe0] sm:$0xff]
    %v4121 = vld [vmem:[%s3 + $0xe8] sm:$0xff]
    %v4122 = vld [vmem:[%s3 + $0xf0] sm:$0xff]
    %v4123 = vld [vmem:[%s3 + $0xf8] sm:$0xff]
    %v4124 = vld [vmem:[%s3 + $0x100] sm:$0xff]
    %v4125 = vld [vmem:[%s3 + $0x108] sm:$0xff]
    %v4126 = vld [vmem:[%s3 + $0x110] sm:$0xff]
    %v4127 = vld [vmem:[%s3 + $0x118] sm:$0xff]
    %v4128 = vld [vmem:[%s3 + $0x120] sm:$0xff]
    %v4129 = vld [vmem:[%s3 + $0x128] sm:$0xff]
    %v4130 = vld [vmem:[%s3 + $0x130] sm:$0xff]
    %v4131 = vld [vmem:[%s3 + $0x138] sm:$0xff]
    %v4132 = vld [vmem:[%s3 + $0x140] sm:$0xff]
    %v4133 = vld [vmem:[%s3 + $0x148] sm:$0xff]
    %v4134 = vld [vmem:[%s3 + $0x150] sm:$0xff]
    %v4135 = vld [vmem:[%s3 + $0x158] sm:$0xff]
    %v4136 = vld [vmem:[%s3 + $0x160] sm:$0xff]
    %v4137 = vld [vmem:[%s3 + $0x168] sm:$0xff]
    %v4138 = vld [vmem:[%s3 + $0x170] sm:$0xff]
    %v4139 = vld [vmem:[%s3 + $0x178] sm:$0xff]
    %v4140 = vld [vmem:[%s3 + $0x180] sm:$0xff]
    %v4141 = vld [vmem:[%s3 + $0x188] sm:$0xff]
    %v4142 = vld [vmem:[%s3 + $0x190] sm:$0xff]
    %v4143 = vld [vmem:[%s3 + $0x198] sm:$0xff]
    %v4144 = vld [vmem:[%s3 + $0x1a0] sm:$0xff]
    %v4145 = vld [vmem:[%s3 + $0x1a8] sm:$0xff]
    %v4146 = vld [vmem:[%s3 + $0x1b0] sm:$0xff]
    %v4147 = vld [vmem:[%s3 + $0x1b8] sm:$0xff]
    %v4148 = vld [vmem:[%s3 + $0x1c0] sm:$0xff]
    %v4149 = vld [vmem:[%s3 + $0x1c8] sm:$0xff]
    %v4150 = vld [vmem:[%s3 + $0x1d0] sm:$0xff]
    %v4151 = vld [vmem:[%s3 + $0x1d8] sm:$0xff]
    %v4152 = vld [vmem:[%s3 + $0x1e0] sm:$0xff]
    %v4153 = vld [vmem:[%s3 + $0x1e8] sm:$0xff]
    %v4154 = vld [vmem:[%s3 + $0x1f0] sm:$0xff]
    %v4155 = vld [vmem:[%s3 + $0x1f8] sm:$0xff]
    %4156 = vmatprep.subr.mxu0 %v4153
    %4157 = vmatpush1.msra.mxu0 %v4152
    %4158 = vmatprep.subr.mxu0 %v4149
    %4159 = vmatpush1.msra.mxu0 %v4148
    %4160 = vmatprep.subr.mxu0 %v4145
    %4161 = vmatpush1.msra.mxu0 %v4144
    %4162 = vmatprep.subr.mxu0 %v4141
    %4163 = vmatpush1.msra.mxu0 %v4140
    %4164 = vmatprep.subr.mxu0 %v4137
    %4165 = vmatpush1.msra.mxu0 %v4136
    %4166 = vmatprep.subr.mxu0 %v4133
    %4167 = vmatpush1.msra.mxu0 %v4132
    %4168 = vmatprep.subr.mxu0 %v4129
    %4169 = vmatpush1.msra.mxu0 %v4128
    %4170 = vmatprep.subr.mxu0 %v4125
    %4171 = vmatpush1.msra.mxu0 %v4124
    %4172 = vmatprep.subr.mxu0 %v4121
    %4173 = vmatpush1.msra.mxu0 %v4120
    %4174 = vmatprep.subr.mxu0 %v4117
    %4175 = vmatpush1.msra.mxu0 %v4116
    %4176 = vmatprep.subr.mxu0 %v4113
    %4177 = vmatpush1.msra.mxu0 %v4112
    %4178 = vmatprep.subr.mxu0 %v4109
    %4179 = vmatpush1.msra.mxu0 %v4108
    %4180 = vmatprep.subr.mxu0 %v4105
    %4181 = vmatpush1.msra.mxu0 %v4104
    %4182 = vmatprep.subr.mxu0 %v4101
    %4183 = vmatpush1.msra.mxu0 %v4100
    %4184 = vmatprep.subr.mxu0 %v4097
    %4185 = vmatpush1.msra.mxu0 %v4096
    %4186 = vmatprep.subr.mxu0 %v4093
    %4187 = vmatpush1.msra.mxu0 %v4092
    %4188 = vmatprep.subr.mxu0 0.0
    %4189 = vmatpush2.msra.mxu0 0.0
    %4190 = vmatprep.subr.mxu0 0.0
    %4191 = vmatpush2.msra.mxu0 0.0
    %4192 = vmatprep.subr.mxu0 0.0
    %4193 = vmatpush2.msra.mxu0 0.0
    %4194 = vmatprep.subr.mxu0 0.0
    %4195 = vmatpush2.msra.mxu0 0.0
    %4196 = vmatprep.subr.mxu0 0.0
    %4197 = vmatpush2.msra.mxu0 0.0
    %4198 = vmatprep.subr.mxu0 0.0
    %4199 = vmatpush2.msra.mxu0 0.0
    %4200 = vmatprep.subr.mxu0 0.0
    %4201 = vmatpush2.msra.mxu0 0.0
    %4202 = vmatprep.subr.mxu0 0.0
    %4203 = vmatpush2.msra.mxu0 0.0
    %4204 = vmatprep.subr.mxu0 0.0
    %4205 = vmatpush2.msra.mxu0 0.0
    %4206 = vmatprep.subr.mxu0 0.0
    %4207 = vmatpush2.msra.mxu0 0.0
    %4208 = vmatprep.subr.mxu0 0.0
    %4209 = vmatpush2.msra.mxu0 0.0
    %4210 = vmatprep.subr.mxu0 0.0
    %4211 = vmatpush2.msra.mxu0 0.0
    %4212 = vmatprep.subr.mxu0 0.0
    %4213 = vmatpush2.msra.mxu0 0.0
    %4214 = vmatprep.subr.mxu0 0.0
    %4215 = vmatpush2.msra.mxu0 0.0
    %4216 = vmatprep.subr.mxu0 0.0
    %4217 = vmatpush2.msra.mxu0 0.0
    %4218 = vmatprep.subr.mxu0 0.0
    %4219 = vmatpush2.msra.mxu0 0.0
    %4220 = vmatprep.mubr.f32.mxu0 0.0
    %4221 = vmatmul.mubr.f32.gmra.mxu0 %v3847
    %v4222 = vpop.f32.mrf.mxu0
    %v4223 = vadd.f32 0.0, %v4222
    %v4224 = vpop.f32.mrf.mxu0
    %v4225 = vadd.f32 0.0, %v4224
    %4226 = vdwg.mxu0
    %4227 = vmatprep.subr.mxu0 %v4155
    %4228 = vmatpush1.msra.mxu0 %v4154
    %4229 = vmatprep.subr.mxu0 %v4151
    %4230 = vmatpush1.msra.mxu0 %v4150
    %4231 = vmatprep.subr.mxu0 %v4147
    %4232 = vmatpush1.msra.mxu0 %v4146
    %4233 = vmatprep.subr.mxu0 %v4143
    %4234 = vmatpush1.msra.mxu0 %v4142
    %4235 = vmatprep.subr.mxu0 %v4139
    %4236 = vmatpush1.msra.mxu0 %v4138
    %4237 = vmatprep.subr.mxu0 %v4135
    %4238 = vmatpush1.msra.mxu0 %v4134
    %4239 = vmatprep.subr.mxu0 %v4131
    %4240 = vmatpush1.msra.mxu0 %v4130
    %4241 = vmatprep.subr.mxu0 %v4127
    %4242 = vmatpush1.msra.mxu0 %v4126
    %4243 = vmatprep.subr.mxu0 %v4123
    %4244 = vmatpush1.msra.mxu0 %v4122
    %4245 = vmatprep.subr.mxu0 %v4119
    %4246 = vmatpush1.msra.mxu0 %v4118
    %4247 = vmatprep.subr.mxu0 %v4115
    %4248 = vmatpush1.msra.mxu0 %v4114
    %4249 = vmatprep.subr.mxu0 %v4111
    %4250 = vmatpush1.msra.mxu0 %v4110
    %4251 = vmatprep.subr.mxu0 %v4107
    %4252 = vmatpush1.msra.mxu0 %v4106
    %4253 = vmatprep.subr.mxu0 %v4103
    %4254 = vmatpush1.msra.mxu0 %v4102
    %4255 = vmatprep.subr.mxu0 %v4099
    %4256 = vmatpush1.msra.mxu0 %v4098
    %4257 = vmatprep.subr.mxu0 %v4095
    %4258 = vmatpush1.msra.mxu0 %v4094
    %4259 = vmatprep.subr.mxu0 0.0
    %4260 = vmatpush2.msra.mxu0 0.0
    %4261 = vmatprep.subr.mxu0 0.0
    %4262 = vmatpush2.msra.mxu0 0.0
    %4263 = vmatprep.subr.mxu0 0.0
    %4264 = vmatpush2.msra.mxu0 0.0
    %4265 = vmatprep.subr.mxu0 0.0
    %4266 = vmatpush2.msra.mxu0 0.0
    %4267 = vmatprep.subr.mxu0 0.0
    %4268 = vmatpush2.msra.mxu0 0.0
    %4269 = vmatprep.subr.mxu0 0.0
    %4270 = vmatpush2.msra.mxu0 0.0
    %4271 = vmatprep.subr.mxu0 0.0
    %4272 = vmatpush2.msra.mxu0 0.0
    %4273 = vmatprep.subr.mxu0 0.0
    %4274 = vmatpush2.msra.mxu0 0.0
    %4275 = vmatprep.subr.mxu0 0.0
    %4276 = vmatpush2.msra.mxu0 0.0
    %4277 = vmatprep.subr.mxu0 0.0
    %4278 = vmatpush2.msra.mxu0 0.0
    %4279 = vmatprep.subr.mxu0 0.0
    %4280 = vmatpush2.msra.mxu0 0.0
    %4281 = vmatprep.subr.mxu0 0.0
    %4282 = vmatpush2.msra.mxu0 0.0
    %4283 = vmatprep.subr.mxu0 0.0
    %4284 = vmatpush2.msra.mxu0 0.0
    %4285 = vmatprep.subr.mxu0 0.0
    %4286 = vmatpush2.msra.mxu0 0.0
    %4287 = vmatprep.subr.mxu0 0.0
    %4288 = vmatpush2.msra.mxu0 0.0
    %4289 = vmatprep.subr.mxu0 0.0
    %4290 = vmatpush2.msra.mxu0 0.0
    %4291 = vmatprep.mubr.f32.mxu0 0.0
    %4292 = vmatmul.mubr.f32.gmra.mxu0 %v3847
    %v4293 = vpop.f32.mrf.mxu0
    %v4294 = vadd.f32 0.0, %v4293
    %v4295 = vpop.f32.mrf.mxu0
    %v4296 = vadd.f32 0.0, %v4295
    %4297 = vdwg.mxu0
    %v4298 = vadd.f32 %v4088, %v4223
    %v4299 = vadd.f32 %v4089, %v4225
    %v4300 = vadd.f32 %v4090, %v4294
    %v4301 = vadd.f32 %v4091, %v4296
    %v4302 = vxor.u32 %v4298, 2147483648
    %v4303 = vmul.f32 %v4302, 1.442695
    %v4304 = vpow.pop %v4303
    %v4305 = vadd.f32 %v4304, 1.0
    %v4306 = vrcp.pop %v4305
    %v4307 = vmul.f32 1.0, %v4306
    %v4308 = vxor.u32 %v4299, 2147483648
    %v4309 = vmul.f32 %v4308, 1.442695
    %v4310 = vpow.pop %v4309
    %v4311 = vadd.f32 %v4310, 1.0
    %v4312 = vrcp.pop %v4311
    %v4313 = vmul.f32 1.0, %v4312
    %v4314 = vtanh.pop %v4300
    %v4315 = vxor.u32 %v4301, 2147483648
    %v4316 = vmul.f32 %v4315, 1.442695
    %v4317 = vpow.pop %v4316
    %v4318 = vadd.f32 %v4317, 1.0
    %v4319 = vrcp.pop %v4318
    %v4320 = vmul.f32 1.0, %v4319
    %v4321 = vmul.f32 %v4313, %v3845
    %v4322 = vmul.f32 %v4307, %v4314
    %v4323 = vadd.f32 %v4321, %v4322
    %v4324 = vtanh.pop %v4323
    %v4325 = vmul.f32 %v4320, %v4324
    %v4326 = vld [vmem:[#allocation3] sm:$0xff]
    %v4327 = vld [vmem:[#allocation3 + $0x8] sm:$0xff]
    %v4328 = vld [vmem:[#allocation3 + $0x10] sm:$0xff]
    %v4329 = vld [vmem:[#allocation3 + $0x18] sm:$0xff]
    %v4330 = vld [vmem:[#allocation12] sm:$0xff]
    %v4331 = vld [vmem:[#allocation12 + $0x8] sm:$0xff]
    %v4332 = vld [vmem:[#allocation12 + $0x10] sm:$0xff]
    %v4333 = vld [vmem:[#allocation12 + $0x18] sm:$0xff]
    %v4334 = vld [vmem:[#allocation12 + $0x20] sm:$0xff]
    %v4335 = vld [vmem:[#allocation12 + $0x28] sm:$0xff]
    %v4336 = vld [vmem:[#allocation12 + $0x30] sm:$0xff]
    %v4337 = vld [vmem:[#allocation12 + $0x38] sm:$0xff]
    %v4338 = vld [vmem:[#allocation12 + $0x40] sm:$0xff]
    %v4339 = vld [vmem:[#allocation12 + $0x48] sm:$0xff]
    %v4340 = vld [vmem:[#allocation12 + $0x50] sm:$0xff]
    %v4341 = vld [vmem:[#allocation12 + $0x58] sm:$0xff]
    %v4342 = vld [vmem:[#allocation12 + $0x60] sm:$0xff]
    %v4343 = vld [vmem:[#allocation12 + $0x68] sm:$0xff]
    %v4344 = vld [vmem:[#allocation12 + $0x70] sm:$0xff]
    %v4345 = vld [vmem:[#allocation12 + $0x78] sm:$0xff]
    %v4346 = vld [vmem:[#allocation12 + $0x80] sm:$0xff]
    %v4347 = vld [vmem:[#allocation12 + $0x88] sm:$0xff]
    %v4348 = vld [vmem:[#allocation12 + $0x90] sm:$0xff]
    %v4349 = vld [vmem:[#allocation12 + $0x98] sm:$0xff]
    %v4350 = vld [vmem:[#allocation12 + $0xa0] sm:$0xff]
    %v4351 = vld [vmem:[#allocation12 + $0xa8] sm:$0xff]
    %v4352 = vld [vmem:[#allocation12 + $0xb0] sm:$0xff]
    %v4353 = vld [vmem:[#allocation12 + $0xb8] sm:$0xff]
    %v4354 = vld [vmem:[#allocation12 + $0xc0] sm:$0xff]
    %v4355 = vld [vmem:[#allocation12 + $0xc8] sm:$0xff]
    %v4356 = vld [vmem:[#allocation12 + $0xd0] sm:$0xff]
    %v4357 = vld [vmem:[#allocation12 + $0xd8] sm:$0xff]
    %v4358 = vld [vmem:[#allocation12 + $0xe0] sm:$0xff]
    %v4359 = vld [vmem:[#allocation12 + $0xe8] sm:$0xff]
    %v4360 = vld [vmem:[#allocation12 + $0xf0] sm:$0xff]
    %v4361 = vld [vmem:[#allocation12 + $0xf8] sm:$0xff]
    %v4362 = vld [vmem:[#allocation12 + $0x100] sm:$0xff]
    %v4363 = vld [vmem:[#allocation12 + $0x108] sm:$0xff]
    %v4364 = vld [vmem:[#allocation12 + $0x110] sm:$0xff]
    %v4365 = vld [vmem:[#allocation12 + $0x118] sm:$0xff]
    %v4366 = vld [vmem:[#allocation12 + $0x120] sm:$0xff]
    %v4367 = vld [vmem:[#allocation12 + $0x128] sm:$0xff]
    %v4368 = vld [vmem:[#allocation12 + $0x130] sm:$0xff]
    %v4369 = vld [vmem:[#allocation12 + $0x138] sm:$0xff]
    %v4370 = vld [vmem:[#allocation12 + $0x140] sm:$0xff]
    %v4371 = vld [vmem:[#allocation12 + $0x148] sm:$0xff]
    %v4372 = vld [vmem:[#allocation12 + $0x150] sm:$0xff]
    %v4373 = vld [vmem:[#allocation12 + $0x158] sm:$0xff]
    %v4374 = vld [vmem:[#allocation12 + $0x160] sm:$0xff]
    %v4375 = vld [vmem:[#allocation12 + $0x168] sm:$0xff]
    %v4376 = vld [vmem:[#allocation12 + $0x170] sm:$0xff]
    %v4377 = vld [vmem:[#allocation12 + $0x178] sm:$0xff]
    %v4378 = vld [vmem:[#allocation12 + $0x180] sm:$0xff]
    %v4379 = vld [vmem:[#allocation12 + $0x188] sm:$0xff]
    %v4380 = vld [vmem:[#allocation12 + $0x190] sm:$0xff]
    %v4381 = vld [vmem:[#allocation12 + $0x198] sm:$0xff]
    %v4382 = vld [vmem:[#allocation12 + $0x1a0] sm:$0xff]
    %v4383 = vld [vmem:[#allocation12 + $0x1a8] sm:$0xff]
    %v4384 = vld [vmem:[#allocation12 + $0x1b0] sm:$0xff]
    %v4385 = vld [vmem:[#allocation12 + $0x1b8] sm:$0xff]
    %v4386 = vld [vmem:[#allocation12 + $0x1c0] sm:$0xff]
    %v4387 = vld [vmem:[#allocation12 + $0x1c8] sm:$0xff]
    %v4388 = vld [vmem:[#allocation12 + $0x1d0] sm:$0xff]
    %v4389 = vld [vmem:[#allocation12 + $0x1d8] sm:$0xff]
    %v4390 = vld [vmem:[#allocation12 + $0x1e0] sm:$0xff]
    %v4391 = vld [vmem:[#allocation12 + $0x1e8] sm:$0xff]
    %v4392 = vld [vmem:[#allocation12 + $0x1f0] sm:$0xff]
    %v4393 = vld [vmem:[#allocation12 + $0x1f8] sm:$0xff]
    %4394 = vmatprep.subr.mxu0 %v4391
    %4395 = vmatpush1.msra.mxu0 %v4390
    %4396 = vmatprep.subr.mxu0 %v4387
    %4397 = vmatpush1.msra.mxu0 %v4386
    %4398 = vmatprep.subr.mxu0 %v4383
    %4399 = vmatpush1.msra.mxu0 %v4382
    %4400 = vmatprep.subr.mxu0 %v4379
    %4401 = vmatpush1.msra.mxu0 %v4378
    %4402 = vmatprep.subr.mxu0 %v4375
    %4403 = vmatpush1.msra.mxu0 %v4374
    %4404 = vmatprep.subr.mxu0 %v4371
    %4405 = vmatpush1.msra.mxu0 %v4370
    %4406 = vmatprep.subr.mxu0 %v4367
    %4407 = vmatpush1.msra.mxu0 %v4366
    %4408 = vmatprep.subr.mxu0 %v4363
    %4409 = vmatpush1.msra.mxu0 %v4362
    %4410 = vmatprep.subr.mxu0 %v4359
    %4411 = vmatpush1.msra.mxu0 %v4358
    %4412 = vmatprep.subr.mxu0 %v4355
    %4413 = vmatpush1.msra.mxu0 %v4354
    %4414 = vmatprep.subr.mxu0 %v4351
    %4415 = vmatpush1.msra.mxu0 %v4350
    %4416 = vmatprep.subr.mxu0 %v4347
    %4417 = vmatpush1.msra.mxu0 %v4346
    %4418 = vmatprep.subr.mxu0 %v4343
    %4419 = vmatpush1.msra.mxu0 %v4342
    %4420 = vmatprep.subr.mxu0 %v4339
    %4421 = vmatpush1.msra.mxu0 %v4338
    %4422 = vmatprep.subr.mxu0 %v4335
    %4423 = vmatpush1.msra.mxu0 %v4334
    %4424 = vmatprep.subr.mxu0 %v4331
    %4425 = vmatpush1.msra.mxu0 %v4330
    %4426 = vmatprep.subr.mxu0 0.0
    %4427 = vmatpush2.msra.mxu0 0.0
    %4428 = vmatprep.subr.mxu0 0.0
    %4429 = vmatpush2.msra.mxu0 0.0
    %4430 = vmatprep.subr.mxu0 0.0
    %4431 = vmatpush2.msra.mxu0 0.0
    %4432 = vmatprep.subr.mxu0 0.0
    %4433 = vmatpush2.msra.mxu0 0.0
    %4434 = vmatprep.subr.mxu0 0.0
    %4435 = vmatpush2.msra.mxu0 0.0
    %4436 = vmatprep.subr.mxu0 0.0
    %4437 = vmatpush2.msra.mxu0 0.0
    %4438 = vmatprep.subr.mxu0 0.0
    %4439 = vmatpush2.msra.mxu0 0.0
    %4440 = vmatprep.subr.mxu0 0.0
    %4441 = vmatpush2.msra.mxu0 0.0
    %4442 = vmatprep.subr.mxu0 0.0
    %4443 = vmatpush2.msra.mxu0 0.0
    %4444 = vmatprep.subr.mxu0 0.0
    %4445 = vmatpush2.msra.mxu0 0.0
    %4446 = vmatprep.subr.mxu0 0.0
    %4447 = vmatpush2.msra.mxu0 0.0
    %4448 = vmatprep.subr.mxu0 0.0
    %4449 = vmatpush2.msra.mxu0 0.0
    %4450 = vmatprep.subr.mxu0 0.0
    %4451 = vmatpush2.msra.mxu0 0.0
    %4452 = vmatprep.subr.mxu0 0.0
    %4453 = vmatpush2.msra.mxu0 0.0
    %4454 = vmatprep.subr.mxu0 0.0
    %4455 = vmatpush2.msra.mxu0 0.0
    %4456 = vmatprep.subr.mxu0 0.0
    %4457 = vmatpush2.msra.mxu0 0.0
    %4458 = vmatprep.mubr.f32.mxu0 0.0
    %4459 = vmatmul.mubr.f32.gmra.mxu0 %v4085
    %v4460 = vpop.f32.mrf.mxu0
    %v4461 = vadd.f32 0.0, %v4460
    %v4462 = vpop.f32.mrf.mxu0
    %v4463 = vadd.f32 0.0, %v4462
    %4464 = vdwg.mxu0
    %4465 = vmatprep.subr.mxu0 %v4393
    %4466 = vmatpush1.msra.mxu0 %v4392
    %4467 = vmatprep.subr.mxu0 %v4389
    %4468 = vmatpush1.msra.mxu0 %v4388
    %4469 = vmatprep.subr.mxu0 %v4385
    %4470 = vmatpush1.msra.mxu0 %v4384
    %4471 = vmatprep.subr.mxu0 %v4381
    %4472 = vmatpush1.msra.mxu0 %v4380
    %4473 = vmatprep.subr.mxu0 %v4377
    %4474 = vmatpush1.msra.mxu0 %v4376
    %4475 = vmatprep.subr.mxu0 %v4373
    %4476 = vmatpush1.msra.mxu0 %v4372
    %4477 = vmatprep.subr.mxu0 %v4369
    %4478 = vmatpush1.msra.mxu0 %v4368
    %4479 = vmatprep.subr.mxu0 %v4365
    %4480 = vmatpush1.msra.mxu0 %v4364
    %4481 = vmatprep.subr.mxu0 %v4361
    %4482 = vmatpush1.msra.mxu0 %v4360
    %4483 = vmatprep.subr.mxu0 %v4357
    %4484 = vmatpush1.msra.mxu0 %v4356
    %4485 = vmatprep.subr.mxu0 %v4353
    %4486 = vmatpush1.msra.mxu0 %v4352
    %4487 = vmatprep.subr.mxu0 %v4349
    %4488 = vmatpush1.msra.mxu0 %v4348
    %4489 = vmatprep.subr.mxu0 %v4345
    %4490 = vmatpush1.msra.mxu0 %v4344
    %4491 = vmatprep.subr.mxu0 %v4341
    %4492 = vmatpush1.msra.mxu0 %v4340
    %4493 = vmatprep.subr.mxu0 %v4337
    %4494 = vmatpush1.msra.mxu0 %v4336
    %4495 = vmatprep.subr.mxu0 %v4333
    %4496 = vmatpush1.msra.mxu0 %v4332
    %4497 = vmatprep.subr.mxu0 0.0
    %4498 = vmatpush2.msra.mxu0 0.0
    %4499 = vmatprep.subr.mxu0 0.0
    %4500 = vmatpush2.msra.mxu0 0.0
    %4501 = vmatprep.subr.mxu0 0.0
    %4502 = vmatpush2.msra.mxu0 0.0
    %4503 = vmatprep.subr.mxu0 0.0
    %4504 = vmatpush2.msra.mxu0 0.0
    %4505 = vmatprep.subr.mxu0 0.0
    %4506 = vmatpush2.msra.mxu0 0.0
    %4507 = vmatprep.subr.mxu0 0.0
    %4508 = vmatpush2.msra.mxu0 0.0
    %4509 = vmatprep.subr.mxu0 0.0
    %4510 = vmatpush2.msra.mxu0 0.0
    %4511 = vmatprep.subr.mxu0 0.0
    %4512 = vmatpush2.msra.mxu0 0.0
    %4513 = vmatprep.subr.mxu0 0.0
    %4514 = vmatpush2.msra.mxu0 0.0
    %4515 = vmatprep.subr.mxu0 0.0
    %4516 = vmatpush2.msra.mxu0 0.0
    %4517 = vmatprep.subr.mxu0 0.0
    %4518 = vmatpush2.msra.mxu0 0.0
    %4519 = vmatprep.subr.mxu0 0.0
    %4520 = vmatpush2.msra.mxu0 0.0
    %4521 = vmatprep.subr.mxu0 0.0
    %4522 = vmatpush2.msra.mxu0 0.0
    %4523 = vmatprep.subr.mxu0 0.0
    %4524 = vmatpush2.msra.mxu0 0.0
    %4525 = vmatprep.subr.mxu0 0.0
    %4526 = vmatpush2.msra.mxu0 0.0
    %4527 = vmatprep.subr.mxu0 0.0
    %4528 = vmatpush2.msra.mxu0 0.0
    %4529 = vmatprep.mubr.f32.mxu0 0.0
    %4530 = vmatmul.mubr.f32.gmra.mxu0 %v4085
    %v4531 = vpop.f32.mrf.mxu0
    %v4532 = vadd.f32 0.0, %v4531
    %v4533 = vpop.f32.mrf.mxu0
    %v4534 = vadd.f32 0.0, %v4533
    %4535 = vdwg.mxu0
    %v4536 = vadd.f32 %v4326, %v4461
    %v4537 = vadd.f32 %v4327, %v4463
    %v4538 = vadd.f32 %v4328, %v4532
    %v4539 = vadd.f32 %v4329, %v4534
    %v4540 = vxor.u32 %v4536, 2147483648
    %v4541 = vmul.f32 %v4540, 1.442695
    %v4542 = vpow.pop %v4541
    %v4543 = vadd.f32 %v4542, 1.0
    %v4544 = vrcp.pop %v4543
    %v4545 = vmul.f32 1.0, %v4544
    %v4546 = vxor.u32 %v4537, 2147483648
    %v4547 = vmul.f32 %v4546, 1.442695
    %v4548 = vpow.pop %v4547
    %v4549 = vadd.f32 %v4548, 1.0
    %v4550 = vrcp.pop %v4549
    %v4551 = vmul.f32 1.0, %v4550
    %v4552 = vtanh.pop %v4538
    %v4553 = vxor.u32 %v4539, 2147483648
    %v4554 = vmul.f32 %v4553, 1.442695
    %v4555 = vpow.pop %v4554
    %v4556 = vadd.f32 %v4555, 1.0
    %v4557 = vrcp.pop %v4556
    %v4558 = vmul.f32 1.0, %v4557
    %v4559 = vmul.f32 %v4551, %v4083
    %v4560 = vmul.f32 %v4545, %v4552
    %v4561 = vadd.f32 %v4559, %v4560
    %v4562 = vtanh.pop %v4561
    %v4563 = vmul.f32 %v4558, %v4562
    %4564 = vst [vmem:[#allocation4 + $0x70] sm:$0xff] %v4325
    %4565 = vst [vmem:[#allocation4 + $0x8] sm:$0xff] %v4563
    %s4566 = smul.u32 8, 32
    %s4567 = smul.u32 %s4566, 4
    %s4568 = sshll.u32 %s4567, 4
    %4569 = dma.done [#allocation9], %s4568
    %s4570 = sshll.u32 %s4567, 4
    %4571 = dma.done %s81, %s4570
    %s4572 = smul.u32 8, 16
    %s4573 = smul.u32 %s4572, 4
    %s4574 = sshll.u32 %s4573, 4
    %4575 = dma.done %s93, %s4574
    %s4576 = sshll.u32 %s4573, 4
    %4577 = dma.done %s105, %s4576
    %v4578 = vld [vmem:[#allocation4] sm:$0xff]
    %v4579 = vld [vmem:[#allocation4 + $0x8] sm:$0xff]
    %v4580 = vld [vmem:[#allocation4 + $0x10] sm:$0xff]
    %v4581 = vld [vmem:[#allocation4 + $0x18] sm:$0xff]
    %v4582 = vld [vmem:[#allocation4 + $0x20] sm:$0xff]
    %v4583 = vld [vmem:[#allocation4 + $0x28] sm:$0xff]
    %v4584 = vld [vmem:[#allocation4 + $0x30] sm:$0xff]
    %v4585 = vld [vmem:[#allocation4 + $0x38] sm:$0xff]
    %v4586 = vld [vmem:[#allocation4 + $0x40] sm:$0xff]
    %v4587 = vld [vmem:[#allocation4 + $0x48] sm:$0xff]
    %v4588 = vld [vmem:[#allocation4 + $0x50] sm:$0xff]
    %v4589 = vld [vmem:[#allocation4 + $0x58] sm:$0xff]
    %v4590 = vld [vmem:[#allocation4 + $0x60] sm:$0xff]
    %v4591 = vld [vmem:[#allocation4 + $0x68] sm:$0xff]
    %v4592 = vld [vmem:[#allocation4 + $0x70] sm:$0xff]
    %v4593 = vld [vmem:[#allocation4 + $0x78] sm:$0xff]
    %v4594 = vld [vmem:[#allocation5] sm:$0xff]
    %v4595 = vld [vmem:[#allocation5 + $0x8] sm:$0xff]
    %v4596 = vld [vmem:[#allocation5 + $0x10] sm:$0xff]
    %v4597 = vld [vmem:[#allocation5 + $0x18] sm:$0xff]
    %v4598 = vld [vmem:[#allocation5 + $0x20] sm:$0xff]
    %v4599 = vld [vmem:[#allocation5 + $0x28] sm:$0xff]
    %v4600 = vld [vmem:[#allocation5 + $0x30] sm:$0xff]
    %v4601 = vld [vmem:[#allocation5 + $0x38] sm:$0xff]
    %v4602 = vld [vmem:[#allocation5 + $0x40] sm:$0xff]
    %v4603 = vld [vmem:[#allocation5 + $0x48] sm:$0xff]
    %v4604 = vld [vmem:[#allocation5 + $0x50] sm:$0xff]
    %v4605 = vld [vmem:[#allocation5 + $0x58] sm:$0xff]
    %v4606 = vld [vmem:[#allocation5 + $0x60] sm:$0xff]
    %v4607 = vld [vmem:[#allocation5 + $0x68] sm:$0xff]
    %v4608 = vld [vmem:[#allocation5 + $0x70] sm:$0xff]
    %v4609 = vld [vmem:[#allocation5 + $0x78] sm:$0xff]
    %v4610 = vld [vmem:[#allocation5 + $0x80] sm:$0xff]
    %v4611 = vld [vmem:[#allocation5 + $0x88] sm:$0xff]
    %v4612 = vld [vmem:[#allocation5 + $0x90] sm:$0xff]
    %v4613 = vld [vmem:[#allocation5 + $0x98] sm:$0xff]
    %v4614 = vld [vmem:[#allocation5 + $0xa0] sm:$0xff]
    %v4615 = vld [vmem:[#allocation5 + $0xa8] sm:$0xff]
    %v4616 = vld [vmem:[#allocation5 + $0xb0] sm:$0xff]
    %v4617 = vld [vmem:[#allocation5 + $0xb8] sm:$0xff]
    %v4618 = vld [vmem:[#allocation5 + $0xc0] sm:$0xff]
    %v4619 = vld [vmem:[#allocation5 + $0xc8] sm:$0xff]
    %v4620 = vld [vmem:[#allocation5 + $0xd0] sm:$0xff]
    %v4621 = vld [vmem:[#allocation5 + $0xd8] sm:$0xff]
    %v4622 = vld [vmem:[#allocation5 + $0xe0] sm:$0xff]
    %v4623 = vld [vmem:[#allocation5 + $0xe8] sm:$0xff]
    %v4624 = vld [vmem:[#allocation5 + $0xf0] sm:$0xff]
    %v4625 = vld [vmem:[#allocation5 + $0xf8] sm:$0xff]
    %v4626 = vld [vmem:[#allocation5 + $0x100] sm:$0xff]
    %v4627 = vld [vmem:[#allocation5 + $0x108] sm:$0xff]
    %v4628 = vld [vmem:[#allocation5 + $0x110] sm:$0xff]
    %v4629 = vld [vmem:[#allocation5 + $0x118] sm:$0xff]
    %v4630 = vld [vmem:[#allocation5 + $0x120] sm:$0xff]
    %v4631 = vld [vmem:[#allocation5 + $0x128] sm:$0xff]
    %v4632 = vld [vmem:[#allocation5 + $0x130] sm:$0xff]
    %v4633 = vld [vmem:[#allocation5 + $0x138] sm:$0xff]
    %v4634 = vld [vmem:[#allocation5 + $0x140] sm:$0xff]
    %v4635 = vld [vmem:[#allocation5 + $0x148] sm:$0xff]
    %v4636 = vld [vmem:[#allocation5 + $0x150] sm:$0xff]
    %v4637 = vld [vmem:[#allocation5 + $0x158] sm:$0xff]
    %v4638 = vld [vmem:[#allocation5 + $0x160] sm:$0xff]
    %v4639 = vld [vmem:[#allocation5 + $0x168] sm:$0xff]
    %v4640 = vld [vmem:[#allocation5 + $0x170] sm:$0xff]
    %v4641 = vld [vmem:[#allocation5 + $0x178] sm:$0xff]
    %v4642 = vld [vmem:[#allocation5 + $0x180] sm:$0xff]
    %v4643 = vld [vmem:[#allocation5 + $0x188] sm:$0xff]
    %v4644 = vld [vmem:[#allocation5 + $0x190] sm:$0xff]
    %v4645 = vld [vmem:[#allocation5 + $0x198] sm:$0xff]
    %v4646 = vld [vmem:[#allocation5 + $0x1a0] sm:$0xff]
    %v4647 = vld [vmem:[#allocation5 + $0x1a8] sm:$0xff]
    %v4648 = vld [vmem:[#allocation5 + $0x1b0] sm:$0xff]
    %v4649 = vld [vmem:[#allocation5 + $0x1b8] sm:$0xff]
    %v4650 = vld [vmem:[#allocation5 + $0x1c0] sm:$0xff]
    %v4651 = vld [vmem:[#allocation5 + $0x1c8] sm:$0xff]
    %v4652 = vld [vmem:[#allocation5 + $0x1d0] sm:$0xff]
    %v4653 = vld [vmem:[#allocation5 + $0x1d8] sm:$0xff]
    %v4654 = vld [vmem:[#allocation5 + $0x1e0] sm:$0xff]
    %v4655 = vld [vmem:[#allocation5 + $0x1e8] sm:$0xff]
    %v4656 = vld [vmem:[#allocation5 + $0x1f0] sm:$0xff]
    %v4657 = vld [vmem:[#allocation5 + $0x1f8] sm:$0xff]
    %v4658 = vld [vmem:[#allocation5 + $0x200] sm:$0xff]
    %v4659 = vld [vmem:[#allocation5 + $0x208] sm:$0xff]
    %v4660 = vld [vmem:[#allocation5 + $0x210] sm:$0xff]
    %v4661 = vld [vmem:[#allocation5 + $0x218] sm:$0xff]
    %v4662 = vld [vmem:[#allocation5 + $0x220] sm:$0xff]
    %v4663 = vld [vmem:[#allocation5 + $0x228] sm:$0xff]
    %v4664 = vld [vmem:[#allocation5 + $0x230] sm:$0xff]
    %v4665 = vld [vmem:[#allocation5 + $0x238] sm:$0xff]
    %v4666 = vld [vmem:[#allocation5 + $0x240] sm:$0xff]
    %v4667 = vld [vmem:[#allocation5 + $0x248] sm:$0xff]
    %v4668 = vld [vmem:[#allocation5 + $0x250] sm:$0xff]
    %v4669 = vld [vmem:[#allocation5 + $0x258] sm:$0xff]
    %v4670 = vld [vmem:[#allocation5 + $0x260] sm:$0xff]
    %v4671 = vld [vmem:[#allocation5 + $0x268] sm:$0xff]
    %v4672 = vld [vmem:[#allocation5 + $0x270] sm:$0xff]
    %v4673 = vld [vmem:[#allocation5 + $0x278] sm:$0xff]
    %v4674 = vld [vmem:[#allocation5 + $0x280] sm:$0xff]
    %v4675 = vld [vmem:[#allocation5 + $0x288] sm:$0xff]
    %v4676 = vld [vmem:[#allocation5 + $0x290] sm:$0xff]
    %v4677 = vld [vmem:[#allocation5 + $0x298] sm:$0xff]
    %v4678 = vld [vmem:[#allocation5 + $0x2a0] sm:$0xff]
    %v4679 = vld [vmem:[#allocation5 + $0x2a8] sm:$0xff]
    %v4680 = vld [vmem:[#allocation5 + $0x2b0] sm:$0xff]
    %v4681 = vld [vmem:[#allocation5 + $0x2b8] sm:$0xff]
    %v4682 = vld [vmem:[#allocation5 + $0x2c0] sm:$0xff]
    %v4683 = vld [vmem:[#allocation5 + $0x2c8] sm:$0xff]
    %v4684 = vld [vmem:[#allocation5 + $0x2d0] sm:$0xff]
    %v4685 = vld [vmem:[#allocation5 + $0x2d8] sm:$0xff]
    %v4686 = vld [vmem:[#allocation5 + $0x2e0] sm:$0xff]
    %v4687 = vld [vmem:[#allocation5 + $0x2e8] sm:$0xff]
    %v4688 = vld [vmem:[#allocation5 + $0x2f0] sm:$0xff]
    %v4689 = vld [vmem:[#allocation5 + $0x2f8] sm:$0xff]
    %v4690 = vld [vmem:[#allocation5 + $0x300] sm:$0xff]
    %v4691 = vld [vmem:[#allocation5 + $0x308] sm:$0xff]
    %v4692 = vld [vmem:[#allocation5 + $0x310] sm:$0xff]
    %v4693 = vld [vmem:[#allocation5 + $0x318] sm:$0xff]
    %v4694 = vld [vmem:[#allocation5 + $0x320] sm:$0xff]
    %v4695 = vld [vmem:[#allocation5 + $0x328] sm:$0xff]
    %v4696 = vld [vmem:[#allocation5 + $0x330] sm:$0xff]
    %v4697 = vld [vmem:[#allocation5 + $0x338] sm:$0xff]
    %v4698 = vld [vmem:[#allocation5 + $0x340] sm:$0xff]
    %v4699 = vld [vmem:[#allocation5 + $0x348] sm:$0xff]
    %v4700 = vld [vmem:[#allocation5 + $0x350] sm:$0xff]
    %v4701 = vld [vmem:[#allocation5 + $0x358] sm:$0xff]
    %v4702 = vld [vmem:[#allocation5 + $0x360] sm:$0xff]
    %v4703 = vld [vmem:[#allocation5 + $0x368] sm:$0xff]
    %v4704 = vld [vmem:[#allocation5 + $0x370] sm:$0xff]
    %v4705 = vld [vmem:[#allocation5 + $0x378] sm:$0xff]
    %v4706 = vld [vmem:[#allocation5 + $0x380] sm:$0xff]
    %v4707 = vld [vmem:[#allocation5 + $0x388] sm:$0xff]
    %v4708 = vld [vmem:[#allocation5 + $0x390] sm:$0xff]
    %v4709 = vld [vmem:[#allocation5 + $0x398] sm:$0xff]
    %v4710 = vld [vmem:[#allocation5 + $0x3a0] sm:$0xff]
    %v4711 = vld [vmem:[#allocation5 + $0x3a8] sm:$0xff]
    %v4712 = vld [vmem:[#allocation5 + $0x3b0] sm:$0xff]
    %v4713 = vld [vmem:[#allocation5 + $0x3b8] sm:$0xff]
    %v4714 = vld [vmem:[#allocation5 + $0x3c0] sm:$0xff]
    %v4715 = vld [vmem:[#allocation5 + $0x3c8] sm:$0xff]
    %v4716 = vld [vmem:[#allocation5 + $0x3d0] sm:$0xff]
    %v4717 = vld [vmem:[#allocation5 + $0x3d8] sm:$0xff]
    %v4718 = vld [vmem:[#allocation5 + $0x3e0] sm:$0xff]
    %v4719 = vld [vmem:[#allocation5 + $0x3e8] sm:$0xff]
    %v4720 = vld [vmem:[#allocation5 + $0x3f0] sm:$0xff]
    %v4721 = vld [vmem:[#allocation5 + $0x3f8] sm:$0xff]
    %v4722 = vld [vmem:[%s11] sm:$0xf]
    %v4724 = vlaneseq
    %v4725 = vshrl.u32 %v4724, 7
    %v4726 = vsub.s32 0, %v4725
    %v4727 = vrot.slane %v4722, %v4726
    %v4728 = vlaneseq
    %v4729 = vshrl.u32 %v4728, 7
    %v4730 = vsub.s32 1, %v4729
    %v4731 = vrot.slane %v4722, %v4730
    %v4732 = vlaneseq
    %v4733 = vshrl.u32 %v4732, 7
    %v4734 = vsub.s32 2, %v4733
    %v4735 = vrot.slane %v4722, %v4734
    %v4736 = vlaneseq
    %v4737 = vshrl.u32 %v4736, 7
    %v4738 = vsub.s32 3, %v4737
    %v4739 = vrot.slane %v4722, %v4738
    %4744 = vmatprep.subr.mxu0 %v4655
    %4745 = vmatpush1.msra.mxu0 %v4654
    %4746 = vmatprep.subr.mxu0 %v4651
    %4747 = vmatpush1.msra.mxu0 %v4650
    %4748 = vmatprep.subr.mxu0 %v4647
    %4749 = vmatpush1.msra.mxu0 %v4646
    %4750 = vmatprep.subr.mxu0 %v4643
    %4751 = vmatpush1.msra.mxu0 %v4642
    %4752 = vmatprep.subr.mxu0 %v4639
    %4753 = vmatpush1.msra.mxu0 %v4638
    %4754 = vmatprep.subr.mxu0 %v4635
    %4755 = vmatpush1.msra.mxu0 %v4634
    %4756 = vmatprep.subr.mxu0 %v4631
    %4757 = vmatpush1.msra.mxu0 %v4630
    %4758 = vmatprep.subr.mxu0 %v4627
    %4759 = vmatpush1.msra.mxu0 %v4626
    %4760 = vmatprep.subr.mxu0 %v4623
    %4761 = vmatpush1.msra.mxu0 %v4622
    %4762 = vmatprep.subr.mxu0 %v4619
    %4763 = vmatpush1.msra.mxu0 %v4618
    %4764 = vmatprep.subr.mxu0 %v4615
    %4765 = vmatpush1.msra.mxu0 %v4614
    %4766 = vmatprep.subr.mxu0 %v4611
    %4767 = vmatpush1.msra.mxu0 %v4610
    %4768 = vmatprep.subr.mxu0 %v4607
    %4769 = vmatpush1.msra.mxu0 %v4606
    %4770 = vmatprep.subr.mxu0 %v4603
    %4771 = vmatpush1.msra.mxu0 %v4602
    %4772 = vmatprep.subr.mxu0 %v4599
    %4773 = vmatpush1.msra.mxu0 %v4598
    %4774 = vmatprep.subr.mxu0 %v4595
    %4775 = vmatpush1.msra.mxu0 %v4594
    %4776 = vmatprep.subr.mxu0 %v4719
    %4777 = vmatpush2.msra.mxu0 %v4718
    %4778 = vmatprep.subr.mxu0 %v4715
    %4779 = vmatpush2.msra.mxu0 %v4714
    %4780 = vmatprep.subr.mxu0 %v4711
    %4781 = vmatpush2.msra.mxu0 %v4710
    %4782 = vmatprep.subr.mxu0 %v4707
    %4783 = vmatpush2.msra.mxu0 %v4706
    %4784 = vmatprep.subr.mxu0 %v4703
    %4785 = vmatpush2.msra.mxu0 %v4702
    %4786 = vmatprep.subr.mxu0 %v4699
    %4787 = vmatpush2.msra.mxu0 %v4698
    %4788 = vmatprep.subr.mxu0 %v4695
    %4789 = vmatpush2.msra.mxu0 %v4694
    %4790 = vmatprep.subr.mxu0 %v4691
    %4791 = vmatpush2.msra.mxu0 %v4690
    %4792 = vmatprep.subr.mxu0 %v4687
    %4793 = vmatpush2.msra.mxu0 %v4686
    %4794 = vmatprep.subr.mxu0 %v4683
    %4795 = vmatpush2.msra.mxu0 %v4682
    %4796 = vmatprep.subr.mxu0 %v4679
    %4797 = vmatpush2.msra.mxu0 %v4678
    %4798 = vmatprep.subr.mxu0 %v4675
    %4799 = vmatpush2.msra.mxu0 %v4674
    %4800 = vmatprep.subr.mxu0 %v4671
    %4801 = vmatpush2.msra.mxu0 %v4670
    %4802 = vmatprep.subr.mxu0 %v4667
    %4803 = vmatpush2.msra.mxu0 %v4666
    %4804 = vmatprep.subr.mxu0 %v4663
    %4805 = vmatpush2.msra.mxu0 %v4662
    %4806 = vmatprep.subr.mxu0 %v4659
    %4807 = vmatpush2.msra.mxu0 %v4658
    %4808 = vmatprep.mubr.f32.mxu0 %v4579
    %4809 = vmatmul.mubr.f32.gmra.mxu0 %v4578
    %v4810 = vpop.f32.mrf.mxu0
    %v4811 = vadd.f32 %v4727, %v4810
    %v4812 = vpop.f32.mrf.mxu0
    %v4813 = vadd.f32 %v4731, %v4812
    %4814 = vmatprep.mubr.f32.mxu0 %v4581
    %4815 = vmatmul.mubr.f32.gmra.mxu0 %v4580
    %v4816 = vpop.f32.mrf.mxu0
    %v4817 = vadd.f32 %v4727, %v4816
    %v4818 = vpop.f32.mrf.mxu0
    %v4819 = vadd.f32 %v4731, %v4818
    %4820 = vmatprep.mubr.f32.mxu0 %v4583
    %4821 = vmatmul.mubr.f32.gmra.mxu0 %v4582
    %v4822 = vpop.f32.mrf.mxu0
    %v4823 = vadd.f32 %v4727, %v4822
    %v4824 = vpop.f32.mrf.mxu0
    %v4825 = vadd.f32 %v4731, %v4824
    %4826 = vmatprep.mubr.f32.mxu0 %v4585
    %4827 = vmatmul.mubr.f32.gmra.mxu0 %v4584
    %v4828 = vpop.f32.mrf.mxu0
    %v4829 = vadd.f32 %v4727, %v4828
    %v4830 = vpop.f32.mrf.mxu0
    %v4831 = vadd.f32 %v4731, %v4830
    %4832 = vmatprep.mubr.f32.mxu0 %v4587
    %4833 = vmatmul.mubr.f32.gmra.mxu0 %v4586
    %v4834 = vpop.f32.mrf.mxu0
    %v4835 = vadd.f32 %v4727, %v4834
    %v4836 = vpop.f32.mrf.mxu0
    %v4837 = vadd.f32 %v4731, %v4836
    %4838 = vmatprep.mubr.f32.mxu0 %v4589
    %4839 = vmatmul.mubr.f32.gmra.mxu0 %v4588
    %v4840 = vpop.f32.mrf.mxu0
    %v4841 = vadd.f32 %v4727, %v4840
    %v4842 = vpop.f32.mrf.mxu0
    %v4843 = vadd.f32 %v4731, %v4842
    %4844 = vmatprep.mubr.f32.mxu0 %v4591
    %4845 = vmatmul.mubr.f32.gmra.mxu0 %v4590
    %v4846 = vpop.f32.mrf.mxu0
    %v4847 = vadd.f32 %v4727, %v4846
    %v4848 = vpop.f32.mrf.mxu0
    %v4849 = vadd.f32 %v4731, %v4848
    %4850 = vmatprep.mubr.f32.mxu0 %v4593
    %4851 = vmatmul.mubr.f32.gmra.mxu0 %v4592
    %v4852 = vpop.f32.mrf.mxu0
    %v4853 = vadd.f32 %v4727, %v4852
    %v4854 = vpop.f32.mrf.mxu0
    %v4855 = vadd.f32 %v4731, %v4854
    %4856 = vdwg.mxu0
    %4857 = vmatprep.subr.mxu0 %v4657
    %4858 = vmatpush1.msra.mxu0 %v4656
    %4859 = vmatprep.subr.mxu0 %v4653
    %4860 = vmatpush1.msra.mxu0 %v4652
    %4861 = vmatprep.subr.mxu0 %v4649
    %4862 = vmatpush1.msra.mxu0 %v4648
    %4863 = vmatprep.subr.mxu0 %v4645
    %4864 = vmatpush1.msra.mxu0 %v4644
    %4865 = vmatprep.subr.mxu0 %v4641
    %4866 = vmatpush1.msra.mxu0 %v4640
    %4867 = vmatprep.subr.mxu0 %v4637
    %4868 = vmatpush1.msra.mxu0 %v4636
    %4869 = vmatprep.subr.mxu0 %v4633
    %4870 = vmatpush1.msra.mxu0 %v4632
    %4871 = vmatprep.subr.mxu0 %v4629
    %4872 = vmatpush1.msra.mxu0 %v4628
    %4873 = vmatprep.subr.mxu0 %v4625
    %4874 = vmatpush1.msra.mxu0 %v4624
    %4875 = vmatprep.subr.mxu0 %v4621
    %4876 = vmatpush1.msra.mxu0 %v4620
    %4877 = vmatprep.subr.mxu0 %v4617
    %4878 = vmatpush1.msra.mxu0 %v4616
    %4879 = vmatprep.subr.mxu0 %v4613
    %4880 = vmatpush1.msra.mxu0 %v4612
    %4881 = vmatprep.subr.mxu0 %v4609
    %4882 = vmatpush1.msra.mxu0 %v4608
    %4883 = vmatprep.subr.mxu0 %v4605
    %4884 = vmatpush1.msra.mxu0 %v4604
    %4885 = vmatprep.subr.mxu0 %v4601
    %4886 = vmatpush1.msra.mxu0 %v4600
    %4887 = vmatprep.subr.mxu0 %v4597
    %4888 = vmatpush1.msra.mxu0 %v4596
    %4889 = vmatprep.subr.mxu0 %v4721
    %4890 = vmatpush2.msra.mxu0 %v4720
    %4891 = vmatprep.subr.mxu0 %v4717
    %4892 = vmatpush2.msra.mxu0 %v4716
    %4893 = vmatprep.subr.mxu0 %v4713
    %4894 = vmatpush2.msra.mxu0 %v4712
    %4895 = vmatprep.subr.mxu0 %v4709
    %4896 = vmatpush2.msra.mxu0 %v4708
    %4897 = vmatprep.subr.mxu0 %v4705
    %4898 = vmatpush2.msra.mxu0 %v4704
    %4899 = vmatprep.subr.mxu0 %v4701
    %4900 = vmatpush2.msra.mxu0 %v4700
    %4901 = vmatprep.subr.mxu0 %v4697
    %4902 = vmatpush2.msra.mxu0 %v4696
    %4903 = vmatprep.subr.mxu0 %v4693
    %4904 = vmatpush2.msra.mxu0 %v4692
    %4905 = vmatprep.subr.mxu0 %v4689
    %4906 = vmatpush2.msra.mxu0 %v4688
    %4907 = vmatprep.subr.mxu0 %v4685
    %4908 = vmatpush2.msra.mxu0 %v4684
    %4909 = vmatprep.subr.mxu0 %v4681
    %4910 = vmatpush2.msra.mxu0 %v4680
    %4911 = vmatprep.subr.mxu0 %v4677
    %4912 = vmatpush2.msra.mxu0 %v4676
    %4913 = vmatprep.subr.mxu0 %v4673
    %4914 = vmatpush2.msra.mxu0 %v4672
    %4915 = vmatprep.subr.mxu0 %v4669
    %4916 = vmatpush2.msra.mxu0 %v4668
    %4917 = vmatprep.subr.mxu0 %v4665
    %4918 = vmatpush2.msra.mxu0 %v4664
    %4919 = vmatprep.subr.mxu0 %v4661
    %4920 = vmatpush2.msra.mxu0 %v4660
    %4921 = vmatprep.mubr.f32.mxu0 %v4579
    %4922 = vmatmul.mubr.f32.gmra.mxu0 %v4578
    %v4923 = vpop.f32.mrf.mxu0
    %v4924 = vadd.f32 %v4735, %v4923
    %v4925 = vpop.f32.mrf.mxu0
    %v4926 = vadd.f32 %v4739, %v4925
    %4927 = vmatprep.mubr.f32.mxu0 %v4581
    %4928 = vmatmul.mubr.f32.gmra.mxu0 %v4580
    %v4929 = vpop.f32.mrf.mxu0
    %v4930 = vadd.f32 %v4735, %v4929
    %v4931 = vpop.f32.mrf.mxu0
    %v4932 = vadd.f32 %v4739, %v4931
    %4933 = vmatprep.mubr.f32.mxu0 %v4583
    %4934 = vmatmul.mubr.f32.gmra.mxu0 %v4582
    %v4935 = vpop.f32.mrf.mxu0
    %v4936 = vadd.f32 %v4735, %v4935
    %v4937 = vpop.f32.mrf.mxu0
    %v4938 = vadd.f32 %v4739, %v4937
    %4939 = vmatprep.mubr.f32.mxu0 %v4585
    %4940 = vmatmul.mubr.f32.gmra.mxu0 %v4584
    %v4941 = vpop.f32.mrf.mxu0
    %v4942 = vadd.f32 %v4735, %v4941
    %v4943 = vpop.f32.mrf.mxu0
    %v4944 = vadd.f32 %v4739, %v4943
    %4945 = vmatprep.mubr.f32.mxu0 %v4587
    %4946 = vmatmul.mubr.f32.gmra.mxu0 %v4586
    %v4947 = vpop.f32.mrf.mxu0
    %v4948 = vadd.f32 %v4735, %v4947
    %v4949 = vpop.f32.mrf.mxu0
    %v4950 = vadd.f32 %v4739, %v4949
    %4951 = vmatprep.mubr.f32.mxu0 %v4589
    %4952 = vmatmul.mubr.f32.gmra.mxu0 %v4588
    %v4953 = vpop.f32.mrf.mxu0
    %v4954 = vadd.f32 %v4735, %v4953
    %v4955 = vpop.f32.mrf.mxu0
    %v4956 = vadd.f32 %v4739, %v4955
    %4957 = vmatprep.mubr.f32.mxu0 %v4591
    %4958 = vmatmul.mubr.f32.gmra.mxu0 %v4590
    %v4959 = vpop.f32.mrf.mxu0
    %v4960 = vadd.f32 %v4735, %v4959
    %v4961 = vpop.f32.mrf.mxu0
    %v4962 = vadd.f32 %v4739, %v4961
    %4963 = vmatprep.mubr.f32.mxu0 %v4593
    %4964 = vmatmul.mubr.f32.gmra.mxu0 %v4592
    %v4965 = vpop.f32.mrf.mxu0
    %v4966 = vadd.f32 %v4735, %v4965
    %v4967 = vpop.f32.mrf.mxu0
    %v4968 = vadd.f32 %v4739, %v4967
    %4969 = vdwg.mxu0
    %4970 = vst [vmem:[#allocation2] sm:$0xff] %v4811
    %4971 = vst [vmem:[#allocation2 + $0x8] sm:$0xff] %v4813
    %4972 = vst [vmem:[#allocation2 + $0x10] sm:$0xff] %v4924
    %4973 = vst [vmem:[#allocation2 + $0x18] sm:$0xff] %v4926
    %4974 = vst [vmem:[#allocation2 + $0x20] sm:$0xff] %v4817
    %4975 = vst [vmem:[#allocation2 + $0x28] sm:$0xff] %v4819
    %4976 = vst [vmem:[#allocation2 + $0x30] sm:$0xff] %v4930
    %4977 = vst [vmem:[#allocation2 + $0x38] sm:$0xff] %v4932
    %4978 = vst [vmem:[#allocation2 + $0x40] sm:$0xff] %v4823
    %4979 = vst [vmem:[#allocation2 + $0x48] sm:$0xff] %v4825
    %4980 = vst [vmem:[#allocation2 + $0x50] sm:$0xff] %v4936
    %4981 = vst [vmem:[#allocation2 + $0x58] sm:$0xff] %v4938
    %4982 = vst [vmem:[#allocation2 + $0x60] sm:$0xff] %v4829
    %4983 = vst [vmem:[#allocation2 + $0x68] sm:$0xff] %v4831
    %4984 = vst [vmem:[#allocation2 + $0x70] sm:$0xff] %v4942
    %4985 = vst [vmem:[#allocation2 + $0x78] sm:$0xff] %v4944
    %4986 = vst [vmem:[#allocation2 + $0x80] sm:$0xff] %v4835
    %4987 = vst [vmem:[#allocation2 + $0x88] sm:$0xff] %v4837
    %4988 = vst [vmem:[#allocation2 + $0x90] sm:$0xff] %v4948
    %4989 = vst [vmem:[#allocation2 + $0x98] sm:$0xff] %v4950
    %4990 = vst [vmem:[#allocation2 + $0xa0] sm:$0xff] %v4841
    %4991 = vst [vmem:[#allocation2 + $0xa8] sm:$0xff] %v4843
    %4992 = vst [vmem:[#allocation2 + $0xb0] sm:$0xff] %v4954
    %4993 = vst [vmem:[#allocation2 + $0xb8] sm:$0xff] %v4956
    %4994 = vst [vmem:[#allocation2 + $0xc0] sm:$0xff] %v4847
    %4995 = vst [vmem:[#allocation2 + $0xc8] sm:$0xff] %v4849
    %4996 = vst [vmem:[#allocation2 + $0xd0] sm:$0xff] %v4960
    %4997 = vst [vmem:[#allocation2 + $0xd8] sm:$0xff] %v4962
    %4998 = vst [vmem:[#allocation2 + $0xe0] sm:$0xff] %v4853
    %4999 = vst [vmem:[#allocation2 + $0xe8] sm:$0xff] %v4855
    %5000 = vst [vmem:[#allocation2 + $0xf0] sm:$0xff] %v4966
    %5001 = vst [vmem:[#allocation2 + $0xf8] sm:$0xff] %v4968
    %v5002 = vld [vmem:[#allocation6] sm:$0xff]
    %v5003 = vld [vmem:[#allocation6 + $0x8] sm:$0xff]
    %v5004 = vld [vmem:[#allocation6 + $0x10] sm:$0xff]
    %v5005 = vld [vmem:[#allocation6 + $0x18] sm:$0xff]
    %v5006 = vld [vmem:[#allocation6 + $0x20] sm:$0xff]
    %v5007 = vld [vmem:[#allocation6 + $0x28] sm:$0xff]
    %v5008 = vld [vmem:[#allocation6 + $0x30] sm:$0xff]
    %v5009 = vld [vmem:[#allocation6 + $0x38] sm:$0xff]
    %v5010 = vld [vmem:[#allocation6 + $0x40] sm:$0xff]
    %v5011 = vld [vmem:[#allocation6 + $0x48] sm:$0xff]
    %v5012 = vld [vmem:[#allocation6 + $0x50] sm:$0xff]
    %v5013 = vld [vmem:[#allocation6 + $0x58] sm:$0xff]
    %v5014 = vld [vmem:[#allocation6 + $0x60] sm:$0xff]
    %v5015 = vld [vmem:[#allocation6 + $0x68] sm:$0xff]
    %v5016 = vld [vmem:[#allocation6 + $0x70] sm:$0xff]
    %v5017 = vld [vmem:[#allocation6 + $0x78] sm:$0xff]
    %v5018 = vld [vmem:[#allocation6 + $0x80] sm:$0xff]
    %v5019 = vld [vmem:[#allocation6 + $0x88] sm:$0xff]
    %v5020 = vld [vmem:[#allocation6 + $0x90] sm:$0xff]
    %v5021 = vld [vmem:[#allocation6 + $0x98] sm:$0xff]
    %v5022 = vld [vmem:[#allocation6 + $0xa0] sm:$0xff]
    %v5023 = vld [vmem:[#allocation6 + $0xa8] sm:$0xff]
    %v5024 = vld [vmem:[#allocation6 + $0xb0] sm:$0xff]
    %v5025 = vld [vmem:[#allocation6 + $0xb8] sm:$0xff]
    %v5026 = vld [vmem:[#allocation6 + $0xc0] sm:$0xff]
    %v5027 = vld [vmem:[#allocation6 + $0xc8] sm:$0xff]
    %v5028 = vld [vmem:[#allocation6 + $0xd0] sm:$0xff]
    %v5029 = vld [vmem:[#allocation6 + $0xd8] sm:$0xff]
    %v5030 = vld [vmem:[#allocation6 + $0xe0] sm:$0xff]
    %v5031 = vld [vmem:[#allocation6 + $0xe8] sm:$0xff]
    %v5032 = vld [vmem:[#allocation6 + $0xf0] sm:$0xff]
    %v5033 = vld [vmem:[#allocation6 + $0xf8] sm:$0xff]
    %v5034 = vld [vmem:[#allocation6 + $0x100] sm:$0xff]
    %v5035 = vld [vmem:[#allocation6 + $0x108] sm:$0xff]
    %v5036 = vld [vmem:[#allocation6 + $0x110] sm:$0xff]
    %v5037 = vld [vmem:[#allocation6 + $0x118] sm:$0xff]
    %v5038 = vld [vmem:[#allocation6 + $0x120] sm:$0xff]
    %v5039 = vld [vmem:[#allocation6 + $0x128] sm:$0xff]
    %v5040 = vld [vmem:[#allocation6 + $0x130] sm:$0xff]
    %v5041 = vld [vmem:[#allocation6 + $0x138] sm:$0xff]
    %v5042 = vld [vmem:[#allocation6 + $0x140] sm:$0xff]
    %v5043 = vld [vmem:[#allocation6 + $0x148] sm:$0xff]
    %v5044 = vld [vmem:[#allocation6 + $0x150] sm:$0xff]
    %v5045 = vld [vmem:[#allocation6 + $0x158] sm:$0xff]
    %v5046 = vld [vmem:[#allocation6 + $0x160] sm:$0xff]
    %v5047 = vld [vmem:[#allocation6 + $0x168] sm:$0xff]
    %v5048 = vld [vmem:[#allocation6 + $0x170] sm:$0xff]
    %v5049 = vld [vmem:[#allocation6 + $0x178] sm:$0xff]
    %v5050 = vld [vmem:[#allocation6 + $0x180] sm:$0xff]
    %v5051 = vld [vmem:[#allocation6 + $0x188] sm:$0xff]
    %v5052 = vld [vmem:[#allocation6 + $0x190] sm:$0xff]
    %v5053 = vld [vmem:[#allocation6 + $0x198] sm:$0xff]
    %v5054 = vld [vmem:[#allocation6 + $0x1a0] sm:$0xff]
    %v5055 = vld [vmem:[#allocation6 + $0x1a8] sm:$0xff]
    %v5056 = vld [vmem:[#allocation6 + $0x1b0] sm:$0xff]
    %v5057 = vld [vmem:[#allocation6 + $0x1b8] sm:$0xff]
    %v5058 = vld [vmem:[#allocation6 + $0x1c0] sm:$0xff]
    %v5059 = vld [vmem:[#allocation6 + $0x1c8] sm:$0xff]
    %v5060 = vld [vmem:[#allocation6 + $0x1d0] sm:$0xff]
    %v5061 = vld [vmem:[#allocation6 + $0x1d8] sm:$0xff]
    %v5062 = vld [vmem:[#allocation6 + $0x1e0] sm:$0xff]
    %v5063 = vld [vmem:[#allocation6 + $0x1e8] sm:$0xff]
    %v5064 = vld [vmem:[#allocation6 + $0x1f0] sm:$0xff]
    %v5065 = vld [vmem:[#allocation6 + $0x1f8] sm:$0xff]
    %v5066 = vld [vmem:[#allocation6 + $0x200] sm:$0xff]
    %v5067 = vld [vmem:[#allocation6 + $0x208] sm:$0xff]
    %v5068 = vld [vmem:[#allocation6 + $0x210] sm:$0xff]
    %v5069 = vld [vmem:[#allocation6 + $0x218] sm:$0xff]
    %v5070 = vld [vmem:[#allocation6 + $0x220] sm:$0xff]
    %v5071 = vld [vmem:[#allocation6 + $0x228] sm:$0xff]
    %v5072 = vld [vmem:[#allocation6 + $0x230] sm:$0xff]
    %v5073 = vld [vmem:[#allocation6 + $0x238] sm:$0xff]
    %v5074 = vld [vmem:[#allocation6 + $0x240] sm:$0xff]
    %v5075 = vld [vmem:[#allocation6 + $0x248] sm:$0xff]
    %v5076 = vld [vmem:[#allocation6 + $0x250] sm:$0xff]
    %v5077 = vld [vmem:[#allocation6 + $0x258] sm:$0xff]
    %v5078 = vld [vmem:[#allocation6 + $0x260] sm:$0xff]
    %v5079 = vld [vmem:[#allocation6 + $0x268] sm:$0xff]
    %v5080 = vld [vmem:[#allocation6 + $0x270] sm:$0xff]
    %v5081 = vld [vmem:[#allocation6 + $0x278] sm:$0xff]
    %v5082 = vld [vmem:[#allocation6 + $0x280] sm:$0xff]
    %v5083 = vld [vmem:[#allocation6 + $0x288] sm:$0xff]
    %v5084 = vld [vmem:[#allocation6 + $0x290] sm:$0xff]
    %v5085 = vld [vmem:[#allocation6 + $0x298] sm:$0xff]
    %v5086 = vld [vmem:[#allocation6 + $0x2a0] sm:$0xff]
    %v5087 = vld [vmem:[#allocation6 + $0x2a8] sm:$0xff]
    %v5088 = vld [vmem:[#allocation6 + $0x2b0] sm:$0xff]
    %v5089 = vld [vmem:[#allocation6 + $0x2b8] sm:$0xff]
    %v5090 = vld [vmem:[#allocation6 + $0x2c0] sm:$0xff]
    %v5091 = vld [vmem:[#allocation6 + $0x2c8] sm:$0xff]
    %v5092 = vld [vmem:[#allocation6 + $0x2d0] sm:$0xff]
    %v5093 = vld [vmem:[#allocation6 + $0x2d8] sm:$0xff]
    %v5094 = vld [vmem:[#allocation6 + $0x2e0] sm:$0xff]
    %v5095 = vld [vmem:[#allocation6 + $0x2e8] sm:$0xff]
    %v5096 = vld [vmem:[#allocation6 + $0x2f0] sm:$0xff]
    %v5097 = vld [vmem:[#allocation6 + $0x2f8] sm:$0xff]
    %v5098 = vld [vmem:[#allocation6 + $0x300] sm:$0xff]
    %v5099 = vld [vmem:[#allocation6 + $0x308] sm:$0xff]
    %v5100 = vld [vmem:[#allocation6 + $0x310] sm:$0xff]
    %v5101 = vld [vmem:[#allocation6 + $0x318] sm:$0xff]
    %v5102 = vld [vmem:[#allocation6 + $0x320] sm:$0xff]
    %v5103 = vld [vmem:[#allocation6 + $0x328] sm:$0xff]
    %v5104 = vld [vmem:[#allocation6 + $0x330] sm:$0xff]
    %v5105 = vld [vmem:[#allocation6 + $0x338] sm:$0xff]
    %v5106 = vld [vmem:[#allocation6 + $0x340] sm:$0xff]
    %v5107 = vld [vmem:[#allocation6 + $0x348] sm:$0xff]
    %v5108 = vld [vmem:[#allocation6 + $0x350] sm:$0xff]
    %v5109 = vld [vmem:[#allocation6 + $0x358] sm:$0xff]
    %v5110 = vld [vmem:[#allocation6 + $0x360] sm:$0xff]
    %v5111 = vld [vmem:[#allocation6 + $0x368] sm:$0xff]
    %v5112 = vld [vmem:[#allocation6 + $0x370] sm:$0xff]
    %v5113 = vld [vmem:[#allocation6 + $0x378] sm:$0xff]
    %v5114 = vld [vmem:[#allocation6 + $0x380] sm:$0xff]
    %v5115 = vld [vmem:[#allocation6 + $0x388] sm:$0xff]
    %v5116 = vld [vmem:[#allocation6 + $0x390] sm:$0xff]
    %v5117 = vld [vmem:[#allocation6 + $0x398] sm:$0xff]
    %v5118 = vld [vmem:[#allocation6 + $0x3a0] sm:$0xff]
    %v5119 = vld [vmem:[#allocation6 + $0x3a8] sm:$0xff]
    %v5120 = vld [vmem:[#allocation6 + $0x3b0] sm:$0xff]
    %v5121 = vld [vmem:[#allocation6 + $0x3b8] sm:$0xff]
    %v5122 = vld [vmem:[#allocation6 + $0x3c0] sm:$0xff]
    %v5123 = vld [vmem:[#allocation6 + $0x3c8] sm:$0xff]
    %v5124 = vld [vmem:[#allocation6 + $0x3d0] sm:$0xff]
    %v5125 = vld [vmem:[#allocation6 + $0x3d8] sm:$0xff]
    %v5126 = vld [vmem:[#allocation6 + $0x3e0] sm:$0xff]
    %v5127 = vld [vmem:[#allocation6 + $0x3e8] sm:$0xff]
    %v5128 = vld [vmem:[#allocation6 + $0x3f0] sm:$0xff]
    %v5129 = vld [vmem:[#allocation6 + $0x3f8] sm:$0xff]
    %v5130 = vld [vmem:[%s12] sm:$0xf]
    %v5132 = vlaneseq
    %v5133 = vshrl.u32 %v5132, 7
    %v5134 = vsub.s32 0, %v5133
    %v5135 = vrot.slane %v5130, %v5134
    %v5136 = vlaneseq
    %v5137 = vshrl.u32 %v5136, 7
    %v5138 = vsub.s32 1, %v5137
    %v5139 = vrot.slane %v5130, %v5138
    %v5140 = vlaneseq
    %v5141 = vshrl.u32 %v5140, 7
    %v5142 = vsub.s32 2, %v5141
    %v5143 = vrot.slane %v5130, %v5142
    %v5144 = vlaneseq
    %v5145 = vshrl.u32 %v5144, 7
    %v5146 = vsub.s32 3, %v5145
    %v5147 = vrot.slane %v5130, %v5146
    %5152 = vmatprep.subr.mxu0 %v5063
    %5153 = vmatpush1.msra.mxu0 %v5062
    %5154 = vmatprep.subr.mxu0 %v5059
    %5155 = vmatpush1.msra.mxu0 %v5058
    %5156 = vmatprep.subr.mxu0 %v5055
    %5157 = vmatpush1.msra.mxu0 %v5054
    %5158 = vmatprep.subr.mxu0 %v5051
    %5159 = vmatpush1.msra.mxu0 %v5050
    %5160 = vmatprep.subr.mxu0 %v5047
    %5161 = vmatpush1.msra.mxu0 %v5046
    %5162 = vmatprep.subr.mxu0 %v5043
    %5163 = vmatpush1.msra.mxu0 %v5042
    %5164 = vmatprep.subr.mxu0 %v5039
    %5165 = vmatpush1.msra.mxu0 %v5038
    %5166 = vmatprep.subr.mxu0 %v5035
    %5167 = vmatpush1.msra.mxu0 %v5034
    %5168 = vmatprep.subr.mxu0 %v5031
    %5169 = vmatpush1.msra.mxu0 %v5030
    %5170 = vmatprep.subr.mxu0 %v5027
    %5171 = vmatpush1.msra.mxu0 %v5026
    %5172 = vmatprep.subr.mxu0 %v5023
    %5173 = vmatpush1.msra.mxu0 %v5022
    %5174 = vmatprep.subr.mxu0 %v5019
    %5175 = vmatpush1.msra.mxu0 %v5018
    %5176 = vmatprep.subr.mxu0 %v5015
    %5177 = vmatpush1.msra.mxu0 %v5014
    %5178 = vmatprep.subr.mxu0 %v5011
    %5179 = vmatpush1.msra.mxu0 %v5010
    %5180 = vmatprep.subr.mxu0 %v5007
    %5181 = vmatpush1.msra.mxu0 %v5006
    %5182 = vmatprep.subr.mxu0 %v5003
    %5183 = vmatpush1.msra.mxu0 %v5002
    %5184 = vmatprep.subr.mxu0 %v5127
    %5185 = vmatpush2.msra.mxu0 %v5126
    %5186 = vmatprep.subr.mxu0 %v5123
    %5187 = vmatpush2.msra.mxu0 %v5122
    %5188 = vmatprep.subr.mxu0 %v5119
    %5189 = vmatpush2.msra.mxu0 %v5118
    %5190 = vmatprep.subr.mxu0 %v5115
    %5191 = vmatpush2.msra.mxu0 %v5114
    %5192 = vmatprep.subr.mxu0 %v5111
    %5193 = vmatpush2.msra.mxu0 %v5110
    %5194 = vmatprep.subr.mxu0 %v5107
    %5195 = vmatpush2.msra.mxu0 %v5106
    %5196 = vmatprep.subr.mxu0 %v5103
    %5197 = vmatpush2.msra.mxu0 %v5102
    %5198 = vmatprep.subr.mxu0 %v5099
    %5199 = vmatpush2.msra.mxu0 %v5098
    %5200 = vmatprep.subr.mxu0 %v5095
    %5201 = vmatpush2.msra.mxu0 %v5094
    %5202 = vmatprep.subr.mxu0 %v5091
    %5203 = vmatpush2.msra.mxu0 %v5090
    %5204 = vmatprep.subr.mxu0 %v5087
    %5205 = vmatpush2.msra.mxu0 %v5086
    %5206 = vmatprep.subr.mxu0 %v5083
    %5207 = vmatpush2.msra.mxu0 %v5082
    %5208 = vmatprep.subr.mxu0 %v5079
    %5209 = vmatpush2.msra.mxu0 %v5078
    %5210 = vmatprep.subr.mxu0 %v5075
    %5211 = vmatpush2.msra.mxu0 %v5074
    %5212 = vmatprep.subr.mxu0 %v5071
    %5213 = vmatpush2.msra.mxu0 %v5070
    %5214 = vmatprep.subr.mxu0 %v5067
    %5215 = vmatpush2.msra.mxu0 %v5066
    %5216 = vmatprep.mubr.f32.mxu0 %v4579
    %5217 = vmatmul.mubr.f32.gmra.mxu0 %v4578
    %v5218 = vpop.f32.mrf.mxu0
    %v5219 = vadd.f32 %v5135, %v5218
    %v5220 = vpop.f32.mrf.mxu0
    %v5221 = vadd.f32 %v5139, %v5220
    %5222 = vmatprep.mubr.f32.mxu0 %v4581
    %5223 = vmatmul.mubr.f32.gmra.mxu0 %v4580
    %v5224 = vpop.f32.mrf.mxu0
    %v5225 = vadd.f32 %v5135, %v5224
    %v5226 = vpop.f32.mrf.mxu0
    %v5227 = vadd.f32 %v5139, %v5226
    %5228 = vmatprep.mubr.f32.mxu0 %v4583
    %5229 = vmatmul.mubr.f32.gmra.mxu0 %v4582
    %v5230 = vpop.f32.mrf.mxu0
    %v5231 = vadd.f32 %v5135, %v5230
    %v5232 = vpop.f32.mrf.mxu0
    %v5233 = vadd.f32 %v5139, %v5232
    %5234 = vmatprep.mubr.f32.mxu0 %v4585
    %5235 = vmatmul.mubr.f32.gmra.mxu0 %v4584
    %v5236 = vpop.f32.mrf.mxu0
    %v5237 = vadd.f32 %v5135, %v5236
    %v5238 = vpop.f32.mrf.mxu0
    %v5239 = vadd.f32 %v5139, %v5238
    %5240 = vmatprep.mubr.f32.mxu0 %v4587
    %5241 = vmatmul.mubr.f32.gmra.mxu0 %v4586
    %v5242 = vpop.f32.mrf.mxu0
    %v5243 = vadd.f32 %v5135, %v5242
    %v5244 = vpop.f32.mrf.mxu0
    %v5245 = vadd.f32 %v5139, %v5244
    %5246 = vmatprep.mubr.f32.mxu0 %v4589
    %5247 = vmatmul.mubr.f32.gmra.mxu0 %v4588
    %v5248 = vpop.f32.mrf.mxu0
    %v5249 = vadd.f32 %v5135, %v5248
    %v5250 = vpop.f32.mrf.mxu0
    %v5251 = vadd.f32 %v5139, %v5250
    %5252 = vmatprep.mubr.f32.mxu0 %v4591
    %5253 = vmatmul.mubr.f32.gmra.mxu0 %v4590
    %v5254 = vpop.f32.mrf.mxu0
    %v5255 = vadd.f32 %v5135, %v5254
    %v5256 = vpop.f32.mrf.mxu0
    %v5257 = vadd.f32 %v5139, %v5256
    %5258 = vmatprep.mubr.f32.mxu0 %v4593
    %5259 = vmatmul.mubr.f32.gmra.mxu0 %v4592
    %v5260 = vpop.f32.mrf.mxu0
    %v5261 = vadd.f32 %v5135, %v5260
    %v5262 = vpop.f32.mrf.mxu0
    %v5263 = vadd.f32 %v5139, %v5262
    %5264 = vdwg.mxu0
    %5265 = vmatprep.subr.mxu0 %v5065
    %5266 = vmatpush1.msra.mxu0 %v5064
    %5267 = vmatprep.subr.mxu0 %v5061
    %5268 = vmatpush1.msra.mxu0 %v5060
    %5269 = vmatprep.subr.mxu0 %v5057
    %5270 = vmatpush1.msra.mxu0 %v5056
    %5271 = vmatprep.subr.mxu0 %v5053
    %5272 = vmatpush1.msra.mxu0 %v5052
    %5273 = vmatprep.subr.mxu0 %v5049
    %5274 = vmatpush1.msra.mxu0 %v5048
    %5275 = vmatprep.subr.mxu0 %v5045
    %5276 = vmatpush1.msra.mxu0 %v5044
    %5277 = vmatprep.subr.mxu0 %v5041
    %5278 = vmatpush1.msra.mxu0 %v5040
    %5279 = vmatprep.subr.mxu0 %v5037
    %5280 = vmatpush1.msra.mxu0 %v5036
    %5281 = vmatprep.subr.mxu0 %v5033
    %5282 = vmatpush1.msra.mxu0 %v5032
    %5283 = vmatprep.subr.mxu0 %v5029
    %5284 = vmatpush1.msra.mxu0 %v5028
    %5285 = vmatprep.subr.mxu0 %v5025
    %5286 = vmatpush1.msra.mxu0 %v5024
    %5287 = vmatprep.subr.mxu0 %v5021
    %5288 = vmatpush1.msra.mxu0 %v5020
    %5289 = vmatprep.subr.mxu0 %v5017
    %5290 = vmatpush1.msra.mxu0 %v5016
    %5291 = vmatprep.subr.mxu0 %v5013
    %5292 = vmatpush1.msra.mxu0 %v5012
    %5293 = vmatprep.subr.mxu0 %v5009
    %5294 = vmatpush1.msra.mxu0 %v5008
    %5295 = vmatprep.subr.mxu0 %v5005
    %5296 = vmatpush1.msra.mxu0 %v5004
    %5297 = vmatprep.subr.mxu0 %v5129
    %5298 = vmatpush2.msra.mxu0 %v5128
    %5299 = vmatprep.subr.mxu0 %v5125
    %5300 = vmatpush2.msra.mxu0 %v5124
    %5301 = vmatprep.subr.mxu0 %v5121
    %5302 = vmatpush2.msra.mxu0 %v5120
    %5303 = vmatprep.subr.mxu0 %v5117
    %5304 = vmatpush2.msra.mxu0 %v5116
    %5305 = vmatprep.subr.mxu0 %v5113
    %5306 = vmatpush2.msra.mxu0 %v5112
    %5307 = vmatprep.subr.mxu0 %v5109
    %5308 = vmatpush2.msra.mxu0 %v5108
    %5309 = vmatprep.subr.mxu0 %v5105
    %5310 = vmatpush2.msra.mxu0 %v5104
    %5311 = vmatprep.subr.mxu0 %v5101
    %5312 = vmatpush2.msra.mxu0 %v5100
    %5313 = vmatprep.subr.mxu0 %v5097
    %5314 = vmatpush2.msra.mxu0 %v5096
    %5315 = vmatprep.subr.mxu0 %v5093
    %5316 = vmatpush2.msra.mxu0 %v5092
    %5317 = vmatprep.subr.mxu0 %v5089
    %5318 = vmatpush2.msra.mxu0 %v5088
    %5319 = vmatprep.subr.mxu0 %v5085
    %5320 = vmatpush2.msra.mxu0 %v5084
    %5321 = vmatprep.subr.mxu0 %v5081
    %5322 = vmatpush2.msra.mxu0 %v5080
    %5323 = vmatprep.subr.mxu0 %v5077
    %5324 = vmatpush2.msra.mxu0 %v5076
    %5325 = vmatprep.subr.mxu0 %v5073
    %5326 = vmatpush2.msra.mxu0 %v5072
    %5327 = vmatprep.subr.mxu0 %v5069
    %5328 = vmatpush2.msra.mxu0 %v5068
    %5329 = vmatprep.mubr.f32.mxu0 %v4579
    %5330 = vmatmul.mubr.f32.gmra.mxu0 %v4578
    %v5331 = vpop.f32.mrf.mxu0
    %v5332 = vadd.f32 %v5143, %v5331
    %v5333 = vpop.f32.mrf.mxu0
    %v5334 = vadd.f32 %v5147, %v5333
    %5335 = vmatprep.mubr.f32.mxu0 %v4581
    %5336 = vmatmul.mubr.f32.gmra.mxu0 %v4580
    %v5337 = vpop.f32.mrf.mxu0
    %v5338 = vadd.f32 %v5143, %v5337
    %v5339 = vpop.f32.mrf.mxu0
    %v5340 = vadd.f32 %v5147, %v5339
    %5341 = vmatprep.mubr.f32.mxu0 %v4583
    %5342 = vmatmul.mubr.f32.gmra.mxu0 %v4582
    %v5343 = vpop.f32.mrf.mxu0
    %v5344 = vadd.f32 %v5143, %v5343
    %v5345 = vpop.f32.mrf.mxu0
    %v5346 = vadd.f32 %v5147, %v5345
    %5347 = vmatprep.mubr.f32.mxu0 %v4585
    %5348 = vmatmul.mubr.f32.gmra.mxu0 %v4584
    %v5349 = vpop.f32.mrf.mxu0
    %v5350 = vadd.f32 %v5143, %v5349
    %v5351 = vpop.f32.mrf.mxu0
    %v5352 = vadd.f32 %v5147, %v5351
    %5353 = vmatprep.mubr.f32.mxu0 %v4587
    %5354 = vmatmul.mubr.f32.gmra.mxu0 %v4586
    %v5355 = vpop.f32.mrf.mxu0
    %v5356 = vadd.f32 %v5143, %v5355
    %v5357 = vpop.f32.mrf.mxu0
    %v5358 = vadd.f32 %v5147, %v5357
    %5359 = vmatprep.mubr.f32.mxu0 %v4589
    %5360 = vmatmul.mubr.f32.gmra.mxu0 %v4588
    %v5361 = vpop.f32.mrf.mxu0
    %v5362 = vadd.f32 %v5143, %v5361
    %v5363 = vpop.f32.mrf.mxu0
    %v5364 = vadd.f32 %v5147, %v5363
    %5365 = vmatprep.mubr.f32.mxu0 %v4591
    %5366 = vmatmul.mubr.f32.gmra.mxu0 %v4590
    %v5367 = vpop.f32.mrf.mxu0
    %v5368 = vadd.f32 %v5143, %v5367
    %v5369 = vpop.f32.mrf.mxu0
    %v5370 = vadd.f32 %v5147, %v5369
    %5371 = vmatprep.mubr.f32.mxu0 %v4593
    %5372 = vmatmul.mubr.f32.gmra.mxu0 %v4592
    %v5373 = vpop.f32.mrf.mxu0
    %v5374 = vadd.f32 %v5143, %v5373
    %v5375 = vpop.f32.mrf.mxu0
    %v5376 = vadd.f32 %v5147, %v5375
    %5377 = vdwg.mxu0
    %5378 = vst [vmem:[#allocation3] sm:$0xff] %v5219
    %5379 = vst [vmem:[#allocation3 + $0x8] sm:$0xff] %v5221
    %5380 = vst [vmem:[#allocation3 + $0x10] sm:$0xff] %v5332
    %5381 = vst [vmem:[#allocation3 + $0x18] sm:$0xff] %v5334
    %5382 = vst [vmem:[#allocation3 + $0x20] sm:$0xff] %v5225
    %5383 = vst [vmem:[#allocation3 + $0x28] sm:$0xff] %v5227
    %5384 = vst [vmem:[#allocation3 + $0x30] sm:$0xff] %v5338
    %5385 = vst [vmem:[#allocation3 + $0x38] sm:$0xff] %v5340
    %5386 = vst [vmem:[#allocation3 + $0x40] sm:$0xff] %v5231
    %5387 = vst [vmem:[#allocation3 + $0x48] sm:$0xff] %v5233
    %5388 = vst [vmem:[#allocation3 + $0x50] sm:$0xff] %v5344
    %5389 = vst [vmem:[#allocation3 + $0x58] sm:$0xff] %v5346
    %5390 = vst [vmem:[#allocation3 + $0x60] sm:$0xff] %v5237
    %5391 = vst [vmem:[#allocation3 + $0x68] sm:$0xff] %v5239
    %5392 = vst [vmem:[#allocation3 + $0x70] sm:$0xff] %v5350
    %5393 = vst [vmem:[#allocation3 + $0x78] sm:$0xff] %v5352
    %5394 = vst [vmem:[#allocation3 + $0x80] sm:$0xff] %v5243
    %5395 = vst [vmem:[#allocation3 + $0x88] sm:$0xff] %v5245
    %5396 = vst [vmem:[#allocation3 + $0x90] sm:$0xff] %v5356
    %5397 = vst [vmem:[#allocation3 + $0x98] sm:$0xff] %v5358
    %5398 = vst [vmem:[#allocation3 + $0xa0] sm:$0xff] %v5249
    %5399 = vst [vmem:[#allocation3 + $0xa8] sm:$0xff] %v5251
    %5400 = vst [vmem:[#allocation3 + $0xb0] sm:$0xff] %v5362
    %5401 = vst [vmem:[#allocation3 + $0xb8] sm:$0xff] %v5364
    %5402 = vst [vmem:[#allocation3 + $0xc0] sm:$0xff] %v5255
    %5403 = vst [vmem:[#allocation3 + $0xc8] sm:$0xff] %v5257
    %5404 = vst [vmem:[#allocation3 + $0xd0] sm:$0xff] %v5368
    %5405 = vst [vmem:[#allocation3 + $0xd8] sm:$0xff] %v5370
    %5406 = vst [vmem:[#allocation3 + $0xe0] sm:$0xff] %v5261
    %5407 = vst [vmem:[#allocation3 + $0xe8] sm:$0xff] %v5263
    %5408 = vst [vmem:[#allocation3 + $0xf0] sm:$0xff] %v5374
    %5409 = vst [vmem:[#allocation3 + $0xf8] sm:$0xff] %v5376
    %v5410 = vld [vmem:[#allocation2] sm:$0xff]
    %v5411 = vld [vmem:[#allocation2 + $0x8] sm:$0xff]
    %v5412 = vld [vmem:[#allocation2 + $0x10] sm:$0xff]
    %v5413 = vld [vmem:[#allocation2 + $0x18] sm:$0xff]
    %v5414 = vld [vmem:[#allocation7] sm:$0xff]
    %v5415 = vld [vmem:[#allocation7 + $0x8] sm:$0xff]
    %v5416 = vld [vmem:[#allocation7 + $0x10] sm:$0xff]
    %v5417 = vld [vmem:[#allocation7 + $0x18] sm:$0xff]
    %v5418 = vld [vmem:[#allocation7 + $0x20] sm:$0xff]
    %v5419 = vld [vmem:[#allocation7 + $0x28] sm:$0xff]
    %v5420 = vld [vmem:[#allocation7 + $0x30] sm:$0xff]
    %v5421 = vld [vmem:[#allocation7 + $0x38] sm:$0xff]
    %v5422 = vld [vmem:[#allocation7 + $0x40] sm:$0xff]
    %v5423 = vld [vmem:[#allocation7 + $0x48] sm:$0xff]
    %v5424 = vld [vmem:[#allocation7 + $0x50] sm:$0xff]
    %v5425 = vld [vmem:[#allocation7 + $0x58] sm:$0xff]
    %v5426 = vld [vmem:[#allocation7 + $0x60] sm:$0xff]
    %v5427 = vld [vmem:[#allocation7 + $0x68] sm:$0xff]
    %v5428 = vld [vmem:[#allocation7 + $0x70] sm:$0xff]
    %v5429 = vld [vmem:[#allocation7 + $0x78] sm:$0xff]
    %v5430 = vld [vmem:[#allocation7 + $0x80] sm:$0xff]
    %v5431 = vld [vmem:[#allocation7 + $0x88] sm:$0xff]
    %v5432 = vld [vmem:[#allocation7 + $0x90] sm:$0xff]
    %v5433 = vld [vmem:[#allocation7 + $0x98] sm:$0xff]
    %v5434 = vld [vmem:[#allocation7 + $0xa0] sm:$0xff]
    %v5435 = vld [vmem:[#allocation7 + $0xa8] sm:$0xff]
    %v5436 = vld [vmem:[#allocation7 + $0xb0] sm:$0xff]
    %v5437 = vld [vmem:[#allocation7 + $0xb8] sm:$0xff]
    %v5438 = vld [vmem:[#allocation7 + $0xc0] sm:$0xff]
    %v5439 = vld [vmem:[#allocation7 + $0xc8] sm:$0xff]
    %v5440 = vld [vmem:[#allocation7 + $0xd0] sm:$0xff]
    %v5441 = vld [vmem:[#allocation7 + $0xd8] sm:$0xff]
    %v5442 = vld [vmem:[#allocation7 + $0xe0] sm:$0xff]
    %v5443 = vld [vmem:[#allocation7 + $0xe8] sm:$0xff]
    %v5444 = vld [vmem:[#allocation7 + $0xf0] sm:$0xff]
    %v5445 = vld [vmem:[#allocation7 + $0xf8] sm:$0xff]
    %v5446 = vld [vmem:[#allocation7 + $0x100] sm:$0xff]
    %v5447 = vld [vmem:[#allocation7 + $0x108] sm:$0xff]
    %v5448 = vld [vmem:[#allocation7 + $0x110] sm:$0xff]
    %v5449 = vld [vmem:[#allocation7 + $0x118] sm:$0xff]
    %v5450 = vld [vmem:[#allocation7 + $0x120] sm:$0xff]
    %v5451 = vld [vmem:[#allocation7 + $0x128] sm:$0xff]
    %v5452 = vld [vmem:[#allocation7 + $0x130] sm:$0xff]
    %v5453 = vld [vmem:[#allocation7 + $0x138] sm:$0xff]
    %v5454 = vld [vmem:[#allocation7 + $0x140] sm:$0xff]
    %v5455 = vld [vmem:[#allocation7 + $0x148] sm:$0xff]
    %v5456 = vld [vmem:[#allocation7 + $0x150] sm:$0xff]
    %v5457 = vld [vmem:[#allocation7 + $0x158] sm:$0xff]
    %v5458 = vld [vmem:[#allocation7 + $0x160] sm:$0xff]
    %v5459 = vld [vmem:[#allocation7 + $0x168] sm:$0xff]
    %v5460 = vld [vmem:[#allocation7 + $0x170] sm:$0xff]
    %v5461 = vld [vmem:[#allocation7 + $0x178] sm:$0xff]
    %v5462 = vld [vmem:[#allocation7 + $0x180] sm:$0xff]
    %v5463 = vld [vmem:[#allocation7 + $0x188] sm:$0xff]
    %v5464 = vld [vmem:[#allocation7 + $0x190] sm:$0xff]
    %v5465 = vld [vmem:[#allocation7 + $0x198] sm:$0xff]
    %v5466 = vld [vmem:[#allocation7 + $0x1a0] sm:$0xff]
    %v5467 = vld [vmem:[#allocation7 + $0x1a8] sm:$0xff]
    %v5468 = vld [vmem:[#allocation7 + $0x1b0] sm:$0xff]
    %v5469 = vld [vmem:[#allocation7 + $0x1b8] sm:$0xff]
    %v5470 = vld [vmem:[#allocation7 + $0x1c0] sm:$0xff]
    %v5471 = vld [vmem:[#allocation7 + $0x1c8] sm:$0xff]
    %v5472 = vld [vmem:[#allocation7 + $0x1d0] sm:$0xff]
    %v5473 = vld [vmem:[#allocation7 + $0x1d8] sm:$0xff]
    %v5474 = vld [vmem:[#allocation7 + $0x1e0] sm:$0xff]
    %v5475 = vld [vmem:[#allocation7 + $0x1e8] sm:$0xff]
    %v5476 = vld [vmem:[#allocation7 + $0x1f0] sm:$0xff]
    %v5477 = vld [vmem:[#allocation7 + $0x1f8] sm:$0xff]
    %5478 = vmatprep.subr.mxu0 %v5475
    %5479 = vmatpush1.msra.mxu0 %v5474
    %5480 = vmatprep.subr.mxu0 %v5471
    %5481 = vmatpush1.msra.mxu0 %v5470
    %5482 = vmatprep.subr.mxu0 %v5467
    %5483 = vmatpush1.msra.mxu0 %v5466
    %5484 = vmatprep.subr.mxu0 %v5463
    %5485 = vmatpush1.msra.mxu0 %v5462
    %5486 = vmatprep.subr.mxu0 %v5459
    %5487 = vmatpush1.msra.mxu0 %v5458
    %5488 = vmatprep.subr.mxu0 %v5455
    %5489 = vmatpush1.msra.mxu0 %v5454
    %5490 = vmatprep.subr.mxu0 %v5451
    %5491 = vmatpush1.msra.mxu0 %v5450
    %5492 = vmatprep.subr.mxu0 %v5447
    %5493 = vmatpush1.msra.mxu0 %v5446
    %5494 = vmatprep.subr.mxu0 %v5443
    %5495 = vmatpush1.msra.mxu0 %v5442
    %5496 = vmatprep.subr.mxu0 %v5439
    %5497 = vmatpush1.msra.mxu0 %v5438
    %5498 = vmatprep.subr.mxu0 %v5435
    %5499 = vmatpush1.msra.mxu0 %v5434
    %5500 = vmatprep.subr.mxu0 %v5431
    %5501 = vmatpush1.msra.mxu0 %v5430
    %5502 = vmatprep.subr.mxu0 %v5427
    %5503 = vmatpush1.msra.mxu0 %v5426
    %5504 = vmatprep.subr.mxu0 %v5423
    %5505 = vmatpush1.msra.mxu0 %v5422
    %5506 = vmatprep.subr.mxu0 %v5419
    %5507 = vmatpush1.msra.mxu0 %v5418
    %5508 = vmatprep.subr.mxu0 %v5415
    %5509 = vmatpush1.msra.mxu0 %v5414
    %5510 = vmatprep.subr.mxu0 0.0
    %5511 = vmatpush2.msra.mxu0 0.0
    %5512 = vmatprep.subr.mxu0 0.0
    %5513 = vmatpush2.msra.mxu0 0.0
    %5514 = vmatprep.subr.mxu0 0.0
    %5515 = vmatpush2.msra.mxu0 0.0
    %5516 = vmatprep.subr.mxu0 0.0
    %5517 = vmatpush2.msra.mxu0 0.0
    %5518 = vmatprep.subr.mxu0 0.0
    %5519 = vmatpush2.msra.mxu0 0.0
    %5520 = vmatprep.subr.mxu0 0.0
    %5521 = vmatpush2.msra.mxu0 0.0
    %5522 = vmatprep.subr.mxu0 0.0
    %5523 = vmatpush2.msra.mxu0 0.0
    %5524 = vmatprep.subr.mxu0 0.0
    %5525 = vmatpush2.msra.mxu0 0.0
    %5526 = vmatprep.subr.mxu0 0.0
    %5527 = vmatpush2.msra.mxu0 0.0
    %5528 = vmatprep.subr.mxu0 0.0
    %5529 = vmatpush2.msra.mxu0 0.0
    %5530 = vmatprep.subr.mxu0 0.0
    %5531 = vmatpush2.msra.mxu0 0.0
    %5532 = vmatprep.subr.mxu0 0.0
    %5533 = vmatpush2.msra.mxu0 0.0
    %5534 = vmatprep.subr.mxu0 0.0
    %5535 = vmatpush2.msra.mxu0 0.0
    %5536 = vmatprep.subr.mxu0 0.0
    %5537 = vmatpush2.msra.mxu0 0.0
    %5538 = vmatprep.subr.mxu0 0.0
    %5539 = vmatpush2.msra.mxu0 0.0
    %5540 = vmatprep.subr.mxu0 0.0
    %5541 = vmatpush2.msra.mxu0 0.0
    %5542 = vmatprep.mubr.f32.mxu0 0.0
    %5543 = vmatmul.mubr.f32.gmra.mxu0 0.0
    %v5544 = vpop.f32.mrf.mxu0
    %v5545 = vadd.f32 0.0, %v5544
    %v5546 = vpop.f32.mrf.mxu0
    %v5547 = vadd.f32 0.0, %v5546
    %5548 = vdwg.mxu0
    %5549 = vmatprep.subr.mxu0 %v5477
    %5550 = vmatpush1.msra.mxu0 %v5476
    %5551 = vmatprep.subr.mxu0 %v5473
    %5552 = vmatpush1.msra.mxu0 %v5472
    %5553 = vmatprep.subr.mxu0 %v5469
    %5554 = vmatpush1.msra.mxu0 %v5468
    %5555 = vmatprep.subr.mxu0 %v5465
    %5556 = vmatpush1.msra.mxu0 %v5464
    %5557 = vmatprep.subr.mxu0 %v5461
    %5558 = vmatpush1.msra.mxu0 %v5460
    %5559 = vmatprep.subr.mxu0 %v5457
    %5560 = vmatpush1.msra.mxu0 %v5456
    %5561 = vmatprep.subr.mxu0 %v5453
    %5562 = vmatpush1.msra.mxu0 %v5452
    %5563 = vmatprep.subr.mxu0 %v5449
    %5564 = vmatpush1.msra.mxu0 %v5448
    %5565 = vmatprep.subr.mxu0 %v5445
    %5566 = vmatpush1.msra.mxu0 %v5444
    %5567 = vmatprep.subr.mxu0 %v5441
    %5568 = vmatpush1.msra.mxu0 %v5440
    %5569 = vmatprep.subr.mxu0 %v5437
    %5570 = vmatpush1.msra.mxu0 %v5436
    %5571 = vmatprep.subr.mxu0 %v5433
    %5572 = vmatpush1.msra.mxu0 %v5432
    %5573 = vmatprep.subr.mxu0 %v5429
    %5574 = vmatpush1.msra.mxu0 %v5428
    %5575 = vmatprep.subr.mxu0 %v5425
    %5576 = vmatpush1.msra.mxu0 %v5424
    %5577 = vmatprep.subr.mxu0 %v5421
    %5578 = vmatpush1.msra.mxu0 %v5420
    %5579 = vmatprep.subr.mxu0 %v5417
    %5580 = vmatpush1.msra.mxu0 %v5416
    %5581 = vmatprep.subr.mxu0 0.0
    %5582 = vmatpush2.msra.mxu0 0.0
    %5583 = vmatprep.subr.mxu0 0.0
    %5584 = vmatpush2.msra.mxu0 0.0
    %5585 = vmatprep.subr.mxu0 0.0
    %5586 = vmatpush2.msra.mxu0 0.0
    %5587 = vmatprep.subr.mxu0 0.0
    %5588 = vmatpush2.msra.mxu0 0.0
    %5589 = vmatprep.subr.mxu0 0.0
    %5590 = vmatpush2.msra.mxu0 0.0
    %5591 = vmatprep.subr.mxu0 0.0
    %5592 = vmatpush2.msra.mxu0 0.0
    %5593 = vmatprep.subr.mxu0 0.0
    %5594 = vmatpush2.msra.mxu0 0.0
    %5595 = vmatprep.subr.mxu0 0.0
    %5596 = vmatpush2.msra.mxu0 0.0
    %5597 = vmatprep.subr.mxu0 0.0
    %5598 = vmatpush2.msra.mxu0 0.0
    %5599 = vmatprep.subr.mxu0 0.0
    %5600 = vmatpush2.msra.mxu0 0.0
    %5601 = vmatprep.subr.mxu0 0.0
    %5602 = vmatpush2.msra.mxu0 0.0
    %5603 = vmatprep.subr.mxu0 0.0
    %5604 = vmatpush2.msra.mxu0 0.0
    %5605 = vmatprep.subr.mxu0 0.0
    %5606 = vmatpush2.msra.mxu0 0.0
    %5607 = vmatprep.subr.mxu0 0.0
    %5608 = vmatpush2.msra.mxu0 0.0
    %5609 = vmatprep.subr.mxu0 0.0
    %5610 = vmatpush2.msra.mxu0 0.0
    %5611 = vmatprep.subr.mxu0 0.0
    %5612 = vmatpush2.msra.mxu0 0.0
    %5613 = vmatprep.mubr.f32.mxu0 0.0
    %5614 = vmatmul.mubr.f32.gmra.mxu0 0.0
    %v5615 = vpop.f32.mrf.mxu0
    %v5616 = vadd.f32 0.0, %v5615
    %v5617 = vpop.f32.mrf.mxu0
    %v5618 = vadd.f32 0.0, %v5617
    %5619 = vdwg.mxu0
    %v5620 = vadd.f32 %v5410, %v5545
    %v5621 = vadd.f32 %v5411, %v5547
    %v5622 = vadd.f32 %v5412, %v5616
    %v5623 = vadd.f32 %v5413, %v5618
    %v5624 = vxor.u32 %v5620, 2147483648
    %v5625 = vmul.f32 %v5624, 1.442695
    %v5626 = vpow.pop %v5625
    %v5627 = vadd.f32 %v5626, 1.0
    %v5628 = vrcp.pop %v5627
    %v5629 = vmul.f32 1.0, %v5628
    %v5630 = vxor.u32 %v5621, 2147483648
    %v5631 = vmul.f32 %v5630, 1.442695
    %v5632 = vpow.pop %v5631
    %v5633 = vadd.f32 %v5632, 1.0
    %v5634 = vrcp.pop %v5633
    %v5635 = vmul.f32 1.0, %v5634
    %v5636 = vtanh.pop %v5622
    %v5637 = vxor.u32 %v5623, 2147483648
    %v5638 = vmul.f32 %v5637, 1.442695
    %v5639 = vpow.pop %v5638
    %v5640 = vadd.f32 %v5639, 1.0
    %v5641 = vrcp.pop %v5640
    %v5642 = vmul.f32 1.0, %v5641
    %v5643 = vmul.f32 %v5635, 0.0
    %v5644 = vmul.f32 %v5629, %v5636
    %v5645 = vadd.f32 %v5643, %v5644
    %v5646 = vtanh.pop %v5645
    %v5647 = vmul.f32 %v5642, %v5646
    %v5648 = vld [vmem:[#allocation3 + $0xe0] sm:$0xff]
    %v5649 = vld [vmem:[#allocation3 + $0xe8] sm:$0xff]
    %v5650 = vld [vmem:[#allocation3 + $0xf0] sm:$0xff]
    %v5651 = vld [vmem:[#allocation3 + $0xf8] sm:$0xff]
    %v5652 = vld [vmem:[#allocation8] sm:$0xff]
    %v5653 = vld [vmem:[#allocation8 + $0x8] sm:$0xff]
    %v5654 = vld [vmem:[#allocation8 + $0x10] sm:$0xff]
    %v5655 = vld [vmem:[#allocation8 + $0x18] sm:$0xff]
    %v5656 = vld [vmem:[#allocation8 + $0x20] sm:$0xff]
    %v5657 = vld [vmem:[#allocation8 + $0x28] sm:$0xff]
    %v5658 = vld [vmem:[#allocation8 + $0x30] sm:$0xff]
    %v5659 = vld [vmem:[#allocation8 + $0x38] sm:$0xff]
    %v5660 = vld [vmem:[#allocation8 + $0x40] sm:$0xff]
    %v5661 = vld [vmem:[#allocation8 + $0x48] sm:$0xff]
    %v5662 = vld [vmem:[#allocation8 + $0x50] sm:$0xff]
    %v5663 = vld [vmem:[#allocation8 + $0x58] sm:$0xff]
    %v5664 = vld [vmem:[#allocation8 + $0x60] sm:$0xff]
    %v5665 = vld [vmem:[#allocation8 + $0x68] sm:$0xff]
    %v5666 = vld [vmem:[#allocation8 + $0x70] sm:$0xff]
    %v5667 = vld [vmem:[#allocation8 + $0x78] sm:$0xff]
    %v5668 = vld [vmem:[#allocation8 + $0x80] sm:$0xff]
    %v5669 = vld [vmem:[#allocation8 + $0x88] sm:$0xff]
    %v5670 = vld [vmem:[#allocation8 + $0x90] sm:$0xff]
    %v5671 = vld [vmem:[#allocation8 + $0x98] sm:$0xff]
    %v5672 = vld [vmem:[#allocation8 + $0xa0] sm:$0xff]
    %v5673 = vld [vmem:[#allocation8 + $0xa8] sm:$0xff]
    %v5674 = vld [vmem:[#allocation8 + $0xb0] sm:$0xff]
    %v5675 = vld [vmem:[#allocation8 + $0xb8] sm:$0xff]
    %v5676 = vld [vmem:[#allocation8 + $0xc0] sm:$0xff]
    %v5677 = vld [vmem:[#allocation8 + $0xc8] sm:$0xff]
    %v5678 = vld [vmem:[#allocation8 + $0xd0] sm:$0xff]
    %v5679 = vld [vmem:[#allocation8 + $0xd8] sm:$0xff]
    %v5680 = vld [vmem:[#allocation8 + $0xe0] sm:$0xff]
    %v5681 = vld [vmem:[#allocation8 + $0xe8] sm:$0xff]
    %v5682 = vld [vmem:[#allocation8 + $0xf0] sm:$0xff]
    %v5683 = vld [vmem:[#allocation8 + $0xf8] sm:$0xff]
    %v5684 = vld [vmem:[#allocation8 + $0x100] sm:$0xff]
    %v5685 = vld [vmem:[#allocation8 + $0x108] sm:$0xff]
    %v5686 = vld [vmem:[#allocation8 + $0x110] sm:$0xff]
    %v5687 = vld [vmem:[#allocation8 + $0x118] sm:$0xff]
    %v5688 = vld [vmem:[#allocation8 + $0x120] sm:$0xff]
    %v5689 = vld [vmem:[#allocation8 + $0x128] sm:$0xff]
    %v5690 = vld [vmem:[#allocation8 + $0x130] sm:$0xff]
    %v5691 = vld [vmem:[#allocation8 + $0x138] sm:$0xff]
    %v5692 = vld [vmem:[#allocation8 + $0x140] sm:$0xff]
    %v5693 = vld [vmem:[#allocation8 + $0x148] sm:$0xff]
    %v5694 = vld [vmem:[#allocation8 + $0x150] sm:$0xff]
    %v5695 = vld [vmem:[#allocation8 + $0x158] sm:$0xff]
    %v5696 = vld [vmem:[#allocation8 + $0x160] sm:$0xff]
    %v5697 = vld [vmem:[#allocation8 + $0x168] sm:$0xff]
    %v5698 = vld [vmem:[#allocation8 + $0x170] sm:$0xff]
    %v5699 = vld [vmem:[#allocation8 + $0x178] sm:$0xff]
    %v5700 = vld [vmem:[#allocation8 + $0x180] sm:$0xff]
    %v5701 = vld [vmem:[#allocation8 + $0x188] sm:$0xff]
    %v5702 = vld [vmem:[#allocation8 + $0x190] sm:$0xff]
    %v5703 = vld [vmem:[#allocation8 + $0x198] sm:$0xff]
    %v5704 = vld [vmem:[#allocation8 + $0x1a0] sm:$0xff]
    %v5705 = vld [vmem:[#allocation8 + $0x1a8] sm:$0xff]
    %v5706 = vld [vmem:[#allocation8 + $0x1b0] sm:$0xff]
    %v5707 = vld [vmem:[#allocation8 + $0x1b8] sm:$0xff]
    %v5708 = vld [vmem:[#allocation8 + $0x1c0] sm:$0xff]
    %v5709 = vld [vmem:[#allocation8 + $0x1c8] sm:$0xff]
    %v5710 = vld [vmem:[#allocation8 + $0x1d0] sm:$0xff]
    %v5711 = vld [vmem:[#allocation8 + $0x1d8] sm:$0xff]
    %v5712 = vld [vmem:[#allocation8 + $0x1e0] sm:$0xff]
    %v5713 = vld [vmem:[#allocation8 + $0x1e8] sm:$0xff]
    %v5714 = vld [vmem:[#allocation8 + $0x1f0] sm:$0xff]
    %v5715 = vld [vmem:[#allocation8 + $0x1f8] sm:$0xff]
    %5716 = vmatprep.subr.mxu0 %v5713
    %5717 = vmatpush1.msra.mxu0 %v5712
    %5718 = vmatprep.subr.mxu0 %v5709
    %5719 = vmatpush1.msra.mxu0 %v5708
    %5720 = vmatprep.subr.mxu0 %v5705
    %5721 = vmatpush1.msra.mxu0 %v5704
    %5722 = vmatprep.subr.mxu0 %v5701
    %5723 = vmatpush1.msra.mxu0 %v5700
    %5724 = vmatprep.subr.mxu0 %v5697
    %5725 = vmatpush1.msra.mxu0 %v5696
    %5726 = vmatprep.subr.mxu0 %v5693
    %5727 = vmatpush1.msra.mxu0 %v5692
    %5728 = vmatprep.subr.mxu0 %v5689
    %5729 = vmatpush1.msra.mxu0 %v5688
    %5730 = vmatprep.subr.mxu0 %v5685
    %5731 = vmatpush1.msra.mxu0 %v5684
    %5732 = vmatprep.subr.mxu0 %v5681
    %5733 = vmatpush1.msra.mxu0 %v5680
    %5734 = vmatprep.subr.mxu0 %v5677
    %5735 = vmatpush1.msra.mxu0 %v5676
    %5736 = vmatprep.subr.mxu0 %v5673
    %5737 = vmatpush1.msra.mxu0 %v5672
    %5738 = vmatprep.subr.mxu0 %v5669
    %5739 = vmatpush1.msra.mxu0 %v5668
    %5740 = vmatprep.subr.mxu0 %v5665
    %5741 = vmatpush1.msra.mxu0 %v5664
    %5742 = vmatprep.subr.mxu0 %v5661
    %5743 = vmatpush1.msra.mxu0 %v5660
    %5744 = vmatprep.subr.mxu0 %v5657
    %5745 = vmatpush1.msra.mxu0 %v5656
    %5746 = vmatprep.subr.mxu0 %v5653
    %5747 = vmatpush1.msra.mxu0 %v5652
    %5748 = vmatprep.subr.mxu0 0.0
    %5749 = vmatpush2.msra.mxu0 0.0
    %5750 = vmatprep.subr.mxu0 0.0
    %5751 = vmatpush2.msra.mxu0 0.0
    %5752 = vmatprep.subr.mxu0 0.0
    %5753 = vmatpush2.msra.mxu0 0.0
    %5754 = vmatprep.subr.mxu0 0.0
    %5755 = vmatpush2.msra.mxu0 0.0
    %5756 = vmatprep.subr.mxu0 0.0
    %5757 = vmatpush2.msra.mxu0 0.0
    %5758 = vmatprep.subr.mxu0 0.0
    %5759 = vmatpush2.msra.mxu0 0.0
    %5760 = vmatprep.subr.mxu0 0.0
    %5761 = vmatpush2.msra.mxu0 0.0
    %5762 = vmatprep.subr.mxu0 0.0
    %5763 = vmatpush2.msra.mxu0 0.0
    %5764 = vmatprep.subr.mxu0 0.0
    %5765 = vmatpush2.msra.mxu0 0.0
    %5766 = vmatprep.subr.mxu0 0.0
    %5767 = vmatpush2.msra.mxu0 0.0
    %5768 = vmatprep.subr.mxu0 0.0
    %5769 = vmatpush2.msra.mxu0 0.0
    %5770 = vmatprep.subr.mxu0 0.0
    %5771 = vmatpush2.msra.mxu0 0.0
    %5772 = vmatprep.subr.mxu0 0.0
    %5773 = vmatpush2.msra.mxu0 0.0
    %5774 = vmatprep.subr.mxu0 0.0
    %5775 = vmatpush2.msra.mxu0 0.0
    %5776 = vmatprep.subr.mxu0 0.0
    %5777 = vmatpush2.msra.mxu0 0.0
    %5778 = vmatprep.subr.mxu0 0.0
    %5779 = vmatpush2.msra.mxu0 0.0
    %5780 = vmatprep.mubr.f32.mxu0 0.0
    %5781 = vmatmul.mubr.f32.gmra.mxu0 0.0
    %v5782 = vpop.f32.mrf.mxu0
    %v5783 = vadd.f32 0.0, %v5782
    %v5784 = vpop.f32.mrf.mxu0
    %v5785 = vadd.f32 0.0, %v5784
    %5786 = vdwg.mxu0
    %5787 = vmatprep.subr.mxu0 %v5715
    %5788 = vmatpush1.msra.mxu0 %v5714
    %5789 = vmatprep.subr.mxu0 %v5711
    %5790 = vmatpush1.msra.mxu0 %v5710
    %5791 = vmatprep.subr.mxu0 %v5707
    %5792 = vmatpush1.msra.mxu0 %v5706
    %5793 = vmatprep.subr.mxu0 %v5703
    %5794 = vmatpush1.msra.mxu0 %v5702
    %5795 = vmatprep.subr.mxu0 %v5699
    %5796 = vmatpush1.msra.mxu0 %v5698
    %5797 = vmatprep.subr.mxu0 %v5695
    %5798 = vmatpush1.msra.mxu0 %v5694
    %5799 = vmatprep.subr.mxu0 %v5691
    %5800 = vmatpush1.msra.mxu0 %v5690
    %5801 = vmatprep.subr.mxu0 %v5687
    %5802 = vmatpush1.msra.mxu0 %v5686
    %5803 = vmatprep.subr.mxu0 %v5683
    %5804 = vmatpush1.msra.mxu0 %v5682
    %5805 = vmatprep.subr.mxu0 %v5679
    %5806 = vmatpush1.msra.mxu0 %v5678
    %5807 = vmatprep.subr.mxu0 %v5675
    %5808 = vmatpush1.msra.mxu0 %v5674
    %5809 = vmatprep.subr.mxu0 %v5671
    %5810 = vmatpush1.msra.mxu0 %v5670
    %5811 = vmatprep.subr.mxu0 %v5667
    %5812 = vmatpush1.msra.mxu0 %v5666
    %5813 = vmatprep.subr.mxu0 %v5663
    %5814 = vmatpush1.msra.mxu0 %v5662
    %5815 = vmatprep.subr.mxu0 %v5659
    %5816 = vmatpush1.msra.mxu0 %v5658
    %5817 = vmatprep.subr.mxu0 %v5655
    %5818 = vmatpush1.msra.mxu0 %v5654
    %5819 = vmatprep.subr.mxu0 0.0
    %5820 = vmatpush2.msra.mxu0 0.0
    %5821 = vmatprep.subr.mxu0 0.0
    %5822 = vmatpush2.msra.mxu0 0.0
    %5823 = vmatprep.subr.mxu0 0.0
    %5824 = vmatpush2.msra.mxu0 0.0
    %5825 = vmatprep.subr.mxu0 0.0
    %5826 = vmatpush2.msra.mxu0 0.0
    %5827 = vmatprep.subr.mxu0 0.0
    %5828 = vmatpush2.msra.mxu0 0.0
    %5829 = vmatprep.subr.mxu0 0.0
    %5830 = vmatpush2.msra.mxu0 0.0
    %5831 = vmatprep.subr.mxu0 0.0
    %5832 = vmatpush2.msra.mxu0 0.0
    %5833 = vmatprep.subr.mxu0 0.0
    %5834 = vmatpush2.msra.mxu0 0.0
    %5835 = vmatprep.subr.mxu0 0.0
    %5836 = vmatpush2.msra.mxu0 0.0
    %5837 = vmatprep.subr.mxu0 0.0
    %5838 = vmatpush2.msra.mxu0 0.0
    %5839 = vmatprep.subr.mxu0 0.0
    %5840 = vmatpush2.msra.mxu0 0.0
    %5841 = vmatprep.subr.mxu0 0.0
    %5842 = vmatpush2.msra.mxu0 0.0
    %5843 = vmatprep.subr.mxu0 0.0
    %5844 = vmatpush2.msra.mxu0 0.0
    %5845 = vmatprep.subr.mxu0 0.0
    %5846 = vmatpush2.msra.mxu0 0.0
    %5847 = vmatprep.subr.mxu0 0.0
    %5848 = vmatpush2.msra.mxu0 0.0
    %5849 = vmatprep.subr.mxu0 0.0
    %5850 = vmatpush2.msra.mxu0 0.0
    %5851 = vmatprep.mubr.f32.mxu0 0.0
    %5852 = vmatmul.mubr.f32.gmra.mxu0 0.0
    %v5853 = vpop.f32.mrf.mxu0
    %v5854 = vadd.f32 0.0, %v5853
    %v5855 = vpop.f32.mrf.mxu0
    %v5856 = vadd.f32 0.0, %v5855
    %5857 = vdwg.mxu0
    %v5858 = vadd.f32 %v5648, %v5783
    %v5859 = vadd.f32 %v5649, %v5785
    %v5860 = vadd.f32 %v5650, %v5854
    %v5861 = vadd.f32 %v5651, %v5856
    %v5862 = vxor.u32 %v5858, 2147483648
    %v5863 = vmul.f32 %v5862, 1.442695
    %v5864 = vpow.pop %v5863
    %v5865 = vadd.f32 %v5864, 1.0
    %v5866 = vrcp.pop %v5865
    %v5867 = vmul.f32 1.0, %v5866
    %v5868 = vxor.u32 %v5859, 2147483648
    %v5869 = vmul.f32 %v5868, 1.442695
    %v5870 = vpow.pop %v5869
    %v5871 = vadd.f32 %v5870, 1.0
    %v5872 = vrcp.pop %v5871
    %v5873 = vmul.f32 1.0, %v5872
    %v5874 = vtanh.pop %v5860
    %v5875 = vxor.u32 %v5861, 2147483648
    %v5876 = vmul.f32 %v5875, 1.442695
    %v5877 = vpow.pop %v5876
    %v5878 = vadd.f32 %v5877, 1.0
    %v5879 = vrcp.pop %v5878
    %v5880 = vmul.f32 1.0, %v5879
    %v5881 = vmul.f32 %v5873, 0.0
    %v5882 = vmul.f32 %v5867, %v5874
    %v5883 = vadd.f32 %v5881, %v5882
    %v5884 = vtanh.pop %v5883
    %v5885 = vmul.f32 %v5880, %v5884
    %v5886 = vld [vmem:[#allocation2 + $0x20] sm:$0xff]
    %v5887 = vld [vmem:[#allocation2 + $0x28] sm:$0xff]
    %v5888 = vld [vmem:[#allocation2 + $0x30] sm:$0xff]
    %v5889 = vld [vmem:[#allocation2 + $0x38] sm:$0xff]
    %5890 = vmatprep.subr.mxu0 %v5475
    %5891 = vmatpush1.msra.mxu0 %v5474
    %5892 = vmatprep.subr.mxu0 %v5471
    %5893 = vmatpush1.msra.mxu0 %v5470
    %5894 = vmatprep.subr.mxu0 %v5467
    %5895 = vmatpush1.msra.mxu0 %v5466
    %5896 = vmatprep.subr.mxu0 %v5463
    %5897 = vmatpush1.msra.mxu0 %v5462
    %5898 = vmatprep.subr.mxu0 %v5459
    %5899 = vmatpush1.msra.mxu0 %v5458
    %5900 = vmatprep.subr.mxu0 %v5455
    %5901 = vmatpush1.msra.mxu0 %v5454
    %5902 = vmatprep.subr.mxu0 %v5451
    %5903 = vmatpush1.msra.mxu0 %v5450
    %5904 = vmatprep.subr.mxu0 %v5447
    %5905 = vmatpush1.msra.mxu0 %v5446
    %5906 = vmatprep.subr.mxu0 %v5443
    %5907 = vmatpush1.msra.mxu0 %v5442
    %5908 = vmatprep.subr.mxu0 %v5439
    %5909 = vmatpush1.msra.mxu0 %v5438
    %5910 = vmatprep.subr.mxu0 %v5435
    %5911 = vmatpush1.msra.mxu0 %v5434
    %5912 = vmatprep.subr.mxu0 %v5431
    %5913 = vmatpush1.msra.mxu0 %v5430
    %5914 = vmatprep.subr.mxu0 %v5427
    %5915 = vmatpush1.msra.mxu0 %v5426
    %5916 = vmatprep.subr.mxu0 %v5423
    %5917 = vmatpush1.msra.mxu0 %v5422
    %5918 = vmatprep.subr.mxu0 %v5419
    %5919 = vmatpush1.msra.mxu0 %v5418
    %5920 = vmatprep.subr.mxu0 %v5415
    %5921 = vmatpush1.msra.mxu0 %v5414
    %5922 = vmatprep.subr.mxu0 0.0
    %5923 = vmatpush2.msra.mxu0 0.0
    %5924 = vmatprep.subr.mxu0 0.0
    %5925 = vmatpush2.msra.mxu0 0.0
    %5926 = vmatprep.subr.mxu0 0.0
    %5927 = vmatpush2.msra.mxu0 0.0
    %5928 = vmatprep.subr.mxu0 0.0
    %5929 = vmatpush2.msra.mxu0 0.0
    %5930 = vmatprep.subr.mxu0 0.0
    %5931 = vmatpush2.msra.mxu0 0.0
    %5932 = vmatprep.subr.mxu0 0.0
    %5933 = vmatpush2.msra.mxu0 0.0
    %5934 = vmatprep.subr.mxu0 0.0
    %5935 = vmatpush2.msra.mxu0 0.0
    %5936 = vmatprep.subr.mxu0 0.0
    %5937 = vmatpush2.msra.mxu0 0.0
    %5938 = vmatprep.subr.mxu0 0.0
    %5939 = vmatpush2.msra.mxu0 0.0
    %5940 = vmatprep.subr.mxu0 0.0
    %5941 = vmatpush2.msra.mxu0 0.0
    %5942 = vmatprep.subr.mxu0 0.0
    %5943 = vmatpush2.msra.mxu0 0.0
    %5944 = vmatprep.subr.mxu0 0.0
    %5945 = vmatpush2.msra.mxu0 0.0
    %5946 = vmatprep.subr.mxu0 0.0
    %5947 = vmatpush2.msra.mxu0 0.0
    %5948 = vmatprep.subr.mxu0 0.0
    %5949 = vmatpush2.msra.mxu0 0.0
    %5950 = vmatprep.subr.mxu0 0.0
    %5951 = vmatpush2.msra.mxu0 0.0
    %5952 = vmatprep.subr.mxu0 0.0
    %5953 = vmatpush2.msra.mxu0 0.0
    %5954 = vmatprep.mubr.f32.mxu0 0.0
    %5955 = vmatmul.mubr.f32.gmra.mxu0 %v5647
    %v5956 = vpop.f32.mrf.mxu0
    %v5957 = vadd.f32 0.0, %v5956
    %v5958 = vpop.f32.mrf.mxu0
    %v5959 = vadd.f32 0.0, %v5958
    %5960 = vdwg.mxu0
    %5961 = vmatprep.subr.mxu0 %v5477
    %5962 = vmatpush1.msra.mxu0 %v5476
    %5963 = vmatprep.subr.mxu0 %v5473
    %5964 = vmatpush1.msra.mxu0 %v5472
    %5965 = vmatprep.subr.mxu0 %v5469
    %5966 = vmatpush1.msra.mxu0 %v5468
    %5967 = vmatprep.subr.mxu0 %v5465
    %5968 = vmatpush1.msra.mxu0 %v5464
    %5969 = vmatprep.subr.mxu0 %v5461
    %5970 = vmatpush1.msra.mxu0 %v5460
    %5971 = vmatprep.subr.mxu0 %v5457
    %5972 = vmatpush1.msra.mxu0 %v5456
    %5973 = vmatprep.subr.mxu0 %v5453
    %5974 = vmatpush1.msra.mxu0 %v5452
    %5975 = vmatprep.subr.mxu0 %v5449
    %5976 = vmatpush1.msra.mxu0 %v5448
    %5977 = vmatprep.subr.mxu0 %v5445
    %5978 = vmatpush1.msra.mxu0 %v5444
    %5979 = vmatprep.subr.mxu0 %v5441
    %5980 = vmatpush1.msra.mxu0 %v5440
    %5981 = vmatprep.subr.mxu0 %v5437
    %5982 = vmatpush1.msra.mxu0 %v5436
    %5983 = vmatprep.subr.mxu0 %v5433
    %5984 = vmatpush1.msra.mxu0 %v5432
    %5985 = vmatprep.subr.mxu0 %v5429
    %5986 = vmatpush1.msra.mxu0 %v5428
    %5987 = vmatprep.subr.mxu0 %v5425
    %5988 = vmatpush1.msra.mxu0 %v5424
    %5989 = vmatprep.subr.mxu0 %v5421
    %5990 = vmatpush1.msra.mxu0 %v5420
    %5991 = vmatprep.subr.mxu0 %v5417
    %5992 = vmatpush1.msra.mxu0 %v5416
    %5993 = vmatprep.subr.mxu0 0.0
    %5994 = vmatpush2.msra.mxu0 0.0
    %5995 = vmatprep.subr.mxu0 0.0
    %5996 = vmatpush2.msra.mxu0 0.0
    %5997 = vmatprep.subr.mxu0 0.0
    %5998 = vmatpush2.msra.mxu0 0.0
    %5999 = vmatprep.subr.mxu0 0.0
    %6000 = vmatpush2.msra.mxu0 0.0
    %6001 = vmatprep.subr.mxu0 0.0
    %6002 = vmatpush2.msra.mxu0 0.0
    %6003 = vmatprep.subr.mxu0 0.0
    %6004 = vmatpush2.msra.mxu0 0.0
    %6005 = vmatprep.subr.mxu0 0.0
    %6006 = vmatpush2.msra.mxu0 0.0
    %6007 = vmatprep.subr.mxu0 0.0
    %6008 = vmatpush2.msra.mxu0 0.0
    %6009 = vmatprep.subr.mxu0 0.0
    %6010 = vmatpush2.msra.mxu0 0.0
    %6011 = vmatprep.subr.mxu0 0.0
    %6012 = vmatpush2.msra.mxu0 0.0
    %6013 = vmatprep.subr.mxu0 0.0
    %6014 = vmatpush2.msra.mxu0 0.0
    %6015 = vmatprep.subr.mxu0 0.0
    %6016 = vmatpush2.msra.mxu0 0.0
    %6017 = vmatprep.subr.mxu0 0.0
    %6018 = vmatpush2.msra.mxu0 0.0
    %6019 = vmatprep.subr.mxu0 0.0
    %6020 = vmatpush2.msra.mxu0 0.0
    %6021 = vmatprep.subr.mxu0 0.0
    %6022 = vmatpush2.msra.mxu0 0.0
    %6023 = vmatprep.subr.mxu0 0.0
    %6024 = vmatpush2.msra.mxu0 0.0
    %6025 = vmatprep.mubr.f32.mxu0 0.0
    %6026 = vmatmul.mubr.f32.gmra.mxu0 %v5647
    %v6027 = vpop.f32.mrf.mxu0
    %v6028 = vadd.f32 0.0, %v6027
    %v6029 = vpop.f32.mrf.mxu0
    %v6030 = vadd.f32 0.0, %v6029
    %6031 = vdwg.mxu0
    %v6032 = vadd.f32 %v5886, %v5957
    %v6033 = vadd.f32 %v5887, %v5959
    %v6034 = vadd.f32 %v5888, %v6028
    %v6035 = vadd.f32 %v5889, %v6030
    %v6036 = vxor.u32 %v6032, 2147483648
    %v6037 = vmul.f32 %v6036, 1.442695
    %v6038 = vpow.pop %v6037
    %v6039 = vadd.f32 %v6038, 1.0
    %v6040 = vrcp.pop %v6039
    %v6041 = vmul.f32 1.0, %v6040
    %v6042 = vxor.u32 %v6033, 2147483648
    %v6043 = vmul.f32 %v6042, 1.442695
    %v6044 = vpow.pop %v6043
    %v6045 = vadd.f32 %v6044, 1.0
    %v6046 = vrcp.pop %v6045
    %v6047 = vmul.f32 1.0, %v6046
    %v6048 = vtanh.pop %v6034
    %v6049 = vxor.u32 %v6035, 2147483648
    %v6050 = vmul.f32 %v6049, 1.442695
    %v6051 = vpow.pop %v6050
    %v6052 = vadd.f32 %v6051, 1.0
    %v6053 = vrcp.pop %v6052
    %v6054 = vmul.f32 1.0, %v6053
    %v6055 = vmul.f32 %v6047, %v5645
    %v6056 = vmul.f32 %v6041, %v6048
    %v6057 = vadd.f32 %v6055, %v6056
    %v6058 = vtanh.pop %v6057
    %v6059 = vmul.f32 %v6054, %v6058
    %v6060 = vld [vmem:[#allocation2 + $0x40] sm:$0xff]
    %v6061 = vld [vmem:[#allocation2 + $0x48] sm:$0xff]
    %v6062 = vld [vmem:[#allocation2 + $0x50] sm:$0xff]
    %v6063 = vld [vmem:[#allocation2 + $0x58] sm:$0xff]
    %6064 = vmatprep.subr.mxu0 %v5475
    %6065 = vmatpush1.msra.mxu0 %v5474
    %6066 = vmatprep.subr.mxu0 %v5471
    %6067 = vmatpush1.msra.mxu0 %v5470
    %6068 = vmatprep.subr.mxu0 %v5467
    %6069 = vmatpush1.msra.mxu0 %v5466
    %6070 = vmatprep.subr.mxu0 %v5463
    %6071 = vmatpush1.msra.mxu0 %v5462
    %6072 = vmatprep.subr.mxu0 %v5459
    %6073 = vmatpush1.msra.mxu0 %v5458
    %6074 = vmatprep.subr.mxu0 %v5455
    %6075 = vmatpush1.msra.mxu0 %v5454
    %6076 = vmatprep.subr.mxu0 %v5451
    %6077 = vmatpush1.msra.mxu0 %v5450
    %6078 = vmatprep.subr.mxu0 %v5447
    %6079 = vmatpush1.msra.mxu0 %v5446
    %6080 = vmatprep.subr.mxu0 %v5443
    %6081 = vmatpush1.msra.mxu0 %v5442
    %6082 = vmatprep.subr.mxu0 %v5439
    %6083 = vmatpush1.msra.mxu0 %v5438
    %6084 = vmatprep.subr.mxu0 %v5435
    %6085 = vmatpush1.msra.mxu0 %v5434
    %6086 = vmatprep.subr.mxu0 %v5431
    %6087 = vmatpush1.msra.mxu0 %v5430
    %6088 = vmatprep.subr.mxu0 %v5427
    %6089 = vmatpush1.msra.mxu0 %v5426
    %6090 = vmatprep.subr.mxu0 %v5423
    %6091 = vmatpush1.msra.mxu0 %v5422
    %6092 = vmatprep.subr.mxu0 %v5419
    %6093 = vmatpush1.msra.mxu0 %v5418
    %6094 = vmatprep.subr.mxu0 %v5415
    %6095 = vmatpush1.msra.mxu0 %v5414
    %6096 = vmatprep.subr.mxu0 0.0
    %6097 = vmatpush2.msra.mxu0 0.0
    %6098 = vmatprep.subr.mxu0 0.0
    %6099 = vmatpush2.msra.mxu0 0.0
    %6100 = vmatprep.subr.mxu0 0.0
    %6101 = vmatpush2.msra.mxu0 0.0
    %6102 = vmatprep.subr.mxu0 0.0
    %6103 = vmatpush2.msra.mxu0 0.0
    %6104 = vmatprep.subr.mxu0 0.0
    %6105 = vmatpush2.msra.mxu0 0.0
    %6106 = vmatprep.subr.mxu0 0.0
    %6107 = vmatpush2.msra.mxu0 0.0
    %6108 = vmatprep.subr.mxu0 0.0
    %6109 = vmatpush2.msra.mxu0 0.0
    %6110 = vmatprep.subr.mxu0 0.0
    %6111 = vmatpush2.msra.mxu0 0.0
    %6112 = vmatprep.subr.mxu0 0.0
    %6113 = vmatpush2.msra.mxu0 0.0
    %6114 = vmatprep.subr.mxu0 0.0
    %6115 = vmatpush2.msra.mxu0 0.0
    %6116 = vmatprep.subr.mxu0 0.0
    %6117 = vmatpush2.msra.mxu0 0.0
    %6118 = vmatprep.subr.mxu0 0.0
    %6119 = vmatpush2.msra.mxu0 0.0
    %6120 = vmatprep.subr.mxu0 0.0
    %6121 = vmatpush2.msra.mxu0 0.0
    %6122 = vmatprep.subr.mxu0 0.0
    %6123 = vmatpush2.msra.mxu0 0.0
    %6124 = vmatprep.subr.mxu0 0.0
    %6125 = vmatpush2.msra.mxu0 0.0
    %6126 = vmatprep.subr.mxu0 0.0
    %6127 = vmatpush2.msra.mxu0 0.0
    %6128 = vmatprep.mubr.f32.mxu0 0.0
    %6129 = vmatmul.mubr.f32.gmra.mxu0 %v6059
    %v6130 = vpop.f32.mrf.mxu0
    %v6131 = vadd.f32 0.0, %v6130
    %v6132 = vpop.f32.mrf.mxu0
    %v6133 = vadd.f32 0.0, %v6132
    %6134 = vdwg.mxu0
    %6135 = vmatprep.subr.mxu0 %v5477
    %6136 = vmatpush1.msra.mxu0 %v5476
    %6137 = vmatprep.subr.mxu0 %v5473
    %6138 = vmatpush1.msra.mxu0 %v5472
    %6139 = vmatprep.subr.mxu0 %v5469
    %6140 = vmatpush1.msra.mxu0 %v5468
    %6141 = vmatprep.subr.mxu0 %v5465
    %6142 = vmatpush1.msra.mxu0 %v5464
    %6143 = vmatprep.subr.mxu0 %v5461
    %6144 = vmatpush1.msra.mxu0 %v5460
    %6145 = vmatprep.subr.mxu0 %v5457
    %6146 = vmatpush1.msra.mxu0 %v5456
    %6147 = vmatprep.subr.mxu0 %v5453
    %6148 = vmatpush1.msra.mxu0 %v5452
    %6149 = vmatprep.subr.mxu0 %v5449
    %6150 = vmatpush1.msra.mxu0 %v5448
    %6151 = vmatprep.subr.mxu0 %v5445
    %6152 = vmatpush1.msra.mxu0 %v5444
    %6153 = vmatprep.subr.mxu0 %v5441
    %6154 = vmatpush1.msra.mxu0 %v5440
    %6155 = vmatprep.subr.mxu0 %v5437
    %6156 = vmatpush1.msra.mxu0 %v5436
    %6157 = vmatprep.subr.mxu0 %v5433
    %6158 = vmatpush1.msra.mxu0 %v5432
    %6159 = vmatprep.subr.mxu0 %v5429
    %6160 = vmatpush1.msra.mxu0 %v5428
    %6161 = vmatprep.subr.mxu0 %v5425
    %6162 = vmatpush1.msra.mxu0 %v5424
    %6163 = vmatprep.subr.mxu0 %v5421
    %6164 = vmatpush1.msra.mxu0 %v5420
    %6165 = vmatprep.subr.mxu0 %v5417
    %6166 = vmatpush1.msra.mxu0 %v5416
    %6167 = vmatprep.subr.mxu0 0.0
    %6168 = vmatpush2.msra.mxu0 0.0
    %6169 = vmatprep.subr.mxu0 0.0
    %6170 = vmatpush2.msra.mxu0 0.0
    %6171 = vmatprep.subr.mxu0 0.0
    %6172 = vmatpush2.msra.mxu0 0.0
    %6173 = vmatprep.subr.mxu0 0.0
    %6174 = vmatpush2.msra.mxu0 0.0
    %6175 = vmatprep.subr.mxu0 0.0
    %6176 = vmatpush2.msra.mxu0 0.0
    %6177 = vmatprep.subr.mxu0 0.0
    %6178 = vmatpush2.msra.mxu0 0.0
    %6179 = vmatprep.subr.mxu0 0.0
    %6180 = vmatpush2.msra.mxu0 0.0
    %6181 = vmatprep.subr.mxu0 0.0
    %6182 = vmatpush2.msra.mxu0 0.0
    %6183 = vmatprep.subr.mxu0 0.0
    %6184 = vmatpush2.msra.mxu0 0.0
    %6185 = vmatprep.subr.mxu0 0.0
    %6186 = vmatpush2.msra.mxu0 0.0
    %6187 = vmatprep.subr.mxu0 0.0
    %6188 = vmatpush2.msra.mxu0 0.0
    %6189 = vmatprep.subr.mxu0 0.0
    %6190 = vmatpush2.msra.mxu0 0.0
    %6191 = vmatprep.subr.mxu0 0.0
    %6192 = vmatpush2.msra.mxu0 0.0
    %6193 = vmatprep.subr.mxu0 0.0
    %6194 = vmatpush2.msra.mxu0 0.0
    %6195 = vmatprep.subr.mxu0 0.0
    %6196 = vmatpush2.msra.mxu0 0.0
    %6197 = vmatprep.subr.mxu0 0.0
    %6198 = vmatpush2.msra.mxu0 0.0
    %6199 = vmatprep.mubr.f32.mxu0 0.0
    %6200 = vmatmul.mubr.f32.gmra.mxu0 %v6059
    %v6201 = vpop.f32.mrf.mxu0
    %v6202 = vadd.f32 0.0, %v6201
    %v6203 = vpop.f32.mrf.mxu0
    %v6204 = vadd.f32 0.0, %v6203
    %6205 = vdwg.mxu0
    %v6206 = vadd.f32 %v6060, %v6131
    %v6207 = vadd.f32 %v6061, %v6133
    %v6208 = vadd.f32 %v6062, %v6202
    %v6209 = vadd.f32 %v6063, %v6204
    %v6210 = vxor.u32 %v6206, 2147483648
    %v6211 = vmul.f32 %v6210, 1.442695
    %v6212 = vpow.pop %v6211
    %v6213 = vadd.f32 %v6212, 1.0
    %v6214 = vrcp.pop %v6213
    %v6215 = vmul.f32 1.0, %v6214
    %v6216 = vxor.u32 %v6207, 2147483648
    %v6217 = vmul.f32 %v6216, 1.442695
    %v6218 = vpow.pop %v6217
    %v6219 = vadd.f32 %v6218, 1.0
    %v6220 = vrcp.pop %v6219
    %v6221 = vmul.f32 1.0, %v6220
    %v6222 = vtanh.pop %v6208
    %v6223 = vxor.u32 %v6209, 2147483648
    %v6224 = vmul.f32 %v6223, 1.442695
    %v6225 = vpow.pop %v6224
    %v6226 = vadd.f32 %v6225, 1.0
    %v6227 = vrcp.pop %v6226
    %v6228 = vmul.f32 1.0, %v6227
    %v6229 = vmul.f32 %v6221, %v6057
    %v6230 = vmul.f32 %v6215, %v6222
    %v6231 = vadd.f32 %v6229, %v6230
    %v6232 = vtanh.pop %v6231
    %v6233 = vmul.f32 %v6228, %v6232
    %v6234 = vld [vmem:[#allocation2 + $0x60] sm:$0xff]
    %v6235 = vld [vmem:[#allocation2 + $0x68] sm:$0xff]
    %v6236 = vld [vmem:[#allocation2 + $0x70] sm:$0xff]
    %v6237 = vld [vmem:[#allocation2 + $0x78] sm:$0xff]
    %6238 = vmatprep.subr.mxu0 %v5475
    %6239 = vmatpush1.msra.mxu0 %v5474
    %6240 = vmatprep.subr.mxu0 %v5471
    %6241 = vmatpush1.msra.mxu0 %v5470
    %6242 = vmatprep.subr.mxu0 %v5467
    %6243 = vmatpush1.msra.mxu0 %v5466
    %6244 = vmatprep.subr.mxu0 %v5463
    %6245 = vmatpush1.msra.mxu0 %v5462
    %6246 = vmatprep.subr.mxu0 %v5459
    %6247 = vmatpush1.msra.mxu0 %v5458
    %6248 = vmatprep.subr.mxu0 %v5455
    %6249 = vmatpush1.msra.mxu0 %v5454
    %6250 = vmatprep.subr.mxu0 %v5451
    %6251 = vmatpush1.msra.mxu0 %v5450
    %6252 = vmatprep.subr.mxu0 %v5447
    %6253 = vmatpush1.msra.mxu0 %v5446
    %6254 = vmatprep.subr.mxu0 %v5443
    %6255 = vmatpush1.msra.mxu0 %v5442
    %6256 = vmatprep.subr.mxu0 %v5439
    %6257 = vmatpush1.msra.mxu0 %v5438
    %6258 = vmatprep.subr.mxu0 %v5435
    %6259 = vmatpush1.msra.mxu0 %v5434
    %6260 = vmatprep.subr.mxu0 %v5431
    %6261 = vmatpush1.msra.mxu0 %v5430
    %6262 = vmatprep.subr.mxu0 %v5427
    %6263 = vmatpush1.msra.mxu0 %v5426
    %6264 = vmatprep.subr.mxu0 %v5423
    %6265 = vmatpush1.msra.mxu0 %v5422
    %6266 = vmatprep.subr.mxu0 %v5419
    %6267 = vmatpush1.msra.mxu0 %v5418
    %6268 = vmatprep.subr.mxu0 %v5415
    %6269 = vmatpush1.msra.mxu0 %v5414
    %6270 = vmatprep.subr.mxu0 0.0
    %6271 = vmatpush2.msra.mxu0 0.0
    %6272 = vmatprep.subr.mxu0 0.0
    %6273 = vmatpush2.msra.mxu0 0.0
    %6274 = vmatprep.subr.mxu0 0.0
    %6275 = vmatpush2.msra.mxu0 0.0
    %6276 = vmatprep.subr.mxu0 0.0
    %6277 = vmatpush2.msra.mxu0 0.0
    %6278 = vmatprep.subr.mxu0 0.0
    %6279 = vmatpush2.msra.mxu0 0.0
    %6280 = vmatprep.subr.mxu0 0.0
    %6281 = vmatpush2.msra.mxu0 0.0
    %6282 = vmatprep.subr.mxu0 0.0
    %6283 = vmatpush2.msra.mxu0 0.0
    %6284 = vmatprep.subr.mxu0 0.0
    %6285 = vmatpush2.msra.mxu0 0.0
    %6286 = vmatprep.subr.mxu0 0.0
    %6287 = vmatpush2.msra.mxu0 0.0
    %6288 = vmatprep.subr.mxu0 0.0
    %6289 = vmatpush2.msra.mxu0 0.0
    %6290 = vmatprep.subr.mxu0 0.0
    %6291 = vmatpush2.msra.mxu0 0.0
    %6292 = vmatprep.subr.mxu0 0.0
    %6293 = vmatpush2.msra.mxu0 0.0
    %6294 = vmatprep.subr.mxu0 0.0
    %6295 = vmatpush2.msra.mxu0 0.0
    %6296 = vmatprep.subr.mxu0 0.0
    %6297 = vmatpush2.msra.mxu0 0.0
    %6298 = vmatprep.subr.mxu0 0.0
    %6299 = vmatpush2.msra.mxu0 0.0
    %6300 = vmatprep.subr.mxu0 0.0
    %6301 = vmatpush2.msra.mxu0 0.0
    %6302 = vmatprep.mubr.f32.mxu0 0.0
    %6303 = vmatmul.mubr.f32.gmra.mxu0 %v6233
    %v6304 = vpop.f32.mrf.mxu0
    %v6305 = vadd.f32 0.0, %v6304
    %v6306 = vpop.f32.mrf.mxu0
    %v6307 = vadd.f32 0.0, %v6306
    %6308 = vdwg.mxu0
    %6309 = vmatprep.subr.mxu0 %v5477
    %6310 = vmatpush1.msra.mxu0 %v5476
    %6311 = vmatprep.subr.mxu0 %v5473
    %6312 = vmatpush1.msra.mxu0 %v5472
    %6313 = vmatprep.subr.mxu0 %v5469
    %6314 = vmatpush1.msra.mxu0 %v5468
    %6315 = vmatprep.subr.mxu0 %v5465
    %6316 = vmatpush1.msra.mxu0 %v5464
    %6317 = vmatprep.subr.mxu0 %v5461
    %6318 = vmatpush1.msra.mxu0 %v5460
    %6319 = vmatprep.subr.mxu0 %v5457
    %6320 = vmatpush1.msra.mxu0 %v5456
    %6321 = vmatprep.subr.mxu0 %v5453
    %6322 = vmatpush1.msra.mxu0 %v5452
    %6323 = vmatprep.subr.mxu0 %v5449
    %6324 = vmatpush1.msra.mxu0 %v5448
    %6325 = vmatprep.subr.mxu0 %v5445
    %6326 = vmatpush1.msra.mxu0 %v5444
    %6327 = vmatprep.subr.mxu0 %v5441
    %6328 = vmatpush1.msra.mxu0 %v5440
    %6329 = vmatprep.subr.mxu0 %v5437
    %6330 = vmatpush1.msra.mxu0 %v5436
    %6331 = vmatprep.subr.mxu0 %v5433
    %6332 = vmatpush1.msra.mxu0 %v5432
    %6333 = vmatprep.subr.mxu0 %v5429
    %6334 = vmatpush1.msra.mxu0 %v5428
    %6335 = vmatprep.subr.mxu0 %v5425
    %6336 = vmatpush1.msra.mxu0 %v5424
    %6337 = vmatprep.subr.mxu0 %v5421
    %6338 = vmatpush1.msra.mxu0 %v5420
    %6339 = vmatprep.subr.mxu0 %v5417
    %6340 = vmatpush1.msra.mxu0 %v5416
    %6341 = vmatprep.subr.mxu0 0.0
    %6342 = vmatpush2.msra.mxu0 0.0
    %6343 = vmatprep.subr.mxu0 0.0
    %6344 = vmatpush2.msra.mxu0 0.0
    %6345 = vmatprep.subr.mxu0 0.0
    %6346 = vmatpush2.msra.mxu0 0.0
    %6347 = vmatprep.subr.mxu0 0.0
    %6348 = vmatpush2.msra.mxu0 0.0
    %6349 = vmatprep.subr.mxu0 0.0
    %6350 = vmatpush2.msra.mxu0 0.0
    %6351 = vmatprep.subr.mxu0 0.0
    %6352 = vmatpush2.msra.mxu0 0.0
    %6353 = vmatprep.subr.mxu0 0.0
    %6354 = vmatpush2.msra.mxu0 0.0
    %6355 = vmatprep.subr.mxu0 0.0
    %6356 = vmatpush2.msra.mxu0 0.0
    %6357 = vmatprep.subr.mxu0 0.0
    %6358 = vmatpush2.msra.mxu0 0.0
    %6359 = vmatprep.subr.mxu0 0.0
    %6360 = vmatpush2.msra.mxu0 0.0
    %6361 = vmatprep.subr.mxu0 0.0
    %6362 = vmatpush2.msra.mxu0 0.0
    %6363 = vmatprep.subr.mxu0 0.0
    %6364 = vmatpush2.msra.mxu0 0.0
    %6365 = vmatprep.subr.mxu0 0.0
    %6366 = vmatpush2.msra.mxu0 0.0
    %6367 = vmatprep.subr.mxu0 0.0
    %6368 = vmatpush2.msra.mxu0 0.0
    %6369 = vmatprep.subr.mxu0 0.0
    %6370 = vmatpush2.msra.mxu0 0.0
    %6371 = vmatprep.subr.mxu0 0.0
    %6372 = vmatpush2.msra.mxu0 0.0
    %6373 = vmatprep.mubr.f32.mxu0 0.0
    %6374 = vmatmul.mubr.f32.gmra.mxu0 %v6233
    %v6375 = vpop.f32.mrf.mxu0
    %v6376 = vadd.f32 0.0, %v6375
    %v6377 = vpop.f32.mrf.mxu0
    %v6378 = vadd.f32 0.0, %v6377
    %6379 = vdwg.mxu0
    %v6380 = vadd.f32 %v6234, %v6305
    %v6381 = vadd.f32 %v6235, %v6307
    %v6382 = vadd.f32 %v6236, %v6376
    %v6383 = vadd.f32 %v6237, %v6378
    %v6384 = vxor.u32 %v6380, 2147483648
    %v6385 = vmul.f32 %v6384, 1.442695
    %v6386 = vpow.pop %v6385
    %v6387 = vadd.f32 %v6386, 1.0
    %v6388 = vrcp.pop %v6387
    %v6389 = vmul.f32 1.0, %v6388
    %v6390 = vxor.u32 %v6381, 2147483648
    %v6391 = vmul.f32 %v6390, 1.442695
    %v6392 = vpow.pop %v6391
    %v6393 = vadd.f32 %v6392, 1.0
    %v6394 = vrcp.pop %v6393
    %v6395 = vmul.f32 1.0, %v6394
    %v6396 = vtanh.pop %v6382
    %v6397 = vxor.u32 %v6383, 2147483648
    %v6398 = vmul.f32 %v6397, 1.442695
    %v6399 = vpow.pop %v6398
    %v6400 = vadd.f32 %v6399, 1.0
    %v6401 = vrcp.pop %v6400
    %v6402 = vmul.f32 1.0, %v6401
    %v6403 = vmul.f32 %v6395, %v6231
    %v6404 = vmul.f32 %v6389, %v6396
    %v6405 = vadd.f32 %v6403, %v6404
    %v6406 = vtanh.pop %v6405
    %v6407 = vmul.f32 %v6402, %v6406
    %v6408 = vld [vmem:[#allocation2 + $0x80] sm:$0xff]
    %v6409 = vld [vmem:[#allocation2 + $0x88] sm:$0xff]
    %v6410 = vld [vmem:[#allocation2 + $0x90] sm:$0xff]
    %v6411 = vld [vmem:[#allocation2 + $0x98] sm:$0xff]
    %6412 = vmatprep.subr.mxu0 %v5475
    %6413 = vmatpush1.msra.mxu0 %v5474
    %6414 = vmatprep.subr.mxu0 %v5471
    %6415 = vmatpush1.msra.mxu0 %v5470
    %6416 = vmatprep.subr.mxu0 %v5467
    %6417 = vmatpush1.msra.mxu0 %v5466
    %6418 = vmatprep.subr.mxu0 %v5463
    %6419 = vmatpush1.msra.mxu0 %v5462
    %6420 = vmatprep.subr.mxu0 %v5459
    %6421 = vmatpush1.msra.mxu0 %v5458
    %6422 = vmatprep.subr.mxu0 %v5455
    %6423 = vmatpush1.msra.mxu0 %v5454
    %6424 = vmatprep.subr.mxu0 %v5451
    %6425 = vmatpush1.msra.mxu0 %v5450
    %6426 = vmatprep.subr.mxu0 %v5447
    %6427 = vmatpush1.msra.mxu0 %v5446
    %6428 = vmatprep.subr.mxu0 %v5443
    %6429 = vmatpush1.msra.mxu0 %v5442
    %6430 = vmatprep.subr.mxu0 %v5439
    %6431 = vmatpush1.msra.mxu0 %v5438
    %6432 = vmatprep.subr.mxu0 %v5435
    %6433 = vmatpush1.msra.mxu0 %v5434
    %6434 = vmatprep.subr.mxu0 %v5431
    %6435 = vmatpush1.msra.mxu0 %v5430
    %6436 = vmatprep.subr.mxu0 %v5427
    %6437 = vmatpush1.msra.mxu0 %v5426
    %6438 = vmatprep.subr.mxu0 %v5423
    %6439 = vmatpush1.msra.mxu0 %v5422
    %6440 = vmatprep.subr.mxu0 %v5419
    %6441 = vmatpush1.msra.mxu0 %v5418
    %6442 = vmatprep.subr.mxu0 %v5415
    %6443 = vmatpush1.msra.mxu0 %v5414
    %6444 = vmatprep.subr.mxu0 0.0
    %6445 = vmatpush2.msra.mxu0 0.0
    %6446 = vmatprep.subr.mxu0 0.0
    %6447 = vmatpush2.msra.mxu0 0.0
    %6448 = vmatprep.subr.mxu0 0.0
    %6449 = vmatpush2.msra.mxu0 0.0
    %6450 = vmatprep.subr.mxu0 0.0
    %6451 = vmatpush2.msra.mxu0 0.0
    %6452 = vmatprep.subr.mxu0 0.0
    %6453 = vmatpush2.msra.mxu0 0.0
    %6454 = vmatprep.subr.mxu0 0.0
    %6455 = vmatpush2.msra.mxu0 0.0
    %6456 = vmatprep.subr.mxu0 0.0
    %6457 = vmatpush2.msra.mxu0 0.0
    %6458 = vmatprep.subr.mxu0 0.0
    %6459 = vmatpush2.msra.mxu0 0.0
    %6460 = vmatprep.subr.mxu0 0.0
    %6461 = vmatpush2.msra.mxu0 0.0
    %6462 = vmatprep.subr.mxu0 0.0
    %6463 = vmatpush2.msra.mxu0 0.0
    %6464 = vmatprep.subr.mxu0 0.0
    %6465 = vmatpush2.msra.mxu0 0.0
    %6466 = vmatprep.subr.mxu0 0.0
    %6467 = vmatpush2.msra.mxu0 0.0
    %6468 = vmatprep.subr.mxu0 0.0
    %6469 = vmatpush2.msra.mxu0 0.0
    %6470 = vmatprep.subr.mxu0 0.0
    %6471 = vmatpush2.msra.mxu0 0.0
    %6472 = vmatprep.subr.mxu0 0.0
    %6473 = vmatpush2.msra.mxu0 0.0
    %6474 = vmatprep.subr.mxu0 0.0
    %6475 = vmatpush2.msra.mxu0 0.0
    %6476 = vmatprep.mubr.f32.mxu0 0.0
    %6477 = vmatmul.mubr.f32.gmra.mxu0 %v6407
    %v6478 = vpop.f32.mrf.mxu0
    %v6479 = vadd.f32 0.0, %v6478
    %v6480 = vpop.f32.mrf.mxu0
    %v6481 = vadd.f32 0.0, %v6480
    %6482 = vdwg.mxu0
    %6483 = vmatprep.subr.mxu0 %v5477
    %6484 = vmatpush1.msra.mxu0 %v5476
    %6485 = vmatprep.subr.mxu0 %v5473
    %6486 = vmatpush1.msra.mxu0 %v5472
    %6487 = vmatprep.subr.mxu0 %v5469
    %6488 = vmatpush1.msra.mxu0 %v5468
    %6489 = vmatprep.subr.mxu0 %v5465
    %6490 = vmatpush1.msra.mxu0 %v5464
    %6491 = vmatprep.subr.mxu0 %v5461
    %6492 = vmatpush1.msra.mxu0 %v5460
    %6493 = vmatprep.subr.mxu0 %v5457
    %6494 = vmatpush1.msra.mxu0 %v5456
    %6495 = vmatprep.subr.mxu0 %v5453
    %6496 = vmatpush1.msra.mxu0 %v5452
    %6497 = vmatprep.subr.mxu0 %v5449
    %6498 = vmatpush1.msra.mxu0 %v5448
    %6499 = vmatprep.subr.mxu0 %v5445
    %6500 = vmatpush1.msra.mxu0 %v5444
    %6501 = vmatprep.subr.mxu0 %v5441
    %6502 = vmatpush1.msra.mxu0 %v5440
    %6503 = vmatprep.subr.mxu0 %v5437
    %6504 = vmatpush1.msra.mxu0 %v5436
    %6505 = vmatprep.subr.mxu0 %v5433
    %6506 = vmatpush1.msra.mxu0 %v5432
    %6507 = vmatprep.subr.mxu0 %v5429
    %6508 = vmatpush1.msra.mxu0 %v5428
    %6509 = vmatprep.subr.mxu0 %v5425
    %6510 = vmatpush1.msra.mxu0 %v5424
    %6511 = vmatprep.subr.mxu0 %v5421
    %6512 = vmatpush1.msra.mxu0 %v5420
    %6513 = vmatprep.subr.mxu0 %v5417
    %6514 = vmatpush1.msra.mxu0 %v5416
    %6515 = vmatprep.subr.mxu0 0.0
    %6516 = vmatpush2.msra.mxu0 0.0
    %6517 = vmatprep.subr.mxu0 0.0
    %6518 = vmatpush2.msra.mxu0 0.0
    %6519 = vmatprep.subr.mxu0 0.0
    %6520 = vmatpush2.msra.mxu0 0.0
    %6521 = vmatprep.subr.mxu0 0.0
    %6522 = vmatpush2.msra.mxu0 0.0
    %6523 = vmatprep.subr.mxu0 0.0
    %6524 = vmatpush2.msra.mxu0 0.0
    %6525 = vmatprep.subr.mxu0 0.0
    %6526 = vmatpush2.msra.mxu0 0.0
    %6527 = vmatprep.subr.mxu0 0.0
    %6528 = vmatpush2.msra.mxu0 0.0
    %6529 = vmatprep.subr.mxu0 0.0
    %6530 = vmatpush2.msra.mxu0 0.0
    %6531 = vmatprep.subr.mxu0 0.0
    %6532 = vmatpush2.msra.mxu0 0.0
    %6533 = vmatprep.subr.mxu0 0.0
    %6534 = vmatpush2.msra.mxu0 0.0
    %6535 = vmatprep.subr.mxu0 0.0
    %6536 = vmatpush2.msra.mxu0 0.0
    %6537 = vmatprep.subr.mxu0 0.0
    %6538 = vmatpush2.msra.mxu0 0.0
    %6539 = vmatprep.subr.mxu0 0.0
    %6540 = vmatpush2.msra.mxu0 0.0
    %6541 = vmatprep.subr.mxu0 0.0
    %6542 = vmatpush2.msra.mxu0 0.0
    %6543 = vmatprep.subr.mxu0 0.0
    %6544 = vmatpush2.msra.mxu0 0.0
    %6545 = vmatprep.subr.mxu0 0.0
    %6546 = vmatpush2.msra.mxu0 0.0
    %6547 = vmatprep.mubr.f32.mxu0 0.0
    %6548 = vmatmul.mubr.f32.gmra.mxu0 %v6407
    %v6549 = vpop.f32.mrf.mxu0
    %v6550 = vadd.f32 0.0, %v6549
    %v6551 = vpop.f32.mrf.mxu0
    %v6552 = vadd.f32 0.0, %v6551
    %6553 = vdwg.mxu0
    %v6554 = vadd.f32 %v6408, %v6479
    %v6555 = vadd.f32 %v6409, %v6481
    %v6556 = vadd.f32 %v6410, %v6550
    %v6557 = vadd.f32 %v6411, %v6552
    %v6558 = vxor.u32 %v6554, 2147483648
    %v6559 = vmul.f32 %v6558, 1.442695
    %v6560 = vpow.pop %v6559
    %v6561 = vadd.f32 %v6560, 1.0
    %v6562 = vrcp.pop %v6561
    %v6563 = vmul.f32 1.0, %v6562
    %v6564 = vxor.u32 %v6555, 2147483648
    %v6565 = vmul.f32 %v6564, 1.442695
    %v6566 = vpow.pop %v6565
    %v6567 = vadd.f32 %v6566, 1.0
    %v6568 = vrcp.pop %v6567
    %v6569 = vmul.f32 1.0, %v6568
    %v6570 = vtanh.pop %v6556
    %v6571 = vxor.u32 %v6557, 2147483648
    %v6572 = vmul.f32 %v6571, 1.442695
    %v6573 = vpow.pop %v6572
    %v6574 = vadd.f32 %v6573, 1.0
    %v6575 = vrcp.pop %v6574
    %v6576 = vmul.f32 1.0, %v6575
    %v6577 = vmul.f32 %v6569, %v6405
    %v6578 = vmul.f32 %v6563, %v6570
    %v6579 = vadd.f32 %v6577, %v6578
    %v6580 = vtanh.pop %v6579
    %v6581 = vmul.f32 %v6576, %v6580
    %v6582 = vld [vmem:[#allocation2 + $0xa0] sm:$0xff]
    %v6583 = vld [vmem:[#allocation2 + $0xa8] sm:$0xff]
    %v6584 = vld [vmem:[#allocation2 + $0xb0] sm:$0xff]
    %v6585 = vld [vmem:[#allocation2 + $0xb8] sm:$0xff]
    %6586 = vmatprep.subr.mxu0 %v5475
    %6587 = vmatpush1.msra.mxu0 %v5474
    %6588 = vmatprep.subr.mxu0 %v5471
    %6589 = vmatpush1.msra.mxu0 %v5470
    %6590 = vmatprep.subr.mxu0 %v5467
    %6591 = vmatpush1.msra.mxu0 %v5466
    %6592 = vmatprep.subr.mxu0 %v5463
    %6593 = vmatpush1.msra.mxu0 %v5462
    %6594 = vmatprep.subr.mxu0 %v5459
    %6595 = vmatpush1.msra.mxu0 %v5458
    %6596 = vmatprep.subr.mxu0 %v5455
    %6597 = vmatpush1.msra.mxu0 %v5454
    %6598 = vmatprep.subr.mxu0 %v5451
    %6599 = vmatpush1.msra.mxu0 %v5450
    %6600 = vmatprep.subr.mxu0 %v5447
    %6601 = vmatpush1.msra.mxu0 %v5446
    %6602 = vmatprep.subr.mxu0 %v5443
    %6603 = vmatpush1.msra.mxu0 %v5442
    %6604 = vmatprep.subr.mxu0 %v5439
    %6605 = vmatpush1.msra.mxu0 %v5438
    %6606 = vmatprep.subr.mxu0 %v5435
    %6607 = vmatpush1.msra.mxu0 %v5434
    %6608 = vmatprep.subr.mxu0 %v5431
    %6609 = vmatpush1.msra.mxu0 %v5430
    %6610 = vmatprep.subr.mxu0 %v5427
    %6611 = vmatpush1.msra.mxu0 %v5426
    %6612 = vmatprep.subr.mxu0 %v5423
    %6613 = vmatpush1.msra.mxu0 %v5422
    %6614 = vmatprep.subr.mxu0 %v5419
    %6615 = vmatpush1.msra.mxu0 %v5418
    %6616 = vmatprep.subr.mxu0 %v5415
    %6617 = vmatpush1.msra.mxu0 %v5414
    %6618 = vmatprep.subr.mxu0 0.0
    %6619 = vmatpush2.msra.mxu0 0.0
    %6620 = vmatprep.subr.mxu0 0.0
    %6621 = vmatpush2.msra.mxu0 0.0
    %6622 = vmatprep.subr.mxu0 0.0
    %6623 = vmatpush2.msra.mxu0 0.0
    %6624 = vmatprep.subr.mxu0 0.0
    %6625 = vmatpush2.msra.mxu0 0.0
    %6626 = vmatprep.subr.mxu0 0.0
    %6627 = vmatpush2.msra.mxu0 0.0
    %6628 = vmatprep.subr.mxu0 0.0
    %6629 = vmatpush2.msra.mxu0 0.0
    %6630 = vmatprep.subr.mxu0 0.0
    %6631 = vmatpush2.msra.mxu0 0.0
    %6632 = vmatprep.subr.mxu0 0.0
    %6633 = vmatpush2.msra.mxu0 0.0
    %6634 = vmatprep.subr.mxu0 0.0
    %6635 = vmatpush2.msra.mxu0 0.0
    %6636 = vmatprep.subr.mxu0 0.0
    %6637 = vmatpush2.msra.mxu0 0.0
    %6638 = vmatprep.subr.mxu0 0.0
    %6639 = vmatpush2.msra.mxu0 0.0
    %6640 = vmatprep.subr.mxu0 0.0
    %6641 = vmatpush2.msra.mxu0 0.0
    %6642 = vmatprep.subr.mxu0 0.0
    %6643 = vmatpush2.msra.mxu0 0.0
    %6644 = vmatprep.subr.mxu0 0.0
    %6645 = vmatpush2.msra.mxu0 0.0
    %6646 = vmatprep.subr.mxu0 0.0
    %6647 = vmatpush2.msra.mxu0 0.0
    %6648 = vmatprep.subr.mxu0 0.0
    %6649 = vmatpush2.msra.mxu0 0.0
    %6650 = vmatprep.mubr.f32.mxu0 0.0
    %6651 = vmatmul.mubr.f32.gmra.mxu0 %v6581
    %v6652 = vpop.f32.mrf.mxu0
    %v6653 = vadd.f32 0.0, %v6652
    %v6654 = vpop.f32.mrf.mxu0
    %v6655 = vadd.f32 0.0, %v6654
    %6656 = vdwg.mxu0
    %6657 = vmatprep.subr.mxu0 %v5477
    %6658 = vmatpush1.msra.mxu0 %v5476
    %6659 = vmatprep.subr.mxu0 %v5473
    %6660 = vmatpush1.msra.mxu0 %v5472
    %6661 = vmatprep.subr.mxu0 %v5469
    %6662 = vmatpush1.msra.mxu0 %v5468
    %6663 = vmatprep.subr.mxu0 %v5465
    %6664 = vmatpush1.msra.mxu0 %v5464
    %6665 = vmatprep.subr.mxu0 %v5461
    %6666 = vmatpush1.msra.mxu0 %v5460
    %6667 = vmatprep.subr.mxu0 %v5457
    %6668 = vmatpush1.msra.mxu0 %v5456
    %6669 = vmatprep.subr.mxu0 %v5453
    %6670 = vmatpush1.msra.mxu0 %v5452
    %6671 = vmatprep.subr.mxu0 %v5449
    %6672 = vmatpush1.msra.mxu0 %v5448
    %6673 = vmatprep.subr.mxu0 %v5445
    %6674 = vmatpush1.msra.mxu0 %v5444
    %6675 = vmatprep.subr.mxu0 %v5441
    %6676 = vmatpush1.msra.mxu0 %v5440
    %6677 = vmatprep.subr.mxu0 %v5437
    %6678 = vmatpush1.msra.mxu0 %v5436
    %6679 = vmatprep.subr.mxu0 %v5433
    %6680 = vmatpush1.msra.mxu0 %v5432
    %6681 = vmatprep.subr.mxu0 %v5429
    %6682 = vmatpush1.msra.mxu0 %v5428
    %6683 = vmatprep.subr.mxu0 %v5425
    %6684 = vmatpush1.msra.mxu0 %v5424
    %6685 = vmatprep.subr.mxu0 %v5421
    %6686 = vmatpush1.msra.mxu0 %v5420
    %6687 = vmatprep.subr.mxu0 %v5417
    %6688 = vmatpush1.msra.mxu0 %v5416
    %6689 = vmatprep.subr.mxu0 0.0
    %6690 = vmatpush2.msra.mxu0 0.0
    %6691 = vmatprep.subr.mxu0 0.0
    %6692 = vmatpush2.msra.mxu0 0.0
    %6693 = vmatprep.subr.mxu0 0.0
    %6694 = vmatpush2.msra.mxu0 0.0
    %6695 = vmatprep.subr.mxu0 0.0
    %6696 = vmatpush2.msra.mxu0 0.0
    %6697 = vmatprep.subr.mxu0 0.0
    %6698 = vmatpush2.msra.mxu0 0.0
    %6699 = vmatprep.subr.mxu0 0.0
    %6700 = vmatpush2.msra.mxu0 0.0
    %6701 = vmatprep.subr.mxu0 0.0
    %6702 = vmatpush2.msra.mxu0 0.0
    %6703 = vmatprep.subr.mxu0 0.0
    %6704 = vmatpush2.msra.mxu0 0.0
    %6705 = vmatprep.subr.mxu0 0.0
    %6706 = vmatpush2.msra.mxu0 0.0
    %6707 = vmatprep.subr.mxu0 0.0
    %6708 = vmatpush2.msra.mxu0 0.0
    %6709 = vmatprep.subr.mxu0 0.0
    %6710 = vmatpush2.msra.mxu0 0.0
    %6711 = vmatprep.subr.mxu0 0.0
    %6712 = vmatpush2.msra.mxu0 0.0
    %6713 = vmatprep.subr.mxu0 0.0
    %6714 = vmatpush2.msra.mxu0 0.0
    %6715 = vmatprep.subr.mxu0 0.0
    %6716 = vmatpush2.msra.mxu0 0.0
    %6717 = vmatprep.subr.mxu0 0.0
    %6718 = vmatpush2.msra.mxu0 0.0
    %6719 = vmatprep.subr.mxu0 0.0
    %6720 = vmatpush2.msra.mxu0 0.0
    %6721 = vmatprep.mubr.f32.mxu0 0.0
    %6722 = vmatmul.mubr.f32.gmra.mxu0 %v6581
    %v6723 = vpop.f32.mrf.mxu0
    %v6724 = vadd.f32 0.0, %v6723
    %v6725 = vpop.f32.mrf.mxu0
    %v6726 = vadd.f32 0.0, %v6725
    %6727 = vdwg.mxu0
    %v6728 = vadd.f32 %v6582, %v6653
    %v6729 = vadd.f32 %v6583, %v6655
    %v6730 = vadd.f32 %v6584, %v6724
    %v6731 = vadd.f32 %v6585, %v6726
    %v6732 = vxor.u32 %v6728, 2147483648
    %v6733 = vmul.f32 %v6732, 1.442695
    %v6734 = vpow.pop %v6733
    %v6735 = vadd.f32 %v6734, 1.0
    %v6736 = vrcp.pop %v6735
    %v6737 = vmul.f32 1.0, %v6736
    %v6738 = vxor.u32 %v6729, 2147483648
    %v6739 = vmul.f32 %v6738, 1.442695
    %v6740 = vpow.pop %v6739
    %v6741 = vadd.f32 %v6740, 1.0
    %v6742 = vrcp.pop %v6741
    %v6743 = vmul.f32 1.0, %v6742
    %v6744 = vtanh.pop %v6730
    %v6745 = vxor.u32 %v6731, 2147483648
    %v6746 = vmul.f32 %v6745, 1.442695
    %v6747 = vpow.pop %v6746
    %v6748 = vadd.f32 %v6747, 1.0
    %v6749 = vrcp.pop %v6748
    %v6750 = vmul.f32 1.0, %v6749
    %v6751 = vmul.f32 %v6743, %v6579
    %v6752 = vmul.f32 %v6737, %v6744
    %v6753 = vadd.f32 %v6751, %v6752
    %v6754 = vtanh.pop %v6753
    %v6755 = vmul.f32 %v6750, %v6754
    %v6756 = vld [vmem:[#allocation2 + $0xc0] sm:$0xff]
    %v6757 = vld [vmem:[#allocation2 + $0xc8] sm:$0xff]
    %v6758 = vld [vmem:[#allocation2 + $0xd0] sm:$0xff]
    %v6759 = vld [vmem:[#allocation2 + $0xd8] sm:$0xff]
    %6760 = vmatprep.subr.mxu0 %v5475
    %6761 = vmatpush1.msra.mxu0 %v5474
    %6762 = vmatprep.subr.mxu0 %v5471
    %6763 = vmatpush1.msra.mxu0 %v5470
    %6764 = vmatprep.subr.mxu0 %v5467
    %6765 = vmatpush1.msra.mxu0 %v5466
    %6766 = vmatprep.subr.mxu0 %v5463
    %6767 = vmatpush1.msra.mxu0 %v5462
    %6768 = vmatprep.subr.mxu0 %v5459
    %6769 = vmatpush1.msra.mxu0 %v5458
    %6770 = vmatprep.subr.mxu0 %v5455
    %6771 = vmatpush1.msra.mxu0 %v5454
    %6772 = vmatprep.subr.mxu0 %v5451
    %6773 = vmatpush1.msra.mxu0 %v5450
    %6774 = vmatprep.subr.mxu0 %v5447
    %6775 = vmatpush1.msra.mxu0 %v5446
    %6776 = vmatprep.subr.mxu0 %v5443
    %6777 = vmatpush1.msra.mxu0 %v5442
    %6778 = vmatprep.subr.mxu0 %v5439
    %6779 = vmatpush1.msra.mxu0 %v5438
    %6780 = vmatprep.subr.mxu0 %v5435
    %6781 = vmatpush1.msra.mxu0 %v5434
    %6782 = vmatprep.subr.mxu0 %v5431
    %6783 = vmatpush1.msra.mxu0 %v5430
    %6784 = vmatprep.subr.mxu0 %v5427
    %6785 = vmatpush1.msra.mxu0 %v5426
    %6786 = vmatprep.subr.mxu0 %v5423
    %6787 = vmatpush1.msra.mxu0 %v5422
    %6788 = vmatprep.subr.mxu0 %v5419
    %6789 = vmatpush1.msra.mxu0 %v5418
    %6790 = vmatprep.subr.mxu0 %v5415
    %6791 = vmatpush1.msra.mxu0 %v5414
    %6792 = vmatprep.subr.mxu0 0.0
    %6793 = vmatpush2.msra.mxu0 0.0
    %6794 = vmatprep.subr.mxu0 0.0
    %6795 = vmatpush2.msra.mxu0 0.0
    %6796 = vmatprep.subr.mxu0 0.0
    %6797 = vmatpush2.msra.mxu0 0.0
    %6798 = vmatprep.subr.mxu0 0.0
    %6799 = vmatpush2.msra.mxu0 0.0
    %6800 = vmatprep.subr.mxu0 0.0
    %6801 = vmatpush2.msra.mxu0 0.0
    %6802 = vmatprep.subr.mxu0 0.0
    %6803 = vmatpush2.msra.mxu0 0.0
    %6804 = vmatprep.subr.mxu0 0.0
    %6805 = vmatpush2.msra.mxu0 0.0
    %6806 = vmatprep.subr.mxu0 0.0
    %6807 = vmatpush2.msra.mxu0 0.0
    %6808 = vmatprep.subr.mxu0 0.0
    %6809 = vmatpush2.msra.mxu0 0.0
    %6810 = vmatprep.subr.mxu0 0.0
    %6811 = vmatpush2.msra.mxu0 0.0
    %6812 = vmatprep.subr.mxu0 0.0
    %6813 = vmatpush2.msra.mxu0 0.0
    %6814 = vmatprep.subr.mxu0 0.0
    %6815 = vmatpush2.msra.mxu0 0.0
    %6816 = vmatprep.subr.mxu0 0.0
    %6817 = vmatpush2.msra.mxu0 0.0
    %6818 = vmatprep.subr.mxu0 0.0
    %6819 = vmatpush2.msra.mxu0 0.0
    %6820 = vmatprep.subr.mxu0 0.0
    %6821 = vmatpush2.msra.mxu0 0.0
    %6822 = vmatprep.subr.mxu0 0.0
    %6823 = vmatpush2.msra.mxu0 0.0
    %6824 = vmatprep.mubr.f32.mxu0 0.0
    %6825 = vmatmul.mubr.f32.gmra.mxu0 %v6755
    %v6826 = vpop.f32.mrf.mxu0
    %v6827 = vadd.f32 0.0, %v6826
    %v6828 = vpop.f32.mrf.mxu0
    %v6829 = vadd.f32 0.0, %v6828
    %6830 = vdwg.mxu0
    %6831 = vmatprep.subr.mxu0 %v5477
    %6832 = vmatpush1.msra.mxu0 %v5476
    %6833 = vmatprep.subr.mxu0 %v5473
    %6834 = vmatpush1.msra.mxu0 %v5472
    %6835 = vmatprep.subr.mxu0 %v5469
    %6836 = vmatpush1.msra.mxu0 %v5468
    %6837 = vmatprep.subr.mxu0 %v5465
    %6838 = vmatpush1.msra.mxu0 %v5464
    %6839 = vmatprep.subr.mxu0 %v5461
    %6840 = vmatpush1.msra.mxu0 %v5460
    %6841 = vmatprep.subr.mxu0 %v5457
    %6842 = vmatpush1.msra.mxu0 %v5456
    %6843 = vmatprep.subr.mxu0 %v5453
    %6844 = vmatpush1.msra.mxu0 %v5452
    %6845 = vmatprep.subr.mxu0 %v5449
    %6846 = vmatpush1.msra.mxu0 %v5448
    %6847 = vmatprep.subr.mxu0 %v5445
    %6848 = vmatpush1.msra.mxu0 %v5444
    %6849 = vmatprep.subr.mxu0 %v5441
    %6850 = vmatpush1.msra.mxu0 %v5440
    %6851 = vmatprep.subr.mxu0 %v5437
    %6852 = vmatpush1.msra.mxu0 %v5436
    %6853 = vmatprep.subr.mxu0 %v5433
    %6854 = vmatpush1.msra.mxu0 %v5432
    %6855 = vmatprep.subr.mxu0 %v5429
    %6856 = vmatpush1.msra.mxu0 %v5428
    %6857 = vmatprep.subr.mxu0 %v5425
    %6858 = vmatpush1.msra.mxu0 %v5424
    %6859 = vmatprep.subr.mxu0 %v5421
    %6860 = vmatpush1.msra.mxu0 %v5420
    %6861 = vmatprep.subr.mxu0 %v5417
    %6862 = vmatpush1.msra.mxu0 %v5416
    %6863 = vmatprep.subr.mxu0 0.0
    %6864 = vmatpush2.msra.mxu0 0.0
    %6865 = vmatprep.subr.mxu0 0.0
    %6866 = vmatpush2.msra.mxu0 0.0
    %6867 = vmatprep.subr.mxu0 0.0
    %6868 = vmatpush2.msra.mxu0 0.0
    %6869 = vmatprep.subr.mxu0 0.0
    %6870 = vmatpush2.msra.mxu0 0.0
    %6871 = vmatprep.subr.mxu0 0.0
    %6872 = vmatpush2.msra.mxu0 0.0
    %6873 = vmatprep.subr.mxu0 0.0
    %6874 = vmatpush2.msra.mxu0 0.0
    %6875 = vmatprep.subr.mxu0 0.0
    %6876 = vmatpush2.msra.mxu0 0.0
    %6877 = vmatprep.subr.mxu0 0.0
    %6878 = vmatpush2.msra.mxu0 0.0
    %6879 = vmatprep.subr.mxu0 0.0
    %6880 = vmatpush2.msra.mxu0 0.0
    %6881 = vmatprep.subr.mxu0 0.0
    %6882 = vmatpush2.msra.mxu0 0.0
    %6883 = vmatprep.subr.mxu0 0.0
    %6884 = vmatpush2.msra.mxu0 0.0
    %6885 = vmatprep.subr.mxu0 0.0
    %6886 = vmatpush2.msra.mxu0 0.0
    %6887 = vmatprep.subr.mxu0 0.0
    %6888 = vmatpush2.msra.mxu0 0.0
    %6889 = vmatprep.subr.mxu0 0.0
    %6890 = vmatpush2.msra.mxu0 0.0
    %6891 = vmatprep.subr.mxu0 0.0
    %6892 = vmatpush2.msra.mxu0 0.0
    %6893 = vmatprep.subr.mxu0 0.0
    %6894 = vmatpush2.msra.mxu0 0.0
    %6895 = vmatprep.mubr.f32.mxu0 0.0
    %6896 = vmatmul.mubr.f32.gmra.mxu0 %v6755
    %v6897 = vpop.f32.mrf.mxu0
    %v6898 = vadd.f32 0.0, %v6897
    %v6899 = vpop.f32.mrf.mxu0
    %v6900 = vadd.f32 0.0, %v6899
    %6901 = vdwg.mxu0
    %v6902 = vadd.f32 %v6756, %v6827
    %v6903 = vadd.f32 %v6757, %v6829
    %v6904 = vadd.f32 %v6758, %v6898
    %v6905 = vadd.f32 %v6759, %v6900
    %v6906 = vxor.u32 %v6902, 2147483648
    %v6907 = vmul.f32 %v6906, 1.442695
    %v6908 = vpow.pop %v6907
    %v6909 = vadd.f32 %v6908, 1.0
    %v6910 = vrcp.pop %v6909
    %v6911 = vmul.f32 1.0, %v6910
    %v6912 = vxor.u32 %v6903, 2147483648
    %v6913 = vmul.f32 %v6912, 1.442695
    %v6914 = vpow.pop %v6913
    %v6915 = vadd.f32 %v6914, 1.0
    %v6916 = vrcp.pop %v6915
    %v6917 = vmul.f32 1.0, %v6916
    %v6918 = vtanh.pop %v6904
    %v6919 = vxor.u32 %v6905, 2147483648
    %v6920 = vmul.f32 %v6919, 1.442695
    %v6921 = vpow.pop %v6920
    %v6922 = vadd.f32 %v6921, 1.0
    %v6923 = vrcp.pop %v6922
    %v6924 = vmul.f32 1.0, %v6923
    %v6925 = vmul.f32 %v6917, %v6753
    %v6926 = vmul.f32 %v6911, %v6918
    %v6927 = vadd.f32 %v6925, %v6926
    %v6928 = vtanh.pop %v6927
    %v6929 = vmul.f32 %v6924, %v6928
    %v6930 = vld [vmem:[#allocation2 + $0xe0] sm:$0xff]
    %v6931 = vld [vmem:[#allocation2 + $0xe8] sm:$0xff]
    %v6932 = vld [vmem:[#allocation2 + $0xf0] sm:$0xff]
    %v6933 = vld [vmem:[#allocation2 + $0xf8] sm:$0xff]
    %6934 = vmatprep.subr.mxu0 %v5475
    %6935 = vmatpush1.msra.mxu0 %v5474
    %6936 = vmatprep.subr.mxu0 %v5471
    %6937 = vmatpush1.msra.mxu0 %v5470
    %6938 = vmatprep.subr.mxu0 %v5467
    %6939 = vmatpush1.msra.mxu0 %v5466
    %6940 = vmatprep.subr.mxu0 %v5463
    %6941 = vmatpush1.msra.mxu0 %v5462
    %6942 = vmatprep.subr.mxu0 %v5459
    %6943 = vmatpush1.msra.mxu0 %v5458
    %6944 = vmatprep.subr.mxu0 %v5455
    %6945 = vmatpush1.msra.mxu0 %v5454
    %6946 = vmatprep.subr.mxu0 %v5451
    %6947 = vmatpush1.msra.mxu0 %v5450
    %6948 = vmatprep.subr.mxu0 %v5447
    %6949 = vmatpush1.msra.mxu0 %v5446
    %6950 = vmatprep.subr.mxu0 %v5443
    %6951 = vmatpush1.msra.mxu0 %v5442
    %6952 = vmatprep.subr.mxu0 %v5439
    %6953 = vmatpush1.msra.mxu0 %v5438
    %6954 = vmatprep.subr.mxu0 %v5435
    %6955 = vmatpush1.msra.mxu0 %v5434
    %6956 = vmatprep.subr.mxu0 %v5431
    %6957 = vmatpush1.msra.mxu0 %v5430
    %6958 = vmatprep.subr.mxu0 %v5427
    %6959 = vmatpush1.msra.mxu0 %v5426
    %6960 = vmatprep.subr.mxu0 %v5423
    %6961 = vmatpush1.msra.mxu0 %v5422
    %6962 = vmatprep.subr.mxu0 %v5419
    %6963 = vmatpush1.msra.mxu0 %v5418
    %6964 = vmatprep.subr.mxu0 %v5415
    %6965 = vmatpush1.msra.mxu0 %v5414
    %6966 = vmatprep.subr.mxu0 0.0
    %6967 = vmatpush2.msra.mxu0 0.0
    %6968 = vmatprep.subr.mxu0 0.0
    %6969 = vmatpush2.msra.mxu0 0.0
    %6970 = vmatprep.subr.mxu0 0.0
    %6971 = vmatpush2.msra.mxu0 0.0
    %6972 = vmatprep.subr.mxu0 0.0
    %6973 = vmatpush2.msra.mxu0 0.0
    %6974 = vmatprep.subr.mxu0 0.0
    %6975 = vmatpush2.msra.mxu0 0.0
    %6976 = vmatprep.subr.mxu0 0.0
    %6977 = vmatpush2.msra.mxu0 0.0
    %6978 = vmatprep.subr.mxu0 0.0
    %6979 = vmatpush2.msra.mxu0 0.0
    %6980 = vmatprep.subr.mxu0 0.0
    %6981 = vmatpush2.msra.mxu0 0.0
    %6982 = vmatprep.subr.mxu0 0.0
    %6983 = vmatpush2.msra.mxu0 0.0
    %6984 = vmatprep.subr.mxu0 0.0
    %6985 = vmatpush2.msra.mxu0 0.0
    %6986 = vmatprep.subr.mxu0 0.0
    %6987 = vmatpush2.msra.mxu0 0.0
    %6988 = vmatprep.subr.mxu0 0.0
    %6989 = vmatpush2.msra.mxu0 0.0
    %6990 = vmatprep.subr.mxu0 0.0
    %6991 = vmatpush2.msra.mxu0 0.0
    %6992 = vmatprep.subr.mxu0 0.0
    %6993 = vmatpush2.msra.mxu0 0.0
    %6994 = vmatprep.subr.mxu0 0.0
    %6995 = vmatpush2.msra.mxu0 0.0
    %6996 = vmatprep.subr.mxu0 0.0
    %6997 = vmatpush2.msra.mxu0 0.0
    %6998 = vmatprep.mubr.f32.mxu0 0.0
    %6999 = vmatmul.mubr.f32.gmra.mxu0 %v6929
    %v7000 = vpop.f32.mrf.mxu0
    %v7001 = vadd.f32 0.0, %v7000
    %v7002 = vpop.f32.mrf.mxu0
    %v7003 = vadd.f32 0.0, %v7002
    %7004 = vdwg.mxu0
    %7005 = vmatprep.subr.mxu0 %v5477
    %7006 = vmatpush1.msra.mxu0 %v5476
    %7007 = vmatprep.subr.mxu0 %v5473
    %7008 = vmatpush1.msra.mxu0 %v5472
    %7009 = vmatprep.subr.mxu0 %v5469
    %7010 = vmatpush1.msra.mxu0 %v5468
    %7011 = vmatprep.subr.mxu0 %v5465
    %7012 = vmatpush1.msra.mxu0 %v5464
    %7013 = vmatprep.subr.mxu0 %v5461
    %7014 = vmatpush1.msra.mxu0 %v5460
    %7015 = vmatprep.subr.mxu0 %v5457
    %7016 = vmatpush1.msra.mxu0 %v5456
    %7017 = vmatprep.subr.mxu0 %v5453
    %7018 = vmatpush1.msra.mxu0 %v5452
    %7019 = vmatprep.subr.mxu0 %v5449
    %7020 = vmatpush1.msra.mxu0 %v5448
    %7021 = vmatprep.subr.mxu0 %v5445
    %7022 = vmatpush1.msra.mxu0 %v5444
    %7023 = vmatprep.subr.mxu0 %v5441
    %7024 = vmatpush1.msra.mxu0 %v5440
    %7025 = vmatprep.subr.mxu0 %v5437
    %7026 = vmatpush1.msra.mxu0 %v5436
    %7027 = vmatprep.subr.mxu0 %v5433
    %7028 = vmatpush1.msra.mxu0 %v5432
    %7029 = vmatprep.subr.mxu0 %v5429
    %7030 = vmatpush1.msra.mxu0 %v5428
    %7031 = vmatprep.subr.mxu0 %v5425
    %7032 = vmatpush1.msra.mxu0 %v5424
    %7033 = vmatprep.subr.mxu0 %v5421
    %7034 = vmatpush1.msra.mxu0 %v5420
    %7035 = vmatprep.subr.mxu0 %v5417
    %7036 = vmatpush1.msra.mxu0 %v5416
    %7037 = vmatprep.subr.mxu0 0.0
    %7038 = vmatpush2.msra.mxu0 0.0
    %7039 = vmatprep.subr.mxu0 0.0
    %7040 = vmatpush2.msra.mxu0 0.0
    %7041 = vmatprep.subr.mxu0 0.0
    %7042 = vmatpush2.msra.mxu0 0.0
    %7043 = vmatprep.subr.mxu0 0.0
    %7044 = vmatpush2.msra.mxu0 0.0
    %7045 = vmatprep.subr.mxu0 0.0
    %7046 = vmatpush2.msra.mxu0 0.0
    %7047 = vmatprep.subr.mxu0 0.0
    %7048 = vmatpush2.msra.mxu0 0.0
    %7049 = vmatprep.subr.mxu0 0.0
    %7050 = vmatpush2.msra.mxu0 0.0
    %7051 = vmatprep.subr.mxu0 0.0
    %7052 = vmatpush2.msra.mxu0 0.0
    %7053 = vmatprep.subr.mxu0 0.0
    %7054 = vmatpush2.msra.mxu0 0.0
    %7055 = vmatprep.subr.mxu0 0.0
    %7056 = vmatpush2.msra.mxu0 0.0
    %7057 = vmatprep.subr.mxu0 0.0
    %7058 = vmatpush2.msra.mxu0 0.0
    %7059 = vmatprep.subr.mxu0 0.0
    %7060 = vmatpush2.msra.mxu0 0.0
    %7061 = vmatprep.subr.mxu0 0.0
    %7062 = vmatpush2.msra.mxu0 0.0
    %7063 = vmatprep.subr.mxu0 0.0
    %7064 = vmatpush2.msra.mxu0 0.0
    %7065 = vmatprep.subr.mxu0 0.0
    %7066 = vmatpush2.msra.mxu0 0.0
    %7067 = vmatprep.subr.mxu0 0.0
    %7068 = vmatpush2.msra.mxu0 0.0
    %7069 = vmatprep.mubr.f32.mxu0 0.0
    %7070 = vmatmul.mubr.f32.gmra.mxu0 %v6929
    %v7071 = vpop.f32.mrf.mxu0
    %v7072 = vadd.f32 0.0, %v7071
    %v7073 = vpop.f32.mrf.mxu0
    %v7074 = vadd.f32 0.0, %v7073
    %7075 = vdwg.mxu0
    %v7076 = vadd.f32 %v6930, %v7001
    %v7077 = vadd.f32 %v6931, %v7003
    %v7078 = vadd.f32 %v6932, %v7072
    %v7079 = vadd.f32 %v6933, %v7074
    %v7080 = vxor.u32 %v7076, 2147483648
    %v7081 = vmul.f32 %v7080, 1.442695
    %v7082 = vpow.pop %v7081
    %v7083 = vadd.f32 %v7082, 1.0
    %v7084 = vrcp.pop %v7083
    %v7085 = vmul.f32 1.0, %v7084
    %v7086 = vxor.u32 %v7077, 2147483648
    %v7087 = vmul.f32 %v7086, 1.442695
    %v7088 = vpow.pop %v7087
    %v7089 = vadd.f32 %v7088, 1.0
    %v7090 = vrcp.pop %v7089
    %v7091 = vmul.f32 1.0, %v7090
    %v7092 = vtanh.pop %v7078
    %v7093 = vxor.u32 %v7079, 2147483648
    %v7094 = vmul.f32 %v7093, 1.442695
    %v7095 = vpow.pop %v7094
    %v7096 = vadd.f32 %v7095, 1.0
    %v7097 = vrcp.pop %v7096
    %v7098 = vmul.f32 1.0, %v7097
    %v7099 = vmul.f32 %v7091, %v6927
    %v7100 = vmul.f32 %v7085, %v7092
    %v7101 = vadd.f32 %v7099, %v7100
    %v7102 = vtanh.pop %v7101
    %v7103 = vmul.f32 %v7098, %v7102
    %v7104 = vld [vmem:[%s13] sm:$0xff]
    %v7105 = vld [vmem:[%s13 + $0x8] sm:$0xff]
    %v7106 = vld [vmem:[%s13 + $0x10] sm:$0xff]
    %v7107 = vld [vmem:[%s13 + $0x18] sm:$0xff]
    %v7108 = vld [vmem:[%s13 + $0x20] sm:$0xff]
    %v7109 = vld [vmem:[%s13 + $0x28] sm:$0xff]
    %v7110 = vld [vmem:[%s13 + $0x30] sm:$0xff]
    %v7111 = vld [vmem:[%s13 + $0x38] sm:$0xff]
    %v7112 = vld [vmem:[%s13 + $0x40] sm:$0xff]
    %v7113 = vld [vmem:[%s13 + $0x48] sm:$0xff]
    %v7114 = vld [vmem:[%s13 + $0x50] sm:$0xff]
    %v7115 = vld [vmem:[%s13 + $0x58] sm:$0xff]
    %v7116 = vld [vmem:[%s13 + $0x60] sm:$0xff]
    %v7117 = vld [vmem:[%s13 + $0x68] sm:$0xff]
    %v7118 = vld [vmem:[%s13 + $0x70] sm:$0xff]
    %v7119 = vld [vmem:[%s13 + $0x78] sm:$0xff]
    %v7120 = vld [vmem:[%s13 + $0x80] sm:$0xff]
    %v7121 = vld [vmem:[%s13 + $0x88] sm:$0xff]
    %v7122 = vld [vmem:[%s13 + $0x90] sm:$0xff]
    %v7123 = vld [vmem:[%s13 + $0x98] sm:$0xff]
    %v7124 = vld [vmem:[%s13 + $0xa0] sm:$0xff]
    %v7125 = vld [vmem:[%s13 + $0xa8] sm:$0xff]
    %v7126 = vld [vmem:[%s13 + $0xb0] sm:$0xff]
    %v7127 = vld [vmem:[%s13 + $0xb8] sm:$0xff]
    %v7128 = vld [vmem:[%s13 + $0xc0] sm:$0xff]
    %v7129 = vld [vmem:[%s13 + $0xc8] sm:$0xff]
    %v7130 = vld [vmem:[%s13 + $0xd0] sm:$0xff]
    %v7131 = vld [vmem:[%s13 + $0xd8] sm:$0xff]
    %v7132 = vld [vmem:[%s13 + $0xe0] sm:$0xff]
    %v7133 = vld [vmem:[%s13 + $0xe8] sm:$0xff]
    %v7134 = vld [vmem:[%s13 + $0xf0] sm:$0xff]
    %v7135 = vld [vmem:[%s13 + $0xf8] sm:$0xff]
    %v7136 = vld [vmem:[%s14] sm:$0x1]
    %v7138 = vlaneseq
    %v7139 = vshrl.u32 %v7138, 7
    %v7140 = vsub.s32 0, %v7139
    %v7141 = vrot.slane %v7136, %v7140
    %7143 = vmatprep.subr.mxu0 0.0
    %7144 = vmatpush1.msra.mxu0 %v7119
    %7145 = vmatprep.subr.mxu0 0.0
    %7146 = vmatpush1.msra.mxu0 %v7118
    %7147 = vmatprep.subr.mxu0 0.0
    %7148 = vmatpush1.msra.mxu0 %v7117
    %7149 = vmatprep.subr.mxu0 0.0
    %7150 = vmatpush1.msra.mxu0 %v7116
    %7151 = vmatprep.subr.mxu0 0.0
    %7152 = vmatpush1.msra.mxu0 %v7115
    %7153 = vmatprep.subr.mxu0 0.0
    %7154 = vmatpush1.msra.mxu0 %v7114
    %7155 = vmatprep.subr.mxu0 0.0
    %7156 = vmatpush1.msra.mxu0 %v7113
    %7157 = vmatprep.subr.mxu0 0.0
    %7158 = vmatpush1.msra.mxu0 %v7112
    %7159 = vmatprep.subr.mxu0 0.0
    %7160 = vmatpush1.msra.mxu0 %v7111
    %7161 = vmatprep.subr.mxu0 0.0
    %7162 = vmatpush1.msra.mxu0 %v7110
    %7163 = vmatprep.subr.mxu0 0.0
    %7164 = vmatpush1.msra.mxu0 %v7109
    %7165 = vmatprep.subr.mxu0 0.0
    %7166 = vmatpush1.msra.mxu0 %v7108
    %7167 = vmatprep.subr.mxu0 0.0
    %7168 = vmatpush1.msra.mxu0 %v7107
    %7169 = vmatprep.subr.mxu0 0.0
    %7170 = vmatpush1.msra.mxu0 %v7106
    %7171 = vmatprep.subr.mxu0 0.0
    %7172 = vmatpush1.msra.mxu0 %v7105
    %7173 = vmatprep.subr.mxu0 0.0
    %7174 = vmatpush1.msra.mxu0 %v7104
    %7175 = vmatprep.subr.mxu0 0.0
    %7176 = vmatpush2.msra.mxu0 %v7135
    %7177 = vmatprep.subr.mxu0 0.0
    %7178 = vmatpush2.msra.mxu0 %v7134
    %7179 = vmatprep.subr.mxu0 0.0
    %7180 = vmatpush2.msra.mxu0 %v7133
    %7181 = vmatprep.subr.mxu0 0.0
    %7182 = vmatpush2.msra.mxu0 %v7132
    %7183 = vmatprep.subr.mxu0 0.0
    %7184 = vmatpush2.msra.mxu0 %v7131
    %7185 = vmatprep.subr.mxu0 0.0
    %7186 = vmatpush2.msra.mxu0 %v7130
    %7187 = vmatprep.subr.mxu0 0.0
    %7188 = vmatpush2.msra.mxu0 %v7129
    %7189 = vmatprep.subr.mxu0 0.0
    %7190 = vmatpush2.msra.mxu0 %v7128
    %7191 = vmatprep.subr.mxu0 0.0
    %7192 = vmatpush2.msra.mxu0 %v7127
    %7193 = vmatprep.subr.mxu0 0.0
    %7194 = vmatpush2.msra.mxu0 %v7126
    %7195 = vmatprep.subr.mxu0 0.0
    %7196 = vmatpush2.msra.mxu0 %v7125
    %7197 = vmatprep.subr.mxu0 0.0
    %7198 = vmatpush2.msra.mxu0 %v7124
    %7199 = vmatprep.subr.mxu0 0.0
    %7200 = vmatpush2.msra.mxu0 %v7123
    %7201 = vmatprep.subr.mxu0 0.0
    %7202 = vmatpush2.msra.mxu0 %v7122
    %7203 = vmatprep.subr.mxu0 0.0
    %7204 = vmatpush2.msra.mxu0 %v7121
    %7205 = vmatprep.subr.mxu0 0.0
    %7206 = vmatpush2.msra.mxu0 %v7120
    %7207 = vmatprep.mubr.f32.mxu0 %v5885
    %7208 = vmatmul.mubr.f32.gmra.mxu0 %v7103
    %v7209 = vpop.f32.mrf.mxu0
    %v7210 = vadd.f32 %v7141, %v7209
    %v7211 = vpop.f32.mrf.mxu0
    %7212 = vdwg.mxu0
    %vm7213 = vcmask 31744
    %7214 = vst.msk [vmem:[%s15] sm:$0xff] %vm7213, %v7210
    // Predicated region
    $region70: #{text_birnn_forward.1} parent=1 // pred_check
      _
    $region71: #{text_birnn_forward.1} parent=1 // pred_check_branch
      %7216 = sbr.rel (0) target = $region73
    $region72: #{text_birnn_forward.1} parent=1 // pred_region
      _
    $region73: #{text_birnn_forward.1} parent=1 // pred_fallthru
      _
    // Predicated region
    $region74: #{text_birnn_forward.1} parent=1 // pred_check
      _
    $region75: #{text_birnn_forward.1} parent=1 // pred_check_branch
      %7218 = sbr.rel (0) target = $region77
    $region76: #{text_birnn_forward.1} parent=1 // pred_region
      _
    $region77: #{text_birnn_forward.1} parent=1 // pred_fallthru
      _
    %7219 = vsyncpa [#allocation11], 1
    %7220 = vsyncpa [#allocation13], 1
  %7221 = vsyncmov [#allocation9]
  %s7222 = vpop.sfrf %7221
  %p7223 = scmp.eq.s32.totalorder %s7222, 0
  %p7224 = pneg %p7223
  %7226 = shalt.err (%p7224)
  %s7227 = scalar_lea.sflag [#allocation9], 1
  %7228 = vsyncmov %s7227
  %s7229 = vpop.sfrf %7228
  %p7230 = scmp.eq.s32.totalorder %s7229, 0
  %p7231 = pneg %p7230
  %7233 = shalt.err (%p7231)
  %s7234 = scalar_lea.sflag [#allocation9], 2
  %7235 = vsyncmov %s7234
  %s7236 = vpop.sfrf %7235
  %p7237 = scmp.eq.s32.totalorder %s7236, 0
  %p7238 = pneg %p7237
  %7240 = shalt.err (%p7238)
  %s7241 = scalar_lea.sflag [#allocation9], 3
  %7242 = vsyncmov %s7241
  %s7243 = vpop.sfrf %7242
  %p7244 = scmp.eq.s32.totalorder %s7243, 0
  %p7245 = pneg %p7244
  %7247 = shalt.err (%p7245)

</llo_original>
